<compile_context>
chip_gen: v7x
topology: tpu7x:2x2x1
jax: 0.10.0
libtpu: 0.0.40
codegen_flags: <defaults>
</compile_context>

<pallas_src>
import functools

import jax
import jax.numpy as jnp
from jax import lax
from jax.experimental import pallas as pl
from jax.experimental.pallas import tpu as pltpu

LANES = 128  # hidden-layer channel width == TPU lane width


# ----------------------------- in-kernel helpers -----------------------------
def _elu(x):
    # ELU(alpha=1). exp(x)-1 (guaranteed Mosaic lowering) instead of expm1; the
    # absolute difference is < 2^-24 and irrelevant for this net.
    return jnp.where(x > 0.0, x, jnp.exp(jnp.minimum(x, 0.0)) - 1.0)


def _store_h_im2col(xc_ref, y):
    """Store activation y (H, W, C) f32 as a bf16 [left | center | right]
    horizontal-reflection im2col slab in xc_ref (H*W, 3C).

    Shifts are built on the f32 value (v5e-safe) and cast once at the store, so
    the consuming conv does zero shuffle work on its matmul operand."""
    H, W, C = y.shape
    left = jnp.concatenate([y[:, 1:2], y[:, :-1]], axis=1)    # col j -> y[:, j-1]; reflect -1 -> 1
    right = jnp.concatenate([y[:, 1:], y[:, -2:-1]], axis=1)  # col j -> y[:, j+1]; reflect W -> W-2
    dt = xc_ref.dtype
    xc_ref[:, 0 * C:1 * C] = left.reshape(H * W, C).astype(dt)
    xc_ref[:, 1 * C:2 * C] = y.reshape(H * W, C).astype(dt)
    xc_ref[:, 2 * C:3 * C] = right.reshape(H * W, C).astype(dt)


def _conv3x3(xc_ref, w_ref, b_ref, W):
    """Reflect-padded 3x3 conv from a horizontal im2col slab.

    xc_ref: (H*W, 3C) bf16, lanes ordered [kx=0 | kx=1 | kx=2] x C.
    w_ref:  (3, 3C, Cout) bf16, laid out as [ky, kx*C + c, co].
    b_ref:  (1, Cout) f32.

    One K=3C matmul per ky; the vertical taps are applied by shifting the f32
    matmul OUTPUT by +/-W rows (a multiple of 8 sublanes -> cheap re-addressing),
    instead of materializing vertically shifted copies of the 3C-wide input."""
    xc = xc_ref[...]
    p0 = jnp.dot(xc, w_ref[0], preferred_element_type=jnp.float32)
    p1 = jnp.dot(xc, w_ref[1], preferred_element_type=jnp.float32)
    p2 = jnp.dot(xc, w_ref[2], preferred_element_type=jnp.float32)
    # ky=0 reads input row i-1 (reflect row -1 -> 1).
    p0s = jnp.concatenate([p0[W:2 * W], p0[:-W]], axis=0)
    # ky=2 reads input row i+1 (reflect row H -> H-2).
    p2s = jnp.concatenate([p2[W:], p2[-2 * W:-W]], axis=0)
    return p0s + p1 + p2s + b_ref[...]


# --------------------------------- the kernel --------------------------------
def block_kernel(p0_ref, w0_ref, b0_ref, w1_ref, b1_ref, w2_ref, b2_ref,
                 w3_ref, b3_ref, o_ref, xc0_ref, xc1_ref):
    """One batch element of the whole block; intermediates stay in VMEM scratch."""
    H, W, _ = o_ref.shape
    C = b1_ref.shape[-1]

    # C00: in_planes -> 128, ELU.  The 9-tap im2col patch is prebuilt by the XLA
    # wrapper (Cin=4 is lane-sparse), so layer 0 is a single aligned matmul.
    a0 = jnp.dot(p0_ref[...], w0_ref[...],
                 preferred_element_type=jnp.float32) + b0_ref[...]
    _store_h_im2col(xc0_ref, _elu(a0).reshape(H, W, C))

    # C01: 128 -> 128, ELU, then residual add with ELU(C00) (bf16 center tap).
    a1 = _conv3x3(xc0_ref, w1_ref, b1_ref, W)
    y1 = _elu(a1) + xc0_ref[:, C:2 * C].astype(jnp.float32)
    _store_h_im2col(xc1_ref, y1.reshape(H, W, C))

    # C02: 128 -> 128, ELU.
    a2 = _conv3x3(xc1_ref, w2_ref, b2_ref, W)
    _store_h_im2col(xc0_ref, _elu(a2).reshape(H, W, C))

    # C03: 128 -> out_planes (padded to 8 lanes), no activation.
    a3 = _conv3x3(xc0_ref, w3_ref, b3_ref, W)
    o_ref[...] = a3.reshape(o_ref.shape)


# --------------------------------- wrapper -----------------------------------
@functools.partial(jax.jit, static_argnames=("out_planes",))
def block_forward(x_nchw, packed, out_planes=7):
    N, Cin, H, W = x_nchw.shape
    w0k, b0k, w1k, b1k, w2k, b2k, w3k, b3k = packed
    k0_pad = w0k.shape[0]
    cout_pad = w3k.shape[-1]

    # NCHW -> NHWC (channels on lanes).
    x = jnp.transpose(x_nchw, (0, 2, 3, 1))

    # Layer-0 im2col hoisted out of the kernel: 9 reflection taps -> K = 9*Cin,
    # zero-padded to a lane-aligned K and pre-cast to bf16.
    xpad = jnp.pad(x, ((0, 0), (1, 1), (1, 1), (0, 0)), mode="reflect")
    taps = [xpad[:, ky:ky + H, kx:kx + W, :] for ky in range(3) for kx in range(3)]
    patch = jnp.concatenate(taps, axis=-1).reshape(N, H * W, 9 * Cin)
    patch = jnp.pad(patch, ((0, 0), (0, 0), (0, k0_pad - 9 * Cin)))
    patch = patch.astype(jnp.bfloat16)

    out = pl.pallas_call(
        block_kernel,
        out_shape=jax.ShapeDtypeStruct((N, H, W, cout_pad), jnp.float32),
        grid=(N,),
        in_specs=[
            pl.BlockSpec((None, H * W, k0_pad), lambda n: (n, 0, 0)),
            # Weights/biases: full-array blocks with constant index maps, so the
            # pipeline fetches them once and keeps them VMEM-resident.  (At this
            # size the default double-buffer on them is a negligible ~0.5 MiB.)
            pl.BlockSpec(w0k.shape, lambda n: (0, 0)),
            pl.BlockSpec(b0k.shape, lambda n: (0, 0)),
            pl.BlockSpec(w1k.shape, lambda n: (0, 0, 0)),
            pl.BlockSpec(b1k.shape, lambda n: (0, 0)),
            pl.BlockSpec(w2k.shape, lambda n: (0, 0, 0)),
            pl.BlockSpec(b2k.shape, lambda n: (0, 0)),
            pl.BlockSpec(w3k.shape, lambda n: (0, 0, 0)),
            pl.BlockSpec(b3k.shape, lambda n: (0, 0)),
        ],
        out_specs=pl.BlockSpec((None, H, W, cout_pad), lambda n: (n, 0, 0, 0)),
        scratch_shapes=[
            pltpu.VMEM((H * W, 3 * LANES), jnp.bfloat16),   # im2col slab A
            pltpu.VMEM((H * W, 3 * LANES), jnp.bfloat16),   # im2col slab B
        ],
        # TODO(synk): if H/W scale well past 16x16, switch to a row-band grid axis
        # with a 1-row halo (gate whole-image vs row-band on
        # pltpu.get_tpu_info().vmem_capacity_bytes -- v7x has half of v6e's VMEM)
        # and add a second "parallel" axis so odd-N batches keep both v7x cores busy.
        compiler_params=pltpu.CompilerParams(
            dimension_semantics=("parallel",)),             # batch across TensorCores
    )(patch, w0k, b0k, w1k, b1k, w2k, b2k, w3k, b3k)

    out = jnp.transpose(out, (0, 3, 1, 2))                   # NHWC(padded) -> NCHW
    return out[:, :out_planes]


# ------------------------------ parameter setup ------------------------------
def init_conv_params(key, cin, cout, k=3):
    """Kaiming-normal weights (fan_in, gain=sqrt(2)) and bias = 0.1, as in __init__."""
    fan_in = cin * k * k
    std = (2.0 / fan_in) ** 0.5
    w = jax.random.normal(key, (k, k, cin, cout), dtype=jnp.float32) * std
    b = jnp.full((cout,), 0.1, dtype=jnp.float32)
    return w, b


def init_block_params(key, in_planes, out_planes=7):
    k0, k1, k2, k3 = jax.random.split(key, 4)
    return {
        "C00": init_conv_params(k0, in_planes, LANES),
        "C01": init_conv_params(k1, LANES, LANES),
        "C02": init_conv_params(k2, LANES, LANES),
        "C03": init_conv_params(k3, LANES, out_planes),
    }


def pack_params(params, out_planes):
    """Kernel-layout params: 3x3 taps folded into the contraction dim
    ([ky, kx*Cin + c]), bf16 weights (f32 accumulate in-kernel); layer-0 K and the
    last layer's Cout are zero-padded for aligned loads / stores."""
    w0, b0 = params["C00"]
    w1, b1 = params["C01"]
    w2, b2 = params["C02"]
    w3, b3 = params["C03"]
    cin0 = w0.shape[2]
    k0 = 9 * cin0
    k0_pad = pl.cdiv(k0, LANES) * LANES
    cout_pad = max(8, pl.cdiv(out_planes, 8) * 8)

    w0k = jnp.pad(w0.reshape(k0, LANES), ((0, k0_pad - k0), (0, 0))).astype(jnp.bfloat16)
    w1k = w1.reshape(3, 3 * LANES, LANES).astype(jnp.bfloat16)
    w2k = w2.reshape(3, 3 * LANES, LANES).astype(jnp.bfloat16)
    w3k = jnp.pad(w3, ((0, 0), (0, 0), (0, 0), (0, cout_pad - out_planes)))
    w3k = w3k.reshape(3, 3 * LANES, cout_pad).astype(jnp.bfloat16)
    b0k = b0.reshape(1, LANES)
    b1k = b1.reshape(1, LANES)
    b2k = b2.reshape(1, LANES)
    b3k = jnp.pad(b3, (0, cout_pad - out_planes)).reshape(1, cout_pad)
    return (w0k, b0k, w1k, b1k, w2k, b2k, w3k, b3k)


# --------------------------- pure-XLA f32 reference --------------------------
def _conv_ref(x_nhwc, w, b):
    xpad = jnp.pad(x_nhwc, ((0, 0), (1, 1), (1, 1), (0, 0)), mode="reflect")
    y = lax.conv_general_dilated(xpad, w, window_strides=(1, 1), padding="VALID",
                                 dimension_numbers=("NHWC", "HWIO", "NHWC"))
    return y + b


def block_reference(x_nchw, params):
    x = jnp.transpose(x_nchw, (0, 2, 3, 1))
    t0 = jax.nn.elu(_conv_ref(x, *params["C00"]))
    t1 = jax.nn.elu(_conv_ref(t0, *params["C01"]))
    o = jax.nn.elu(_conv_ref(t0 + t1, *params["C02"]))
    o = _conv_ref(o, *params["C03"])
    return jnp.transpose(o, (0, 3, 1, 2))


if __name__ == "__main__":
    key = jax.random.PRNGKey(0)
    k_params, k_x = jax.random.split(key)

    in_planes, out_planes = 4, 7
    N, H, W = 2, 16, 16

    params = init_block_params(k_params, in_planes, out_planes)
    packed = pack_params(params, out_planes)
    x = jax.random.normal(k_x, (N, in_planes, H, W), dtype=jnp.float32)

    y = block_forward(x, packed, out_planes=out_planes)
    jax.block_until_ready(y)
    assert y.shape == (N, out_planes, H, W), y.shape

    # Loose tolerance: kernel matmuls use bf16 operands with f32 accumulation.
    y_ref = block_reference(x, params)
    rel_err = float(jnp.linalg.norm(y - y_ref) / jnp.linalg.norm(y_ref))
    assert rel_err < 0.1, rel_err

    print("KERNEL_OK")
</pallas_src>

<mosaic_0001>
module attributes {stable_mosaic.version = 11 : i64} {
  func.func @block_kernel(%arg0: i32, %arg1: memref<1x256x128xbf16, #tpu.memory_space<vmem>>, %arg2: memref<128x128xbf16, #tpu.memory_space<vmem>>, %arg3: memref<1x128xf32, #tpu.memory_space<vmem>>, %arg4: memref<3x384x128xbf16, #tpu.memory_space<vmem>>, %arg5: memref<1x128xf32, #tpu.memory_space<vmem>>, %arg6: memref<3x384x128xbf16, #tpu.memory_space<vmem>>, %arg7: memref<1x128xf32, #tpu.memory_space<vmem>>, %arg8: memref<3x384x8xbf16, #tpu.memory_space<vmem>>, %arg9: memref<1x8xf32, #tpu.memory_space<vmem>>, %arg10: memref<1x16x16x8xf32, #tpu.memory_space<vmem>>, %arg11: memref<256x384xbf16, #tpu.memory_space<vmem>>, %arg12: memref<256x384xbf16, #tpu.memory_space<vmem>>) attributes {dimension_semantics = [#tpu.dimension_semantics<parallel>], iteration_bounds = array<i64: 2>, scalar_prefetch = 0 : i64, scratch_operands = 2 : i64, tpu.core_type = #tpu.core_type<tc>, window_params = [{transform_indices = @transform_0, window_bounds = array<i64: 1, 256, 128>}, {pipeline_mode = #tpu.pipeline_mode<synchronous>, transform_indices = @transform_1, window_bounds = array<i64: 128, 128>}, {pipeline_mode = #tpu.pipeline_mode<synchronous>, transform_indices = @transform_2, window_bounds = array<i64: 1, 128>}, {pipeline_mode = #tpu.pipeline_mode<synchronous>, transform_indices = @transform_3, window_bounds = array<i64: 3, 384, 128>}, {pipeline_mode = #tpu.pipeline_mode<synchronous>, transform_indices = @transform_4, window_bounds = array<i64: 1, 128>}, {pipeline_mode = #tpu.pipeline_mode<synchronous>, transform_indices = @transform_5, window_bounds = array<i64: 3, 384, 128>}, {pipeline_mode = #tpu.pipeline_mode<synchronous>, transform_indices = @transform_6, window_bounds = array<i64: 1, 128>}, {pipeline_mode = #tpu.pipeline_mode<synchronous>, transform_indices = @transform_7, window_bounds = array<i64: 3, 384, 8>}, {pipeline_mode = #tpu.pipeline_mode<synchronous>, transform_indices = @transform_8, window_bounds = array<i64: 1, 8>}, {transform_indices = @transform_9, window_bounds = array<i64: 1, 16, 16, 8>}]} {
    %c0 = arith.constant 0 : index
    %c0_0 = arith.constant 0 : index
    %c0_1 = arith.constant 0 : index
    %0 = vector.load %arg1[%c0, %c0_0, %c0_1] : memref<1x256x128xbf16, #tpu.memory_space<vmem>>, vector<1x256x128xbf16>
    %1 = vector.shape_cast %0 : vector<1x256x128xbf16> to vector<256x128xbf16>
    %c0_2 = arith.constant 0 : index
    %c0_3 = arith.constant 0 : index
    %2 = vector.load %arg2[%c0_2, %c0_3] : memref<128x128xbf16, #tpu.memory_space<vmem>>, vector<128x128xbf16>
    %cst = arith.constant dense<0.000000e+00> : vector<256x128xf32>
    %3 = tpu.matmul %1, %2, %cst {dimension_numbers = #tpu.dot_dimension_numbers<[1], [0], [0], [1], [0, 0, 1, 1], [], []>} : vector<256x128xbf16>, vector<128x128xbf16>, vector<256x128xf32> -> vector<256x128xf32>
    %c0_4 = arith.constant 0 : index
    %c0_5 = arith.constant 0 : index
    %4 = vector.load %arg3[%c0_4, %c0_5] : memref<1x128xf32, #tpu.memory_space<vmem>>, vector<1x128xf32>
    %5 = vector.broadcast %4 : vector<1x128xf32> to vector<256x128xf32>
    %6 = arith.addf %3, %5 : vector<256x128xf32>
    %cst_6 = arith.constant 0.000000e+00 : f32
    %7 = vector.broadcast %cst_6 : f32 to vector<256x128xf32>
    %8 = arith.cmpf ogt, %6, %7 : vector<256x128xf32>
    %cst_7 = arith.constant 0.000000e+00 : f32
    %9 = vector.broadcast %cst_7 : f32 to vector<256x128xf32>
    %10 = arith.minimumf %6, %9 : vector<256x128xf32>
    %11 = math.exp %10 : vector<256x128xf32>
    %cst_8 = arith.constant 1.000000e+00 : f32
    %12 = vector.broadcast %cst_8 : f32 to vector<256x128xf32>
    %13 = arith.subf %11, %12 : vector<256x128xf32>
    %14 = arith.select %8, %6, %13 : vector<256x128xi1>, vector<256x128xf32>
    %15 = vector.shape_cast %14 : vector<256x128xf32> to vector<16x16x128xf32>
    %16 = vector.extract_strided_slice %15 {offsets = [0, 1, 0], sizes = [16, 1, 128], strides = [1, 1, 1]} : vector<16x16x128xf32> to vector<16x1x128xf32>
    %17 = vector.extract_strided_slice %15 {offsets = [0, 0, 0], sizes = [16, 15, 128], strides = [1, 1, 1]} : vector<16x16x128xf32> to vector<16x15x128xf32>
    %18 = tpu.concatenate %16, %17 in 1 : vector<16x1x128xf32>, vector<16x15x128xf32> -> vector<16x16x128xf32>
    %19 = vector.extract_strided_slice %15 {offsets = [0, 1, 0], sizes = [16, 15, 128], strides = [1, 1, 1]} : vector<16x16x128xf32> to vector<16x15x128xf32>
    %20 = vector.extract_strided_slice %15 {offsets = [0, 14, 0], sizes = [16, 1, 128], strides = [1, 1, 1]} : vector<16x16x128xf32> to vector<16x1x128xf32>
    %21 = tpu.concatenate %19, %20 in 1 : vector<16x15x128xf32>, vector<16x1x128xf32> -> vector<16x16x128xf32>
    %22 = vector.shape_cast %18 : vector<16x16x128xf32> to vector<256x128xf32>
    %23 = arith.truncf %22 : vector<256x128xf32> to vector<256x128xbf16>
    %c0_9 = arith.constant 0 : index
    %c0_10 = arith.constant 0 : index
    %24 = vector.load %arg11[%c0_9, %c0_10] : memref<256x384xbf16, #tpu.memory_space<vmem>>, vector<256x128xbf16>
    tpu.vector_store %arg11[%c0_9, %c0_10], %23 {strides = array<i32>} : memref<256x384xbf16, #tpu.memory_space<vmem>>, vector<256x128xbf16>,
    %25 = vector.shape_cast %15 : vector<16x16x128xf32> to vector<256x128xf32>
    %26 = arith.truncf %25 : vector<256x128xf32> to vector<256x128xbf16>
    %c0_11 = arith.constant 0 : index
    %c128 = arith.constant 128 : index
    %27 = vector.load %arg11[%c0_11, %c128] : memref<256x384xbf16, #tpu.memory_space<vmem>>, vector<256x128xbf16>
    tpu.vector_store %arg11[%c0_11, %c128], %26 {strides = array<i32>} : memref<256x384xbf16, #tpu.memory_space<vmem>>, vector<256x128xbf16>,
    %28 = vector.shape_cast %21 : vector<16x16x128xf32> to vector<256x128xf32>
    %29 = arith.truncf %28 : vector<256x128xf32> to vector<256x128xbf16>
    %c0_12 = arith.constant 0 : index
    %c256 = arith.constant 256 : index
    %30 = vector.load %arg11[%c0_12, %c256] : memref<256x384xbf16, #tpu.memory_space<vmem>>, vector<256x128xbf16>
    tpu.vector_store %arg11[%c0_12, %c256], %29 {strides = array<i32>} : memref<256x384xbf16, #tpu.memory_space<vmem>>, vector<256x128xbf16>,
    %c0_13 = arith.constant 0 : index
    %c0_14 = arith.constant 0 : index
    %31 = vector.load %arg11[%c0_13, %c0_14] : memref<256x384xbf16, #tpu.memory_space<vmem>>, vector<256x384xbf16>
    %c0_15 = arith.constant 0 : index
    %c0_16 = arith.constant 0 : index
    %c0_17 = arith.constant 0 : index
    %32 = vector.load %arg4[%c0_15, %c0_16, %c0_17] : memref<3x384x128xbf16, #tpu.memory_space<vmem>>, vector<1x384x128xbf16>
    %33 = vector.shape_cast %32 : vector<1x384x128xbf16> to vector<384x128xbf16>
    %cst_18 = arith.constant dense<0.000000e+00> : vector<256x128xf32>
    %34 = tpu.matmul %31, %33, %cst_18 {dimension_numbers = #tpu.dot_dimension_numbers<[1], [0], [0], [1], [0, 0, 1, 1], [], []>} : vector<256x384xbf16>, vector<384x128xbf16>, vector<256x128xf32> -> vector<256x128xf32>
    %c1 = arith.constant 1 : index
    %c0_19 = arith.constant 0 : index
    %c0_20 = arith.constant 0 : index
    %35 = vector.load %arg4[%c1, %c0_19, %c0_20] : memref<3x384x128xbf16, #tpu.memory_space<vmem>>, vector<1x384x128xbf16>
    %36 = vector.shape_cast %35 : vector<1x384x128xbf16> to vector<384x128xbf16>
    %cst_21 = arith.constant dense<0.000000e+00> : vector<256x128xf32>
    %37 = tpu.matmul %31, %36, %cst_21 {dimension_numbers = #tpu.dot_dimension_numbers<[1], [0], [0], [1], [0, 0, 1, 1], [], []>} : vector<256x384xbf16>, vector<384x128xbf16>, vector<256x128xf32> -> vector<256x128xf32>
    %c2 = arith.constant 2 : index
    %c0_22 = arith.constant 0 : index
    %c0_23 = arith.constant 0 : index
    %38 = vector.load %arg4[%c2, %c0_22, %c0_23] : memref<3x384x128xbf16, #tpu.memory_space<vmem>>, vector<1x384x128xbf16>
    %39 = vector.shape_cast %38 : vector<1x384x128xbf16> to vector<384x128xbf16>
    %cst_24 = arith.constant dense<0.000000e+00> : vector<256x128xf32>
    %40 = tpu.matmul %31, %39, %cst_24 {dimension_numbers = #tpu.dot_dimension_numbers<[1], [0], [0], [1], [0, 0, 1, 1], [], []>} : vector<256x384xbf16>, vector<384x128xbf16>, vector<256x128xf32> -> vector<256x128xf32>
    %41 = vector.extract_strided_slice %34 {offsets = [16, 0], sizes = [16, 128], strides = [1, 1]} : vector<256x128xf32> to vector<16x128xf32>
    %42 = vector.extract_strided_slice %34 {offsets = [0, 0], sizes = [240, 128], strides = [1, 1]} : vector<256x128xf32> to vector<240x128xf32>
    %43 = tpu.concatenate %41, %42 in 0 : vector<16x128xf32>, vector<240x128xf32> -> vector<256x128xf32>
    %44 = vector.extract_strided_slice %40 {offsets = [16, 0], sizes = [240, 128], strides = [1, 1]} : vector<256x128xf32> to vector<240x128xf32>
    %45 = vector.extract_strided_slice %40 {offsets = [224, 0], sizes = [16, 128], strides = [1, 1]} : vector<256x128xf32> to vector<16x128xf32>
    %46 = tpu.concatenate %44, %45 in 0 : vector<240x128xf32>, vector<16x128xf32> -> vector<256x128xf32>
    %47 = arith.addf %43, %37 : vector<256x128xf32>
    %48 = arith.addf %47, %46 : vector<256x128xf32>
    %c0_25 = arith.constant 0 : index
    %c0_26 = arith.constant 0 : index
    %49 = vector.load %arg5[%c0_25, %c0_26] : memref<1x128xf32, #tpu.memory_space<vmem>>, vector<1x128xf32>
    %50 = vector.broadcast %49 : vector<1x128xf32> to vector<256x128xf32>
    %51 = arith.addf %48, %50 : vector<256x128xf32>
    %cst_27 = arith.constant 0.000000e+00 : f32
    %52 = vector.broadcast %cst_27 : f32 to vector<256x128xf32>
    %53 = arith.cmpf ogt, %51, %52 : vector<256x128xf32>
    %cst_28 = arith.constant 0.000000e+00 : f32
    %54 = vector.broadcast %cst_28 : f32 to vector<256x128xf32>
    %55 = arith.minimumf %51, %54 : vector<256x128xf32>
    %56 = math.exp %55 : vector<256x128xf32>
    %cst_29 = arith.constant 1.000000e+00 : f32
    %57 = vector.broadcast %cst_29 : f32 to vector<256x128xf32>
    %58 = arith.subf %56, %57 : vector<256x128xf32>
    %59 = arith.select %53, %51, %58 : vector<256x128xi1>, vector<256x128xf32>
    %c0_30 = arith.constant 0 : index
    %c128_31 = arith.constant 128 : index
    %60 = vector.load %arg11[%c0_30, %c128_31] : memref<256x384xbf16, #tpu.memory_space<vmem>>, vector<256x128xbf16>
    %61 = arith.extf %60 : vector<256x128xbf16> to vector<256x128xf32>
    %62 = arith.addf %59, %61 : vector<256x128xf32>
    %63 = vector.shape_cast %62 : vector<256x128xf32> to vector<16x16x128xf32>
    %64 = vector.extract_strided_slice %63 {offsets = [0, 1, 0], sizes = [16, 1, 128], strides = [1, 1, 1]} : vector<16x16x128xf32> to vector<16x1x128xf32>
    %65 = vector.extract_strided_slice %63 {offsets = [0, 0, 0], sizes = [16, 15, 128], strides = [1, 1, 1]} : vector<16x16x128xf32> to vector<16x15x128xf32>
    %66 = tpu.concatenate %64, %65 in 1 : vector<16x1x128xf32>, vector<16x15x128xf32> -> vector<16x16x128xf32>
    %67 = vector.extract_strided_slice %63 {offsets = [0, 1, 0], sizes = [16, 15, 128], strides = [1, 1, 1]} : vector<16x16x128xf32> to vector<16x15x128xf32>
    %68 = vector.extract_strided_slice %63 {offsets = [0, 14, 0], sizes = [16, 1, 128], strides = [1, 1, 1]} : vector<16x16x128xf32> to vector<16x1x128xf32>
    %69 = tpu.concatenate %67, %68 in 1 : vector<16x15x128xf32>, vector<16x1x128xf32> -> vector<16x16x128xf32>
    %70 = vector.shape_cast %66 : vector<16x16x128xf32> to vector<256x128xf32>
    %71 = arith.truncf %70 : vector<256x128xf32> to vector<256x128xbf16>
    %c0_32 = arith.constant 0 : index
    %c0_33 = arith.constant 0 : index
    %72 = vector.load %arg12[%c0_32, %c0_33] : memref<256x384xbf16, #tpu.memory_space<vmem>>, vector<256x128xbf16>
    tpu.vector_store %arg12[%c0_32, %c0_33], %71 {strides = array<i32>} : memref<256x384xbf16, #tpu.memory_space<vmem>>, vector<256x128xbf16>,
    %73 = vector.shape_cast %63 : vector<16x16x128xf32> to vector<256x128xf32>
    %74 = arith.truncf %73 : vector<256x128xf32> to vector<256x128xbf16>
    %c0_34 = arith.constant 0 : index
    %c128_35 = arith.constant 128 : index
    %75 = vector.load %arg12[%c0_34, %c128_35] : memref<256x384xbf16, #tpu.memory_space<vmem>>, vector<256x128xbf16>
    tpu.vector_store %arg12[%c0_34, %c128_35], %74 {strides = array<i32>} : memref<256x384xbf16, #tpu.memory_space<vmem>>, vector<256x128xbf16>,
    %76 = vector.shape_cast %69 : vector<16x16x128xf32> to vector<256x128xf32>
    %77 = arith.truncf %76 : vector<256x128xf32> to vector<256x128xbf16>
    %c0_36 = arith.constant 0 : index
    %c256_37 = arith.constant 256 : index
    %78 = vector.load %arg12[%c0_36, %c256_37] : memref<256x384xbf16, #tpu.memory_space<vmem>>, vector<256x128xbf16>
    tpu.vector_store %arg12[%c0_36, %c256_37], %77 {strides = array<i32>} : memref<256x384xbf16, #tpu.memory_space<vmem>>, vector<256x128xbf16>,
    %c0_38 = arith.constant 0 : index
    %c0_39 = arith.constant 0 : index
    %79 = vector.load %arg12[%c0_38, %c0_39] : memref<256x384xbf16, #tpu.memory_space<vmem>>, vector<256x384xbf16>
    %c0_40 = arith.constant 0 : index
    %c0_41 = arith.constant 0 : index
    %c0_42 = arith.constant 0 : index
    %80 = vector.load %arg6[%c0_40, %c0_41, %c0_42] : memref<3x384x128xbf16, #tpu.memory_space<vmem>>, vector<1x384x128xbf16>
    %81 = vector.shape_cast %80 : vector<1x384x128xbf16> to vector<384x128xbf16>
    %cst_43 = arith.constant dense<0.000000e+00> : vector<256x128xf32>
    %82 = tpu.matmul %79, %81, %cst_43 {dimension_numbers = #tpu.dot_dimension_numbers<[1], [0], [0], [1], [0, 0, 1, 1], [], []>} : vector<256x384xbf16>, vector<384x128xbf16>, vector<256x128xf32> -> vector<256x128xf32>
    %c1_44 = arith.constant 1 : index
    %c0_45 = arith.constant 0 : index
    %c0_46 = arith.constant 0 : index
    %83 = vector.load %arg6[%c1_44, %c0_45, %c0_46] : memref<3x384x128xbf16, #tpu.memory_space<vmem>>, vector<1x384x128xbf16>
    %84 = vector.shape_cast %83 : vector<1x384x128xbf16> to vector<384x128xbf16>
    %cst_47 = arith.constant dense<0.000000e+00> : vector<256x128xf32>
    %85 = tpu.matmul %79, %84, %cst_47 {dimension_numbers = #tpu.dot_dimension_numbers<[1], [0], [0], [1], [0, 0, 1, 1], [], []>} : vector<256x384xbf16>, vector<384x128xbf16>, vector<256x128xf32> -> vector<256x128xf32>
    %c2_48 = arith.constant 2 : index
    %c0_49 = arith.constant 0 : index
    %c0_50 = arith.constant 0 : index
    %86 = vector.load %arg6[%c2_48, %c0_49, %c0_50] : memref<3x384x128xbf16, #tpu.memory_space<vmem>>, vector<1x384x128xbf16>
    %87 = vector.shape_cast %86 : vector<1x384x128xbf16> to vector<384x128xbf16>
    %cst_51 = arith.constant dense<0.000000e+00> : vector<256x128xf32>
    %88 = tpu.matmul %79, %87, %cst_51 {dimension_numbers = #tpu.dot_dimension_numbers<[1], [0], [0], [1], [0, 0, 1, 1], [], []>} : vector<256x384xbf16>, vector<384x128xbf16>, vector<256x128xf32> -> vector<256x128xf32>
    %89 = vector.extract_strided_slice %82 {offsets = [16, 0], sizes = [16, 128], strides = [1, 1]} : vector<256x128xf32> to vector<16x128xf32>
    %90 = vector.extract_strided_slice %82 {offsets = [0, 0], sizes = [240, 128], strides = [1, 1]} : vector<256x128xf32> to vector<240x128xf32>
    %91 = tpu.concatenate %89, %90 in 0 : vector<16x128xf32>, vector<240x128xf32> -> vector<256x128xf32>
    %92 = vector.extract_strided_slice %88 {offsets = [16, 0], sizes = [240, 128], strides = [1, 1]} : vector<256x128xf32> to vector<240x128xf32>
    %93 = vector.extract_strided_slice %88 {offsets = [224, 0], sizes = [16, 128], strides = [1, 1]} : vector<256x128xf32> to vector<16x128xf32>
    %94 = tpu.concatenate %92, %93 in 0 : vector<240x128xf32>, vector<16x128xf32> -> vector<256x128xf32>
    %95 = arith.addf %91, %85 : vector<256x128xf32>
    %96 = arith.addf %95, %94 : vector<256x128xf32>
    %c0_52 = arith.constant 0 : index
    %c0_53 = arith.constant 0 : index
    %97 = vector.load %arg7[%c0_52, %c0_53] : memref<1x128xf32, #tpu.memory_space<vmem>>, vector<1x128xf32>
    %98 = vector.broadcast %97 : vector<1x128xf32> to vector<256x128xf32>
    %99 = arith.addf %96, %98 : vector<256x128xf32>
    %cst_54 = arith.constant 0.000000e+00 : f32
    %100 = vector.broadcast %cst_54 : f32 to vector<256x128xf32>
    %101 = arith.cmpf ogt, %99, %100 : vector<256x128xf32>
    %cst_55 = arith.constant 0.000000e+00 : f32
    %102 = vector.broadcast %cst_55 : f32 to vector<256x128xf32>
    %103 = arith.minimumf %99, %102 : vector<256x128xf32>
    %104 = math.exp %103 : vector<256x128xf32>
    %cst_56 = arith.constant 1.000000e+00 : f32
    %105 = vector.broadcast %cst_56 : f32 to vector<256x128xf32>
    %106 = arith.subf %104, %105 : vector<256x128xf32>
    %107 = arith.select %101, %99, %106 : vector<256x128xi1>, vector<256x128xf32>
    %108 = vector.shape_cast %107 : vector<256x128xf32> to vector<16x16x128xf32>
    %109 = vector.extract_strided_slice %108 {offsets = [0, 1, 0], sizes = [16, 1, 128], strides = [1, 1, 1]} : vector<16x16x128xf32> to vector<16x1x128xf32>
    %110 = vector.extract_strided_slice %108 {offsets = [0, 0, 0], sizes = [16, 15, 128], strides = [1, 1, 1]} : vector<16x16x128xf32> to vector<16x15x128xf32>
    %111 = tpu.concatenate %109, %110 in 1 : vector<16x1x128xf32>, vector<16x15x128xf32> -> vector<16x16x128xf32>
    %112 = vector.extract_strided_slice %108 {offsets = [0, 1, 0], sizes = [16, 15, 128], strides = [1, 1, 1]} : vector<16x16x128xf32> to vector<16x15x128xf32>
    %113 = vector.extract_strided_slice %108 {offsets = [0, 14, 0], sizes = [16, 1, 128], strides = [1, 1, 1]} : vector<16x16x128xf32> to vector<16x1x128xf32>
    %114 = tpu.concatenate %112, %113 in 1 : vector<16x15x128xf32>, vector<16x1x128xf32> -> vector<16x16x128xf32>
    %115 = vector.shape_cast %111 : vector<16x16x128xf32> to vector<256x128xf32>
    %116 = arith.truncf %115 : vector<256x128xf32> to vector<256x128xbf16>
    %c0_57 = arith.constant 0 : index
    %c0_58 = arith.constant 0 : index
    %117 = vector.load %arg11[%c0_57, %c0_58] : memref<256x384xbf16, #tpu.memory_space<vmem>>, vector<256x128xbf16>
    tpu.vector_store %arg11[%c0_57, %c0_58], %116 {strides = array<i32>} : memref<256x384xbf16, #tpu.memory_space<vmem>>, vector<256x128xbf16>,
    %118 = vector.shape_cast %108 : vector<16x16x128xf32> to vector<256x128xf32>
    %119 = arith.truncf %118 : vector<256x128xf32> to vector<256x128xbf16>
    %c0_59 = arith.constant 0 : index
    %c128_60 = arith.constant 128 : index
    %120 = vector.load %arg11[%c0_59, %c128_60] : memref<256x384xbf16, #tpu.memory_space<vmem>>, vector<256x128xbf16>
    tpu.vector_store %arg11[%c0_59, %c128_60], %119 {strides = array<i32>} : memref<256x384xbf16, #tpu.memory_space<vmem>>, vector<256x128xbf16>,
    %121 = vector.shape_cast %114 : vector<16x16x128xf32> to vector<256x128xf32>
    %122 = arith.truncf %121 : vector<256x128xf32> to vector<256x128xbf16>
    %c0_61 = arith.constant 0 : index
    %c256_62 = arith.constant 256 : index
    %123 = vector.load %arg11[%c0_61, %c256_62] : memref<256x384xbf16, #tpu.memory_space<vmem>>, vector<256x128xbf16>
    tpu.vector_store %arg11[%c0_61, %c256_62], %122 {strides = array<i32>} : memref<256x384xbf16, #tpu.memory_space<vmem>>, vector<256x128xbf16>,
    %c0_63 = arith.constant 0 : index
    %c0_64 = arith.constant 0 : index
    %124 = vector.load %arg11[%c0_63, %c0_64] : memref<256x384xbf16, #tpu.memory_space<vmem>>, vector<256x384xbf16>
    %c0_65 = arith.constant 0 : index
    %c0_66 = arith.constant 0 : index
    %c0_67 = arith.constant 0 : index
    %125 = vector.load %arg8[%c0_65, %c0_66, %c0_67] : memref<3x384x8xbf16, #tpu.memory_space<vmem>>, vector<1x384x8xbf16>
    %126 = vector.shape_cast %125 : vector<1x384x8xbf16> to vector<384x8xbf16>
    %cst_68 = arith.constant dense<0.000000e+00> : vector<256x8xf32>
    %127 = tpu.matmul %124, %126, %cst_68 {dimension_numbers = #tpu.dot_dimension_numbers<[1], [0], [0], [1], [0, 0, 1, 1], [], []>} : vector<256x384xbf16>, vector<384x8xbf16>, vector<256x8xf32> -> vector<256x8xf32>
    %c1_69 = arith.constant 1 : index
    %c0_70 = arith.constant 0 : index
    %c0_71 = arith.constant 0 : index
    %128 = vector.load %arg8[%c1_69, %c0_70, %c0_71] : memref<3x384x8xbf16, #tpu.memory_space<vmem>>, vector<1x384x8xbf16>
    %129 = vector.shape_cast %128 : vector<1x384x8xbf16> to vector<384x8xbf16>
    %cst_72 = arith.constant dense<0.000000e+00> : vector<256x8xf32>
    %130 = tpu.matmul %124, %129, %cst_72 {dimension_numbers = #tpu.dot_dimension_numbers<[1], [0], [0], [1], [0, 0, 1, 1], [], []>} : vector<256x384xbf16>, vector<384x8xbf16>, vector<256x8xf32> -> vector<256x8xf32>
    %c2_73 = arith.constant 2 : index
    %c0_74 = arith.constant 0 : index
    %c0_75 = arith.constant 0 : index
    %131 = vector.load %arg8[%c2_73, %c0_74, %c0_75] : memref<3x384x8xbf16, #tpu.memory_space<vmem>>, vector<1x384x8xbf16>
    %132 = vector.shape_cast %131 : vector<1x384x8xbf16> to vector<384x8xbf16>
    %cst_76 = arith.constant dense<0.000000e+00> : vector<256x8xf32>
    %133 = tpu.matmul %124, %132, %cst_76 {dimension_numbers = #tpu.dot_dimension_numbers<[1], [0], [0], [1], [0, 0, 1, 1], [], []>} : vector<256x384xbf16>, vector<384x8xbf16>, vector<256x8xf32> -> vector<256x8xf32>
    %134 = vector.extract_strided_slice %127 {offsets = [16, 0], sizes = [16, 8], strides = [1, 1]} : vector<256x8xf32> to vector<16x8xf32>
    %135 = vector.extract_strided_slice %127 {offsets = [0, 0], sizes = [240, 8], strides = [1, 1]} : vector<256x8xf32> to vector<240x8xf32>
    %136 = tpu.concatenate %134, %135 in 0 : vector<16x8xf32>, vector<240x8xf32> -> vector<256x8xf32>
    %137 = vector.extract_strided_slice %133 {offsets = [16, 0], sizes = [240, 8], strides = [1, 1]} : vector<256x8xf32> to vector<240x8xf32>
    %138 = vector.extract_strided_slice %133 {offsets = [224, 0], sizes = [16, 8], strides = [1, 1]} : vector<256x8xf32> to vector<16x8xf32>
    %139 = tpu.concatenate %137, %138 in 0 : vector<240x8xf32>, vector<16x8xf32> -> vector<256x8xf32>
    %140 = arith.addf %136, %130 : vector<256x8xf32>
    %141 = arith.addf %140, %139 : vector<256x8xf32>
    %c0_77 = arith.constant 0 : index
    %c0_78 = arith.constant 0 : index
    %142 = vector.load %arg9[%c0_77, %c0_78] : memref<1x8xf32, #tpu.memory_space<vmem>>, vector<1x8xf32>
    %143 = vector.broadcast %142 : vector<1x8xf32> to vector<256x8xf32>
    %144 = arith.addf %141, %143 : vector<256x8xf32>
    %145 = vector.shape_cast %144 : vector<256x8xf32> to vector<16x16x8xf32>
    %c0_79 = arith.constant 0 : index
    %c0_80 = arith.constant 0 : index
    %c0_81 = arith.constant 0 : index
    %c0_82 = arith.constant 0 : index
    %146 = vector.load %arg10[%c0_79, %c0_80, %c0_81, %c0_82] : memref<1x16x16x8xf32, #tpu.memory_space<vmem>>, vector<1x16x16x8xf32>
    %147 = vector.shape_cast %146 : vector<1x16x16x8xf32> to vector<16x16x8xf32>
    %148 = vector.shape_cast %145 : vector<16x16x8xf32> to vector<1x16x16x8xf32>
    tpu.vector_store %arg10[%c0_79, %c0_80, %c0_81, %c0_82], %148 {strides = array<i32>} : memref<1x16x16x8xf32, #tpu.memory_space<vmem>>, vector<1x16x16x8xf32>,
    return
  }
  func.func @transform_0(%arg0: i32) -> (i32, i32, i32) {
    %c0_i32 = arith.constant 0 : i32
    %c0_i32_0 = arith.constant 0 : i32
    %c0_i32_1 = arith.constant 0 : i32
    return %arg0, %c0_i32, %c0_i32_0 : i32, i32, i32
  }
  func.func @transform_1(%arg0: i32) -> (i32, i32) {
    %c0_i32 = arith.constant 0 : i32
    %c0_i32_0 = arith.constant 0 : i32
    %c0_i32_1 = arith.constant 0 : i32
    return %c0_i32, %c0_i32_0 : i32, i32
  }
  func.func @transform_2(%arg0: i32) -> (i32, i32) {
    %c0_i32 = arith.constant 0 : i32
    %c0_i32_0 = arith.constant 0 : i32
    %c0_i32_1 = arith.constant 0 : i32
    return %c0_i32, %c0_i32_0 : i32, i32
  }
  func.func @transform_3(%arg0: i32) -> (i32, i32, i32) {
    %c0_i32 = arith.constant 0 : i32
    %c0_i32_0 = arith.constant 0 : i32
    %c0_i32_1 = arith.constant 0 : i32
    %c0_i32_2 = arith.constant 0 : i32
    return %c0_i32, %c0_i32_0, %c0_i32_1 : i32, i32, i32
  }
  func.func @transform_4(%arg0: i32) -> (i32, i32) {
    %c0_i32 = arith.constant 0 : i32
    %c0_i32_0 = arith.constant 0 : i32
    %c0_i32_1 = arith.constant 0 : i32
    return %c0_i32, %c0_i32_0 : i32, i32
  }
  func.func @transform_5(%arg0: i32) -> (i32, i32, i32) {
    %c0_i32 = arith.constant 0 : i32
    %c0_i32_0 = arith.constant 0 : i32
    %c0_i32_1 = arith.constant 0 : i32
    %c0_i32_2 = arith.constant 0 : i32
    return %c0_i32, %c0_i32_0, %c0_i32_1 : i32, i32, i32
  }
  func.func @transform_6(%arg0: i32) -> (i32, i32) {
    %c0_i32 = arith.constant 0 : i32
    %c0_i32_0 = arith.constant 0 : i32
    %c0_i32_1 = arith.constant 0 : i32
    return %c0_i32, %c0_i32_0 : i32, i32
  }
  func.func @transform_7(%arg0: i32) -> (i32, i32, i32) {
    %c0_i32 = arith.constant 0 : i32
    %c0_i32_0 = arith.constant 0 : i32
    %c0_i32_1 = arith.constant 0 : i32
    %c0_i32_2 = arith.constant 0 : i32
    return %c0_i32, %c0_i32_0, %c0_i32_1 : i32, i32, i32
  }
  func.func @transform_8(%arg0: i32) -> (i32, i32) {
    %c0_i32 = arith.constant 0 : i32
    %c0_i32_0 = arith.constant 0 : i32
    %c0_i32_1 = arith.constant 0 : i32
    return %c0_i32, %c0_i32_0 : i32, i32
  }
  func.func @transform_9(%arg0: i32) -> (i32, i32, i32, i32) {
    %c0_i32 = arith.constant 0 : i32
    %c0_i32_0 = arith.constant 0 : i32
    %c0_i32_1 = arith.constant 0 : i32
    %c0_i32_2 = arith.constant 0 : i32
    return %arg0, %c0_i32, %c0_i32_0, %c0_i32_1 : i32, i32, i32, i32
  }
}

</mosaic_0001>

<llo_original>
// kernel: block_forward.1
$region0: #{block_forward.1}
  #allocation0 [shape = 'u32[]', space=smem, size = 0x4, offset = 0x4, fixed_abs, tag = 'smem constant byte address 0x4 - core index']
  #allocation1 [shape = 'u32[144,128]{1,0:T(1,128)}', space=vmem, size = 0x12000, scoped, tag = 'internal scratch']
  #allocation2 [shape = 'bf16[256,384]{1,0:T(16,128)(2,1)}', space=vmem, size = 0x30000, scoped, tag = 'scratch operand']
  #allocation3 [shape = 'bf16[256,384]{1,0:T(16,128)(2,1)}', space=vmem, size = 0x30000, scoped, tag = 'scratch operand']
  %s0 = inlined_call_operand.vmem [shape: bf16[2,256,128], index: 0, kind: input, shape index: {}]
  %s1 = inlined_call_operand.vmem [shape: bf16[128,128], index: 1, kind: input, shape index: {}]
  %s2 = inlined_call_operand.vmem [shape: f32[1,128], index: 2, kind: input, shape index: {}]
  %s3 = inlined_call_operand.vmem [shape: bf16[3,384,128], index: 3, kind: input, shape index: {}]
  %s4 = inlined_call_operand.vmem [shape: f32[1,128], index: 4, kind: input, shape index: {}]
  %s5 = inlined_call_operand.vmem [shape: bf16[3,384,128], index: 5, kind: input, shape index: {}]
  %s6 = inlined_call_operand.vmem [shape: f32[1,128], index: 6, kind: input, shape index: {}]
  %s7 = inlined_call_operand.vmem [shape: bf16[3,384,8], index: 7, kind: input, shape index: {}]
  %s8 = inlined_call_operand.vmem [shape: f32[1,8], index: 8, kind: input, shape index: {}]
  %s9 = inlined_call_operand.vmem [shape: f32[2,16,16,8], index: 9, kind: output, shape index: {}]
  %s10 = sld [smem:[#allocation0]]
  $region69: #{block_forward.1} parent=0
    _
  %s12 = ssub.s32 1, %s10
  %s13 = scalar_select 0, %s12, %s10
  loop: start=0, step=1, limit=4
  $region2: #{block_forward.1} parent=0 // loop_pre_header
    _
  $region3: #{block_forward.1} parent=0 // loop_header
    %s15 = sphi 0, %s19
    %p16 = scmp.ge.s32.totalorder %s15, 4
    %s25 = sphi 0, %s27
    %s28 = sphi 0, %s25
    %s29 = sphi 0, %s28
    %s45 = sphi 0, %s29
    %s49 = sphi 0, %s49
    %s51 = sphi 0, %s49
    %s52 = sphi 0, %s51
    %s66 = sphi 0, %s52
    %s70 = sphi 0, %s70
    %s72 = sphi 0, %s70
    %s73 = sphi 0, %s72
    %s87 = sphi 0, %s73
    %s91 = sphi 0, %s91
    %s93 = sphi 0, %s91
    %s94 = sphi 0, %s93
    %s108 = sphi 0, %s94
    %s112 = sphi 0, %s112
    %s114 = sphi 0, %s112
    %s115 = sphi 0, %s114
    %s129 = sphi 0, %s115
    %s133 = sphi 0, %s133
    %s135 = sphi 0, %s133
    %s136 = sphi 0, %s135
    %s150 = sphi 0, %s136
    %s154 = sphi 0, %s154
    %s156 = sphi 0, %s154
    %s157 = sphi 0, %s156
    %s171 = sphi 0, %s157
    %s175 = sphi 0, %s175
    %s177 = sphi 0, %s175
    %s178 = sphi 0, %s177
    %s192 = sphi 0, %s178
    %s196 = sphi 0, %s196
    %s198 = sphi 0, %s196
    %s199 = sphi 0, %s198
    %s213 = sphi 0, %s199
    %s219 = sphi 0, %s221
    %s222 = sphi 0, %s219
    %s223 = sphi 0, %s222
    %s239 = sphi 0, %s223
  $region4: #{block_forward.1} parent=0 // loop_header_branch
    %18 = sbr.rel (%p16) target = $region8
  $region5: #{block_forward.1} parent=0 // loop_body
    %s20 = ssub.s32 %s15, 1
    %s21 = ssub.s32 %s15, 2
    %s22 = sadd.s32 %s15, 1
    %s23 = ssub.s32 %s15, %s22
    %p24 = scmp.eq.s32.totalorder %s23, 0
    %s26 = sadd.s32 %s25, 1
    %s27 = scalar_select %p24, %s25, %s26
    %p30 = pneg %p24
    %p31 = scmp.eq.s32.totalorder %s15, 1
    %p32 = por %p30, %p31
    %p33 = scmp.ne.s32.totalorder %s25, %s28
    %p34 = scmp.eq.s32.totalorder %s15, 0
    %p35 = por %p33, %p34
    %p36 = scmp.ne.s32.totalorder %s25, %s28
    %p37 = scmp.eq.s32.totalorder %s20, 1
    %p38 = por %p36, %p37
    %p39 = scmp.ne.s32.totalorder %s28, %s29
    %p40 = scmp.eq.s32.totalorder %s20, 0
    %p41 = por %p39, %p40
    %p42 = scmp.ne.s32.totalorder %s28, %s29
    %p43 = scmp.eq.s32.totalorder %s21, 1
    %p44 = por %p42, %p43
    %p46 = scmp.ne.s32.totalorder %s29, %s45
    %p47 = scmp.eq.s32.totalorder %s21, 0
    %p48 = por %p46, %p47
    %s50 = sadd.s32 %s49, 1
    %p53 = scmp.eq.s32.totalorder %s15, 1
    %p54 = scmp.ne.s32.totalorder %s49, %s51
    %p55 = scmp.eq.s32.totalorder %s15, 0
    %p56 = por %p54, %p55
    %p57 = scmp.ne.s32.totalorder %s49, %s51
    %p58 = scmp.eq.s32.totalorder %s20, 1
    %p59 = por %p57, %p58
    %p60 = scmp.ne.s32.totalorder %s51, %s52
    %p61 = scmp.eq.s32.totalorder %s20, 0
    %p62 = por %p60, %p61
    %p63 = scmp.ne.s32.totalorder %s51, %s52
    %p64 = scmp.eq.s32.totalorder %s21, 1
    %p65 = por %p63, %p64
    %p67 = scmp.ne.s32.totalorder %s52, %s66
    %p68 = scmp.eq.s32.totalorder %s21, 0
    %p69 = por %p67, %p68
    %s71 = sadd.s32 %s70, 1
    %p74 = scmp.eq.s32.totalorder %s15, 1
    %p75 = scmp.ne.s32.totalorder %s70, %s72
    %p76 = scmp.eq.s32.totalorder %s15, 0
    %p77 = por %p75, %p76
    %p78 = scmp.ne.s32.totalorder %s70, %s72
    %p79 = scmp.eq.s32.totalorder %s20, 1
    %p80 = por %p78, %p79
    %p81 = scmp.ne.s32.totalorder %s72, %s73
    %p82 = scmp.eq.s32.totalorder %s20, 0
    %p83 = por %p81, %p82
    %p84 = scmp.ne.s32.totalorder %s72, %s73
    %p85 = scmp.eq.s32.totalorder %s21, 1
    %p86 = por %p84, %p85
    %p88 = scmp.ne.s32.totalorder %s73, %s87
    %p89 = scmp.eq.s32.totalorder %s21, 0
    %p90 = por %p88, %p89
    %s92 = sadd.s32 %s91, 1
    %p95 = scmp.eq.s32.totalorder %s15, 1
    %p96 = scmp.ne.s32.totalorder %s91, %s93
    %p97 = scmp.eq.s32.totalorder %s15, 0
    %p98 = por %p96, %p97
    %p99 = scmp.ne.s32.totalorder %s91, %s93
    %p100 = scmp.eq.s32.totalorder %s20, 1
    %p101 = por %p99, %p100
    %p102 = scmp.ne.s32.totalorder %s93, %s94
    %p103 = scmp.eq.s32.totalorder %s20, 0
    %p104 = por %p102, %p103
    %p105 = scmp.ne.s32.totalorder %s93, %s94
    %p106 = scmp.eq.s32.totalorder %s21, 1
    %p107 = por %p105, %p106
    %p109 = scmp.ne.s32.totalorder %s94, %s108
    %p110 = scmp.eq.s32.totalorder %s21, 0
    %p111 = por %p109, %p110
    %s113 = sadd.s32 %s112, 1
    %p116 = scmp.eq.s32.totalorder %s15, 1
    %p117 = scmp.ne.s32.totalorder %s112, %s114
    %p118 = scmp.eq.s32.totalorder %s15, 0
    %p119 = por %p117, %p118
    %p120 = scmp.ne.s32.totalorder %s112, %s114
    %p121 = scmp.eq.s32.totalorder %s20, 1
    %p122 = por %p120, %p121
    %p123 = scmp.ne.s32.totalorder %s114, %s115
    %p124 = scmp.eq.s32.totalorder %s20, 0
    %p125 = por %p123, %p124
    %p126 = scmp.ne.s32.totalorder %s114, %s115
    %p127 = scmp.eq.s32.totalorder %s21, 1
    %p128 = por %p126, %p127
    %p130 = scmp.ne.s32.totalorder %s115, %s129
    %p131 = scmp.eq.s32.totalorder %s21, 0
    %p132 = por %p130, %p131
    %s134 = sadd.s32 %s133, 1
    %p137 = scmp.eq.s32.totalorder %s15, 1
    %p138 = scmp.ne.s32.totalorder %s133, %s135
    %p139 = scmp.eq.s32.totalorder %s15, 0
    %p140 = por %p138, %p139
    %p141 = scmp.ne.s32.totalorder %s133, %s135
    %p142 = scmp.eq.s32.totalorder %s20, 1
    %p143 = por %p141, %p142
    %p144 = scmp.ne.s32.totalorder %s135, %s136
    %p145 = scmp.eq.s32.totalorder %s20, 0
    %p146 = por %p144, %p145
    %p147 = scmp.ne.s32.totalorder %s135, %s136
    %p148 = scmp.eq.s32.totalorder %s21, 1
    %p149 = por %p147, %p148
    %p151 = scmp.ne.s32.totalorder %s136, %s150
    %p152 = scmp.eq.s32.totalorder %s21, 0
    %p153 = por %p151, %p152
    %s155 = sadd.s32 %s154, 1
    %p158 = scmp.eq.s32.totalorder %s15, 1
    %p159 = scmp.ne.s32.totalorder %s154, %s156
    %p160 = scmp.eq.s32.totalorder %s15, 0
    %p161 = por %p159, %p160
    %p162 = scmp.ne.s32.totalorder %s154, %s156
    %p163 = scmp.eq.s32.totalorder %s20, 1
    %p164 = por %p162, %p163
    %p165 = scmp.ne.s32.totalorder %s156, %s157
    %p166 = scmp.eq.s32.totalorder %s20, 0
    %p167 = por %p165, %p166
    %p168 = scmp.ne.s32.totalorder %s156, %s157
    %p169 = scmp.eq.s32.totalorder %s21, 1
    %p170 = por %p168, %p169
    %p172 = scmp.ne.s32.totalorder %s157, %s171
    %p173 = scmp.eq.s32.totalorder %s21, 0
    %p174 = por %p172, %p173
    %s176 = sadd.s32 %s175, 1
    %p179 = scmp.eq.s32.totalorder %s15, 1
    %p180 = scmp.ne.s32.totalorder %s175, %s177
    %p181 = scmp.eq.s32.totalorder %s15, 0
    %p182 = por %p180, %p181
    %p183 = scmp.ne.s32.totalorder %s175, %s177
    %p184 = scmp.eq.s32.totalorder %s20, 1
    %p185 = por %p183, %p184
    %p186 = scmp.ne.s32.totalorder %s177, %s178
    %p187 = scmp.eq.s32.totalorder %s20, 0
    %p188 = por %p186, %p187
    %p189 = scmp.ne.s32.totalorder %s177, %s178
    %p190 = scmp.eq.s32.totalorder %s21, 1
    %p191 = por %p189, %p190
    %p193 = scmp.ne.s32.totalorder %s178, %s192
    %p194 = scmp.eq.s32.totalorder %s21, 0
    %p195 = por %p193, %p194
    %s197 = sadd.s32 %s196, 1
    %p200 = scmp.eq.s32.totalorder %s15, 1
    %p201 = scmp.ne.s32.totalorder %s196, %s198
    %p202 = scmp.eq.s32.totalorder %s15, 0
    %p203 = por %p201, %p202
    %p204 = scmp.ne.s32.totalorder %s196, %s198
    %p205 = scmp.eq.s32.totalorder %s20, 1
    %p206 = por %p204, %p205
    %p207 = scmp.ne.s32.totalorder %s198, %s199
    %p208 = scmp.eq.s32.totalorder %s20, 0
    %p209 = por %p207, %p208
    %p210 = scmp.ne.s32.totalorder %s198, %s199
    %p211 = scmp.eq.s32.totalorder %s21, 1
    %p212 = por %p210, %p211
    %p214 = scmp.ne.s32.totalorder %s199, %s213
    %p215 = scmp.eq.s32.totalorder %s21, 0
    %p216 = por %p214, %p215
    %s217 = ssub.s32 %s15, %s22
    %p218 = scmp.eq.s32.totalorder %s217, 0
    %s220 = sadd.s32 %s219, 1
    %s221 = scalar_select %p218, %s219, %s220
    %p224 = pneg %p218
    %p225 = scmp.eq.s32.totalorder %s15, 1
    %p226 = por %p224, %p225
    %p227 = scmp.ne.s32.totalorder %s219, %s222
    %p228 = scmp.eq.s32.totalorder %s15, 0
    %p229 = por %p227, %p228
    %p230 = scmp.ne.s32.totalorder %s219, %s222
    %p231 = scmp.eq.s32.totalorder %s20, 1
    %p232 = por %p230, %p231
    %p233 = scmp.ne.s32.totalorder %s222, %s223
    %p234 = scmp.eq.s32.totalorder %s20, 0
    %p235 = por %p233, %p234
    %p236 = scmp.ne.s32.totalorder %s222, %s223
    %p237 = scmp.eq.s32.totalorder %s21, 1
    %p238 = por %p236, %p237
    %p240 = scmp.ne.s32.totalorder %s223, %s239
    %p241 = scmp.eq.s32.totalorder %s21, 0
    %p242 = por %p240, %p241
    %p243 = scmp.le.s32.totalorder 1, %s15
    %p244 = scmp.lt.s32.totalorder %s15, 3
    %p245 = pnand %p243, %p244
    %p246 = pneg %p245
    // Predicated region
    $region9: #{block_forward.1} parent=5 // pred_check
      _
    $region10: #{block_forward.1} parent=5 // pred_check_branch
      %248 = sbr.rel (%p245) target = $region12
    $region11: #{block_forward.1} parent=5 // pred_region
      %s249 = ssub.s32 %s15, 1
      // Predicated region
      $region13: #{block_forward.1} parent=11 // pred_check
        %p250 = pneg %p62
      $region14: #{block_forward.1} parent=11 // pred_check_branch
        %252 = sbr.rel (%p250) target = $region16
      $region15: #{block_forward.1} parent=11 // pred_region
        _
      $region16: #{block_forward.1} parent=11 // pred_fallthru
        _
      // Predicated region
      $region17: #{block_forward.1} parent=11 // pred_check
        %p253 = pneg %p83
      $region18: #{block_forward.1} parent=11 // pred_check_branch
        %255 = sbr.rel (%p253) target = $region20
      $region19: #{block_forward.1} parent=11 // pred_region
        _
      $region20: #{block_forward.1} parent=11 // pred_fallthru
        _
      // Predicated region
      $region21: #{block_forward.1} parent=11 // pred_check
        %p256 = pneg %p104
      $region22: #{block_forward.1} parent=11 // pred_check_branch
        %258 = sbr.rel (%p256) target = $region24
      $region23: #{block_forward.1} parent=11 // pred_region
        _
      $region24: #{block_forward.1} parent=11 // pred_fallthru
        _
      // Predicated region
      $region25: #{block_forward.1} parent=11 // pred_check
        %p259 = pneg %p125
      $region26: #{block_forward.1} parent=11 // pred_check_branch
        %261 = sbr.rel (%p259) target = $region28
      $region27: #{block_forward.1} parent=11 // pred_region
        _
      $region28: #{block_forward.1} parent=11 // pred_fallthru
        _
      // Predicated region
      $region29: #{block_forward.1} parent=11 // pred_check
        %p262 = pneg %p146
      $region30: #{block_forward.1} parent=11 // pred_check_branch
        %264 = sbr.rel (%p262) target = $region32
      $region31: #{block_forward.1} parent=11 // pred_region
        _
      $region32: #{block_forward.1} parent=11 // pred_fallthru
        _
      // Predicated region
      $region33: #{block_forward.1} parent=11 // pred_check
        %p265 = pneg %p167
      $region34: #{block_forward.1} parent=11 // pred_check_branch
        %267 = sbr.rel (%p265) target = $region36
      $region35: #{block_forward.1} parent=11 // pred_region
        _
      $region36: #{block_forward.1} parent=11 // pred_fallthru
        _
      // Predicated region
      $region37: #{block_forward.1} parent=11 // pred_check
        %p268 = pneg %p188
      $region38: #{block_forward.1} parent=11 // pred_check_branch
        %270 = sbr.rel (%p268) target = $region40
      $region39: #{block_forward.1} parent=11 // pred_region
        _
      $region40: #{block_forward.1} parent=11 // pred_fallthru
        _
      // Predicated region
      $region41: #{block_forward.1} parent=11 // pred_check
        %p271 = pneg %p209
      $region42: #{block_forward.1} parent=11 // pred_check_branch
        %273 = sbr.rel (%p271) target = $region44
      $region43: #{block_forward.1} parent=11 // pred_region
        _
      $region44: #{block_forward.1} parent=11 // pred_fallthru
        _
    $region12: #{block_forward.1} parent=5 // pred_fallthru
      _
    %p274 = scmp.lt.s32.totalorder %s15, 2
    // Predicated region
    $region45: #{block_forward.1} parent=5 // pred_check
      %p275 = pneg %p274
    $region46: #{block_forward.1} parent=5 // pred_check_branch
      %277 = sbr.rel (%p275) target = $region48
    $region47: #{block_forward.1} parent=5 // pred_region
      // Predicated region
      $region49: #{block_forward.1} parent=47 // pred_check
        %p278 = pneg %p35
      $region50: #{block_forward.1} parent=47 // pred_check_branch
        %280 = sbr.rel (%p278) target = $region52
      $region51: #{block_forward.1} parent=47 // pred_region
        %p281 = scmp.lt.s32.totalorder %s15, 1
        %s282 = scalar_select %p281, %s15, 1
        %s283 = smul.addr %s282, 32
        %s284 = smul.addr %s283, 4
        %s285 = scalar_lea.vmem %s0, %s284
      $region52: #{block_forward.1} parent=47 // pred_fallthru
        _
    $region48: #{block_forward.1} parent=5 // pred_fallthru
      _
    %p286 = scmp.le.s32.totalorder 1, %s15
    %p287 = scmp.lt.s32.totalorder %s15, 3
    %p288 = pnand %p286, %p287
    %p289 = pneg %p288
    // Predicated region
    $region53: #{block_forward.1} parent=5 // pred_check
      _
    $region54: #{block_forward.1} parent=5 // pred_check_branch
      %291 = sbr.rel (%p288) target = $region56
    $region55: #{block_forward.1} parent=5 // pred_region
      %s292 = ssub.s32 %s15, 1
      %p293 = scmp.lt.s32.totalorder %s20, 1
      %s294 = scalar_select %p293, %s20, 1
      %s295 = smul.addr %s294, 32
      %s296 = smul.addr %s295, 4
      %s297 = scalar_lea.vmem %s0, %s296
      %p298 = pneg %p41
      %p299 = pneg %p38
      %p300 = pneg %p62
      %p301 = pneg %p59
      %p302 = pneg %p83
      %p303 = pneg %p80
      %p304 = pneg %p104
      %p305 = pneg %p101
      %p306 = pneg %p125
      %p307 = pneg %p122
      %p308 = pneg %p146
      %p309 = pneg %p143
      %p310 = pneg %p167
      %p311 = pneg %p164
      %p312 = pneg %p188
      %p313 = pneg %p185
      %p314 = pneg %p209
      %p315 = pneg %p206
      %p316 = pneg %p235
      %p317 = pneg %p232
      %p318 = scmp.lt.s32.totalorder %s20, 1
      %s319 = scalar_select %p318, %s20, 1
      %s320 = smul.addr %s319, 32
      %s321 = smul.addr %s320, 8
      %s322 = scalar_lea.vmem %s9, %s321
      %p323 = scmp.lt.s32.totalorder %s20, 1
      %s324 = scalar_select %p323, %s20, 1
      %s325 = smul.addr %s324, 32
      %s326 = smul.addr %s325, 4
      %s327 = scalar_lea.vmem %s0, %s326
      %p328 = scmp.lt.s32.totalorder %s20, 1
      %s329 = scalar_select %p328, %s20, 1
      %s330 = smul.addr %s329, 32
      %s331 = smul.addr %s330, 8
      %s332 = scalar_lea.vmem %s9, %s331
      %v334 = vld [vmem:[%s327] sm:$0xf]
      %v335 = vld [vmem:[%s327 + $0x4] sm:$0xf]
      %v336 = vld [vmem:[%s327 + $0x8] sm:$0xf]
      %v337 = vld [vmem:[%s327 + $0xc] sm:$0xf]
      %v338 = vld [vmem:[%s327 + $0x10] sm:$0xf]
      %v339 = vld [vmem:[%s327 + $0x14] sm:$0xf]
      %v340 = vld [vmem:[%s327 + $0x18] sm:$0xf]
      %v341 = vld [vmem:[%s327 + $0x1c] sm:$0xf]
      %v342 = vld [vmem:[%s327 + $0x20] sm:$0xf]
      %v343 = vld [vmem:[%s327 + $0x24] sm:$0xf]
      %v344 = vld [vmem:[%s327 + $0x28] sm:$0xf]
      %v345 = vld [vmem:[%s327 + $0x2c] sm:$0xf]
      %v346 = vld [vmem:[%s327 + $0x30] sm:$0xf]
      %v347 = vld [vmem:[%s327 + $0x34] sm:$0xf]
      %v348 = vld [vmem:[%s327 + $0x38] sm:$0xf]
      %v349 = vld [vmem:[%s327 + $0x3c] sm:$0xf]
      %v350 = vld [vmem:[%s327 + $0x40] sm:$0xf]
      %v351 = vld [vmem:[%s327 + $0x44] sm:$0xf]
      %v352 = vld [vmem:[%s327 + $0x48] sm:$0xf]
      %v353 = vld [vmem:[%s327 + $0x4c] sm:$0xf]
      %v354 = vld [vmem:[%s327 + $0x50] sm:$0xf]
      %v355 = vld [vmem:[%s327 + $0x54] sm:$0xf]
      %v356 = vld [vmem:[%s327 + $0x58] sm:$0xf]
      %v357 = vld [vmem:[%s327 + $0x5c] sm:$0xf]
      %v358 = vld [vmem:[%s327 + $0x60] sm:$0xf]
      %v359 = vld [vmem:[%s327 + $0x64] sm:$0xf]
      %v360 = vld [vmem:[%s327 + $0x68] sm:$0xf]
      %v361 = vld [vmem:[%s327 + $0x6c] sm:$0xf]
      %v362 = vld [vmem:[%s327 + $0x70] sm:$0xf]
      %v363 = vld [vmem:[%s327 + $0x74] sm:$0xf]
      %v364 = vld [vmem:[%s327 + $0x78] sm:$0xf]
      %v365 = vld [vmem:[%s327 + $0x7c] sm:$0xf]
      %v366 = vld [vmem:[%s1] sm:$0xf]
      %v367 = vld [vmem:[%s1 + $0x4] sm:$0xf]
      %v368 = vld [vmem:[%s1 + $0x8] sm:$0xf]
      %v369 = vld [vmem:[%s1 + $0xc] sm:$0xf]
      %v370 = vld [vmem:[%s1 + $0x10] sm:$0xf]
      %v371 = vld [vmem:[%s1 + $0x14] sm:$0xf]
      %v372 = vld [vmem:[%s1 + $0x18] sm:$0xf]
      %v373 = vld [vmem:[%s1 + $0x1c] sm:$0xf]
      %v374 = vld [vmem:[%s1 + $0x20] sm:$0xf]
      %v375 = vld [vmem:[%s1 + $0x24] sm:$0xf]
      %v376 = vld [vmem:[%s1 + $0x28] sm:$0xf]
      %v377 = vld [vmem:[%s1 + $0x2c] sm:$0xf]
      %v378 = vld [vmem:[%s1 + $0x30] sm:$0xf]
      %v379 = vld [vmem:[%s1 + $0x34] sm:$0xf]
      %v380 = vld [vmem:[%s1 + $0x38] sm:$0xf]
      %v381 = vld [vmem:[%s1 + $0x3c] sm:$0xf]
      %v382 = vld [vmem:[%s2] sm:$0x1]
      %v384 = vlaneseq
      %v385 = vshrl.u32 %v384, 7
      %v386 = vsub.s32 0, %v385
      %v387 = vrot.slane %v382, %v386
      %v421 = vunpack.c.l.b16 %v334
      %v422 = vunpack.c.l.b16 %v335
      %v423 = vunpack.c.l.b16 %v336
      %v424 = vunpack.c.l.b16 %v337
      %v425 = vunpack.c.l.b16 %v338
      %v426 = vunpack.c.l.b16 %v339
      %v427 = vunpack.c.l.b16 %v340
      %v428 = vunpack.c.l.b16 %v341
      %v429 = vunpack.c.l.b16 %v342
      %v430 = vunpack.c.l.b16 %v343
      %v431 = vunpack.c.l.b16 %v344
      %v432 = vunpack.c.l.b16 %v345
      %v433 = vunpack.c.l.b16 %v346
      %v434 = vunpack.c.l.b16 %v347
      %v435 = vunpack.c.l.b16 %v348
      %v436 = vunpack.c.l.b16 %v349
      %v437 = vunpack.c.l.b16 %v350
      %v438 = vunpack.c.l.b16 %v351
      %v439 = vunpack.c.l.b16 %v352
      %v440 = vunpack.c.l.b16 %v353
      %v441 = vunpack.c.l.b16 %v354
      %v442 = vunpack.c.l.b16 %v355
      %v443 = vunpack.c.l.b16 %v356
      %v444 = vunpack.c.l.b16 %v357
      %v445 = vunpack.c.l.b16 %v358
      %v446 = vunpack.c.l.b16 %v359
      %v447 = vunpack.c.l.b16 %v360
      %v448 = vunpack.c.l.b16 %v361
      %v449 = vunpack.c.l.b16 %v362
      %v450 = vunpack.c.l.b16 %v363
      %v451 = vunpack.c.l.b16 %v364
      %v452 = vunpack.c.l.b16 %v365
      %v453 = vpack.c.b16 %v422, %v421
      %v454 = vpack.c.b16 %v424, %v423
      %v455 = vpack.c.b16 %v426, %v425
      %v456 = vpack.c.b16 %v428, %v427
      %v457 = vpack.c.b16 %v430, %v429
      %v458 = vpack.c.b16 %v432, %v431
      %v459 = vpack.c.b16 %v434, %v433
      %v460 = vpack.c.b16 %v436, %v435
      %v461 = vpack.c.b16 %v438, %v437
      %v462 = vpack.c.b16 %v440, %v439
      %v463 = vpack.c.b16 %v442, %v441
      %v464 = vpack.c.b16 %v444, %v443
      %v465 = vpack.c.b16 %v446, %v445
      %v466 = vpack.c.b16 %v448, %v447
      %v467 = vpack.c.b16 %v450, %v449
      %v468 = vpack.c.b16 %v452, %v451
      %v501 = vunpack.c.l.b16 %v366
      %v502 = vunpack.c.l.b16 %v367
      %v503 = vunpack.c.l.b16 %v368
      %v504 = vunpack.c.l.b16 %v369
      %v505 = vunpack.c.l.b16 %v370
      %v506 = vunpack.c.l.b16 %v371
      %v507 = vunpack.c.l.b16 %v372
      %v508 = vunpack.c.l.b16 %v373
      %v509 = vunpack.c.l.b16 %v374
      %v510 = vunpack.c.l.b16 %v375
      %v511 = vunpack.c.l.b16 %v376
      %v512 = vunpack.c.l.b16 %v377
      %v513 = vunpack.c.l.b16 %v378
      %v514 = vunpack.c.l.b16 %v379
      %v515 = vunpack.c.l.b16 %v380
      %v516 = vunpack.c.l.b16 %v381
      %v517 = vpack.c.b16 %v502, %v501
      %v518 = vpack.c.b16 %v504, %v503
      %v519 = vpack.c.b16 %v506, %v505
      %v520 = vpack.c.b16 %v508, %v507
      %v521 = vpack.c.b16 %v510, %v509
      %v522 = vpack.c.b16 %v512, %v511
      %v523 = vpack.c.b16 %v514, %v513
      %v524 = vpack.c.b16 %v516, %v515
      %533 = vmatprep.subr.bf16.mxu0 0
      %534 = vmatpush1.bf16.msra.mxu0 %v517
      %535 = vmatprep.subr.bf16.mxu0 0
      %536 = vmatpush1.bf16.msra.mxu0 %v518
      %537 = vmatprep.subr.bf16.mxu0 0
      %538 = vmatpush1.bf16.msra.mxu0 %v519
      %539 = vmatprep.subr.bf16.mxu0 0
      %540 = vmatpush1.bf16.msra.mxu0 %v520
      %541 = vmatprep.subr.bf16.mxu0 0
      %542 = vmatpush1.bf16.msra.mxu0 %v521
      %543 = vmatprep.subr.bf16.mxu0 0
      %544 = vmatpush1.bf16.msra.mxu0 %v522
      %545 = vmatprep.subr.bf16.mxu0 0
      %546 = vmatpush1.bf16.msra.mxu0 %v523
      %547 = vmatprep.subr.bf16.mxu0 0
      %548 = vmatpush1.bf16.msra.mxu0 %v524
      %549 = vmatprep.subr.bf16.mxu0 0
      %550 = vmatpush1.bf16.msra.mxu0 0
      %551 = vmatprep.subr.bf16.mxu0 0
      %552 = vmatpush1.bf16.msra.mxu0 0
      %553 = vmatprep.subr.bf16.mxu0 0
      %554 = vmatpush1.bf16.msra.mxu0 0
      %555 = vmatprep.subr.bf16.mxu0 0
      %556 = vmatpush1.bf16.msra.mxu0 0
      %557 = vmatprep.subr.bf16.mxu0 0
      %558 = vmatpush1.bf16.msra.mxu0 0
      %559 = vmatprep.subr.bf16.mxu0 0
      %560 = vmatpush1.bf16.msra.mxu0 0
      %561 = vmatprep.subr.bf16.mxu0 0
      %562 = vmatpush1.bf16.msra.mxu0 0
      %563 = vmatprep.subr.bf16.mxu0 0
      %564 = vmatpush1.bf16.msra.mxu0 0
      %565 = vmatprep.mubr.bf16.mxu0 0
      %566 = vmatmul.mubr.bf16.gmra.mrb[0].mxu0 %v453
      %v567 = vpop.f32.mrb[0].mxu0
      %v568 = vadd.f32 %v387, %v567
      %v569 = vpop.f32.mrb[0].mxu0
      %v570 = vpop.f32.mrb[0].mxu0
      %v571 = vadd.f32 %v387, %v570
      %v572 = vpop.f32.mrb[0].mxu0
      %573 = vmatprep.mubr.bf16.mxu0 0
      %574 = vmatmul.mubr.bf16.gmra.mrb[0].mxu0 %v454
      %v575 = vpop.f32.mrb[0].mxu0
      %v576 = vadd.f32 %v387, %v575
      %v577 = vpop.f32.mrb[0].mxu0
      %v578 = vpop.f32.mrb[0].mxu0
      %v579 = vadd.f32 %v387, %v578
      %v580 = vpop.f32.mrb[0].mxu0
      %581 = vmatprep.mubr.bf16.mxu0 0
      %582 = vmatmul.mubr.bf16.gmra.mrb[0].mxu0 %v455
      %v583 = vpop.f32.mrb[0].mxu0
      %v584 = vadd.f32 %v387, %v583
      %v585 = vpop.f32.mrb[0].mxu0
      %v586 = vpop.f32.mrb[0].mxu0
      %v587 = vadd.f32 %v387, %v586
      %v588 = vpop.f32.mrb[0].mxu0
      %589 = vmatprep.mubr.bf16.mxu0 0
      %590 = vmatmul.mubr.bf16.gmra.mrb[0].mxu0 %v456
      %v591 = vpop.f32.mrb[0].mxu0
      %v592 = vadd.f32 %v387, %v591
      %v593 = vpop.f32.mrb[0].mxu0
      %v594 = vpop.f32.mrb[0].mxu0
      %v595 = vadd.f32 %v387, %v594
      %v596 = vpop.f32.mrb[0].mxu0
      %597 = vmatprep.mubr.bf16.mxu0 0
      %598 = vmatmul.mubr.bf16.gmra.mrb[0].mxu0 %v457
      %v599 = vpop.f32.mrb[0].mxu0
      %v600 = vadd.f32 %v387, %v599
      %v601 = vpop.f32.mrb[0].mxu0
      %v602 = vpop.f32.mrb[0].mxu0
      %v603 = vadd.f32 %v387, %v602
      %v604 = vpop.f32.mrb[0].mxu0
      %605 = vmatprep.mubr.bf16.mxu0 0
      %606 = vmatmul.mubr.bf16.gmra.mrb[0].mxu0 %v458
      %v607 = vpop.f32.mrb[0].mxu0
      %v608 = vadd.f32 %v387, %v607
      %v609 = vpop.f32.mrb[0].mxu0
      %v610 = vpop.f32.mrb[0].mxu0
      %v611 = vadd.f32 %v387, %v610
      %v612 = vpop.f32.mrb[0].mxu0
      %613 = vmatprep.mubr.bf16.mxu0 0
      %614 = vmatmul.mubr.bf16.gmra.mrb[0].mxu0 %v459
      %v615 = vpop.f32.mrb[0].mxu0
      %v616 = vadd.f32 %v387, %v615
      %v617 = vpop.f32.mrb[0].mxu0
      %v618 = vpop.f32.mrb[0].mxu0
      %v619 = vadd.f32 %v387, %v618
      %v620 = vpop.f32.mrb[0].mxu0
      %621 = vmatprep.mubr.bf16.mxu0 0
      %622 = vmatmul.mubr.bf16.gmra.mrb[0].mxu0 %v460
      %v623 = vpop.f32.mrb[0].mxu0
      %v624 = vadd.f32 %v387, %v623
      %v625 = vpop.f32.mrb[0].mxu0
      %v626 = vpop.f32.mrb[0].mxu0
      %v627 = vadd.f32 %v387, %v626
      %v628 = vpop.f32.mrb[0].mxu0
      %629 = vmatprep.mubr.bf16.mxu0 0
      %630 = vmatmul.mubr.bf16.gmra.mrb[0].mxu0 %v461
      %v631 = vpop.f32.mrb[0].mxu0
      %v632 = vadd.f32 %v387, %v631
      %v633 = vpop.f32.mrb[0].mxu0
      %v634 = vpop.f32.mrb[0].mxu0
      %v635 = vadd.f32 %v387, %v634
      %v636 = vpop.f32.mrb[0].mxu0
      %637 = vmatprep.mubr.bf16.mxu0 0
      %638 = vmatmul.mubr.bf16.gmra.mrb[0].mxu0 %v462
      %v639 = vpop.f32.mrb[0].mxu0
      %v640 = vadd.f32 %v387, %v639
      %v641 = vpop.f32.mrb[0].mxu0
      %v642 = vpop.f32.mrb[0].mxu0
      %v643 = vadd.f32 %v387, %v642
      %v644 = vpop.f32.mrb[0].mxu0
      %645 = vmatprep.mubr.bf16.mxu0 0
      %646 = vmatmul.mubr.bf16.gmra.mrb[0].mxu0 %v463
      %v647 = vpop.f32.mrb[0].mxu0
      %v648 = vadd.f32 %v387, %v647
      %v649 = vpop.f32.mrb[0].mxu0
      %v650 = vpop.f32.mrb[0].mxu0
      %v651 = vadd.f32 %v387, %v650
      %v652 = vpop.f32.mrb[0].mxu0
      %653 = vmatprep.mubr.bf16.mxu0 0
      %654 = vmatmul.mubr.bf16.gmra.mrb[0].mxu0 %v464
      %v655 = vpop.f32.mrb[0].mxu0
      %v656 = vadd.f32 %v387, %v655
      %v657 = vpop.f32.mrb[0].mxu0
      %v658 = vpop.f32.mrb[0].mxu0
      %v659 = vadd.f32 %v387, %v658
      %v660 = vpop.f32.mrb[0].mxu0
      %661 = vmatprep.mubr.bf16.mxu0 0
      %662 = vmatmul.mubr.bf16.gmra.mrb[0].mxu0 %v465
      %v663 = vpop.f32.mrb[0].mxu0
      %v664 = vadd.f32 %v387, %v663
      %v665 = vpop.f32.mrb[0].mxu0
      %v666 = vpop.f32.mrb[0].mxu0
      %v667 = vadd.f32 %v387, %v666
      %v668 = vpop.f32.mrb[0].mxu0
      %669 = vmatprep.mubr.bf16.mxu0 0
      %670 = vmatmul.mubr.bf16.gmra.mrb[0].mxu0 %v466
      %v671 = vpop.f32.mrb[0].mxu0
      %v672 = vadd.f32 %v387, %v671
      %v673 = vpop.f32.mrb[0].mxu0
      %v674 = vpop.f32.mrb[0].mxu0
      %v675 = vadd.f32 %v387, %v674
      %v676 = vpop.f32.mrb[0].mxu0
      %677 = vmatprep.mubr.bf16.mxu0 0
      %678 = vmatmul.mubr.bf16.gmra.mrb[0].mxu0 %v467
      %v679 = vpop.f32.mrb[0].mxu0
      %v680 = vadd.f32 %v387, %v679
      %v681 = vpop.f32.mrb[0].mxu0
      %v682 = vpop.f32.mrb[0].mxu0
      %v683 = vadd.f32 %v387, %v682
      %v684 = vpop.f32.mrb[0].mxu0
      %685 = vmatprep.mubr.bf16.mxu0 0
      %686 = vmatmul.mubr.bf16.gmra.mrb[0].mxu0 %v468
      %v687 = vpop.f32.mrb[0].mxu0
      %v688 = vadd.f32 %v387, %v687
      %v689 = vpop.f32.mrb[0].mxu0
      %v690 = vpop.f32.mrb[0].mxu0
      %v691 = vadd.f32 %v387, %v690
      %v692 = vpop.f32.mrb[0].mxu0
      %693 = vdwg.mxu0
      %vm694 = vcmp.gt.f32.partialorder %v568, 0.0
      %vm695 = vcmp.gt.f32.partialorder %v571, 0.0
      %vm696 = vcmp.gt.f32.partialorder %v576, 0.0
      %vm697 = vcmp.gt.f32.partialorder %v579, 0.0
      %vm698 = vcmp.gt.f32.partialorder %v584, 0.0
      %vm699 = vcmp.gt.f32.partialorder %v587, 0.0
      %vm700 = vcmp.gt.f32.partialorder %v592, 0.0
      %vm701 = vcmp.gt.f32.partialorder %v595, 0.0
      %vm702 = vcmp.gt.f32.partialorder %v600, 0.0
      %vm703 = vcmp.gt.f32.partialorder %v603, 0.0
      %vm704 = vcmp.gt.f32.partialorder %v608, 0.0
      %vm705 = vcmp.gt.f32.partialorder %v611, 0.0
      %vm706 = vcmp.gt.f32.partialorder %v616, 0.0
      %vm707 = vcmp.gt.f32.partialorder %v619, 0.0
      %vm708 = vcmp.gt.f32.partialorder %v624, 0.0
      %vm709 = vcmp.gt.f32.partialorder %v627, 0.0
      %vm710 = vcmp.gt.f32.partialorder %v632, 0.0
      %vm711 = vcmp.gt.f32.partialorder %v635, 0.0
      %vm712 = vcmp.gt.f32.partialorder %v640, 0.0
      %vm713 = vcmp.gt.f32.partialorder %v643, 0.0
      %vm714 = vcmp.gt.f32.partialorder %v648, 0.0
      %vm715 = vcmp.gt.f32.partialorder %v651, 0.0
      %vm716 = vcmp.gt.f32.partialorder %v656, 0.0
      %vm717 = vcmp.gt.f32.partialorder %v659, 0.0
      %vm718 = vcmp.gt.f32.partialorder %v664, 0.0
      %vm719 = vcmp.gt.f32.partialorder %v667, 0.0
      %vm720 = vcmp.gt.f32.partialorder %v672, 0.0
      %vm721 = vcmp.gt.f32.partialorder %v675, 0.0
      %vm722 = vcmp.gt.f32.partialorder %v680, 0.0
      %vm723 = vcmp.gt.f32.partialorder %v683, 0.0
      %vm724 = vcmp.gt.f32.partialorder %v688, 0.0
      %vm725 = vcmp.gt.f32.partialorder %v691, 0.0
      %v726 = vmin.f32 %v568, 0.0
      %v727 = vmin.f32 %v571, 0.0
      %v728 = vmin.f32 %v576, 0.0
      %v729 = vmin.f32 %v579, 0.0
      %v730 = vmin.f32 %v584, 0.0
      %v731 = vmin.f32 %v587, 0.0
      %v732 = vmin.f32 %v592, 0.0
      %v733 = vmin.f32 %v595, 0.0
      %v734 = vmin.f32 %v600, 0.0
      %v735 = vmin.f32 %v603, 0.0
      %v736 = vmin.f32 %v608, 0.0
      %v737 = vmin.f32 %v611, 0.0
      %v738 = vmin.f32 %v616, 0.0
      %v739 = vmin.f32 %v619, 0.0
      %v740 = vmin.f32 %v624, 0.0
      %v741 = vmin.f32 %v627, 0.0
      %v742 = vmin.f32 %v632, 0.0
      %v743 = vmin.f32 %v635, 0.0
      %v744 = vmin.f32 %v640, 0.0
      %v745 = vmin.f32 %v643, 0.0
      %v746 = vmin.f32 %v648, 0.0
      %v747 = vmin.f32 %v651, 0.0
      %v748 = vmin.f32 %v656, 0.0
      %v749 = vmin.f32 %v659, 0.0
      %v750 = vmin.f32 %v664, 0.0
      %v751 = vmin.f32 %v667, 0.0
      %v752 = vmin.f32 %v672, 0.0
      %v753 = vmin.f32 %v675, 0.0
      %v754 = vmin.f32 %v680, 0.0
      %v755 = vmin.f32 %v683, 0.0
      %v756 = vmin.f32 %v688, 0.0
      %v757 = vmin.f32 %v691, 0.0
      %v758 = vmul.f32 %v726, 1.442695
      %v759 = vpow.pop %v758
      %v760 = vmul.f32 %v727, 1.442695
      %v761 = vpow.pop %v760
      %v762 = vmul.f32 %v728, 1.442695
      %v763 = vpow.pop %v762
      %v764 = vmul.f32 %v729, 1.442695
      %v765 = vpow.pop %v764
      %v766 = vmul.f32 %v730, 1.442695
      %v767 = vpow.pop %v766
      %v768 = vmul.f32 %v731, 1.442695
      %v769 = vpow.pop %v768
      %v770 = vmul.f32 %v732, 1.442695
      %v771 = vpow.pop %v770
      %v772 = vmul.f32 %v733, 1.442695
      %v773 = vpow.pop %v772
      %v774 = vmul.f32 %v734, 1.442695
      %v775 = vpow.pop %v774
      %v776 = vmul.f32 %v735, 1.442695
      %v777 = vpow.pop %v776
      %v778 = vmul.f32 %v736, 1.442695
      %v779 = vpow.pop %v778
      %v780 = vmul.f32 %v737, 1.442695
      %v781 = vpow.pop %v780
      %v782 = vmul.f32 %v738, 1.442695
      %v783 = vpow.pop %v782
      %v784 = vmul.f32 %v739, 1.442695
      %v785 = vpow.pop %v784
      %v786 = vmul.f32 %v740, 1.442695
      %v787 = vpow.pop %v786
      %v788 = vmul.f32 %v741, 1.442695
      %v789 = vpow.pop %v788
      %v790 = vmul.f32 %v742, 1.442695
      %v791 = vpow.pop %v790
      %v792 = vmul.f32 %v743, 1.442695
      %v793 = vpow.pop %v792
      %v794 = vmul.f32 %v744, 1.442695
      %v795 = vpow.pop %v794
      %v796 = vmul.f32 %v745, 1.442695
      %v797 = vpow.pop %v796
      %v798 = vmul.f32 %v746, 1.442695
      %v799 = vpow.pop %v798
      %v800 = vmul.f32 %v747, 1.442695
      %v801 = vpow.pop %v800
      %v802 = vmul.f32 %v748, 1.442695
      %v803 = vpow.pop %v802
      %v804 = vmul.f32 %v749, 1.442695
      %v805 = vpow.pop %v804
      %v806 = vmul.f32 %v750, 1.442695
      %v807 = vpow.pop %v806
      %v808 = vmul.f32 %v751, 1.442695
      %v809 = vpow.pop %v808
      %v810 = vmul.f32 %v752, 1.442695
      %v811 = vpow.pop %v810
      %v812 = vmul.f32 %v753, 1.442695
      %v813 = vpow.pop %v812
      %v814 = vmul.f32 %v754, 1.442695
      %v815 = vpow.pop %v814
      %v816 = vmul.f32 %v755, 1.442695
      %v817 = vpow.pop %v816
      %v818 = vmul.f32 %v756, 1.442695
      %v819 = vpow.pop %v818
      %v820 = vmul.f32 %v757, 1.442695
      %v821 = vpow.pop %v820
      %v822 = vsub.f32 %v759, 1.0
      %v823 = vsub.f32 %v761, 1.0
      %v824 = vsub.f32 %v763, 1.0
      %v825 = vsub.f32 %v765, 1.0
      %v826 = vsub.f32 %v767, 1.0
      %v827 = vsub.f32 %v769, 1.0
      %v828 = vsub.f32 %v771, 1.0
      %v829 = vsub.f32 %v773, 1.0
      %v830 = vsub.f32 %v775, 1.0
      %v831 = vsub.f32 %v777, 1.0
      %v832 = vsub.f32 %v779, 1.0
      %v833 = vsub.f32 %v781, 1.0
      %v834 = vsub.f32 %v783, 1.0
      %v835 = vsub.f32 %v785, 1.0
      %v836 = vsub.f32 %v787, 1.0
      %v837 = vsub.f32 %v789, 1.0
      %v838 = vsub.f32 %v791, 1.0
      %v839 = vsub.f32 %v793, 1.0
      %v840 = vsub.f32 %v795, 1.0
      %v841 = vsub.f32 %v797, 1.0
      %v842 = vsub.f32 %v799, 1.0
      %v843 = vsub.f32 %v801, 1.0
      %v844 = vsub.f32 %v803, 1.0
      %v845 = vsub.f32 %v805, 1.0
      %v846 = vsub.f32 %v807, 1.0
      %v847 = vsub.f32 %v809, 1.0
      %v848 = vsub.f32 %v811, 1.0
      %v849 = vsub.f32 %v813, 1.0
      %v850 = vsub.f32 %v815, 1.0
      %v851 = vsub.f32 %v817, 1.0
      %v852 = vsub.f32 %v819, 1.0
      %v853 = vsub.f32 %v821, 1.0
      %v854 = vsel %vm694, %v568, %v822
      %v855 = vsel %vm695, %v571, %v823
      %v856 = vsel %vm696, %v576, %v824
      %v857 = vsel %vm697, %v579, %v825
      %v858 = vsel %vm698, %v584, %v826
      %v859 = vsel %vm699, %v587, %v827
      %v860 = vsel %vm700, %v592, %v828
      %v861 = vsel %vm701, %v595, %v829
      %v862 = vsel %vm702, %v600, %v830
      %v863 = vsel %vm703, %v603, %v831
      %v864 = vsel %vm704, %v608, %v832
      %v865 = vsel %vm705, %v611, %v833
      %v866 = vsel %vm706, %v616, %v834
      %v867 = vsel %vm707, %v619, %v835
      %v868 = vsel %vm708, %v624, %v836
      %v869 = vsel %vm709, %v627, %v837
      %v870 = vsel %vm710, %v632, %v838
      %v871 = vsel %vm711, %v635, %v839
      %v872 = vsel %vm712, %v640, %v840
      %v873 = vsel %vm713, %v643, %v841
      %v874 = vsel %vm714, %v648, %v842
      %v875 = vsel %vm715, %v651, %v843
      %v876 = vsel %vm716, %v656, %v844
      %v877 = vsel %vm717, %v659, %v845
      %v878 = vsel %vm718, %v664, %v846
      %v879 = vsel %vm719, %v667, %v847
      %v880 = vsel %vm720, %v672, %v848
      %v881 = vsel %vm721, %v675, %v849
      %v882 = vsel %vm722, %v680, %v850
      %v883 = vsel %vm723, %v683, %v851
      %v884 = vsel %vm724, %v688, %v852
      %v885 = vsel %vm725, %v691, %v853
      %v902 = vrot.slane %v854, 1
      %v903 = vrot.slane %v856, 1
      %v904 = vrot.slane %v858, 1
      %v905 = vrot.slane %v860, 1
      %v906 = vrot.slane %v862, 1
      %v907 = vrot.slane %v864, 1
      %v908 = vrot.slane %v866, 1
      %v909 = vrot.slane %v868, 1
      %v910 = vrot.slane %v870, 1
      %v911 = vrot.slane %v872, 1
      %v912 = vrot.slane %v874, 1
      %v913 = vrot.slane %v876, 1
      %v914 = vrot.slane %v878, 1
      %v915 = vrot.slane %v880, 1
      %v916 = vrot.slane %v882, 1
      %v917 = vrot.slane %v884, 1
      %vm950 = vcmask 1040384
      %v951 = vrot.slane %v854, 7
      %v952 = vrot.slane %v855, 7
      %v953 = vsel %vm950, %v951, %v952
      %v954 = vrot.slane %v856, 7
      %v955 = vrot.slane %v857, 7
      %v956 = vsel %vm950, %v954, %v955
      %v957 = vrot.slane %v858, 7
      %v958 = vrot.slane %v859, 7
      %v959 = vsel %vm950, %v957, %v958
      %v960 = vrot.slane %v860, 7
      %v961 = vrot.slane %v861, 7
      %v962 = vsel %vm950, %v960, %v961
      %v963 = vrot.slane %v862, 7
      %v964 = vrot.slane %v863, 7
      %v965 = vsel %vm950, %v963, %v964
      %v966 = vrot.slane %v864, 7
      %v967 = vrot.slane %v865, 7
      %v968 = vsel %vm950, %v966, %v967
      %v969 = vrot.slane %v866, 7
      %v970 = vrot.slane %v867, 7
      %v971 = vsel %vm950, %v969, %v970
      %v972 = vrot.slane %v868, 7
      %v973 = vrot.slane %v869, 7
      %v974 = vsel %vm950, %v972, %v973
      %v975 = vrot.slane %v870, 7
      %v976 = vrot.slane %v871, 7
      %v977 = vsel %vm950, %v975, %v976
      %v978 = vrot.slane %v872, 7
      %v979 = vrot.slane %v873, 7
      %v980 = vsel %vm950, %v978, %v979
      %v981 = vrot.slane %v874, 7
      %v982 = vrot.slane %v875, 7
      %v983 = vsel %vm950, %v981, %v982
      %v984 = vrot.slane %v876, 7
      %v985 = vrot.slane %v877, 7
      %v986 = vsel %vm950, %v984, %v985
      %v987 = vrot.slane %v878, 7
      %v988 = vrot.slane %v879, 7
      %v989 = vsel %vm950, %v987, %v988
      %v990 = vrot.slane %v880, 7
      %v991 = vrot.slane %v881, 7
      %v992 = vsel %vm950, %v990, %v991
      %v993 = vrot.slane %v882, 7
      %v994 = vrot.slane %v883, 7
      %v995 = vsel %vm950, %v993, %v994
      %v996 = vrot.slane %v884, 7
      %v997 = vrot.slane %v885, 7
      %v998 = vsel %vm950, %v996, %v997
      %v1031 = vsel %vm950, %v902, %v951
      %v1032 = vsel %vm950, %v903, %v954
      %v1033 = vsel %vm950, %v904, %v957
      %v1034 = vsel %vm950, %v905, %v960
      %v1035 = vsel %vm950, %v906, %v963
      %v1036 = vsel %vm950, %v907, %v966
      %v1037 = vsel %vm950, %v908, %v969
      %v1038 = vsel %vm950, %v909, %v972
      %v1039 = vsel %vm950, %v910, %v975
      %v1040 = vsel %vm950, %v911, %v978
      %v1041 = vsel %vm950, %v912, %v981
      %v1042 = vsel %vm950, %v913, %v984
      %v1043 = vsel %vm950, %v914, %v987
      %v1044 = vsel %vm950, %v915, %v990
      %v1045 = vsel %vm950, %v916, %v993
      %v1046 = vsel %vm950, %v917, %v996
      %vm1047 = vcmask 1046528
      %v1048 = vrot.slane %v855, 1
      %v1049 = vsel %vm1047, %v902, %v1048
      %v1050 = vrot.slane %v857, 1
      %v1051 = vsel %vm1047, %v903, %v1050
      %v1052 = vrot.slane %v859, 1
      %v1053 = vsel %vm1047, %v904, %v1052
      %v1054 = vrot.slane %v861, 1
      %v1055 = vsel %vm1047, %v905, %v1054
      %v1056 = vrot.slane %v863, 1
      %v1057 = vsel %vm1047, %v906, %v1056
      %v1058 = vrot.slane %v865, 1
      %v1059 = vsel %vm1047, %v907, %v1058
      %v1060 = vrot.slane %v867, 1
      %v1061 = vsel %vm1047, %v908, %v1060
      %v1062 = vrot.slane %v869, 1
      %v1063 = vsel %vm1047, %v909, %v1062
      %v1064 = vrot.slane %v871, 1
      %v1065 = vsel %vm1047, %v910, %v1064
      %v1066 = vrot.slane %v873, 1
      %v1067 = vsel %vm1047, %v911, %v1066
      %v1068 = vrot.slane %v875, 1
      %v1069 = vsel %vm1047, %v912, %v1068
      %v1070 = vrot.slane %v877, 1
      %v1071 = vsel %vm1047, %v913, %v1070
      %v1072 = vrot.slane %v879, 1
      %v1073 = vsel %vm1047, %v914, %v1072
      %v1074 = vrot.slane %v881, 1
      %v1075 = vsel %vm1047, %v915, %v1074
      %v1076 = vrot.slane %v883, 1
      %v1077 = vsel %vm1047, %v916, %v1076
      %v1078 = vrot.slane %v885, 1
      %v1079 = vsel %vm1047, %v917, %v1078
      %v1128 = vsel %vm1047, %v1048, %v952
      %v1129 = vsel %vm1047, %v1050, %v955
      %v1130 = vsel %vm1047, %v1052, %v958
      %v1131 = vsel %vm1047, %v1054, %v961
      %v1132 = vsel %vm1047, %v1056, %v964
      %v1133 = vsel %vm1047, %v1058, %v967
      %v1134 = vsel %vm1047, %v1060, %v970
      %v1135 = vsel %vm1047, %v1062, %v973
      %v1136 = vsel %vm1047, %v1064, %v976
      %v1137 = vsel %vm1047, %v1066, %v979
      %v1138 = vsel %vm1047, %v1068, %v982
      %v1139 = vsel %vm1047, %v1070, %v985
      %v1140 = vsel %vm1047, %v1072, %v988
      %v1141 = vsel %vm1047, %v1074, %v991
      %v1142 = vsel %vm1047, %v1076, %v994
      %v1143 = vsel %vm1047, %v1078, %v997
      %v1144 = vpack.c.bf16 %v953, %v1031
      %v1145 = vpack.c.bf16 %v956, %v1032
      %v1146 = vpack.c.bf16 %v959, %v1033
      %v1147 = vpack.c.bf16 %v962, %v1034
      %v1148 = vpack.c.bf16 %v965, %v1035
      %v1149 = vpack.c.bf16 %v968, %v1036
      %v1150 = vpack.c.bf16 %v971, %v1037
      %v1151 = vpack.c.bf16 %v974, %v1038
      %v1152 = vpack.c.bf16 %v977, %v1039
      %v1153 = vpack.c.bf16 %v980, %v1040
      %v1154 = vpack.c.bf16 %v983, %v1041
      %v1155 = vpack.c.bf16 %v986, %v1042
      %v1156 = vpack.c.bf16 %v989, %v1043
      %v1157 = vpack.c.bf16 %v992, %v1044
      %v1158 = vpack.c.bf16 %v995, %v1045
      %v1159 = vpack.c.bf16 %v998, %v1046
      %1160 = vst [vmem:[#allocation2] sm:$0xff] %v1144
      %1161 = vst [vmem:[#allocation2 + $0x18] sm:$0xff] %v1145
      %1162 = vst [vmem:[#allocation2 + $0x30] sm:$0xff] %v1146
      %1163 = vst [vmem:[#allocation2 + $0x48] sm:$0xff] %v1147
      %1164 = vst [vmem:[#allocation2 + $0x60] sm:$0xff] %v1148
      %1165 = vst [vmem:[#allocation2 + $0x78] sm:$0xff] %v1149
      %1166 = vst [vmem:[#allocation2 + $0x90] sm:$0xff] %v1150
      %1167 = vst [vmem:[#allocation2 + $0xa8] sm:$0xff] %v1151
      %1168 = vst [vmem:[#allocation2 + $0xc0] sm:$0xff] %v1152
      %1169 = vst [vmem:[#allocation2 + $0xd8] sm:$0xff] %v1153
      %1170 = vst [vmem:[#allocation2 + $0xf0] sm:$0xff] %v1154
      %1171 = vst [vmem:[#allocation2 + $0x108] sm:$0xff] %v1155
      %1172 = vst [vmem:[#allocation2 + $0x120] sm:$0xff] %v1156
      %1173 = vst [vmem:[#allocation2 + $0x138] sm:$0xff] %v1157
      %1174 = vst [vmem:[#allocation2 + $0x150] sm:$0xff] %v1158
      %1175 = vst [vmem:[#allocation2 + $0x168] sm:$0xff] %v1159
      %v1176 = vpack.c.bf16 %v855, %v854
      %v1177 = vpack.c.bf16 %v857, %v856
      %v1178 = vpack.c.bf16 %v859, %v858
      %v1179 = vpack.c.bf16 %v861, %v860
      %v1180 = vpack.c.bf16 %v863, %v862
      %v1181 = vpack.c.bf16 %v865, %v864
      %v1182 = vpack.c.bf16 %v867, %v866
      %v1183 = vpack.c.bf16 %v869, %v868
      %v1184 = vpack.c.bf16 %v871, %v870
      %v1185 = vpack.c.bf16 %v873, %v872
      %v1186 = vpack.c.bf16 %v875, %v874
      %v1187 = vpack.c.bf16 %v877, %v876
      %v1188 = vpack.c.bf16 %v879, %v878
      %v1189 = vpack.c.bf16 %v881, %v880
      %v1190 = vpack.c.bf16 %v883, %v882
      %v1191 = vpack.c.bf16 %v885, %v884
      %1192 = vst [vmem:[#allocation2 + $0x8] sm:$0xff] %v1176
      %1193 = vst [vmem:[#allocation2 + $0x20] sm:$0xff] %v1177
      %1194 = vst [vmem:[#allocation2 + $0x38] sm:$0xff] %v1178
      %1195 = vst [vmem:[#allocation2 + $0x50] sm:$0xff] %v1179
      %1196 = vst [vmem:[#allocation2 + $0x68] sm:$0xff] %v1180
      %1197 = vst [vmem:[#allocation2 + $0x80] sm:$0xff] %v1181
      %1198 = vst [vmem:[#allocation2 + $0x98] sm:$0xff] %v1182
      %1199 = vst [vmem:[#allocation2 + $0xb0] sm:$0xff] %v1183
      %1200 = vst [vmem:[#allocation2 + $0xc8] sm:$0xff] %v1184
      %1201 = vst [vmem:[#allocation2 + $0xe0] sm:$0xff] %v1185
      %1202 = vst [vmem:[#allocation2 + $0xf8] sm:$0xff] %v1186
      %1203 = vst [vmem:[#allocation2 + $0x110] sm:$0xff] %v1187
      %1204 = vst [vmem:[#allocation2 + $0x128] sm:$0xff] %v1188
      %1205 = vst [vmem:[#allocation2 + $0x140] sm:$0xff] %v1189
      %1206 = vst [vmem:[#allocation2 + $0x158] sm:$0xff] %v1190
      %1207 = vst [vmem:[#allocation2 + $0x170] sm:$0xff] %v1191
      %v1208 = vpack.c.bf16 %v1128, %v1049
      %v1209 = vpack.c.bf16 %v1129, %v1051
      %v1210 = vpack.c.bf16 %v1130, %v1053
      %v1211 = vpack.c.bf16 %v1131, %v1055
      %v1212 = vpack.c.bf16 %v1132, %v1057
      %v1213 = vpack.c.bf16 %v1133, %v1059
      %v1214 = vpack.c.bf16 %v1134, %v1061
      %v1215 = vpack.c.bf16 %v1135, %v1063
      %v1216 = vpack.c.bf16 %v1136, %v1065
      %v1217 = vpack.c.bf16 %v1137, %v1067
      %v1218 = vpack.c.bf16 %v1138, %v1069
      %v1219 = vpack.c.bf16 %v1139, %v1071
      %v1220 = vpack.c.bf16 %v1140, %v1073
      %v1221 = vpack.c.bf16 %v1141, %v1075
      %v1222 = vpack.c.bf16 %v1142, %v1077
      %v1223 = vpack.c.bf16 %v1143, %v1079
      %1224 = vst [vmem:[#allocation2 + $0x10] sm:$0xff] %v1208
      %1225 = vst [vmem:[#allocation2 + $0x28] sm:$0xff] %v1209
      %1226 = vst [vmem:[#allocation2 + $0x40] sm:$0xff] %v1210
      %1227 = vst [vmem:[#allocation2 + $0x58] sm:$0xff] %v1211
      %1228 = vst [vmem:[#allocation2 + $0x70] sm:$0xff] %v1212
      %1229 = vst [vmem:[#allocation2 + $0x88] sm:$0xff] %v1213
      %1230 = vst [vmem:[#allocation2 + $0xa0] sm:$0xff] %v1214
      %1231 = vst [vmem:[#allocation2 + $0xb8] sm:$0xff] %v1215
      %1232 = vst [vmem:[#allocation2 + $0xd0] sm:$0xff] %v1216
      %1233 = vst [vmem:[#allocation2 + $0xe8] sm:$0xff] %v1217
      %1234 = vst [vmem:[#allocation2 + $0x100] sm:$0xff] %v1218
      %1235 = vst [vmem:[#allocation2 + $0x118] sm:$0xff] %v1219
      %1236 = vst [vmem:[#allocation2 + $0x130] sm:$0xff] %v1220
      %1237 = vst [vmem:[#allocation2 + $0x148] sm:$0xff] %v1221
      %1238 = vst [vmem:[#allocation2 + $0x160] sm:$0xff] %v1222
      %1239 = vst [vmem:[#allocation2 + $0x178] sm:$0xff] %v1223
      %v1240 = vld [vmem:[#allocation2] sm:$0xff]
      %v1241 = vld [vmem:[#allocation2 + $0x8] sm:$0xff]
      %v1242 = vld [vmem:[#allocation2 + $0x10] sm:$0xff]
      %v1243 = vld [vmem:[#allocation2 + $0x18] sm:$0xff]
      %v1244 = vld [vmem:[#allocation2 + $0x20] sm:$0xff]
      %v1245 = vld [vmem:[#allocation2 + $0x28] sm:$0xff]
      %v1246 = vld [vmem:[#allocation2 + $0x30] sm:$0xff]
      %v1247 = vld [vmem:[#allocation2 + $0x38] sm:$0xff]
      %v1248 = vld [vmem:[#allocation2 + $0x40] sm:$0xff]
      %v1249 = vld [vmem:[#allocation2 + $0x48] sm:$0xff]
      %v1250 = vld [vmem:[#allocation2 + $0x50] sm:$0xff]
      %v1251 = vld [vmem:[#allocation2 + $0x58] sm:$0xff]
      %v1252 = vld [vmem:[#allocation2 + $0x60] sm:$0xff]
      %v1253 = vld [vmem:[#allocation2 + $0x68] sm:$0xff]
      %v1254 = vld [vmem:[#allocation2 + $0x70] sm:$0xff]
      %v1255 = vld [vmem:[#allocation2 + $0x78] sm:$0xff]
      %v1256 = vld [vmem:[#allocation2 + $0x80] sm:$0xff]
      %v1257 = vld [vmem:[#allocation2 + $0x88] sm:$0xff]
      %v1258 = vld [vmem:[#allocation2 + $0x90] sm:$0xff]
      %v1259 = vld [vmem:[#allocation2 + $0x98] sm:$0xff]
      %v1260 = vld [vmem:[#allocation2 + $0xa0] sm:$0xff]
      %v1261 = vld [vmem:[#allocation2 + $0xa8] sm:$0xff]
      %v1262 = vld [vmem:[#allocation2 + $0xb0] sm:$0xff]
      %v1263 = vld [vmem:[#allocation2 + $0xb8] sm:$0xff]
      %v1264 = vld [vmem:[#allocation2 + $0xc0] sm:$0xff]
      %v1265 = vld [vmem:[#allocation2 + $0xc8] sm:$0xff]
      %v1266 = vld [vmem:[#allocation2 + $0xd0] sm:$0xff]
      %v1267 = vld [vmem:[#allocation2 + $0xd8] sm:$0xff]
      %v1268 = vld [vmem:[#allocation2 + $0xe0] sm:$0xff]
      %v1269 = vld [vmem:[#allocation2 + $0xe8] sm:$0xff]
      %v1270 = vld [vmem:[#allocation2 + $0xf0] sm:$0xff]
      %v1271 = vld [vmem:[#allocation2 + $0xf8] sm:$0xff]
      %v1272 = vld [vmem:[#allocation2 + $0x100] sm:$0xff]
      %v1273 = vld [vmem:[#allocation2 + $0x108] sm:$0xff]
      %v1274 = vld [vmem:[#allocation2 + $0x110] sm:$0xff]
      %v1275 = vld [vmem:[#allocation2 + $0x118] sm:$0xff]
      %v1276 = vld [vmem:[#allocation2 + $0x120] sm:$0xff]
      %v1277 = vld [vmem:[#allocation2 + $0x128] sm:$0xff]
      %v1278 = vld [vmem:[#allocation2 + $0x130] sm:$0xff]
      %v1279 = vld [vmem:[#allocation2 + $0x138] sm:$0xff]
      %v1280 = vld [vmem:[#allocation2 + $0x140] sm:$0xff]
      %v1281 = vld [vmem:[#allocation2 + $0x148] sm:$0xff]
      %v1282 = vld [vmem:[#allocation2 + $0x150] sm:$0xff]
      %v1283 = vld [vmem:[#allocation2 + $0x158] sm:$0xff]
      %v1284 = vld [vmem:[#allocation2 + $0x160] sm:$0xff]
      %v1285 = vld [vmem:[#allocation2 + $0x168] sm:$0xff]
      %v1286 = vld [vmem:[#allocation2 + $0x170] sm:$0xff]
      %v1287 = vld [vmem:[#allocation2 + $0x178] sm:$0xff]
      %v1288 = vld [vmem:[%s3] sm:$0xf]
      %v1289 = vld [vmem:[%s3 + $0x4] sm:$0xf]
      %v1290 = vld [vmem:[%s3 + $0x8] sm:$0xf]
      %v1291 = vld [vmem:[%s3 + $0xc] sm:$0xf]
      %v1292 = vld [vmem:[%s3 + $0x10] sm:$0xf]
      %v1293 = vld [vmem:[%s3 + $0x14] sm:$0xf]
      %v1294 = vld [vmem:[%s3 + $0x18] sm:$0xf]
      %v1295 = vld [vmem:[%s3 + $0x1c] sm:$0xf]
      %v1296 = vld [vmem:[%s3 + $0x20] sm:$0xf]
      %v1297 = vld [vmem:[%s3 + $0x24] sm:$0xf]
      %v1298 = vld [vmem:[%s3 + $0x28] sm:$0xf]
      %v1299 = vld [vmem:[%s3 + $0x2c] sm:$0xf]
      %v1300 = vld [vmem:[%s3 + $0x30] sm:$0xf]
      %v1301 = vld [vmem:[%s3 + $0x34] sm:$0xf]
      %v1302 = vld [vmem:[%s3 + $0x38] sm:$0xf]
      %v1303 = vld [vmem:[%s3 + $0x3c] sm:$0xf]
      %v1304 = vld [vmem:[%s3 + $0x40] sm:$0xf]
      %v1305 = vld [vmem:[%s3 + $0x44] sm:$0xf]
      %v1306 = vld [vmem:[%s3 + $0x48] sm:$0xf]
      %v1307 = vld [vmem:[%s3 + $0x4c] sm:$0xf]
      %v1308 = vld [vmem:[%s3 + $0x50] sm:$0xf]
      %v1309 = vld [vmem:[%s3 + $0x54] sm:$0xf]
      %v1310 = vld [vmem:[%s3 + $0x58] sm:$0xf]
      %v1311 = vld [vmem:[%s3 + $0x5c] sm:$0xf]
      %v1312 = vld [vmem:[%s3 + $0x60] sm:$0xf]
      %v1313 = vld [vmem:[%s3 + $0x64] sm:$0xf]
      %v1314 = vld [vmem:[%s3 + $0x68] sm:$0xf]
      %v1315 = vld [vmem:[%s3 + $0x6c] sm:$0xf]
      %v1316 = vld [vmem:[%s3 + $0x70] sm:$0xf]
      %v1317 = vld [vmem:[%s3 + $0x74] sm:$0xf]
      %v1318 = vld [vmem:[%s3 + $0x78] sm:$0xf]
      %v1319 = vld [vmem:[%s3 + $0x7c] sm:$0xf]
      %v1320 = vld [vmem:[%s3 + $0x80] sm:$0xf]
      %v1321 = vld [vmem:[%s3 + $0x84] sm:$0xf]
      %v1322 = vld [vmem:[%s3 + $0x88] sm:$0xf]
      %v1323 = vld [vmem:[%s3 + $0x8c] sm:$0xf]
      %v1324 = vld [vmem:[%s3 + $0x90] sm:$0xf]
      %v1325 = vld [vmem:[%s3 + $0x94] sm:$0xf]
      %v1326 = vld [vmem:[%s3 + $0x98] sm:$0xf]
      %v1327 = vld [vmem:[%s3 + $0x9c] sm:$0xf]
      %v1328 = vld [vmem:[%s3 + $0xa0] sm:$0xf]
      %v1329 = vld [vmem:[%s3 + $0xa4] sm:$0xf]
      %v1330 = vld [vmem:[%s3 + $0xa8] sm:$0xf]
      %v1331 = vld [vmem:[%s3 + $0xac] sm:$0xf]
      %v1332 = vld [vmem:[%s3 + $0xb0] sm:$0xf]
      %v1333 = vld [vmem:[%s3 + $0xb4] sm:$0xf]
      %v1334 = vld [vmem:[%s3 + $0xb8] sm:$0xf]
      %v1335 = vld [vmem:[%s3 + $0xbc] sm:$0xf]
      %v1384 = vunpack.c.l.b16 %v1288
      %v1385 = vunpack.c.l.b16 %v1289
      %v1386 = vunpack.c.l.b16 %v1290
      %v1387 = vunpack.c.l.b16 %v1291
      %v1388 = vunpack.c.l.b16 %v1292
      %v1389 = vunpack.c.l.b16 %v1293
      %v1390 = vunpack.c.l.b16 %v1294
      %v1391 = vunpack.c.l.b16 %v1295
      %v1392 = vunpack.c.l.b16 %v1296
      %v1393 = vunpack.c.l.b16 %v1297
      %v1394 = vunpack.c.l.b16 %v1298
      %v1395 = vunpack.c.l.b16 %v1299
      %v1396 = vunpack.c.l.b16 %v1300
      %v1397 = vunpack.c.l.b16 %v1301
      %v1398 = vunpack.c.l.b16 %v1302
      %v1399 = vunpack.c.l.b16 %v1303
      %v1400 = vunpack.c.l.b16 %v1304
      %v1401 = vunpack.c.l.b16 %v1305
      %v1402 = vunpack.c.l.b16 %v1306
      %v1403 = vunpack.c.l.b16 %v1307
      %v1404 = vunpack.c.l.b16 %v1308
      %v1405 = vunpack.c.l.b16 %v1309
      %v1406 = vunpack.c.l.b16 %v1310
      %v1407 = vunpack.c.l.b16 %v1311
      %v1408 = vunpack.c.l.b16 %v1312
      %v1409 = vunpack.c.l.b16 %v1313
      %v1410 = vunpack.c.l.b16 %v1314
      %v1411 = vunpack.c.l.b16 %v1315
      %v1412 = vunpack.c.l.b16 %v1316
      %v1413 = vunpack.c.l.b16 %v1317
      %v1414 = vunpack.c.l.b16 %v1318
      %v1415 = vunpack.c.l.b16 %v1319
      %v1416 = vunpack.c.l.b16 %v1320
      %v1417 = vunpack.c.l.b16 %v1321
      %v1418 = vunpack.c.l.b16 %v1322
      %v1419 = vunpack.c.l.b16 %v1323
      %v1420 = vunpack.c.l.b16 %v1324
      %v1421 = vunpack.c.l.b16 %v1325
      %v1422 = vunpack.c.l.b16 %v1326
      %v1423 = vunpack.c.l.b16 %v1327
      %v1424 = vunpack.c.l.b16 %v1328
      %v1425 = vunpack.c.l.b16 %v1329
      %v1426 = vunpack.c.l.b16 %v1330
      %v1427 = vunpack.c.l.b16 %v1331
      %v1428 = vunpack.c.l.b16 %v1332
      %v1429 = vunpack.c.l.b16 %v1333
      %v1430 = vunpack.c.l.b16 %v1334
      %v1431 = vunpack.c.l.b16 %v1335
      %v1432 = vpack.c.b16 %v1385, %v1384
      %v1433 = vpack.c.b16 %v1387, %v1386
      %v1434 = vpack.c.b16 %v1389, %v1388
      %v1435 = vpack.c.b16 %v1391, %v1390
      %v1436 = vpack.c.b16 %v1393, %v1392
      %v1437 = vpack.c.b16 %v1395, %v1394
      %v1438 = vpack.c.b16 %v1397, %v1396
      %v1439 = vpack.c.b16 %v1399, %v1398
      %v1440 = vpack.c.b16 %v1401, %v1400
      %v1441 = vpack.c.b16 %v1403, %v1402
      %v1442 = vpack.c.b16 %v1405, %v1404
      %v1443 = vpack.c.b16 %v1407, %v1406
      %v1444 = vpack.c.b16 %v1409, %v1408
      %v1445 = vpack.c.b16 %v1411, %v1410
      %v1446 = vpack.c.b16 %v1413, %v1412
      %v1447 = vpack.c.b16 %v1415, %v1414
      %v1448 = vpack.c.b16 %v1417, %v1416
      %v1449 = vpack.c.b16 %v1419, %v1418
      %v1450 = vpack.c.b16 %v1421, %v1420
      %v1451 = vpack.c.b16 %v1423, %v1422
      %v1452 = vpack.c.b16 %v1425, %v1424
      %v1453 = vpack.c.b16 %v1427, %v1426
      %v1454 = vpack.c.b16 %v1429, %v1428
      %v1455 = vpack.c.b16 %v1431, %v1430
      %1480 = vmatprep.subr.bf16.mxu0 0
      %1481 = vmatpush1.bf16.msra.mxu0 %v1432
      %1482 = vmatprep.subr.bf16.mxu0 0
      %1483 = vmatpush1.bf16.msra.mxu0 %v1433
      %1484 = vmatprep.subr.bf16.mxu0 0
      %1485 = vmatpush1.bf16.msra.mxu0 %v1434
      %1486 = vmatprep.subr.bf16.mxu0 0
      %1487 = vmatpush1.bf16.msra.mxu0 %v1435
      %1488 = vmatprep.subr.bf16.mxu0 0
      %1489 = vmatpush1.bf16.msra.mxu0 %v1436
      %1490 = vmatprep.subr.bf16.mxu0 0
      %1491 = vmatpush1.bf16.msra.mxu0 %v1437
      %1492 = vmatprep.subr.bf16.mxu0 0
      %1493 = vmatpush1.bf16.msra.mxu0 %v1438
      %1494 = vmatprep.subr.bf16.mxu0 0
      %1495 = vmatpush1.bf16.msra.mxu0 %v1439
      %1496 = vmatprep.subr.bf16.mxu0 0
      %1497 = vmatpush1.bf16.msra.mxu0 %v1440
      %1498 = vmatprep.subr.bf16.mxu0 0
      %1499 = vmatpush1.bf16.msra.mxu0 %v1441
      %1500 = vmatprep.subr.bf16.mxu0 0
      %1501 = vmatpush1.bf16.msra.mxu0 %v1442
      %1502 = vmatprep.subr.bf16.mxu0 0
      %1503 = vmatpush1.bf16.msra.mxu0 %v1443
      %1504 = vmatprep.subr.bf16.mxu0 0
      %1505 = vmatpush1.bf16.msra.mxu0 %v1444
      %1506 = vmatprep.subr.bf16.mxu0 0
      %1507 = vmatpush1.bf16.msra.mxu0 %v1445
      %1508 = vmatprep.subr.bf16.mxu0 0
      %1509 = vmatpush1.bf16.msra.mxu0 %v1446
      %1510 = vmatprep.subr.bf16.mxu0 0
      %1511 = vmatpush1.bf16.msra.mxu0 %v1447
      %1512 = vmatprep.mubr.bf16.mxu0 %v1241
      %1513 = vmatmul.mubr.bf16.gmra.mrb[0].mxu0 %v1240
      %v1514 = vpop.f32.mrb[0].mxu0
      %v1515 = vadd.f32 0.0, %v1514
      %v1516 = vpop.f32.mrb[0].mxu0
      %v1517 = vpop.f32.mrb[0].mxu0
      %v1518 = vadd.f32 0.0, %v1517
      %v1519 = vpop.f32.mrb[0].mxu0
      %1520 = vmatprep.mubr.bf16.mxu0 %v1244
      %1521 = vmatmul.mubr.bf16.gmra.mrb[0].mxu0 %v1243
      %v1522 = vpop.f32.mrb[0].mxu0
      %v1523 = vadd.f32 0.0, %v1522
      %v1524 = vpop.f32.mrb[0].mxu0
      %v1525 = vpop.f32.mrb[0].mxu0
      %v1526 = vadd.f32 0.0, %v1525
      %v1527 = vpop.f32.mrb[0].mxu0
      %1528 = vmatprep.mubr.bf16.mxu0 %v1247
      %1529 = vmatmul.mubr.bf16.gmra.mrb[0].mxu0 %v1246
      %v1530 = vpop.f32.mrb[0].mxu0
      %v1531 = vadd.f32 0.0, %v1530
      %v1532 = vpop.f32.mrb[0].mxu0
      %v1533 = vpop.f32.mrb[0].mxu0
      %v1534 = vadd.f32 0.0, %v1533
      %v1535 = vpop.f32.mrb[0].mxu0
      %1536 = vmatprep.mubr.bf16.mxu0 %v1250
      %1537 = vmatmul.mubr.bf16.gmra.mrb[0].mxu0 %v1249
      %v1538 = vpop.f32.mrb[0].mxu0
      %v1539 = vadd.f32 0.0, %v1538
      %v1540 = vpop.f32.mrb[0].mxu0
      %v1541 = vpop.f32.mrb[0].mxu0
      %v1542 = vadd.f32 0.0, %v1541
      %v1543 = vpop.f32.mrb[0].mxu0
      %1544 = vmatprep.mubr.bf16.mxu0 %v1253
      %1545 = vmatmul.mubr.bf16.gmra.mrb[0].mxu0 %v1252
      %v1546 = vpop.f32.mrb[0].mxu0
      %v1547 = vadd.f32 0.0, %v1546
      %v1548 = vpop.f32.mrb[0].mxu0
      %v1549 = vpop.f32.mrb[0].mxu0
      %v1550 = vadd.f32 0.0, %v1549
      %v1551 = vpop.f32.mrb[0].mxu0
      %1552 = vmatprep.mubr.bf16.mxu0 %v1256
      %1553 = vmatmul.mubr.bf16.gmra.mrb[0].mxu0 %v1255
      %v1554 = vpop.f32.mrb[0].mxu0
      %v1555 = vadd.f32 0.0, %v1554
      %v1556 = vpop.f32.mrb[0].mxu0
      %v1557 = vpop.f32.mrb[0].mxu0
      %v1558 = vadd.f32 0.0, %v1557
      %v1559 = vpop.f32.mrb[0].mxu0
      %1560 = vmatprep.mubr.bf16.mxu0 %v1259
      %1561 = vmatmul.mubr.bf16.gmra.mrb[0].mxu0 %v1258
      %v1562 = vpop.f32.mrb[0].mxu0
      %v1563 = vadd.f32 0.0, %v1562
      %v1564 = vpop.f32.mrb[0].mxu0
      %v1565 = vpop.f32.mrb[0].mxu0
      %v1566 = vadd.f32 0.0, %v1565
      %v1567 = vpop.f32.mrb[0].mxu0
      %1568 = vmatprep.mubr.bf16.mxu0 %v1262
      %1569 = vmatmul.mubr.bf16.gmra.mrb[0].mxu0 %v1261
      %v1570 = vpop.f32.mrb[0].mxu0
      %v1571 = vadd.f32 0.0, %v1570
      %v1572 = vpop.f32.mrb[0].mxu0
      %v1573 = vpop.f32.mrb[0].mxu0
      %v1574 = vadd.f32 0.0, %v1573
      %v1575 = vpop.f32.mrb[0].mxu0
      %1576 = vmatprep.mubr.bf16.mxu0 %v1265
      %1577 = vmatmul.mubr.bf16.gmra.mrb[0].mxu0 %v1264
      %v1578 = vpop.f32.mrb[0].mxu0
      %v1579 = vadd.f32 0.0, %v1578
      %v1580 = vpop.f32.mrb[0].mxu0
      %v1581 = vpop.f32.mrb[0].mxu0
      %v1582 = vadd.f32 0.0, %v1581
      %v1583 = vpop.f32.mrb[0].mxu0
      %1584 = vmatprep.mubr.bf16.mxu0 %v1268
      %1585 = vmatmul.mubr.bf16.gmra.mrb[0].mxu0 %v1267
      %v1586 = vpop.f32.mrb[0].mxu0
      %v1587 = vadd.f32 0.0, %v1586
      %v1588 = vpop.f32.mrb[0].mxu0
      %v1589 = vpop.f32.mrb[0].mxu0
      %v1590 = vadd.f32 0.0, %v1589
      %v1591 = vpop.f32.mrb[0].mxu0
      %1592 = vmatprep.mubr.bf16.mxu0 %v1271
      %1593 = vmatmul.mubr.bf16.gmra.mrb[0].mxu0 %v1270
      %v1594 = vpop.f32.mrb[0].mxu0
      %v1595 = vadd.f32 0.0, %v1594
      %v1596 = vpop.f32.mrb[0].mxu0
      %v1597 = vpop.f32.mrb[0].mxu0
      %v1598 = vadd.f32 0.0, %v1597
      %v1599 = vpop.f32.mrb[0].mxu0
      %1600 = vmatprep.mubr.bf16.mxu0 %v1274
      %1601 = vmatmul.mubr.bf16.gmra.mrb[0].mxu0 %v1273
      %v1602 = vpop.f32.mrb[0].mxu0
      %v1603 = vadd.f32 0.0, %v1602
      %v1604 = vpop.f32.mrb[0].mxu0
      %v1605 = vpop.f32.mrb[0].mxu0
      %v1606 = vadd.f32 0.0, %v1605
      %v1607 = vpop.f32.mrb[0].mxu0
      %1608 = vmatprep.mubr.bf16.mxu0 %v1277
      %1609 = vmatmul.mubr.bf16.gmra.mrb[0].mxu0 %v1276
      %v1610 = vpop.f32.mrb[0].mxu0
      %v1611 = vadd.f32 0.0, %v1610
      %v1612 = vpop.f32.mrb[0].mxu0
      %v1613 = vpop.f32.mrb[0].mxu0
      %v1614 = vadd.f32 0.0, %v1613
      %v1615 = vpop.f32.mrb[0].mxu0
      %1616 = vmatprep.mubr.bf16.mxu0 %v1280
      %1617 = vmatmul.mubr.bf16.gmra.mrb[0].mxu0 %v1279
      %v1618 = vpop.f32.mrb[0].mxu0
      %v1619 = vadd.f32 0.0, %v1618
      %v1620 = vpop.f32.mrb[0].mxu0
      %v1621 = vpop.f32.mrb[0].mxu0
      %v1622 = vadd.f32 0.0, %v1621
      %v1623 = vpop.f32.mrb[0].mxu0
      %1624 = vmatprep.mubr.bf16.mxu0 %v1283
      %1625 = vmatmul.mubr.bf16.gmra.mrb[0].mxu0 %v1282
      %v1626 = vpop.f32.mrb[0].mxu0
      %v1627 = vadd.f32 0.0, %v1626
      %v1628 = vpop.f32.mrb[0].mxu0
      %v1629 = vpop.f32.mrb[0].mxu0
      %v1630 = vadd.f32 0.0, %v1629
      %v1631 = vpop.f32.mrb[0].mxu0
      %1632 = vmatprep.mubr.bf16.mxu0 %v1286
      %1633 = vmatmul.mubr.bf16.gmra.mrb[0].mxu0 %v1285
      %v1634 = vpop.f32.mrb[0].mxu0
      %v1635 = vpop.f32.mrb[0].mxu0
      %v1636 = vpop.f32.mrb[0].mxu0
      %v1637 = vpop.f32.mrb[0].mxu0
      %1638 = vdwg.mxu0
      %1639 = vmatprep.subr.bf16.mxu0 0
      %1640 = vmatpush1.bf16.msra.mxu0 %v1448
      %1641 = vmatprep.subr.bf16.mxu0 0
      %1642 = vmatpush1.bf16.msra.mxu0 %v1449
      %1643 = vmatprep.subr.bf16.mxu0 0
      %1644 = vmatpush1.bf16.msra.mxu0 %v1450
      %1645 = vmatprep.subr.bf16.mxu0 0
      %1646 = vmatpush1.bf16.msra.mxu0 %v1451
      %1647 = vmatprep.subr.bf16.mxu0 0
      %1648 = vmatpush1.bf16.msra.mxu0 %v1452
      %1649 = vmatprep.subr.bf16.mxu0 0
      %1650 = vmatpush1.bf16.msra.mxu0 %v1453
      %1651 = vmatprep.subr.bf16.mxu0 0
      %1652 = vmatpush1.bf16.msra.mxu0 %v1454
      %1653 = vmatprep.subr.bf16.mxu0 0
      %1654 = vmatpush1.bf16.msra.mxu0 %v1455
      %1655 = vmatprep.subr.bf16.mxu0 0
      %1656 = vmatpush1.bf16.msra.mxu0 0
      %1657 = vmatprep.subr.bf16.mxu0 0
      %1658 = vmatpush1.bf16.msra.mxu0 0
      %1659 = vmatprep.subr.bf16.mxu0 0
      %1660 = vmatpush1.bf16.msra.mxu0 0
      %1661 = vmatprep.subr.bf16.mxu0 0
      %1662 = vmatpush1.bf16.msra.mxu0 0
      %1663 = vmatprep.subr.bf16.mxu0 0
      %1664 = vmatpush1.bf16.msra.mxu0 0
      %1665 = vmatprep.subr.bf16.mxu0 0
      %1666 = vmatpush1.bf16.msra.mxu0 0
      %1667 = vmatprep.subr.bf16.mxu0 0
      %1668 = vmatpush1.bf16.msra.mxu0 0
      %1669 = vmatprep.subr.bf16.mxu0 0
      %1670 = vmatpush1.bf16.msra.mxu0 0
      %1671 = vmatprep.mubr.bf16.mxu0 0
      %1672 = vmatmul.mubr.bf16.gmra.mrb[0].mxu0 %v1242
      %v1673 = vpop.f32.mrb[0].mxu0
      %v1674 = vadd.f32 %v1515, %v1673
      %v1675 = vpop.f32.mrb[0].mxu0
      %v1676 = vpop.f32.mrb[0].mxu0
      %v1677 = vadd.f32 %v1518, %v1676
      %v1678 = vpop.f32.mrb[0].mxu0
      %1679 = vmatprep.mubr.bf16.mxu0 0
      %1680 = vmatmul.mubr.bf16.gmra.mrb[0].mxu0 %v1245
      %v1681 = vpop.f32.mrb[0].mxu0
      %v1682 = vadd.f32 %v1523, %v1681
      %v1683 = vpop.f32.mrb[0].mxu0
      %v1684 = vpop.f32.mrb[0].mxu0
      %v1685 = vadd.f32 %v1526, %v1684
      %v1686 = vpop.f32.mrb[0].mxu0
      %1687 = vmatprep.mubr.bf16.mxu0 0
      %1688 = vmatmul.mubr.bf16.gmra.mrb[0].mxu0 %v1248
      %v1689 = vpop.f32.mrb[0].mxu0
      %v1690 = vadd.f32 %v1531, %v1689
      %v1691 = vpop.f32.mrb[0].mxu0
      %v1692 = vpop.f32.mrb[0].mxu0
      %v1693 = vadd.f32 %v1534, %v1692
      %v1694 = vpop.f32.mrb[0].mxu0
      %1695 = vmatprep.mubr.bf16.mxu0 0
      %1696 = vmatmul.mubr.bf16.gmra.mrb[0].mxu0 %v1251
      %v1697 = vpop.f32.mrb[0].mxu0
      %v1698 = vadd.f32 %v1539, %v1697
      %v1699 = vpop.f32.mrb[0].mxu0
      %v1700 = vpop.f32.mrb[0].mxu0
      %v1701 = vadd.f32 %v1542, %v1700
      %v1702 = vpop.f32.mrb[0].mxu0
      %1703 = vmatprep.mubr.bf16.mxu0 0
      %1704 = vmatmul.mubr.bf16.gmra.mrb[0].mxu0 %v1254
      %v1705 = vpop.f32.mrb[0].mxu0
      %v1706 = vadd.f32 %v1547, %v1705
      %v1707 = vpop.f32.mrb[0].mxu0
      %v1708 = vpop.f32.mrb[0].mxu0
      %v1709 = vadd.f32 %v1550, %v1708
      %v1710 = vpop.f32.mrb[0].mxu0
      %1711 = vmatprep.mubr.bf16.mxu0 0
      %1712 = vmatmul.mubr.bf16.gmra.mrb[0].mxu0 %v1257
      %v1713 = vpop.f32.mrb[0].mxu0
      %v1714 = vadd.f32 %v1555, %v1713
      %v1715 = vpop.f32.mrb[0].mxu0
      %v1716 = vpop.f32.mrb[0].mxu0
      %v1717 = vadd.f32 %v1558, %v1716
      %v1718 = vpop.f32.mrb[0].mxu0
      %1719 = vmatprep.mubr.bf16.mxu0 0
      %1720 = vmatmul.mubr.bf16.gmra.mrb[0].mxu0 %v1260
      %v1721 = vpop.f32.mrb[0].mxu0
      %v1722 = vadd.f32 %v1563, %v1721
      %v1723 = vpop.f32.mrb[0].mxu0
      %v1724 = vpop.f32.mrb[0].mxu0
      %v1725 = vadd.f32 %v1566, %v1724
      %v1726 = vpop.f32.mrb[0].mxu0
      %1727 = vmatprep.mubr.bf16.mxu0 0
      %1728 = vmatmul.mubr.bf16.gmra.mrb[0].mxu0 %v1263
      %v1729 = vpop.f32.mrb[0].mxu0
      %v1730 = vadd.f32 %v1571, %v1729
      %v1731 = vpop.f32.mrb[0].mxu0
      %v1732 = vpop.f32.mrb[0].mxu0
      %v1733 = vadd.f32 %v1574, %v1732
      %v1734 = vpop.f32.mrb[0].mxu0
      %1735 = vmatprep.mubr.bf16.mxu0 0
      %1736 = vmatmul.mubr.bf16.gmra.mrb[0].mxu0 %v1266
      %v1737 = vpop.f32.mrb[0].mxu0
      %v1738 = vadd.f32 %v1579, %v1737
      %v1739 = vpop.f32.mrb[0].mxu0
      %v1740 = vpop.f32.mrb[0].mxu0
      %v1741 = vadd.f32 %v1582, %v1740
      %v1742 = vpop.f32.mrb[0].mxu0
      %1743 = vmatprep.mubr.bf16.mxu0 0
      %1744 = vmatmul.mubr.bf16.gmra.mrb[0].mxu0 %v1269
      %v1745 = vpop.f32.mrb[0].mxu0
      %v1746 = vadd.f32 %v1587, %v1745
      %v1747 = vpop.f32.mrb[0].mxu0
      %v1748 = vpop.f32.mrb[0].mxu0
      %v1749 = vadd.f32 %v1590, %v1748
      %v1750 = vpop.f32.mrb[0].mxu0
      %1751 = vmatprep.mubr.bf16.mxu0 0
      %1752 = vmatmul.mubr.bf16.gmra.mrb[0].mxu0 %v1272
      %v1753 = vpop.f32.mrb[0].mxu0
      %v1754 = vadd.f32 %v1595, %v1753
      %v1755 = vpop.f32.mrb[0].mxu0
      %v1756 = vpop.f32.mrb[0].mxu0
      %v1757 = vadd.f32 %v1598, %v1756
      %v1758 = vpop.f32.mrb[0].mxu0
      %1759 = vmatprep.mubr.bf16.mxu0 0
      %1760 = vmatmul.mubr.bf16.gmra.mrb[0].mxu0 %v1275
      %v1761 = vpop.f32.mrb[0].mxu0
      %v1762 = vadd.f32 %v1603, %v1761
      %v1763 = vpop.f32.mrb[0].mxu0
      %v1764 = vpop.f32.mrb[0].mxu0
      %v1765 = vadd.f32 %v1606, %v1764
      %v1766 = vpop.f32.mrb[0].mxu0
      %1767 = vmatprep.mubr.bf16.mxu0 0
      %1768 = vmatmul.mubr.bf16.gmra.mrb[0].mxu0 %v1278
      %v1769 = vpop.f32.mrb[0].mxu0
      %v1770 = vadd.f32 %v1611, %v1769
      %v1771 = vpop.f32.mrb[0].mxu0
      %v1772 = vpop.f32.mrb[0].mxu0
      %v1773 = vadd.f32 %v1614, %v1772
      %v1774 = vpop.f32.mrb[0].mxu0
      %1775 = vmatprep.mubr.bf16.mxu0 0
      %1776 = vmatmul.mubr.bf16.gmra.mrb[0].mxu0 %v1281
      %v1777 = vpop.f32.mrb[0].mxu0
      %v1778 = vadd.f32 %v1619, %v1777
      %v1779 = vpop.f32.mrb[0].mxu0
      %v1780 = vpop.f32.mrb[0].mxu0
      %v1781 = vadd.f32 %v1622, %v1780
      %v1782 = vpop.f32.mrb[0].mxu0
      %1783 = vmatprep.mubr.bf16.mxu0 0
      %1784 = vmatmul.mubr.bf16.gmra.mrb[0].mxu0 %v1284
      %v1785 = vpop.f32.mrb[0].mxu0
      %v1786 = vadd.f32 %v1627, %v1785
      %v1787 = vpop.f32.mrb[0].mxu0
      %v1788 = vpop.f32.mrb[0].mxu0
      %v1789 = vadd.f32 %v1630, %v1788
      %v1790 = vpop.f32.mrb[0].mxu0
      %1791 = vmatprep.mubr.bf16.mxu0 0
      %1792 = vmatmul.mubr.bf16.gmra.mrb[0].mxu0 %v1287
      %v1793 = vpop.f32.mrb[0].mxu0
      %v1794 = vpop.f32.mrb[0].mxu0
      %v1795 = vpop.f32.mrb[0].mxu0
      %v1796 = vpop.f32.mrb[0].mxu0
      %1797 = vdwg.mxu0
      %s1798 = scalar_lea.vmem %s3, 192
      %v1799 = vld [vmem:[%s1798] sm:$0xf]
      %v1800 = vld [vmem:[%s1798 + $0x4] sm:$0xf]
      %v1801 = vld [vmem:[%s1798 + $0x8] sm:$0xf]
      %v1802 = vld [vmem:[%s1798 + $0xc] sm:$0xf]
      %v1803 = vld [vmem:[%s1798 + $0x10] sm:$0xf]
      %v1804 = vld [vmem:[%s1798 + $0x14] sm:$0xf]
      %v1805 = vld [vmem:[%s1798 + $0x18] sm:$0xf]
      %v1806 = vld [vmem:[%s1798 + $0x1c] sm:$0xf]
      %v1807 = vld [vmem:[%s1798 + $0x20] sm:$0xf]
      %v1808 = vld [vmem:[%s1798 + $0x24] sm:$0xf]
      %v1809 = vld [vmem:[%s1798 + $0x28] sm:$0xf]
      %v1810 = vld [vmem:[%s1798 + $0x2c] sm:$0xf]
      %v1811 = vld [vmem:[%s1798 + $0x30] sm:$0xf]
      %v1812 = vld [vmem:[%s1798 + $0x34] sm:$0xf]
      %v1813 = vld [vmem:[%s1798 + $0x38] sm:$0xf]
      %v1814 = vld [vmem:[%s1798 + $0x3c] sm:$0xf]
      %v1815 = vld [vmem:[%s1798 + $0x40] sm:$0xf]
      %v1816 = vld [vmem:[%s1798 + $0x44] sm:$0xf]
      %v1817 = vld [vmem:[%s1798 + $0x48] sm:$0xf]
      %v1818 = vld [vmem:[%s1798 + $0x4c] sm:$0xf]
      %v1819 = vld [vmem:[%s1798 + $0x50] sm:$0xf]
      %v1820 = vld [vmem:[%s1798 + $0x54] sm:$0xf]
      %v1821 = vld [vmem:[%s1798 + $0x58] sm:$0xf]
      %v1822 = vld [vmem:[%s1798 + $0x5c] sm:$0xf]
      %v1823 = vld [vmem:[%s1798 + $0x60] sm:$0xf]
      %v1824 = vld [vmem:[%s1798 + $0x64] sm:$0xf]
      %v1825 = vld [vmem:[%s1798 + $0x68] sm:$0xf]
      %v1826 = vld [vmem:[%s1798 + $0x6c] sm:$0xf]
      %v1827 = vld [vmem:[%s1798 + $0x70] sm:$0xf]
      %v1828 = vld [vmem:[%s1798 + $0x74] sm:$0xf]
      %v1829 = vld [vmem:[%s1798 + $0x78] sm:$0xf]
      %v1830 = vld [vmem:[%s1798 + $0x7c] sm:$0xf]
      %v1831 = vld [vmem:[%s1798 + $0x80] sm:$0xf]
      %v1832 = vld [vmem:[%s1798 + $0x84] sm:$0xf]
      %v1833 = vld [vmem:[%s1798 + $0x88] sm:$0xf]
      %v1834 = vld [vmem:[%s1798 + $0x8c] sm:$0xf]
      %v1835 = vld [vmem:[%s1798 + $0x90] sm:$0xf]
      %v1836 = vld [vmem:[%s1798 + $0x94] sm:$0xf]
      %v1837 = vld [vmem:[%s1798 + $0x98] sm:$0xf]
      %v1838 = vld [vmem:[%s1798 + $0x9c] sm:$0xf]
      %v1839 = vld [vmem:[%s1798 + $0xa0] sm:$0xf]
      %v1840 = vld [vmem:[%s1798 + $0xa4] sm:$0xf]
      %v1841 = vld [vmem:[%s1798 + $0xa8] sm:$0xf]
      %v1842 = vld [vmem:[%s1798 + $0xac] sm:$0xf]
      %v1843 = vld [vmem:[%s1798 + $0xb0] sm:$0xf]
      %v1844 = vld [vmem:[%s1798 + $0xb4] sm:$0xf]
      %v1845 = vld [vmem:[%s1798 + $0xb8] sm:$0xf]
      %v1846 = vld [vmem:[%s1798 + $0xbc] sm:$0xf]
      %v1895 = vunpack.c.l.b16 %v1799
      %v1896 = vunpack.c.l.b16 %v1800
      %v1897 = vunpack.c.l.b16 %v1801
      %v1898 = vunpack.c.l.b16 %v1802
      %v1899 = vunpack.c.l.b16 %v1803
      %v1900 = vunpack.c.l.b16 %v1804
      %v1901 = vunpack.c.l.b16 %v1805
      %v1902 = vunpack.c.l.b16 %v1806
      %v1903 = vunpack.c.l.b16 %v1807
      %v1904 = vunpack.c.l.b16 %v1808
      %v1905 = vunpack.c.l.b16 %v1809
      %v1906 = vunpack.c.l.b16 %v1810
      %v1907 = vunpack.c.l.b16 %v1811
      %v1908 = vunpack.c.l.b16 %v1812
      %v1909 = vunpack.c.l.b16 %v1813
      %v1910 = vunpack.c.l.b16 %v1814
      %v1911 = vunpack.c.l.b16 %v1815
      %v1912 = vunpack.c.l.b16 %v1816
      %v1913 = vunpack.c.l.b16 %v1817
      %v1914 = vunpack.c.l.b16 %v1818
      %v1915 = vunpack.c.l.b16 %v1819
      %v1916 = vunpack.c.l.b16 %v1820
      %v1917 = vunpack.c.l.b16 %v1821
      %v1918 = vunpack.c.l.b16 %v1822
      %v1919 = vunpack.c.l.b16 %v1823
      %v1920 = vunpack.c.l.b16 %v1824
      %v1921 = vunpack.c.l.b16 %v1825
      %v1922 = vunpack.c.l.b16 %v1826
      %v1923 = vunpack.c.l.b16 %v1827
      %v1924 = vunpack.c.l.b16 %v1828
      %v1925 = vunpack.c.l.b16 %v1829
      %v1926 = vunpack.c.l.b16 %v1830
      %v1927 = vunpack.c.l.b16 %v1831
      %v1928 = vunpack.c.l.b16 %v1832
      %v1929 = vunpack.c.l.b16 %v1833
      %v1930 = vunpack.c.l.b16 %v1834
      %v1931 = vunpack.c.l.b16 %v1835
      %v1932 = vunpack.c.l.b16 %v1836
      %v1933 = vunpack.c.l.b16 %v1837
      %v1934 = vunpack.c.l.b16 %v1838
      %v1935 = vunpack.c.l.b16 %v1839
      %v1936 = vunpack.c.l.b16 %v1840
      %v1937 = vunpack.c.l.b16 %v1841
      %v1938 = vunpack.c.l.b16 %v1842
      %v1939 = vunpack.c.l.b16 %v1843
      %v1940 = vunpack.c.l.b16 %v1844
      %v1941 = vunpack.c.l.b16 %v1845
      %v1942 = vunpack.c.l.b16 %v1846
      %v1943 = vpack.c.b16 %v1896, %v1895
      %v1944 = vpack.c.b16 %v1898, %v1897
      %v1945 = vpack.c.b16 %v1900, %v1899
      %v1946 = vpack.c.b16 %v1902, %v1901
      %v1947 = vpack.c.b16 %v1904, %v1903
      %v1948 = vpack.c.b16 %v1906, %v1905
      %v1949 = vpack.c.b16 %v1908, %v1907
      %v1950 = vpack.c.b16 %v1910, %v1909
      %v1951 = vpack.c.b16 %v1912, %v1911
      %v1952 = vpack.c.b16 %v1914, %v1913
      %v1953 = vpack.c.b16 %v1916, %v1915
      %v1954 = vpack.c.b16 %v1918, %v1917
      %v1955 = vpack.c.b16 %v1920, %v1919
      %v1956 = vpack.c.b16 %v1922, %v1921
      %v1957 = vpack.c.b16 %v1924, %v1923
      %v1958 = vpack.c.b16 %v1926, %v1925
      %v1959 = vpack.c.b16 %v1928, %v1927
      %v1960 = vpack.c.b16 %v1930, %v1929
      %v1961 = vpack.c.b16 %v1932, %v1931
      %v1962 = vpack.c.b16 %v1934, %v1933
      %v1963 = vpack.c.b16 %v1936, %v1935
      %v1964 = vpack.c.b16 %v1938, %v1937
      %v1965 = vpack.c.b16 %v1940, %v1939
      %v1966 = vpack.c.b16 %v1942, %v1941
      %1991 = vmatprep.subr.bf16.mxu0 0
      %1992 = vmatpush1.bf16.msra.mxu0 %v1943
      %1993 = vmatprep.subr.bf16.mxu0 0
      %1994 = vmatpush1.bf16.msra.mxu0 %v1944
      %1995 = vmatprep.subr.bf16.mxu0 0
      %1996 = vmatpush1.bf16.msra.mxu0 %v1945
      %1997 = vmatprep.subr.bf16.mxu0 0
      %1998 = vmatpush1.bf16.msra.mxu0 %v1946
      %1999 = vmatprep.subr.bf16.mxu0 0
      %2000 = vmatpush1.bf16.msra.mxu0 %v1947
      %2001 = vmatprep.subr.bf16.mxu0 0
      %2002 = vmatpush1.bf16.msra.mxu0 %v1948
      %2003 = vmatprep.subr.bf16.mxu0 0
      %2004 = vmatpush1.bf16.msra.mxu0 %v1949
      %2005 = vmatprep.subr.bf16.mxu0 0
      %2006 = vmatpush1.bf16.msra.mxu0 %v1950
      %2007 = vmatprep.subr.bf16.mxu0 0
      %2008 = vmatpush1.bf16.msra.mxu0 %v1951
      %2009 = vmatprep.subr.bf16.mxu0 0
      %2010 = vmatpush1.bf16.msra.mxu0 %v1952
      %2011 = vmatprep.subr.bf16.mxu0 0
      %2012 = vmatpush1.bf16.msra.mxu0 %v1953
      %2013 = vmatprep.subr.bf16.mxu0 0
      %2014 = vmatpush1.bf16.msra.mxu0 %v1954
      %2015 = vmatprep.subr.bf16.mxu0 0
      %2016 = vmatpush1.bf16.msra.mxu0 %v1955
      %2017 = vmatprep.subr.bf16.mxu0 0
      %2018 = vmatpush1.bf16.msra.mxu0 %v1956
      %2019 = vmatprep.subr.bf16.mxu0 0
      %2020 = vmatpush1.bf16.msra.mxu0 %v1957
      %2021 = vmatprep.subr.bf16.mxu0 0
      %2022 = vmatpush1.bf16.msra.mxu0 %v1958
      %2023 = vmatprep.mubr.bf16.mxu0 %v1241
      %2024 = vmatmul.mubr.bf16.gmra.mrb[0].mxu0 %v1240
      %v2025 = vpop.f32.mrb[0].mxu0
      %v2026 = vadd.f32 0.0, %v2025
      %v2027 = vpop.f32.mrb[0].mxu0
      %v2028 = vpop.f32.mrb[0].mxu0
      %v2029 = vadd.f32 0.0, %v2028
      %v2030 = vpop.f32.mrb[0].mxu0
      %2031 = vmatprep.mubr.bf16.mxu0 %v1244
      %2032 = vmatmul.mubr.bf16.gmra.mrb[0].mxu0 %v1243
      %v2033 = vpop.f32.mrb[0].mxu0
      %v2034 = vadd.f32 0.0, %v2033
      %v2035 = vpop.f32.mrb[0].mxu0
      %v2036 = vpop.f32.mrb[0].mxu0
      %v2037 = vadd.f32 0.0, %v2036
      %v2038 = vpop.f32.mrb[0].mxu0
      %2039 = vmatprep.mubr.bf16.mxu0 %v1247
      %2040 = vmatmul.mubr.bf16.gmra.mrb[0].mxu0 %v1246
      %v2041 = vpop.f32.mrb[0].mxu0
      %v2042 = vadd.f32 0.0, %v2041
      %v2043 = vpop.f32.mrb[0].mxu0
      %v2044 = vpop.f32.mrb[0].mxu0
      %v2045 = vadd.f32 0.0, %v2044
      %v2046 = vpop.f32.mrb[0].mxu0
      %2047 = vmatprep.mubr.bf16.mxu0 %v1250
      %2048 = vmatmul.mubr.bf16.gmra.mrb[0].mxu0 %v1249
      %v2049 = vpop.f32.mrb[0].mxu0
      %v2050 = vadd.f32 0.0, %v2049
      %v2051 = vpop.f32.mrb[0].mxu0
      %v2052 = vpop.f32.mrb[0].mxu0
      %v2053 = vadd.f32 0.0, %v2052
      %v2054 = vpop.f32.mrb[0].mxu0
      %2055 = vmatprep.mubr.bf16.mxu0 %v1253
      %2056 = vmatmul.mubr.bf16.gmra.mrb[0].mxu0 %v1252
      %v2057 = vpop.f32.mrb[0].mxu0
      %v2058 = vadd.f32 0.0, %v2057
      %v2059 = vpop.f32.mrb[0].mxu0
      %v2060 = vpop.f32.mrb[0].mxu0
      %v2061 = vadd.f32 0.0, %v2060
      %v2062 = vpop.f32.mrb[0].mxu0
      %2063 = vmatprep.mubr.bf16.mxu0 %v1256
      %2064 = vmatmul.mubr.bf16.gmra.mrb[0].mxu0 %v1255
      %v2065 = vpop.f32.mrb[0].mxu0
      %v2066 = vadd.f32 0.0, %v2065
      %v2067 = vpop.f32.mrb[0].mxu0
      %v2068 = vpop.f32.mrb[0].mxu0
      %v2069 = vadd.f32 0.0, %v2068
      %v2070 = vpop.f32.mrb[0].mxu0
      %2071 = vmatprep.mubr.bf16.mxu0 %v1259
      %2072 = vmatmul.mubr.bf16.gmra.mrb[0].mxu0 %v1258
      %v2073 = vpop.f32.mrb[0].mxu0
      %v2074 = vadd.f32 0.0, %v2073
      %v2075 = vpop.f32.mrb[0].mxu0
      %v2076 = vpop.f32.mrb[0].mxu0
      %v2077 = vadd.f32 0.0, %v2076
      %v2078 = vpop.f32.mrb[0].mxu0
      %2079 = vmatprep.mubr.bf16.mxu0 %v1262
      %2080 = vmatmul.mubr.bf16.gmra.mrb[0].mxu0 %v1261
      %v2081 = vpop.f32.mrb[0].mxu0
      %v2082 = vadd.f32 0.0, %v2081
      %v2083 = vpop.f32.mrb[0].mxu0
      %v2084 = vpop.f32.mrb[0].mxu0
      %v2085 = vadd.f32 0.0, %v2084
      %v2086 = vpop.f32.mrb[0].mxu0
      %2087 = vmatprep.mubr.bf16.mxu0 %v1265
      %2088 = vmatmul.mubr.bf16.gmra.mrb[0].mxu0 %v1264
      %v2089 = vpop.f32.mrb[0].mxu0
      %v2090 = vadd.f32 0.0, %v2089
      %v2091 = vpop.f32.mrb[0].mxu0
      %v2092 = vpop.f32.mrb[0].mxu0
      %v2093 = vadd.f32 0.0, %v2092
      %v2094 = vpop.f32.mrb[0].mxu0
      %2095 = vmatprep.mubr.bf16.mxu0 %v1268
      %2096 = vmatmul.mubr.bf16.gmra.mrb[0].mxu0 %v1267
      %v2097 = vpop.f32.mrb[0].mxu0
      %v2098 = vadd.f32 0.0, %v2097
      %v2099 = vpop.f32.mrb[0].mxu0
      %v2100 = vpop.f32.mrb[0].mxu0
      %v2101 = vadd.f32 0.0, %v2100
      %v2102 = vpop.f32.mrb[0].mxu0
      %2103 = vmatprep.mubr.bf16.mxu0 %v1271
      %2104 = vmatmul.mubr.bf16.gmra.mrb[0].mxu0 %v1270
      %v2105 = vpop.f32.mrb[0].mxu0
      %v2106 = vadd.f32 0.0, %v2105
      %v2107 = vpop.f32.mrb[0].mxu0
      %v2108 = vpop.f32.mrb[0].mxu0
      %v2109 = vadd.f32 0.0, %v2108
      %v2110 = vpop.f32.mrb[0].mxu0
      %2111 = vmatprep.mubr.bf16.mxu0 %v1274
      %2112 = vmatmul.mubr.bf16.gmra.mrb[0].mxu0 %v1273
      %v2113 = vpop.f32.mrb[0].mxu0
      %v2114 = vadd.f32 0.0, %v2113
      %v2115 = vpop.f32.mrb[0].mxu0
      %v2116 = vpop.f32.mrb[0].mxu0
      %v2117 = vadd.f32 0.0, %v2116
      %v2118 = vpop.f32.mrb[0].mxu0
      %2119 = vmatprep.mubr.bf16.mxu0 %v1277
      %2120 = vmatmul.mubr.bf16.gmra.mrb[0].mxu0 %v1276
      %v2121 = vpop.f32.mrb[0].mxu0
      %v2122 = vadd.f32 0.0, %v2121
      %v2123 = vpop.f32.mrb[0].mxu0
      %v2124 = vpop.f32.mrb[0].mxu0
      %v2125 = vadd.f32 0.0, %v2124
      %v2126 = vpop.f32.mrb[0].mxu0
      %2127 = vmatprep.mubr.bf16.mxu0 %v1280
      %2128 = vmatmul.mubr.bf16.gmra.mrb[0].mxu0 %v1279
      %v2129 = vpop.f32.mrb[0].mxu0
      %v2130 = vadd.f32 0.0, %v2129
      %v2131 = vpop.f32.mrb[0].mxu0
      %v2132 = vpop.f32.mrb[0].mxu0
      %v2133 = vadd.f32 0.0, %v2132
      %v2134 = vpop.f32.mrb[0].mxu0
      %2135 = vmatprep.mubr.bf16.mxu0 %v1283
      %2136 = vmatmul.mubr.bf16.gmra.mrb[0].mxu0 %v1282
      %v2137 = vpop.f32.mrb[0].mxu0
      %v2138 = vadd.f32 0.0, %v2137
      %v2139 = vpop.f32.mrb[0].mxu0
      %v2140 = vpop.f32.mrb[0].mxu0
      %v2141 = vadd.f32 0.0, %v2140
      %v2142 = vpop.f32.mrb[0].mxu0
      %2143 = vmatprep.mubr.bf16.mxu0 %v1286
      %2144 = vmatmul.mubr.bf16.gmra.mrb[0].mxu0 %v1285
      %v2145 = vpop.f32.mrb[0].mxu0
      %v2146 = vadd.f32 0.0, %v2145
      %v2147 = vpop.f32.mrb[0].mxu0
      %v2148 = vpop.f32.mrb[0].mxu0
      %v2149 = vadd.f32 0.0, %v2148
      %v2150 = vpop.f32.mrb[0].mxu0
      %2151 = vdwg.mxu0
      %2152 = vmatprep.subr.bf16.mxu0 0
      %2153 = vmatpush1.bf16.msra.mxu0 %v1959
      %2154 = vmatprep.subr.bf16.mxu0 0
      %2155 = vmatpush1.bf16.msra.mxu0 %v1960
      %2156 = vmatprep.subr.bf16.mxu0 0
      %2157 = vmatpush1.bf16.msra.mxu0 %v1961
      %2158 = vmatprep.subr.bf16.mxu0 0
      %2159 = vmatpush1.bf16.msra.mxu0 %v1962
      %2160 = vmatprep.subr.bf16.mxu0 0
      %2161 = vmatpush1.bf16.msra.mxu0 %v1963
      %2162 = vmatprep.subr.bf16.mxu0 0
      %2163 = vmatpush1.bf16.msra.mxu0 %v1964
      %2164 = vmatprep.subr.bf16.mxu0 0
      %2165 = vmatpush1.bf16.msra.mxu0 %v1965
      %2166 = vmatprep.subr.bf16.mxu0 0
      %2167 = vmatpush1.bf16.msra.mxu0 %v1966
      %2168 = vmatprep.subr.bf16.mxu0 0
      %2169 = vmatpush1.bf16.msra.mxu0 0
      %2170 = vmatprep.subr.bf16.mxu0 0
      %2171 = vmatpush1.bf16.msra.mxu0 0
      %2172 = vmatprep.subr.bf16.mxu0 0
      %2173 = vmatpush1.bf16.msra.mxu0 0
      %2174 = vmatprep.subr.bf16.mxu0 0
      %2175 = vmatpush1.bf16.msra.mxu0 0
      %2176 = vmatprep.subr.bf16.mxu0 0
      %2177 = vmatpush1.bf16.msra.mxu0 0
      %2178 = vmatprep.subr.bf16.mxu0 0
      %2179 = vmatpush1.bf16.msra.mxu0 0
      %2180 = vmatprep.subr.bf16.mxu0 0
      %2181 = vmatpush1.bf16.msra.mxu0 0
      %2182 = vmatprep.subr.bf16.mxu0 0
      %2183 = vmatpush1.bf16.msra.mxu0 0
      %2184 = vmatprep.mubr.bf16.mxu0 0
      %2185 = vmatmul.mubr.bf16.gmra.mrb[0].mxu0 %v1242
      %v2186 = vpop.f32.mrb[0].mxu0
      %v2187 = vadd.f32 %v2026, %v2186
      %v2188 = vpop.f32.mrb[0].mxu0
      %v2189 = vpop.f32.mrb[0].mxu0
      %v2190 = vadd.f32 %v2029, %v2189
      %v2191 = vpop.f32.mrb[0].mxu0
      %2192 = vmatprep.mubr.bf16.mxu0 0
      %2193 = vmatmul.mubr.bf16.gmra.mrb[0].mxu0 %v1245
      %v2194 = vpop.f32.mrb[0].mxu0
      %v2195 = vadd.f32 %v2034, %v2194
      %v2196 = vpop.f32.mrb[0].mxu0
      %v2197 = vpop.f32.mrb[0].mxu0
      %v2198 = vadd.f32 %v2037, %v2197
      %v2199 = vpop.f32.mrb[0].mxu0
      %2200 = vmatprep.mubr.bf16.mxu0 0
      %2201 = vmatmul.mubr.bf16.gmra.mrb[0].mxu0 %v1248
      %v2202 = vpop.f32.mrb[0].mxu0
      %v2203 = vadd.f32 %v2042, %v2202
      %v2204 = vpop.f32.mrb[0].mxu0
      %v2205 = vpop.f32.mrb[0].mxu0
      %v2206 = vadd.f32 %v2045, %v2205
      %v2207 = vpop.f32.mrb[0].mxu0
      %2208 = vmatprep.mubr.bf16.mxu0 0
      %2209 = vmatmul.mubr.bf16.gmra.mrb[0].mxu0 %v1251
      %v2210 = vpop.f32.mrb[0].mxu0
      %v2211 = vadd.f32 %v2050, %v2210
      %v2212 = vpop.f32.mrb[0].mxu0
      %v2213 = vpop.f32.mrb[0].mxu0
      %v2214 = vadd.f32 %v2053, %v2213
      %v2215 = vpop.f32.mrb[0].mxu0
      %2216 = vmatprep.mubr.bf16.mxu0 0
      %2217 = vmatmul.mubr.bf16.gmra.mrb[0].mxu0 %v1254
      %v2218 = vpop.f32.mrb[0].mxu0
      %v2219 = vadd.f32 %v2058, %v2218
      %v2220 = vpop.f32.mrb[0].mxu0
      %v2221 = vpop.f32.mrb[0].mxu0
      %v2222 = vadd.f32 %v2061, %v2221
      %v2223 = vpop.f32.mrb[0].mxu0
      %2224 = vmatprep.mubr.bf16.mxu0 0
      %2225 = vmatmul.mubr.bf16.gmra.mrb[0].mxu0 %v1257
      %v2226 = vpop.f32.mrb[0].mxu0
      %v2227 = vadd.f32 %v2066, %v2226
      %v2228 = vpop.f32.mrb[0].mxu0
      %v2229 = vpop.f32.mrb[0].mxu0
      %v2230 = vadd.f32 %v2069, %v2229
      %v2231 = vpop.f32.mrb[0].mxu0
      %2232 = vmatprep.mubr.bf16.mxu0 0
      %2233 = vmatmul.mubr.bf16.gmra.mrb[0].mxu0 %v1260
      %v2234 = vpop.f32.mrb[0].mxu0
      %v2235 = vadd.f32 %v2074, %v2234
      %v2236 = vpop.f32.mrb[0].mxu0
      %v2237 = vpop.f32.mrb[0].mxu0
      %v2238 = vadd.f32 %v2077, %v2237
      %v2239 = vpop.f32.mrb[0].mxu0
      %2240 = vmatprep.mubr.bf16.mxu0 0
      %2241 = vmatmul.mubr.bf16.gmra.mrb[0].mxu0 %v1263
      %v2242 = vpop.f32.mrb[0].mxu0
      %v2243 = vadd.f32 %v2082, %v2242
      %v2244 = vpop.f32.mrb[0].mxu0
      %v2245 = vpop.f32.mrb[0].mxu0
      %v2246 = vadd.f32 %v2085, %v2245
      %v2247 = vpop.f32.mrb[0].mxu0
      %2248 = vmatprep.mubr.bf16.mxu0 0
      %2249 = vmatmul.mubr.bf16.gmra.mrb[0].mxu0 %v1266
      %v2250 = vpop.f32.mrb[0].mxu0
      %v2251 = vadd.f32 %v2090, %v2250
      %v2252 = vpop.f32.mrb[0].mxu0
      %v2253 = vpop.f32.mrb[0].mxu0
      %v2254 = vadd.f32 %v2093, %v2253
      %v2255 = vpop.f32.mrb[0].mxu0
      %2256 = vmatprep.mubr.bf16.mxu0 0
      %2257 = vmatmul.mubr.bf16.gmra.mrb[0].mxu0 %v1269
      %v2258 = vpop.f32.mrb[0].mxu0
      %v2259 = vadd.f32 %v2098, %v2258
      %v2260 = vpop.f32.mrb[0].mxu0
      %v2261 = vpop.f32.mrb[0].mxu0
      %v2262 = vadd.f32 %v2101, %v2261
      %v2263 = vpop.f32.mrb[0].mxu0
      %2264 = vmatprep.mubr.bf16.mxu0 0
      %2265 = vmatmul.mubr.bf16.gmra.mrb[0].mxu0 %v1272
      %v2266 = vpop.f32.mrb[0].mxu0
      %v2267 = vadd.f32 %v2106, %v2266
      %v2268 = vpop.f32.mrb[0].mxu0
      %v2269 = vpop.f32.mrb[0].mxu0
      %v2270 = vadd.f32 %v2109, %v2269
      %v2271 = vpop.f32.mrb[0].mxu0
      %2272 = vmatprep.mubr.bf16.mxu0 0
      %2273 = vmatmul.mubr.bf16.gmra.mrb[0].mxu0 %v1275
      %v2274 = vpop.f32.mrb[0].mxu0
      %v2275 = vadd.f32 %v2114, %v2274
      %v2276 = vpop.f32.mrb[0].mxu0
      %v2277 = vpop.f32.mrb[0].mxu0
      %v2278 = vadd.f32 %v2117, %v2277
      %v2279 = vpop.f32.mrb[0].mxu0
      %2280 = vmatprep.mubr.bf16.mxu0 0
      %2281 = vmatmul.mubr.bf16.gmra.mrb[0].mxu0 %v1278
      %v2282 = vpop.f32.mrb[0].mxu0
      %v2283 = vadd.f32 %v2122, %v2282
      %v2284 = vpop.f32.mrb[0].mxu0
      %v2285 = vpop.f32.mrb[0].mxu0
      %v2286 = vadd.f32 %v2125, %v2285
      %v2287 = vpop.f32.mrb[0].mxu0
      %2288 = vmatprep.mubr.bf16.mxu0 0
      %2289 = vmatmul.mubr.bf16.gmra.mrb[0].mxu0 %v1281
      %v2290 = vpop.f32.mrb[0].mxu0
      %v2291 = vadd.f32 %v2130, %v2290
      %v2292 = vpop.f32.mrb[0].mxu0
      %v2293 = vpop.f32.mrb[0].mxu0
      %v2294 = vadd.f32 %v2133, %v2293
      %v2295 = vpop.f32.mrb[0].mxu0
      %2296 = vmatprep.mubr.bf16.mxu0 0
      %2297 = vmatmul.mubr.bf16.gmra.mrb[0].mxu0 %v1284
      %v2298 = vpop.f32.mrb[0].mxu0
      %v2299 = vadd.f32 %v2138, %v2298
      %v2300 = vpop.f32.mrb[0].mxu0
      %v2301 = vpop.f32.mrb[0].mxu0
      %v2302 = vadd.f32 %v2141, %v2301
      %v2303 = vpop.f32.mrb[0].mxu0
      %2304 = vmatprep.mubr.bf16.mxu0 0
      %2305 = vmatmul.mubr.bf16.gmra.mrb[0].mxu0 %v1287
      %v2306 = vpop.f32.mrb[0].mxu0
      %v2307 = vadd.f32 %v2146, %v2306
      %v2308 = vpop.f32.mrb[0].mxu0
      %v2309 = vpop.f32.mrb[0].mxu0
      %v2310 = vadd.f32 %v2149, %v2309
      %v2311 = vpop.f32.mrb[0].mxu0
      %2312 = vdwg.mxu0
      %s2313 = scalar_lea.vmem %s3, 384
      %v2314 = vld [vmem:[%s2313] sm:$0xf]
      %v2315 = vld [vmem:[%s2313 + $0x4] sm:$0xf]
      %v2316 = vld [vmem:[%s2313 + $0x8] sm:$0xf]
      %v2317 = vld [vmem:[%s2313 + $0xc] sm:$0xf]
      %v2318 = vld [vmem:[%s2313 + $0x10] sm:$0xf]
      %v2319 = vld [vmem:[%s2313 + $0x14] sm:$0xf]
      %v2320 = vld [vmem:[%s2313 + $0x18] sm:$0xf]
      %v2321 = vld [vmem:[%s2313 + $0x1c] sm:$0xf]
      %v2322 = vld [vmem:[%s2313 + $0x20] sm:$0xf]
      %v2323 = vld [vmem:[%s2313 + $0x24] sm:$0xf]
      %v2324 = vld [vmem:[%s2313 + $0x28] sm:$0xf]
      %v2325 = vld [vmem:[%s2313 + $0x2c] sm:$0xf]
      %v2326 = vld [vmem:[%s2313 + $0x30] sm:$0xf]
      %v2327 = vld [vmem:[%s2313 + $0x34] sm:$0xf]
      %v2328 = vld [vmem:[%s2313 + $0x38] sm:$0xf]
      %v2329 = vld [vmem:[%s2313 + $0x3c] sm:$0xf]
      %v2330 = vld [vmem:[%s2313 + $0x40] sm:$0xf]
      %v2331 = vld [vmem:[%s2313 + $0x44] sm:$0xf]
      %v2332 = vld [vmem:[%s2313 + $0x48] sm:$0xf]
      %v2333 = vld [vmem:[%s2313 + $0x4c] sm:$0xf]
      %v2334 = vld [vmem:[%s2313 + $0x50] sm:$0xf]
      %v2335 = vld [vmem:[%s2313 + $0x54] sm:$0xf]
      %v2336 = vld [vmem:[%s2313 + $0x58] sm:$0xf]
      %v2337 = vld [vmem:[%s2313 + $0x5c] sm:$0xf]
      %v2338 = vld [vmem:[%s2313 + $0x60] sm:$0xf]
      %v2339 = vld [vmem:[%s2313 + $0x64] sm:$0xf]
      %v2340 = vld [vmem:[%s2313 + $0x68] sm:$0xf]
      %v2341 = vld [vmem:[%s2313 + $0x6c] sm:$0xf]
      %v2342 = vld [vmem:[%s2313 + $0x70] sm:$0xf]
      %v2343 = vld [vmem:[%s2313 + $0x74] sm:$0xf]
      %v2344 = vld [vmem:[%s2313 + $0x78] sm:$0xf]
      %v2345 = vld [vmem:[%s2313 + $0x7c] sm:$0xf]
      %v2346 = vld [vmem:[%s2313 + $0x80] sm:$0xf]
      %v2347 = vld [vmem:[%s2313 + $0x84] sm:$0xf]
      %v2348 = vld [vmem:[%s2313 + $0x88] sm:$0xf]
      %v2349 = vld [vmem:[%s2313 + $0x8c] sm:$0xf]
      %v2350 = vld [vmem:[%s2313 + $0x90] sm:$0xf]
      %v2351 = vld [vmem:[%s2313 + $0x94] sm:$0xf]
      %v2352 = vld [vmem:[%s2313 + $0x98] sm:$0xf]
      %v2353 = vld [vmem:[%s2313 + $0x9c] sm:$0xf]
      %v2354 = vld [vmem:[%s2313 + $0xa0] sm:$0xf]
      %v2355 = vld [vmem:[%s2313 + $0xa4] sm:$0xf]
      %v2356 = vld [vmem:[%s2313 + $0xa8] sm:$0xf]
      %v2357 = vld [vmem:[%s2313 + $0xac] sm:$0xf]
      %v2358 = vld [vmem:[%s2313 + $0xb0] sm:$0xf]
      %v2359 = vld [vmem:[%s2313 + $0xb4] sm:$0xf]
      %v2360 = vld [vmem:[%s2313 + $0xb8] sm:$0xf]
      %v2361 = vld [vmem:[%s2313 + $0xbc] sm:$0xf]
      %v2410 = vunpack.c.l.b16 %v2314
      %v2411 = vunpack.c.l.b16 %v2315
      %v2412 = vunpack.c.l.b16 %v2316
      %v2413 = vunpack.c.l.b16 %v2317
      %v2414 = vunpack.c.l.b16 %v2318
      %v2415 = vunpack.c.l.b16 %v2319
      %v2416 = vunpack.c.l.b16 %v2320
      %v2417 = vunpack.c.l.b16 %v2321
      %v2418 = vunpack.c.l.b16 %v2322
      %v2419 = vunpack.c.l.b16 %v2323
      %v2420 = vunpack.c.l.b16 %v2324
      %v2421 = vunpack.c.l.b16 %v2325
      %v2422 = vunpack.c.l.b16 %v2326
      %v2423 = vunpack.c.l.b16 %v2327
      %v2424 = vunpack.c.l.b16 %v2328
      %v2425 = vunpack.c.l.b16 %v2329
      %v2426 = vunpack.c.l.b16 %v2330
      %v2427 = vunpack.c.l.b16 %v2331
      %v2428 = vunpack.c.l.b16 %v2332
      %v2429 = vunpack.c.l.b16 %v2333
      %v2430 = vunpack.c.l.b16 %v2334
      %v2431 = vunpack.c.l.b16 %v2335
      %v2432 = vunpack.c.l.b16 %v2336
      %v2433 = vunpack.c.l.b16 %v2337
      %v2434 = vunpack.c.l.b16 %v2338
      %v2435 = vunpack.c.l.b16 %v2339
      %v2436 = vunpack.c.l.b16 %v2340
      %v2437 = vunpack.c.l.b16 %v2341
      %v2438 = vunpack.c.l.b16 %v2342
      %v2439 = vunpack.c.l.b16 %v2343
      %v2440 = vunpack.c.l.b16 %v2344
      %v2441 = vunpack.c.l.b16 %v2345
      %v2442 = vunpack.c.l.b16 %v2346
      %v2443 = vunpack.c.l.b16 %v2347
      %v2444 = vunpack.c.l.b16 %v2348
      %v2445 = vunpack.c.l.b16 %v2349
      %v2446 = vunpack.c.l.b16 %v2350
      %v2447 = vunpack.c.l.b16 %v2351
      %v2448 = vunpack.c.l.b16 %v2352
      %v2449 = vunpack.c.l.b16 %v2353
      %v2450 = vunpack.c.l.b16 %v2354
      %v2451 = vunpack.c.l.b16 %v2355
      %v2452 = vunpack.c.l.b16 %v2356
      %v2453 = vunpack.c.l.b16 %v2357
      %v2454 = vunpack.c.l.b16 %v2358
      %v2455 = vunpack.c.l.b16 %v2359
      %v2456 = vunpack.c.l.b16 %v2360
      %v2457 = vunpack.c.l.b16 %v2361
      %v2458 = vpack.c.b16 %v2411, %v2410
      %v2459 = vpack.c.b16 %v2413, %v2412
      %v2460 = vpack.c.b16 %v2415, %v2414
      %v2461 = vpack.c.b16 %v2417, %v2416
      %v2462 = vpack.c.b16 %v2419, %v2418
      %v2463 = vpack.c.b16 %v2421, %v2420
      %v2464 = vpack.c.b16 %v2423, %v2422
      %v2465 = vpack.c.b16 %v2425, %v2424
      %v2466 = vpack.c.b16 %v2427, %v2426
      %v2467 = vpack.c.b16 %v2429, %v2428
      %v2468 = vpack.c.b16 %v2431, %v2430
      %v2469 = vpack.c.b16 %v2433, %v2432
      %v2470 = vpack.c.b16 %v2435, %v2434
      %v2471 = vpack.c.b16 %v2437, %v2436
      %v2472 = vpack.c.b16 %v2439, %v2438
      %v2473 = vpack.c.b16 %v2441, %v2440
      %v2474 = vpack.c.b16 %v2443, %v2442
      %v2475 = vpack.c.b16 %v2445, %v2444
      %v2476 = vpack.c.b16 %v2447, %v2446
      %v2477 = vpack.c.b16 %v2449, %v2448
      %v2478 = vpack.c.b16 %v2451, %v2450
      %v2479 = vpack.c.b16 %v2453, %v2452
      %v2480 = vpack.c.b16 %v2455, %v2454
      %v2481 = vpack.c.b16 %v2457, %v2456
      %2506 = vmatprep.subr.bf16.mxu0 0
      %2507 = vmatpush1.bf16.msra.mxu0 %v2458
      %2508 = vmatprep.subr.bf16.mxu0 0
      %2509 = vmatpush1.bf16.msra.mxu0 %v2459
      %2510 = vmatprep.subr.bf16.mxu0 0
      %2511 = vmatpush1.bf16.msra.mxu0 %v2460
      %2512 = vmatprep.subr.bf16.mxu0 0
      %2513 = vmatpush1.bf16.msra.mxu0 %v2461
      %2514 = vmatprep.subr.bf16.mxu0 0
      %2515 = vmatpush1.bf16.msra.mxu0 %v2462
      %2516 = vmatprep.subr.bf16.mxu0 0
      %2517 = vmatpush1.bf16.msra.mxu0 %v2463
      %2518 = vmatprep.subr.bf16.mxu0 0
      %2519 = vmatpush1.bf16.msra.mxu0 %v2464
      %2520 = vmatprep.subr.bf16.mxu0 0
      %2521 = vmatpush1.bf16.msra.mxu0 %v2465
      %2522 = vmatprep.subr.bf16.mxu0 0
      %2523 = vmatpush1.bf16.msra.mxu0 %v2466
      %2524 = vmatprep.subr.bf16.mxu0 0
      %2525 = vmatpush1.bf16.msra.mxu0 %v2467
      %2526 = vmatprep.subr.bf16.mxu0 0
      %2527 = vmatpush1.bf16.msra.mxu0 %v2468
      %2528 = vmatprep.subr.bf16.mxu0 0
      %2529 = vmatpush1.bf16.msra.mxu0 %v2469
      %2530 = vmatprep.subr.bf16.mxu0 0
      %2531 = vmatpush1.bf16.msra.mxu0 %v2470
      %2532 = vmatprep.subr.bf16.mxu0 0
      %2533 = vmatpush1.bf16.msra.mxu0 %v2471
      %2534 = vmatprep.subr.bf16.mxu0 0
      %2535 = vmatpush1.bf16.msra.mxu0 %v2472
      %2536 = vmatprep.subr.bf16.mxu0 0
      %2537 = vmatpush1.bf16.msra.mxu0 %v2473
      %2538 = vmatprep.mubr.bf16.mxu0 %v1241
      %2539 = vmatmul.mubr.bf16.gmra.mrb[0].mxu0 %v1240
      %v2540 = vpop.f32.mrb[0].mxu0
      %v2541 = vpop.f32.mrb[0].mxu0
      %v2542 = vpop.f32.mrb[0].mxu0
      %v2543 = vpop.f32.mrb[0].mxu0
      %2544 = vmatprep.mubr.bf16.mxu0 %v1244
      %2545 = vmatmul.mubr.bf16.gmra.mrb[0].mxu0 %v1243
      %v2546 = vpop.f32.mrb[0].mxu0
      %v2547 = vadd.f32 0.0, %v2546
      %v2548 = vpop.f32.mrb[0].mxu0
      %v2549 = vpop.f32.mrb[0].mxu0
      %v2550 = vadd.f32 0.0, %v2549
      %v2551 = vpop.f32.mrb[0].mxu0
      %2552 = vmatprep.mubr.bf16.mxu0 %v1247
      %2553 = vmatmul.mubr.bf16.gmra.mrb[0].mxu0 %v1246
      %v2554 = vpop.f32.mrb[0].mxu0
      %v2555 = vadd.f32 0.0, %v2554
      %v2556 = vpop.f32.mrb[0].mxu0
      %v2557 = vpop.f32.mrb[0].mxu0
      %v2558 = vadd.f32 0.0, %v2557
      %v2559 = vpop.f32.mrb[0].mxu0
      %2560 = vmatprep.mubr.bf16.mxu0 %v1250
      %2561 = vmatmul.mubr.bf16.gmra.mrb[0].mxu0 %v1249
      %v2562 = vpop.f32.mrb[0].mxu0
      %v2563 = vadd.f32 0.0, %v2562
      %v2564 = vpop.f32.mrb[0].mxu0
      %v2565 = vpop.f32.mrb[0].mxu0
      %v2566 = vadd.f32 0.0, %v2565
      %v2567 = vpop.f32.mrb[0].mxu0
      %2568 = vmatprep.mubr.bf16.mxu0 %v1253
      %2569 = vmatmul.mubr.bf16.gmra.mrb[0].mxu0 %v1252
      %v2570 = vpop.f32.mrb[0].mxu0
      %v2571 = vadd.f32 0.0, %v2570
      %v2572 = vpop.f32.mrb[0].mxu0
      %v2573 = vpop.f32.mrb[0].mxu0
      %v2574 = vadd.f32 0.0, %v2573
      %v2575 = vpop.f32.mrb[0].mxu0
      %2576 = vmatprep.mubr.bf16.mxu0 %v1256
      %2577 = vmatmul.mubr.bf16.gmra.mrb[0].mxu0 %v1255
      %v2578 = vpop.f32.mrb[0].mxu0
      %v2579 = vadd.f32 0.0, %v2578
      %v2580 = vpop.f32.mrb[0].mxu0
      %v2581 = vpop.f32.mrb[0].mxu0
      %v2582 = vadd.f32 0.0, %v2581
      %v2583 = vpop.f32.mrb[0].mxu0
      %2584 = vmatprep.mubr.bf16.mxu0 %v1259
      %2585 = vmatmul.mubr.bf16.gmra.mrb[0].mxu0 %v1258
      %v2586 = vpop.f32.mrb[0].mxu0
      %v2587 = vadd.f32 0.0, %v2586
      %v2588 = vpop.f32.mrb[0].mxu0
      %v2589 = vpop.f32.mrb[0].mxu0
      %v2590 = vadd.f32 0.0, %v2589
      %v2591 = vpop.f32.mrb[0].mxu0
      %2592 = vmatprep.mubr.bf16.mxu0 %v1262
      %2593 = vmatmul.mubr.bf16.gmra.mrb[0].mxu0 %v1261
      %v2594 = vpop.f32.mrb[0].mxu0
      %v2595 = vadd.f32 0.0, %v2594
      %v2596 = vpop.f32.mrb[0].mxu0
      %v2597 = vpop.f32.mrb[0].mxu0
      %v2598 = vadd.f32 0.0, %v2597
      %v2599 = vpop.f32.mrb[0].mxu0
      %2600 = vmatprep.mubr.bf16.mxu0 %v1265
      %2601 = vmatmul.mubr.bf16.gmra.mrb[0].mxu0 %v1264
      %v2602 = vpop.f32.mrb[0].mxu0
      %v2603 = vadd.f32 0.0, %v2602
      %v2604 = vpop.f32.mrb[0].mxu0
      %v2605 = vpop.f32.mrb[0].mxu0
      %v2606 = vadd.f32 0.0, %v2605
      %v2607 = vpop.f32.mrb[0].mxu0
      %2608 = vmatprep.mubr.bf16.mxu0 %v1268
      %2609 = vmatmul.mubr.bf16.gmra.mrb[0].mxu0 %v1267
      %v2610 = vpop.f32.mrb[0].mxu0
      %v2611 = vadd.f32 0.0, %v2610
      %v2612 = vpop.f32.mrb[0].mxu0
      %v2613 = vpop.f32.mrb[0].mxu0
      %v2614 = vadd.f32 0.0, %v2613
      %v2615 = vpop.f32.mrb[0].mxu0
      %2616 = vmatprep.mubr.bf16.mxu0 %v1271
      %2617 = vmatmul.mubr.bf16.gmra.mrb[0].mxu0 %v1270
      %v2618 = vpop.f32.mrb[0].mxu0
      %v2619 = vadd.f32 0.0, %v2618
      %v2620 = vpop.f32.mrb[0].mxu0
      %v2621 = vpop.f32.mrb[0].mxu0
      %v2622 = vadd.f32 0.0, %v2621
      %v2623 = vpop.f32.mrb[0].mxu0
      %2624 = vmatprep.mubr.bf16.mxu0 %v1274
      %2625 = vmatmul.mubr.bf16.gmra.mrb[0].mxu0 %v1273
      %v2626 = vpop.f32.mrb[0].mxu0
      %v2627 = vadd.f32 0.0, %v2626
      %v2628 = vpop.f32.mrb[0].mxu0
      %v2629 = vpop.f32.mrb[0].mxu0
      %v2630 = vadd.f32 0.0, %v2629
      %v2631 = vpop.f32.mrb[0].mxu0
      %2632 = vmatprep.mubr.bf16.mxu0 %v1277
      %2633 = vmatmul.mubr.bf16.gmra.mrb[0].mxu0 %v1276
      %v2634 = vpop.f32.mrb[0].mxu0
      %v2635 = vadd.f32 0.0, %v2634
      %v2636 = vpop.f32.mrb[0].mxu0
      %v2637 = vpop.f32.mrb[0].mxu0
      %v2638 = vadd.f32 0.0, %v2637
      %v2639 = vpop.f32.mrb[0].mxu0
      %2640 = vmatprep.mubr.bf16.mxu0 %v1280
      %2641 = vmatmul.mubr.bf16.gmra.mrb[0].mxu0 %v1279
      %v2642 = vpop.f32.mrb[0].mxu0
      %v2643 = vadd.f32 0.0, %v2642
      %v2644 = vpop.f32.mrb[0].mxu0
      %v2645 = vpop.f32.mrb[0].mxu0
      %v2646 = vadd.f32 0.0, %v2645
      %v2647 = vpop.f32.mrb[0].mxu0
      %2648 = vmatprep.mubr.bf16.mxu0 %v1283
      %2649 = vmatmul.mubr.bf16.gmra.mrb[0].mxu0 %v1282
      %v2650 = vpop.f32.mrb[0].mxu0
      %v2651 = vadd.f32 0.0, %v2650
      %v2652 = vpop.f32.mrb[0].mxu0
      %v2653 = vpop.f32.mrb[0].mxu0
      %v2654 = vadd.f32 0.0, %v2653
      %v2655 = vpop.f32.mrb[0].mxu0
      %2656 = vmatprep.mubr.bf16.mxu0 %v1286
      %2657 = vmatmul.mubr.bf16.gmra.mrb[0].mxu0 %v1285
      %v2658 = vpop.f32.mrb[0].mxu0
      %v2659 = vadd.f32 0.0, %v2658
      %v2660 = vpop.f32.mrb[0].mxu0
      %v2661 = vpop.f32.mrb[0].mxu0
      %v2662 = vadd.f32 0.0, %v2661
      %v2663 = vpop.f32.mrb[0].mxu0
      %2664 = vdwg.mxu0
      %2665 = vmatprep.subr.bf16.mxu0 0
      %2666 = vmatpush1.bf16.msra.mxu0 %v2474
      %2667 = vmatprep.subr.bf16.mxu0 0
      %2668 = vmatpush1.bf16.msra.mxu0 %v2475
      %2669 = vmatprep.subr.bf16.mxu0 0
      %2670 = vmatpush1.bf16.msra.mxu0 %v2476
      %2671 = vmatprep.subr.bf16.mxu0 0
      %2672 = vmatpush1.bf16.msra.mxu0 %v2477
      %2673 = vmatprep.subr.bf16.mxu0 0
      %2674 = vmatpush1.bf16.msra.mxu0 %v2478
      %2675 = vmatprep.subr.bf16.mxu0 0
      %2676 = vmatpush1.bf16.msra.mxu0 %v2479
      %2677 = vmatprep.subr.bf16.mxu0 0
      %2678 = vmatpush1.bf16.msra.mxu0 %v2480
      %2679 = vmatprep.subr.bf16.mxu0 0
      %2680 = vmatpush1.bf16.msra.mxu0 %v2481
      %2681 = vmatprep.subr.bf16.mxu0 0
      %2682 = vmatpush1.bf16.msra.mxu0 0
      %2683 = vmatprep.subr.bf16.mxu0 0
      %2684 = vmatpush1.bf16.msra.mxu0 0
      %2685 = vmatprep.subr.bf16.mxu0 0
      %2686 = vmatpush1.bf16.msra.mxu0 0
      %2687 = vmatprep.subr.bf16.mxu0 0
      %2688 = vmatpush1.bf16.msra.mxu0 0
      %2689 = vmatprep.subr.bf16.mxu0 0
      %2690 = vmatpush1.bf16.msra.mxu0 0
      %2691 = vmatprep.subr.bf16.mxu0 0
      %2692 = vmatpush1.bf16.msra.mxu0 0
      %2693 = vmatprep.subr.bf16.mxu0 0
      %2694 = vmatpush1.bf16.msra.mxu0 0
      %2695 = vmatprep.subr.bf16.mxu0 0
      %2696 = vmatpush1.bf16.msra.mxu0 0
      %2697 = vmatprep.mubr.bf16.mxu0 0
      %2698 = vmatmul.mubr.bf16.gmra.mrb[0].mxu0 %v1242
      %v2699 = vpop.f32.mrb[0].mxu0
      %v2700 = vpop.f32.mrb[0].mxu0
      %v2701 = vpop.f32.mrb[0].mxu0
      %v2702 = vpop.f32.mrb[0].mxu0
      %2703 = vmatprep.mubr.bf16.mxu0 0
      %2704 = vmatmul.mubr.bf16.gmra.mrb[0].mxu0 %v1245
      %v2705 = vpop.f32.mrb[0].mxu0
      %v2706 = vadd.f32 %v2547, %v2705
      %v2707 = vpop.f32.mrb[0].mxu0
      %v2708 = vpop.f32.mrb[0].mxu0
      %v2709 = vadd.f32 %v2550, %v2708
      %v2710 = vpop.f32.mrb[0].mxu0
      %2711 = vmatprep.mubr.bf16.mxu0 0
      %2712 = vmatmul.mubr.bf16.gmra.mrb[0].mxu0 %v1248
      %v2713 = vpop.f32.mrb[0].mxu0
      %v2714 = vadd.f32 %v2555, %v2713
      %v2715 = vpop.f32.mrb[0].mxu0
      %v2716 = vpop.f32.mrb[0].mxu0
      %v2717 = vadd.f32 %v2558, %v2716
      %v2718 = vpop.f32.mrb[0].mxu0
      %2719 = vmatprep.mubr.bf16.mxu0 0
      %2720 = vmatmul.mubr.bf16.gmra.mrb[0].mxu0 %v1251
      %v2721 = vpop.f32.mrb[0].mxu0
      %v2722 = vadd.f32 %v2563, %v2721
      %v2723 = vpop.f32.mrb[0].mxu0
      %v2724 = vpop.f32.mrb[0].mxu0
      %v2725 = vadd.f32 %v2566, %v2724
      %v2726 = vpop.f32.mrb[0].mxu0
      %2727 = vmatprep.mubr.bf16.mxu0 0
      %2728 = vmatmul.mubr.bf16.gmra.mrb[0].mxu0 %v1254
      %v2729 = vpop.f32.mrb[0].mxu0
      %v2730 = vadd.f32 %v2571, %v2729
      %v2731 = vpop.f32.mrb[0].mxu0
      %v2732 = vpop.f32.mrb[0].mxu0
      %v2733 = vadd.f32 %v2574, %v2732
      %v2734 = vpop.f32.mrb[0].mxu0
      %2735 = vmatprep.mubr.bf16.mxu0 0
      %2736 = vmatmul.mubr.bf16.gmra.mrb[0].mxu0 %v1257
      %v2737 = vpop.f32.mrb[0].mxu0
      %v2738 = vadd.f32 %v2579, %v2737
      %v2739 = vpop.f32.mrb[0].mxu0
      %v2740 = vpop.f32.mrb[0].mxu0
      %v2741 = vadd.f32 %v2582, %v2740
      %v2742 = vpop.f32.mrb[0].mxu0
      %2743 = vmatprep.mubr.bf16.mxu0 0
      %2744 = vmatmul.mubr.bf16.gmra.mrb[0].mxu0 %v1260
      %v2745 = vpop.f32.mrb[0].mxu0
      %v2746 = vadd.f32 %v2587, %v2745
      %v2747 = vpop.f32.mrb[0].mxu0
      %v2748 = vpop.f32.mrb[0].mxu0
      %v2749 = vadd.f32 %v2590, %v2748
      %v2750 = vpop.f32.mrb[0].mxu0
      %2751 = vmatprep.mubr.bf16.mxu0 0
      %2752 = vmatmul.mubr.bf16.gmra.mrb[0].mxu0 %v1263
      %v2753 = vpop.f32.mrb[0].mxu0
      %v2754 = vadd.f32 %v2595, %v2753
      %v2755 = vpop.f32.mrb[0].mxu0
      %v2756 = vpop.f32.mrb[0].mxu0
      %v2757 = vadd.f32 %v2598, %v2756
      %v2758 = vpop.f32.mrb[0].mxu0
      %2759 = vmatprep.mubr.bf16.mxu0 0
      %2760 = vmatmul.mubr.bf16.gmra.mrb[0].mxu0 %v1266
      %v2761 = vpop.f32.mrb[0].mxu0
      %v2762 = vadd.f32 %v2603, %v2761
      %v2763 = vpop.f32.mrb[0].mxu0
      %v2764 = vpop.f32.mrb[0].mxu0
      %v2765 = vadd.f32 %v2606, %v2764
      %v2766 = vpop.f32.mrb[0].mxu0
      %2767 = vmatprep.mubr.bf16.mxu0 0
      %2768 = vmatmul.mubr.bf16.gmra.mrb[0].mxu0 %v1269
      %v2769 = vpop.f32.mrb[0].mxu0
      %v2770 = vadd.f32 %v2611, %v2769
      %v2771 = vpop.f32.mrb[0].mxu0
      %v2772 = vpop.f32.mrb[0].mxu0
      %v2773 = vadd.f32 %v2614, %v2772
      %v2774 = vpop.f32.mrb[0].mxu0
      %2775 = vmatprep.mubr.bf16.mxu0 0
      %2776 = vmatmul.mubr.bf16.gmra.mrb[0].mxu0 %v1272
      %v2777 = vpop.f32.mrb[0].mxu0
      %v2778 = vadd.f32 %v2619, %v2777
      %v2779 = vpop.f32.mrb[0].mxu0
      %v2780 = vpop.f32.mrb[0].mxu0
      %v2781 = vadd.f32 %v2622, %v2780
      %v2782 = vpop.f32.mrb[0].mxu0
      %2783 = vmatprep.mubr.bf16.mxu0 0
      %2784 = vmatmul.mubr.bf16.gmra.mrb[0].mxu0 %v1275
      %v2785 = vpop.f32.mrb[0].mxu0
      %v2786 = vadd.f32 %v2627, %v2785
      %v2787 = vpop.f32.mrb[0].mxu0
      %v2788 = vpop.f32.mrb[0].mxu0
      %v2789 = vadd.f32 %v2630, %v2788
      %v2790 = vpop.f32.mrb[0].mxu0
      %2791 = vmatprep.mubr.bf16.mxu0 0
      %2792 = vmatmul.mubr.bf16.gmra.mrb[0].mxu0 %v1278
      %v2793 = vpop.f32.mrb[0].mxu0
      %v2794 = vadd.f32 %v2635, %v2793
      %v2795 = vpop.f32.mrb[0].mxu0
      %v2796 = vpop.f32.mrb[0].mxu0
      %v2797 = vadd.f32 %v2638, %v2796
      %v2798 = vpop.f32.mrb[0].mxu0
      %2799 = vmatprep.mubr.bf16.mxu0 0
      %2800 = vmatmul.mubr.bf16.gmra.mrb[0].mxu0 %v1281
      %v2801 = vpop.f32.mrb[0].mxu0
      %v2802 = vadd.f32 %v2643, %v2801
      %v2803 = vpop.f32.mrb[0].mxu0
      %v2804 = vpop.f32.mrb[0].mxu0
      %v2805 = vadd.f32 %v2646, %v2804
      %v2806 = vpop.f32.mrb[0].mxu0
      %2807 = vmatprep.mubr.bf16.mxu0 0
      %2808 = vmatmul.mubr.bf16.gmra.mrb[0].mxu0 %v1284
      %v2809 = vpop.f32.mrb[0].mxu0
      %v2810 = vadd.f32 %v2651, %v2809
      %v2811 = vpop.f32.mrb[0].mxu0
      %v2812 = vpop.f32.mrb[0].mxu0
      %v2813 = vadd.f32 %v2654, %v2812
      %v2814 = vpop.f32.mrb[0].mxu0
      %2815 = vmatprep.mubr.bf16.mxu0 0
      %2816 = vmatmul.mubr.bf16.gmra.mrb[0].mxu0 %v1287
      %v2817 = vpop.f32.mrb[0].mxu0
      %v2818 = vadd.f32 %v2659, %v2817
      %v2819 = vpop.f32.mrb[0].mxu0
      %v2820 = vpop.f32.mrb[0].mxu0
      %v2821 = vadd.f32 %v2662, %v2820
      %v2822 = vpop.f32.mrb[0].mxu0
      %2823 = vdwg.mxu0
      %v2824 = vadd.f32 %v1682, %v2187
      %v2825 = vadd.f32 %v1685, %v2190
      %v2826 = vadd.f32 %v1674, %v2195
      %v2827 = vadd.f32 %v1677, %v2198
      %v2828 = vadd.f32 %v1682, %v2203
      %v2829 = vadd.f32 %v1685, %v2206
      %v2830 = vadd.f32 %v1690, %v2211
      %v2831 = vadd.f32 %v1693, %v2214
      %v2832 = vadd.f32 %v1698, %v2219
      %v2833 = vadd.f32 %v1701, %v2222
      %v2834 = vadd.f32 %v1706, %v2227
      %v2835 = vadd.f32 %v1709, %v2230
      %v2836 = vadd.f32 %v1714, %v2235
      %v2837 = vadd.f32 %v1717, %v2238
      %v2838 = vadd.f32 %v1722, %v2243
      %v2839 = vadd.f32 %v1725, %v2246
      %v2840 = vadd.f32 %v1730, %v2251
      %v2841 = vadd.f32 %v1733, %v2254
      %v2842 = vadd.f32 %v1738, %v2259
      %v2843 = vadd.f32 %v1741, %v2262
      %v2844 = vadd.f32 %v1746, %v2267
      %v2845 = vadd.f32 %v1749, %v2270
      %v2846 = vadd.f32 %v1754, %v2275
      %v2847 = vadd.f32 %v1757, %v2278
      %v2848 = vadd.f32 %v1762, %v2283
      %v2849 = vadd.f32 %v1765, %v2286
      %v2850 = vadd.f32 %v1770, %v2291
      %v2851 = vadd.f32 %v1773, %v2294
      %v2852 = vadd.f32 %v1778, %v2299
      %v2853 = vadd.f32 %v1781, %v2302
      %v2854 = vadd.f32 %v1786, %v2307
      %v2855 = vadd.f32 %v1789, %v2310
      %v2856 = vadd.f32 %v2824, %v2706
      %v2857 = vadd.f32 %v2825, %v2709
      %v2858 = vadd.f32 %v2826, %v2714
      %v2859 = vadd.f32 %v2827, %v2717
      %v2860 = vadd.f32 %v2828, %v2722
      %v2861 = vadd.f32 %v2829, %v2725
      %v2862 = vadd.f32 %v2830, %v2730
      %v2863 = vadd.f32 %v2831, %v2733
      %v2864 = vadd.f32 %v2832, %v2738
      %v2865 = vadd.f32 %v2833, %v2741
      %v2866 = vadd.f32 %v2834, %v2746
      %v2867 = vadd.f32 %v2835, %v2749
      %v2868 = vadd.f32 %v2836, %v2754
      %v2869 = vadd.f32 %v2837, %v2757
      %v2870 = vadd.f32 %v2838, %v2762
      %v2871 = vadd.f32 %v2839, %v2765
      %v2872 = vadd.f32 %v2840, %v2770
      %v2873 = vadd.f32 %v2841, %v2773
      %v2874 = vadd.f32 %v2842, %v2778
      %v2875 = vadd.f32 %v2843, %v2781
      %v2876 = vadd.f32 %v2844, %v2786
      %v2877 = vadd.f32 %v2845, %v2789
      %v2878 = vadd.f32 %v2846, %v2794
      %v2879 = vadd.f32 %v2847, %v2797
      %v2880 = vadd.f32 %v2848, %v2802
      %v2881 = vadd.f32 %v2849, %v2805
      %v2882 = vadd.f32 %v2850, %v2810
      %v2883 = vadd.f32 %v2851, %v2813
      %v2884 = vadd.f32 %v2852, %v2818
      %v2885 = vadd.f32 %v2853, %v2821
      %v2886 = vadd.f32 %v2854, %v2810
      %v2887 = vadd.f32 %v2855, %v2813
      %v2888 = vld [vmem:[%s4] sm:$0x1]
      %v2890 = vlaneseq
      %v2891 = vshrl.u32 %v2890, 7
      %v2892 = vsub.s32 0, %v2891
      %v2893 = vrot.slane %v2888, %v2892
      %v2895 = vadd.f32 %v2856, %v2893
      %v2896 = vadd.f32 %v2857, %v2893
      %v2897 = vadd.f32 %v2858, %v2893
      %v2898 = vadd.f32 %v2859, %v2893
      %v2899 = vadd.f32 %v2860, %v2893
      %v2900 = vadd.f32 %v2861, %v2893
      %v2901 = vadd.f32 %v2862, %v2893
      %v2902 = vadd.f32 %v2863, %v2893
      %v2903 = vadd.f32 %v2864, %v2893
      %v2904 = vadd.f32 %v2865, %v2893
      %v2905 = vadd.f32 %v2866, %v2893
      %v2906 = vadd.f32 %v2867, %v2893
      %v2907 = vadd.f32 %v2868, %v2893
      %v2908 = vadd.f32 %v2869, %v2893
      %v2909 = vadd.f32 %v2870, %v2893
      %v2910 = vadd.f32 %v2871, %v2893
      %v2911 = vadd.f32 %v2872, %v2893
      %v2912 = vadd.f32 %v2873, %v2893
      %v2913 = vadd.f32 %v2874, %v2893
      %v2914 = vadd.f32 %v2875, %v2893
      %v2915 = vadd.f32 %v2876, %v2893
      %v2916 = vadd.f32 %v2877, %v2893
      %v2917 = vadd.f32 %v2878, %v2893
      %v2918 = vadd.f32 %v2879, %v2893
      %v2919 = vadd.f32 %v2880, %v2893
      %v2920 = vadd.f32 %v2881, %v2893
      %v2921 = vadd.f32 %v2882, %v2893
      %v2922 = vadd.f32 %v2883, %v2893
      %v2923 = vadd.f32 %v2884, %v2893
      %v2924 = vadd.f32 %v2885, %v2893
      %v2925 = vadd.f32 %v2886, %v2893
      %v2926 = vadd.f32 %v2887, %v2893
      %vm2927 = vcmp.gt.f32.partialorder %v2895, 0.0
      %vm2928 = vcmp.gt.f32.partialorder %v2896, 0.0
      %vm2929 = vcmp.gt.f32.partialorder %v2897, 0.0
      %vm2930 = vcmp.gt.f32.partialorder %v2898, 0.0
      %vm2931 = vcmp.gt.f32.partialorder %v2899, 0.0
      %vm2932 = vcmp.gt.f32.partialorder %v2900, 0.0
      %vm2933 = vcmp.gt.f32.partialorder %v2901, 0.0
      %vm2934 = vcmp.gt.f32.partialorder %v2902, 0.0
      %vm2935 = vcmp.gt.f32.partialorder %v2903, 0.0
      %vm2936 = vcmp.gt.f32.partialorder %v2904, 0.0
      %vm2937 = vcmp.gt.f32.partialorder %v2905, 0.0
      %vm2938 = vcmp.gt.f32.partialorder %v2906, 0.0
      %vm2939 = vcmp.gt.f32.partialorder %v2907, 0.0
      %vm2940 = vcmp.gt.f32.partialorder %v2908, 0.0
      %vm2941 = vcmp.gt.f32.partialorder %v2909, 0.0
      %vm2942 = vcmp.gt.f32.partialorder %v2910, 0.0
      %vm2943 = vcmp.gt.f32.partialorder %v2911, 0.0
      %vm2944 = vcmp.gt.f32.partialorder %v2912, 0.0
      %vm2945 = vcmp.gt.f32.partialorder %v2913, 0.0
      %vm2946 = vcmp.gt.f32.partialorder %v2914, 0.0
      %vm2947 = vcmp.gt.f32.partialorder %v2915, 0.0
      %vm2948 = vcmp.gt.f32.partialorder %v2916, 0.0
      %vm2949 = vcmp.gt.f32.partialorder %v2917, 0.0
      %vm2950 = vcmp.gt.f32.partialorder %v2918, 0.0
      %vm2951 = vcmp.gt.f32.partialorder %v2919, 0.0
      %vm2952 = vcmp.gt.f32.partialorder %v2920, 0.0
      %vm2953 = vcmp.gt.f32.partialorder %v2921, 0.0
      %vm2954 = vcmp.gt.f32.partialorder %v2922, 0.0
      %vm2955 = vcmp.gt.f32.partialorder %v2923, 0.0
      %vm2956 = vcmp.gt.f32.partialorder %v2924, 0.0
      %vm2957 = vcmp.gt.f32.partialorder %v2925, 0.0
      %vm2958 = vcmp.gt.f32.partialorder %v2926, 0.0
      %v2959 = vmin.f32 %v2895, 0.0
      %v2960 = vmin.f32 %v2896, 0.0
      %v2961 = vmin.f32 %v2897, 0.0
      %v2962 = vmin.f32 %v2898, 0.0
      %v2963 = vmin.f32 %v2899, 0.0
      %v2964 = vmin.f32 %v2900, 0.0
      %v2965 = vmin.f32 %v2901, 0.0
      %v2966 = vmin.f32 %v2902, 0.0
      %v2967 = vmin.f32 %v2903, 0.0
      %v2968 = vmin.f32 %v2904, 0.0
      %v2969 = vmin.f32 %v2905, 0.0
      %v2970 = vmin.f32 %v2906, 0.0
      %v2971 = vmin.f32 %v2907, 0.0
      %v2972 = vmin.f32 %v2908, 0.0
      %v2973 = vmin.f32 %v2909, 0.0
      %v2974 = vmin.f32 %v2910, 0.0
      %v2975 = vmin.f32 %v2911, 0.0
      %v2976 = vmin.f32 %v2912, 0.0
      %v2977 = vmin.f32 %v2913, 0.0
      %v2978 = vmin.f32 %v2914, 0.0
      %v2979 = vmin.f32 %v2915, 0.0
      %v2980 = vmin.f32 %v2916, 0.0
      %v2981 = vmin.f32 %v2917, 0.0
      %v2982 = vmin.f32 %v2918, 0.0
      %v2983 = vmin.f32 %v2919, 0.0
      %v2984 = vmin.f32 %v2920, 0.0
      %v2985 = vmin.f32 %v2921, 0.0
      %v2986 = vmin.f32 %v2922, 0.0
      %v2987 = vmin.f32 %v2923, 0.0
      %v2988 = vmin.f32 %v2924, 0.0
      %v2989 = vmin.f32 %v2925, 0.0
      %v2990 = vmin.f32 %v2926, 0.0
      %v2991 = vmul.f32 %v2959, 1.442695
      %v2992 = vpow.pop %v2991
      %v2993 = vmul.f32 %v2960, 1.442695
      %v2994 = vpow.pop %v2993
      %v2995 = vmul.f32 %v2961, 1.442695
      %v2996 = vpow.pop %v2995
      %v2997 = vmul.f32 %v2962, 1.442695
      %v2998 = vpow.pop %v2997
      %v2999 = vmul.f32 %v2963, 1.442695
      %v3000 = vpow.pop %v2999
      %v3001 = vmul.f32 %v2964, 1.442695
      %v3002 = vpow.pop %v3001
      %v3003 = vmul.f32 %v2965, 1.442695
      %v3004 = vpow.pop %v3003
      %v3005 = vmul.f32 %v2966, 1.442695
      %v3006 = vpow.pop %v3005
      %v3007 = vmul.f32 %v2967, 1.442695
      %v3008 = vpow.pop %v3007
      %v3009 = vmul.f32 %v2968, 1.442695
      %v3010 = vpow.pop %v3009
      %v3011 = vmul.f32 %v2969, 1.442695
      %v3012 = vpow.pop %v3011
      %v3013 = vmul.f32 %v2970, 1.442695
      %v3014 = vpow.pop %v3013
      %v3015 = vmul.f32 %v2971, 1.442695
      %v3016 = vpow.pop %v3015
      %v3017 = vmul.f32 %v2972, 1.442695
      %v3018 = vpow.pop %v3017
      %v3019 = vmul.f32 %v2973, 1.442695
      %v3020 = vpow.pop %v3019
      %v3021 = vmul.f32 %v2974, 1.442695
      %v3022 = vpow.pop %v3021
      %v3023 = vmul.f32 %v2975, 1.442695
      %v3024 = vpow.pop %v3023
      %v3025 = vmul.f32 %v2976, 1.442695
      %v3026 = vpow.pop %v3025
      %v3027 = vmul.f32 %v2977, 1.442695
      %v3028 = vpow.pop %v3027
      %v3029 = vmul.f32 %v2978, 1.442695
      %v3030 = vpow.pop %v3029
      %v3031 = vmul.f32 %v2979, 1.442695
      %v3032 = vpow.pop %v3031
      %v3033 = vmul.f32 %v2980, 1.442695
      %v3034 = vpow.pop %v3033
      %v3035 = vmul.f32 %v2981, 1.442695
      %v3036 = vpow.pop %v3035
      %v3037 = vmul.f32 %v2982, 1.442695
      %v3038 = vpow.pop %v3037
      %v3039 = vmul.f32 %v2983, 1.442695
      %v3040 = vpow.pop %v3039
      %v3041 = vmul.f32 %v2984, 1.442695
      %v3042 = vpow.pop %v3041
      %v3043 = vmul.f32 %v2985, 1.442695
      %v3044 = vpow.pop %v3043
      %v3045 = vmul.f32 %v2986, 1.442695
      %v3046 = vpow.pop %v3045
      %v3047 = vmul.f32 %v2987, 1.442695
      %v3048 = vpow.pop %v3047
      %v3049 = vmul.f32 %v2988, 1.442695
      %v3050 = vpow.pop %v3049
      %v3051 = vmul.f32 %v2989, 1.442695
      %v3052 = vpow.pop %v3051
      %v3053 = vmul.f32 %v2990, 1.442695
      %v3054 = vpow.pop %v3053
      %v3055 = vsub.f32 %v2992, 1.0
      %v3056 = vsub.f32 %v2994, 1.0
      %v3057 = vsub.f32 %v2996, 1.0
      %v3058 = vsub.f32 %v2998, 1.0
      %v3059 = vsub.f32 %v3000, 1.0
      %v3060 = vsub.f32 %v3002, 1.0
      %v3061 = vsub.f32 %v3004, 1.0
      %v3062 = vsub.f32 %v3006, 1.0
      %v3063 = vsub.f32 %v3008, 1.0
      %v3064 = vsub.f32 %v3010, 1.0
      %v3065 = vsub.f32 %v3012, 1.0
      %v3066 = vsub.f32 %v3014, 1.0
      %v3067 = vsub.f32 %v3016, 1.0
      %v3068 = vsub.f32 %v3018, 1.0
      %v3069 = vsub.f32 %v3020, 1.0
      %v3070 = vsub.f32 %v3022, 1.0
      %v3071 = vsub.f32 %v3024, 1.0
      %v3072 = vsub.f32 %v3026, 1.0
      %v3073 = vsub.f32 %v3028, 1.0
      %v3074 = vsub.f32 %v3030, 1.0
      %v3075 = vsub.f32 %v3032, 1.0
      %v3076 = vsub.f32 %v3034, 1.0
      %v3077 = vsub.f32 %v3036, 1.0
      %v3078 = vsub.f32 %v3038, 1.0
      %v3079 = vsub.f32 %v3040, 1.0
      %v3080 = vsub.f32 %v3042, 1.0
      %v3081 = vsub.f32 %v3044, 1.0
      %v3082 = vsub.f32 %v3046, 1.0
      %v3083 = vsub.f32 %v3048, 1.0
      %v3084 = vsub.f32 %v3050, 1.0
      %v3085 = vsub.f32 %v3052, 1.0
      %v3086 = vsub.f32 %v3054, 1.0
      %v3087 = vsel %vm2927, %v2895, %v3055
      %v3088 = vsel %vm2928, %v2896, %v3056
      %v3089 = vsel %vm2929, %v2897, %v3057
      %v3090 = vsel %vm2930, %v2898, %v3058
      %v3091 = vsel %vm2931, %v2899, %v3059
      %v3092 = vsel %vm2932, %v2900, %v3060
      %v3093 = vsel %vm2933, %v2901, %v3061
      %v3094 = vsel %vm2934, %v2902, %v3062
      %v3095 = vsel %vm2935, %v2903, %v3063
      %v3096 = vsel %vm2936, %v2904, %v3064
      %v3097 = vsel %vm2937, %v2905, %v3065
      %v3098 = vsel %vm2938, %v2906, %v3066
      %v3099 = vsel %vm2939, %v2907, %v3067
      %v3100 = vsel %vm2940, %v2908, %v3068
      %v3101 = vsel %vm2941, %v2909, %v3069
      %v3102 = vsel %vm2942, %v2910, %v3070
      %v3103 = vsel %vm2943, %v2911, %v3071
      %v3104 = vsel %vm2944, %v2912, %v3072
      %v3105 = vsel %vm2945, %v2913, %v3073
      %v3106 = vsel %vm2946, %v2914, %v3074
      %v3107 = vsel %vm2947, %v2915, %v3075
      %v3108 = vsel %vm2948, %v2916, %v3076
      %v3109 = vsel %vm2949, %v2917, %v3077
      %v3110 = vsel %vm2950, %v2918, %v3078
      %v3111 = vsel %vm2951, %v2919, %v3079
      %v3112 = vsel %vm2952, %v2920, %v3080
      %v3113 = vsel %vm2953, %v2921, %v3081
      %v3114 = vsel %vm2954, %v2922, %v3082
      %v3115 = vsel %vm2955, %v2923, %v3083
      %v3116 = vsel %vm2956, %v2924, %v3084
      %v3117 = vsel %vm2957, %v2925, %v3085
      %v3118 = vsel %vm2958, %v2926, %v3086
      %v3119 = vld [vmem:[#allocation2 + $0x8] sm:$0xff]
      %v3120 = vld [vmem:[#allocation2 + $0x20] sm:$0xff]
      %v3121 = vld [vmem:[#allocation2 + $0x38] sm:$0xff]
      %v3122 = vld [vmem:[#allocation2 + $0x50] sm:$0xff]
      %v3123 = vld [vmem:[#allocation2 + $0x68] sm:$0xff]
      %v3124 = vld [vmem:[#allocation2 + $0x80] sm:$0xff]
      %v3125 = vld [vmem:[#allocation2 + $0x98] sm:$0xff]
      %v3126 = vld [vmem:[#allocation2 + $0xb0] sm:$0xff]
      %v3127 = vld [vmem:[#allocation2 + $0xc8] sm:$0xff]
      %v3128 = vld [vmem:[#allocation2 + $0xe0] sm:$0xff]
      %v3129 = vld [vmem:[#allocation2 + $0xf8] sm:$0xff]
      %v3130 = vld [vmem:[#allocation2 + $0x110] sm:$0xff]
      %v3131 = vld [vmem:[#allocation2 + $0x128] sm:$0xff]
      %v3132 = vld [vmem:[#allocation2 + $0x140] sm:$0xff]
      %v3133 = vld [vmem:[#allocation2 + $0x158] sm:$0xff]
      %v3134 = vld [vmem:[#allocation2 + $0x170] sm:$0xff]
      %v3135 = vunpack.c.l.bf16 %v3119
      %v3136 = vunpack.c.h.bf16 %v3119
      %v3137 = vunpack.c.l.bf16 %v3120
      %v3138 = vunpack.c.h.bf16 %v3120
      %v3139 = vunpack.c.l.bf16 %v3121
      %v3140 = vunpack.c.h.bf16 %v3121
      %v3141 = vunpack.c.l.bf16 %v3122
      %v3142 = vunpack.c.h.bf16 %v3122
      %v3143 = vunpack.c.l.bf16 %v3123
      %v3144 = vunpack.c.h.bf16 %v3123
      %v3145 = vunpack.c.l.bf16 %v3124
      %v3146 = vunpack.c.h.bf16 %v3124
      %v3147 = vunpack.c.l.bf16 %v3125
      %v3148 = vunpack.c.h.bf16 %v3125
      %v3149 = vunpack.c.l.bf16 %v3126
      %v3150 = vunpack.c.h.bf16 %v3126
      %v3151 = vunpack.c.l.bf16 %v3127
      %v3152 = vunpack.c.h.bf16 %v3127
      %v3153 = vunpack.c.l.bf16 %v3128
      %v3154 = vunpack.c.h.bf16 %v3128
      %v3155 = vunpack.c.l.bf16 %v3129
      %v3156 = vunpack.c.h.bf16 %v3129
      %v3157 = vunpack.c.l.bf16 %v3130
      %v3158 = vunpack.c.h.bf16 %v3130
      %v3159 = vunpack.c.l.bf16 %v3131
      %v3160 = vunpack.c.h.bf16 %v3131
      %v3161 = vunpack.c.l.bf16 %v3132
      %v3162 = vunpack.c.h.bf16 %v3132
      %v3163 = vunpack.c.l.bf16 %v3133
      %v3164 = vunpack.c.h.bf16 %v3133
      %v3165 = vunpack.c.l.bf16 %v3134
      %v3166 = vunpack.c.h.bf16 %v3134
      %v3167 = vadd.f32 %v3087, %v3135
      %v3168 = vadd.f32 %v3088, %v3136
      %v3169 = vadd.f32 %v3089, %v3137
      %v3170 = vadd.f32 %v3090, %v3138
      %v3171 = vadd.f32 %v3091, %v3139
      %v3172 = vadd.f32 %v3092, %v3140
      %v3173 = vadd.f32 %v3093, %v3141
      %v3174 = vadd.f32 %v3094, %v3142
      %v3175 = vadd.f32 %v3095, %v3143
      %v3176 = vadd.f32 %v3096, %v3144
      %v3177 = vadd.f32 %v3097, %v3145
      %v3178 = vadd.f32 %v3098, %v3146
      %v3179 = vadd.f32 %v3099, %v3147
      %v3180 = vadd.f32 %v3100, %v3148
      %v3181 = vadd.f32 %v3101, %v3149
      %v3182 = vadd.f32 %v3102, %v3150
      %v3183 = vadd.f32 %v3103, %v3151
      %v3184 = vadd.f32 %v3104, %v3152
      %v3185 = vadd.f32 %v3105, %v3153
      %v3186 = vadd.f32 %v3106, %v3154
      %v3187 = vadd.f32 %v3107, %v3155
      %v3188 = vadd.f32 %v3108, %v3156
      %v3189 = vadd.f32 %v3109, %v3157
      %v3190 = vadd.f32 %v3110, %v3158
      %v3191 = vadd.f32 %v3111, %v3159
      %v3192 = vadd.f32 %v3112, %v3160
      %v3193 = vadd.f32 %v3113, %v3161
      %v3194 = vadd.f32 %v3114, %v3162
      %v3195 = vadd.f32 %v3115, %v3163
      %v3196 = vadd.f32 %v3116, %v3164
      %v3197 = vadd.f32 %v3117, %v3165
      %v3198 = vadd.f32 %v3118, %v3166
      %v3215 = vrot.slane %v3167, 1
      %v3216 = vrot.slane %v3169, 1
      %v3217 = vrot.slane %v3171, 1
      %v3218 = vrot.slane %v3173, 1
      %v3219 = vrot.slane %v3175, 1
      %v3220 = vrot.slane %v3177, 1
      %v3221 = vrot.slane %v3179, 1
      %v3222 = vrot.slane %v3181, 1
      %v3223 = vrot.slane %v3183, 1
      %v3224 = vrot.slane %v3185, 1
      %v3225 = vrot.slane %v3187, 1
      %v3226 = vrot.slane %v3189, 1
      %v3227 = vrot.slane %v3191, 1
      %v3228 = vrot.slane %v3193, 1
      %v3229 = vrot.slane %v3195, 1
      %v3230 = vrot.slane %v3197, 1
      %v3263 = vrot.slane %v3167, 7
      %v3264 = vrot.slane %v3168, 7
      %v3265 = vsel %vm950, %v3263, %v3264
      %v3266 = vrot.slane %v3169, 7
      %v3267 = vrot.slane %v3170, 7
      %v3268 = vsel %vm950, %v3266, %v3267
      %v3269 = vrot.slane %v3171, 7
      %v3270 = vrot.slane %v3172, 7
      %v3271 = vsel %vm950, %v3269, %v3270
      %v3272 = vrot.slane %v3173, 7
      %v3273 = vrot.slane %v3174, 7
      %v3274 = vsel %vm950, %v3272, %v3273
      %v3275 = vrot.slane %v3175, 7
      %v3276 = vrot.slane %v3176, 7
      %v3277 = vsel %vm950, %v3275, %v3276
      %v3278 = vrot.slane %v3177, 7
      %v3279 = vrot.slane %v3178, 7
      %v3280 = vsel %vm950, %v3278, %v3279
      %v3281 = vrot.slane %v3179, 7
      %v3282 = vrot.slane %v3180, 7
      %v3283 = vsel %vm950, %v3281, %v3282
      %v3284 = vrot.slane %v3181, 7
      %v3285 = vrot.slane %v3182, 7
      %v3286 = vsel %vm950, %v3284, %v3285
      %v3287 = vrot.slane %v3183, 7
      %v3288 = vrot.slane %v3184, 7
      %v3289 = vsel %vm950, %v3287, %v3288
      %v3290 = vrot.slane %v3185, 7
      %v3291 = vrot.slane %v3186, 7
      %v3292 = vsel %vm950, %v3290, %v3291
      %v3293 = vrot.slane %v3187, 7
      %v3294 = vrot.slane %v3188, 7
      %v3295 = vsel %vm950, %v3293, %v3294
      %v3296 = vrot.slane %v3189, 7
      %v3297 = vrot.slane %v3190, 7
      %v3298 = vsel %vm950, %v3296, %v3297
      %v3299 = vrot.slane %v3191, 7
      %v3300 = vrot.slane %v3192, 7
      %v3301 = vsel %vm950, %v3299, %v3300
      %v3302 = vrot.slane %v3193, 7
      %v3303 = vrot.slane %v3194, 7
      %v3304 = vsel %vm950, %v3302, %v3303
      %v3305 = vrot.slane %v3195, 7
      %v3306 = vrot.slane %v3196, 7
      %v3307 = vsel %vm950, %v3305, %v3306
      %v3308 = vrot.slane %v3197, 7
      %v3309 = vrot.slane %v3198, 7
      %v3310 = vsel %vm950, %v3308, %v3309
      %v3343 = vsel %vm950, %v3215, %v3263
      %v3344 = vsel %vm950, %v3216, %v3266
      %v3345 = vsel %vm950, %v3217, %v3269
      %v3346 = vsel %vm950, %v3218, %v3272
      %v3347 = vsel %vm950, %v3219, %v3275
      %v3348 = vsel %vm950, %v3220, %v3278
      %v3349 = vsel %vm950, %v3221, %v3281
      %v3350 = vsel %vm950, %v3222, %v3284
      %v3351 = vsel %vm950, %v3223, %v3287
      %v3352 = vsel %vm950, %v3224, %v3290
      %v3353 = vsel %vm950, %v3225, %v3293
      %v3354 = vsel %vm950, %v3226, %v3296
      %v3355 = vsel %vm950, %v3227, %v3299
      %v3356 = vsel %vm950, %v3228, %v3302
      %v3357 = vsel %vm950, %v3229, %v3305
      %v3358 = vsel %vm950, %v3230, %v3308
      %v3359 = vrot.slane %v3168, 1
      %v3360 = vsel %vm1047, %v3215, %v3359
      %v3361 = vrot.slane %v3170, 1
      %v3362 = vsel %vm1047, %v3216, %v3361
      %v3363 = vrot.slane %v3172, 1
      %v3364 = vsel %vm1047, %v3217, %v3363
      %v3365 = vrot.slane %v3174, 1
      %v3366 = vsel %vm1047, %v3218, %v3365
      %v3367 = vrot.slane %v3176, 1
      %v3368 = vsel %vm1047, %v3219, %v3367
      %v3369 = vrot.slane %v3178, 1
      %v3370 = vsel %vm1047, %v3220, %v3369
      %v3371 = vrot.slane %v3180, 1
      %v3372 = vsel %vm1047, %v3221, %v3371
      %v3373 = vrot.slane %v3182, 1
      %v3374 = vsel %vm1047, %v3222, %v3373
      %v3375 = vrot.slane %v3184, 1
      %v3376 = vsel %vm1047, %v3223, %v3375
      %v3377 = vrot.slane %v3186, 1
      %v3378 = vsel %vm1047, %v3224, %v3377
      %v3379 = vrot.slane %v3188, 1
      %v3380 = vsel %vm1047, %v3225, %v3379
      %v3381 = vrot.slane %v3190, 1
      %v3382 = vsel %vm1047, %v3226, %v3381
      %v3383 = vrot.slane %v3192, 1
      %v3384 = vsel %vm1047, %v3227, %v3383
      %v3385 = vrot.slane %v3194, 1
      %v3386 = vsel %vm1047, %v3228, %v3385
      %v3387 = vrot.slane %v3196, 1
      %v3388 = vsel %vm1047, %v3229, %v3387
      %v3389 = vrot.slane %v3198, 1
      %v3390 = vsel %vm1047, %v3230, %v3389
      %v3439 = vsel %vm1047, %v3359, %v3264
      %v3440 = vsel %vm1047, %v3361, %v3267
      %v3441 = vsel %vm1047, %v3363, %v3270
      %v3442 = vsel %vm1047, %v3365, %v3273
      %v3443 = vsel %vm1047, %v3367, %v3276
      %v3444 = vsel %vm1047, %v3369, %v3279
      %v3445 = vsel %vm1047, %v3371, %v3282
      %v3446 = vsel %vm1047, %v3373, %v3285
      %v3447 = vsel %vm1047, %v3375, %v3288
      %v3448 = vsel %vm1047, %v3377, %v3291
      %v3449 = vsel %vm1047, %v3379, %v3294
      %v3450 = vsel %vm1047, %v3381, %v3297
      %v3451 = vsel %vm1047, %v3383, %v3300
      %v3452 = vsel %vm1047, %v3385, %v3303
      %v3453 = vsel %vm1047, %v3387, %v3306
      %v3454 = vsel %vm1047, %v3389, %v3309
      %v3455 = vpack.c.bf16 %v3265, %v3343
      %v3456 = vpack.c.bf16 %v3268, %v3344
      %v3457 = vpack.c.bf16 %v3271, %v3345
      %v3458 = vpack.c.bf16 %v3274, %v3346
      %v3459 = vpack.c.bf16 %v3277, %v3347
      %v3460 = vpack.c.bf16 %v3280, %v3348
      %v3461 = vpack.c.bf16 %v3283, %v3349
      %v3462 = vpack.c.bf16 %v3286, %v3350
      %v3463 = vpack.c.bf16 %v3289, %v3351
      %v3464 = vpack.c.bf16 %v3292, %v3352
      %v3465 = vpack.c.bf16 %v3295, %v3353
      %v3466 = vpack.c.bf16 %v3298, %v3354
      %v3467 = vpack.c.bf16 %v3301, %v3355
      %v3468 = vpack.c.bf16 %v3304, %v3356
      %v3469 = vpack.c.bf16 %v3307, %v3357
      %v3470 = vpack.c.bf16 %v3310, %v3358
      %3471 = vst [vmem:[#allocation3] sm:$0xff] %v3455
      %3472 = vst [vmem:[#allocation3 + $0x18] sm:$0xff] %v3456
      %3473 = vst [vmem:[#allocation3 + $0x30] sm:$0xff] %v3457
      %3474 = vst [vmem:[#allocation3 + $0x48] sm:$0xff] %v3458
      %3475 = vst [vmem:[#allocation3 + $0x60] sm:$0xff] %v3459
      %3476 = vst [vmem:[#allocation3 + $0x78] sm:$0xff] %v3460
      %3477 = vst [vmem:[#allocation3 + $0x90] sm:$0xff] %v3461
      %3478 = vst [vmem:[#allocation3 + $0xa8] sm:$0xff] %v3462
      %3479 = vst [vmem:[#allocation3 + $0xc0] sm:$0xff] %v3463
      %3480 = vst [vmem:[#allocation3 + $0xd8] sm:$0xff] %v3464
      %3481 = vst [vmem:[#allocation3 + $0xf0] sm:$0xff] %v3465
      %3482 = vst [vmem:[#allocation3 + $0x108] sm:$0xff] %v3466
      %3483 = vst [vmem:[#allocation3 + $0x120] sm:$0xff] %v3467
      %3484 = vst [vmem:[#allocation3 + $0x138] sm:$0xff] %v3468
      %3485 = vst [vmem:[#allocation3 + $0x150] sm:$0xff] %v3469
      %3486 = vst [vmem:[#allocation3 + $0x168] sm:$0xff] %v3470
      %v3487 = vpack.c.bf16 %v3168, %v3167
      %v3488 = vpack.c.bf16 %v3170, %v3169
      %v3489 = vpack.c.bf16 %v3172, %v3171
      %v3490 = vpack.c.bf16 %v3174, %v3173
      %v3491 = vpack.c.bf16 %v3176, %v3175
      %v3492 = vpack.c.bf16 %v3178, %v3177
      %v3493 = vpack.c.bf16 %v3180, %v3179
      %v3494 = vpack.c.bf16 %v3182, %v3181
      %v3495 = vpack.c.bf16 %v3184, %v3183
      %v3496 = vpack.c.bf16 %v3186, %v3185
      %v3497 = vpack.c.bf16 %v3188, %v3187
      %v3498 = vpack.c.bf16 %v3190, %v3189
      %v3499 = vpack.c.bf16 %v3192, %v3191
      %v3500 = vpack.c.bf16 %v3194, %v3193
      %v3501 = vpack.c.bf16 %v3196, %v3195
      %v3502 = vpack.c.bf16 %v3198, %v3197
      %3503 = vst [vmem:[#allocation3 + $0x8] sm:$0xff] %v3487
      %3504 = vst [vmem:[#allocation3 + $0x20] sm:$0xff] %v3488
      %3505 = vst [vmem:[#allocation3 + $0x38] sm:$0xff] %v3489
      %3506 = vst [vmem:[#allocation3 + $0x50] sm:$0xff] %v3490
      %3507 = vst [vmem:[#allocation3 + $0x68] sm:$0xff] %v3491
      %3508 = vst [vmem:[#allocation3 + $0x80] sm:$0xff] %v3492
      %3509 = vst [vmem:[#allocation3 + $0x98] sm:$0xff] %v3493
      %3510 = vst [vmem:[#allocation3 + $0xb0] sm:$0xff] %v3494
      %3511 = vst [vmem:[#allocation3 + $0xc8] sm:$0xff] %v3495
      %3512 = vst [vmem:[#allocation3 + $0xe0] sm:$0xff] %v3496
      %3513 = vst [vmem:[#allocation3 + $0xf8] sm:$0xff] %v3497
      %3514 = vst [vmem:[#allocation3 + $0x110] sm:$0xff] %v3498
      %3515 = vst [vmem:[#allocation3 + $0x128] sm:$0xff] %v3499
      %3516 = vst [vmem:[#allocation3 + $0x140] sm:$0xff] %v3500
      %3517 = vst [vmem:[#allocation3 + $0x158] sm:$0xff] %v3501
      %3518 = vst [vmem:[#allocation3 + $0x170] sm:$0xff] %v3502
      %v3519 = vpack.c.bf16 %v3439, %v3360
      %v3520 = vpack.c.bf16 %v3440, %v3362
      %v3521 = vpack.c.bf16 %v3441, %v3364
      %v3522 = vpack.c.bf16 %v3442, %v3366
      %v3523 = vpack.c.bf16 %v3443, %v3368
      %v3524 = vpack.c.bf16 %v3444, %v3370
      %v3525 = vpack.c.bf16 %v3445, %v3372
      %v3526 = vpack.c.bf16 %v3446, %v3374
      %v3527 = vpack.c.bf16 %v3447, %v3376
      %v3528 = vpack.c.bf16 %v3448, %v3378
      %v3529 = vpack.c.bf16 %v3449, %v3380
      %v3530 = vpack.c.bf16 %v3450, %v3382
      %v3531 = vpack.c.bf16 %v3451, %v3384
      %v3532 = vpack.c.bf16 %v3452, %v3386
      %v3533 = vpack.c.bf16 %v3453, %v3388
      %v3534 = vpack.c.bf16 %v3454, %v3390
      %3535 = vst [vmem:[#allocation3 + $0x10] sm:$0xff] %v3519
      %3536 = vst [vmem:[#allocation3 + $0x28] sm:$0xff] %v3520
      %3537 = vst [vmem:[#allocation3 + $0x40] sm:$0xff] %v3521
      %3538 = vst [vmem:[#allocation3 + $0x58] sm:$0xff] %v3522
      %3539 = vst [vmem:[#allocation3 + $0x70] sm:$0xff] %v3523
      %3540 = vst [vmem:[#allocation3 + $0x88] sm:$0xff] %v3524
      %3541 = vst [vmem:[#allocation3 + $0xa0] sm:$0xff] %v3525
      %3542 = vst [vmem:[#allocation3 + $0xb8] sm:$0xff] %v3526
      %3543 = vst [vmem:[#allocation3 + $0xd0] sm:$0xff] %v3527
      %3544 = vst [vmem:[#allocation3 + $0xe8] sm:$0xff] %v3528
      %3545 = vst [vmem:[#allocation3 + $0x100] sm:$0xff] %v3529
      %3546 = vst [vmem:[#allocation3 + $0x118] sm:$0xff] %v3530
      %3547 = vst [vmem:[#allocation3 + $0x130] sm:$0xff] %v3531
      %3548 = vst [vmem:[#allocation3 + $0x148] sm:$0xff] %v3532
      %3549 = vst [vmem:[#allocation3 + $0x160] sm:$0xff] %v3533
      %3550 = vst [vmem:[#allocation3 + $0x178] sm:$0xff] %v3534
      %v3551 = vld [vmem:[#allocation3] sm:$0xff]
      %v3552 = vld [vmem:[#allocation3 + $0x8] sm:$0xff]
      %v3553 = vld [vmem:[#allocation3 + $0x10] sm:$0xff]
      %v3554 = vld [vmem:[#allocation3 + $0x18] sm:$0xff]
      %v3555 = vld [vmem:[#allocation3 + $0x20] sm:$0xff]
      %v3556 = vld [vmem:[#allocation3 + $0x28] sm:$0xff]
      %v3557 = vld [vmem:[#allocation3 + $0x30] sm:$0xff]
      %v3558 = vld [vmem:[#allocation3 + $0x38] sm:$0xff]
      %v3559 = vld [vmem:[#allocation3 + $0x40] sm:$0xff]
      %v3560 = vld [vmem:[#allocation3 + $0x48] sm:$0xff]
      %v3561 = vld [vmem:[#allocation3 + $0x50] sm:$0xff]
      %v3562 = vld [vmem:[#allocation3 + $0x58] sm:$0xff]
      %v3563 = vld [vmem:[#allocation3 + $0x60] sm:$0xff]
      %v3564 = vld [vmem:[#allocation3 + $0x68] sm:$0xff]
      %v3565 = vld [vmem:[#allocation3 + $0x70] sm:$0xff]
      %v3566 = vld [vmem:[#allocation3 + $0x78] sm:$0xff]
      %v3567 = vld [vmem:[#allocation3 + $0x80] sm:$0xff]
      %v3568 = vld [vmem:[#allocation3 + $0x88] sm:$0xff]
      %v3569 = vld [vmem:[#allocation3 + $0x90] sm:$0xff]
      %v3570 = vld [vmem:[#allocation3 + $0x98] sm:$0xff]
      %v3571 = vld [vmem:[#allocation3 + $0xa0] sm:$0xff]
      %v3572 = vld [vmem:[#allocation3 + $0xa8] sm:$0xff]
      %v3573 = vld [vmem:[#allocation3 + $0xb0] sm:$0xff]
      %v3574 = vld [vmem:[#allocation3 + $0xb8] sm:$0xff]
      %v3575 = vld [vmem:[#allocation3 + $0xc0] sm:$0xff]
      %v3576 = vld [vmem:[#allocation3 + $0xc8] sm:$0xff]
      %v3577 = vld [vmem:[#allocation3 + $0xd0] sm:$0xff]
      %v3578 = vld [vmem:[#allocation3 + $0xd8] sm:$0xff]
      %v3579 = vld [vmem:[#allocation3 + $0xe0] sm:$0xff]
      %v3580 = vld [vmem:[#allocation3 + $0xe8] sm:$0xff]
      %v3581 = vld [vmem:[#allocation3 + $0xf0] sm:$0xff]
      %v3582 = vld [vmem:[#allocation3 + $0xf8] sm:$0xff]
      %v3583 = vld [vmem:[#allocation3 + $0x100] sm:$0xff]
      %v3584 = vld [vmem:[#allocation3 + $0x108] sm:$0xff]
      %v3585 = vld [vmem:[#allocation3 + $0x110] sm:$0xff]
      %v3586 = vld [vmem:[#allocation3 + $0x118] sm:$0xff]
      %v3587 = vld [vmem:[#allocation3 + $0x120] sm:$0xff]
      %v3588 = vld [vmem:[#allocation3 + $0x128] sm:$0xff]
      %v3589 = vld [vmem:[#allocation3 + $0x130] sm:$0xff]
      %v3590 = vld [vmem:[#allocation3 + $0x138] sm:$0xff]
      %v3591 = vld [vmem:[#allocation3 + $0x140] sm:$0xff]
      %v3592 = vld [vmem:[#allocation3 + $0x148] sm:$0xff]
      %v3593 = vld [vmem:[#allocation3 + $0x150] sm:$0xff]
      %v3594 = vld [vmem:[#allocation3 + $0x158] sm:$0xff]
      %v3595 = vld [vmem:[#allocation3 + $0x160] sm:$0xff]
      %v3596 = vld [vmem:[#allocation3 + $0x168] sm:$0xff]
      %v3597 = vld [vmem:[#allocation3 + $0x170] sm:$0xff]
      %v3598 = vld [vmem:[#allocation3 + $0x178] sm:$0xff]
      %v3599 = vld [vmem:[%s5] sm:$0xf]
      %v3600 = vld [vmem:[%s5 + $0x4] sm:$0xf]
      %v3601 = vld [vmem:[%s5 + $0x8] sm:$0xf]
      %v3602 = vld [vmem:[%s5 + $0xc] sm:$0xf]
      %v3603 = vld [vmem:[%s5 + $0x10] sm:$0xf]
      %v3604 = vld [vmem:[%s5 + $0x14] sm:$0xf]
      %v3605 = vld [vmem:[%s5 + $0x18] sm:$0xf]
      %v3606 = vld [vmem:[%s5 + $0x1c] sm:$0xf]
      %v3607 = vld [vmem:[%s5 + $0x20] sm:$0xf]
      %v3608 = vld [vmem:[%s5 + $0x24] sm:$0xf]
      %v3609 = vld [vmem:[%s5 + $0x28] sm:$0xf]
      %v3610 = vld [vmem:[%s5 + $0x2c] sm:$0xf]
      %v3611 = vld [vmem:[%s5 + $0x30] sm:$0xf]
      %v3612 = vld [vmem:[%s5 + $0x34] sm:$0xf]
      %v3613 = vld [vmem:[%s5 + $0x38] sm:$0xf]
      %v3614 = vld [vmem:[%s5 + $0x3c] sm:$0xf]
      %v3615 = vld [vmem:[%s5 + $0x40] sm:$0xf]
      %v3616 = vld [vmem:[%s5 + $0x44] sm:$0xf]
      %v3617 = vld [vmem:[%s5 + $0x48] sm:$0xf]
      %v3618 = vld [vmem:[%s5 + $0x4c] sm:$0xf]
      %v3619 = vld [vmem:[%s5 + $0x50] sm:$0xf]
      %v3620 = vld [vmem:[%s5 + $0x54] sm:$0xf]
      %v3621 = vld [vmem:[%s5 + $0x58] sm:$0xf]
      %v3622 = vld [vmem:[%s5 + $0x5c] sm:$0xf]
      %v3623 = vld [vmem:[%s5 + $0x60] sm:$0xf]
      %v3624 = vld [vmem:[%s5 + $0x64] sm:$0xf]
      %v3625 = vld [vmem:[%s5 + $0x68] sm:$0xf]
      %v3626 = vld [vmem:[%s5 + $0x6c] sm:$0xf]
      %v3627 = vld [vmem:[%s5 + $0x70] sm:$0xf]
      %v3628 = vld [vmem:[%s5 + $0x74] sm:$0xf]
      %v3629 = vld [vmem:[%s5 + $0x78] sm:$0xf]
      %v3630 = vld [vmem:[%s5 + $0x7c] sm:$0xf]
      %v3631 = vld [vmem:[%s5 + $0x80] sm:$0xf]
      %v3632 = vld [vmem:[%s5 + $0x84] sm:$0xf]
      %v3633 = vld [vmem:[%s5 + $0x88] sm:$0xf]
      %v3634 = vld [vmem:[%s5 + $0x8c] sm:$0xf]
      %v3635 = vld [vmem:[%s5 + $0x90] sm:$0xf]
      %v3636 = vld [vmem:[%s5 + $0x94] sm:$0xf]
      %v3637 = vld [vmem:[%s5 + $0x98] sm:$0xf]
      %v3638 = vld [vmem:[%s5 + $0x9c] sm:$0xf]
      %v3639 = vld [vmem:[%s5 + $0xa0] sm:$0xf]
      %v3640 = vld [vmem:[%s5 + $0xa4] sm:$0xf]
      %v3641 = vld [vmem:[%s5 + $0xa8] sm:$0xf]
      %v3642 = vld [vmem:[%s5 + $0xac] sm:$0xf]
      %v3643 = vld [vmem:[%s5 + $0xb0] sm:$0xf]
      %v3644 = vld [vmem:[%s5 + $0xb4] sm:$0xf]
      %v3645 = vld [vmem:[%s5 + $0xb8] sm:$0xf]
      %v3646 = vld [vmem:[%s5 + $0xbc] sm:$0xf]
      %v3695 = vunpack.c.l.b16 %v3599
      %v3696 = vunpack.c.l.b16 %v3600
      %v3697 = vunpack.c.l.b16 %v3601
      %v3698 = vunpack.c.l.b16 %v3602
      %v3699 = vunpack.c.l.b16 %v3603
      %v3700 = vunpack.c.l.b16 %v3604
      %v3701 = vunpack.c.l.b16 %v3605
      %v3702 = vunpack.c.l.b16 %v3606
      %v3703 = vunpack.c.l.b16 %v3607
      %v3704 = vunpack.c.l.b16 %v3608
      %v3705 = vunpack.c.l.b16 %v3609
      %v3706 = vunpack.c.l.b16 %v3610
      %v3707 = vunpack.c.l.b16 %v3611
      %v3708 = vunpack.c.l.b16 %v3612
      %v3709 = vunpack.c.l.b16 %v3613
      %v3710 = vunpack.c.l.b16 %v3614
      %v3711 = vunpack.c.l.b16 %v3615
      %v3712 = vunpack.c.l.b16 %v3616
      %v3713 = vunpack.c.l.b16 %v3617
      %v3714 = vunpack.c.l.b16 %v3618
      %v3715 = vunpack.c.l.b16 %v3619
      %v3716 = vunpack.c.l.b16 %v3620
      %v3717 = vunpack.c.l.b16 %v3621
      %v3718 = vunpack.c.l.b16 %v3622
      %v3719 = vunpack.c.l.b16 %v3623
      %v3720 = vunpack.c.l.b16 %v3624
      %v3721 = vunpack.c.l.b16 %v3625
      %v3722 = vunpack.c.l.b16 %v3626
      %v3723 = vunpack.c.l.b16 %v3627
      %v3724 = vunpack.c.l.b16 %v3628
      %v3725 = vunpack.c.l.b16 %v3629
      %v3726 = vunpack.c.l.b16 %v3630
      %v3727 = vunpack.c.l.b16 %v3631
      %v3728 = vunpack.c.l.b16 %v3632
      %v3729 = vunpack.c.l.b16 %v3633
      %v3730 = vunpack.c.l.b16 %v3634
      %v3731 = vunpack.c.l.b16 %v3635
      %v3732 = vunpack.c.l.b16 %v3636
      %v3733 = vunpack.c.l.b16 %v3637
      %v3734 = vunpack.c.l.b16 %v3638
      %v3735 = vunpack.c.l.b16 %v3639
      %v3736 = vunpack.c.l.b16 %v3640
      %v3737 = vunpack.c.l.b16 %v3641
      %v3738 = vunpack.c.l.b16 %v3642
      %v3739 = vunpack.c.l.b16 %v3643
      %v3740 = vunpack.c.l.b16 %v3644
      %v3741 = vunpack.c.l.b16 %v3645
      %v3742 = vunpack.c.l.b16 %v3646
      %v3743 = vpack.c.b16 %v3696, %v3695
      %v3744 = vpack.c.b16 %v3698, %v3697
      %v3745 = vpack.c.b16 %v3700, %v3699
      %v3746 = vpack.c.b16 %v3702, %v3701
      %v3747 = vpack.c.b16 %v3704, %v3703
      %v3748 = vpack.c.b16 %v3706, %v3705
      %v3749 = vpack.c.b16 %v3708, %v3707
      %v3750 = vpack.c.b16 %v3710, %v3709
      %v3751 = vpack.c.b16 %v3712, %v3711
      %v3752 = vpack.c.b16 %v3714, %v3713
      %v3753 = vpack.c.b16 %v3716, %v3715
      %v3754 = vpack.c.b16 %v3718, %v3717
      %v3755 = vpack.c.b16 %v3720, %v3719
      %v3756 = vpack.c.b16 %v3722, %v3721
      %v3757 = vpack.c.b16 %v3724, %v3723
      %v3758 = vpack.c.b16 %v3726, %v3725
      %v3759 = vpack.c.b16 %v3728, %v3727
      %v3760 = vpack.c.b16 %v3730, %v3729
      %v3761 = vpack.c.b16 %v3732, %v3731
      %v3762 = vpack.c.b16 %v3734, %v3733
      %v3763 = vpack.c.b16 %v3736, %v3735
      %v3764 = vpack.c.b16 %v3738, %v3737
      %v3765 = vpack.c.b16 %v3740, %v3739
      %v3766 = vpack.c.b16 %v3742, %v3741
      %3791 = vmatprep.subr.bf16.mxu0 0
      %3792 = vmatpush1.bf16.msra.mxu0 %v3743
      %3793 = vmatprep.subr.bf16.mxu0 0
      %3794 = vmatpush1.bf16.msra.mxu0 %v3744
      %3795 = vmatprep.subr.bf16.mxu0 0
      %3796 = vmatpush1.bf16.msra.mxu0 %v3745
      %3797 = vmatprep.subr.bf16.mxu0 0
      %3798 = vmatpush1.bf16.msra.mxu0 %v3746
      %3799 = vmatprep.subr.bf16.mxu0 0
      %3800 = vmatpush1.bf16.msra.mxu0 %v3747
      %3801 = vmatprep.subr.bf16.mxu0 0
      %3802 = vmatpush1.bf16.msra.mxu0 %v3748
      %3803 = vmatprep.subr.bf16.mxu0 0
      %3804 = vmatpush1.bf16.msra.mxu0 %v3749
      %3805 = vmatprep.subr.bf16.mxu0 0
      %3806 = vmatpush1.bf16.msra.mxu0 %v3750
      %3807 = vmatprep.subr.bf16.mxu0 0
      %3808 = vmatpush1.bf16.msra.mxu0 %v3751
      %3809 = vmatprep.subr.bf16.mxu0 0
      %3810 = vmatpush1.bf16.msra.mxu0 %v3752
      %3811 = vmatprep.subr.bf16.mxu0 0
      %3812 = vmatpush1.bf16.msra.mxu0 %v3753
      %3813 = vmatprep.subr.bf16.mxu0 0
      %3814 = vmatpush1.bf16.msra.mxu0 %v3754
      %3815 = vmatprep.subr.bf16.mxu0 0
      %3816 = vmatpush1.bf16.msra.mxu0 %v3755
      %3817 = vmatprep.subr.bf16.mxu0 0
      %3818 = vmatpush1.bf16.msra.mxu0 %v3756
      %3819 = vmatprep.subr.bf16.mxu0 0
      %3820 = vmatpush1.bf16.msra.mxu0 %v3757
      %3821 = vmatprep.subr.bf16.mxu0 0
      %3822 = vmatpush1.bf16.msra.mxu0 %v3758
      %3823 = vmatprep.mubr.bf16.mxu0 %v3552
      %3824 = vmatmul.mubr.bf16.gmra.mrb[0].mxu0 %v3551
      %v3825 = vpop.f32.mrb[0].mxu0
      %v3826 = vadd.f32 0.0, %v3825
      %v3827 = vpop.f32.mrb[0].mxu0
      %v3828 = vpop.f32.mrb[0].mxu0
      %v3829 = vadd.f32 0.0, %v3828
      %v3830 = vpop.f32.mrb[0].mxu0
      %3831 = vmatprep.mubr.bf16.mxu0 %v3555
      %3832 = vmatmul.mubr.bf16.gmra.mrb[0].mxu0 %v3554
      %v3833 = vpop.f32.mrb[0].mxu0
      %v3834 = vadd.f32 0.0, %v3833
      %v3835 = vpop.f32.mrb[0].mxu0
      %v3836 = vpop.f32.mrb[0].mxu0
      %v3837 = vadd.f32 0.0, %v3836
      %v3838 = vpop.f32.mrb[0].mxu0
      %3839 = vmatprep.mubr.bf16.mxu0 %v3558
      %3840 = vmatmul.mubr.bf16.gmra.mrb[0].mxu0 %v3557
      %v3841 = vpop.f32.mrb[0].mxu0
      %v3842 = vadd.f32 0.0, %v3841
      %v3843 = vpop.f32.mrb[0].mxu0
      %v3844 = vpop.f32.mrb[0].mxu0
      %v3845 = vadd.f32 0.0, %v3844
      %v3846 = vpop.f32.mrb[0].mxu0
      %3847 = vmatprep.mubr.bf16.mxu0 %v3561
      %3848 = vmatmul.mubr.bf16.gmra.mrb[0].mxu0 %v3560
      %v3849 = vpop.f32.mrb[0].mxu0
      %v3850 = vadd.f32 0.0, %v3849
      %v3851 = vpop.f32.mrb[0].mxu0
      %v3852 = vpop.f32.mrb[0].mxu0
      %v3853 = vadd.f32 0.0, %v3852
      %v3854 = vpop.f32.mrb[0].mxu0
      %3855 = vmatprep.mubr.bf16.mxu0 %v3564
      %3856 = vmatmul.mubr.bf16.gmra.mrb[0].mxu0 %v3563
      %v3857 = vpop.f32.mrb[0].mxu0
      %v3858 = vadd.f32 0.0, %v3857
      %v3859 = vpop.f32.mrb[0].mxu0
      %v3860 = vpop.f32.mrb[0].mxu0
      %v3861 = vadd.f32 0.0, %v3860
      %v3862 = vpop.f32.mrb[0].mxu0
      %3863 = vmatprep.mubr.bf16.mxu0 %v3567
      %3864 = vmatmul.mubr.bf16.gmra.mrb[0].mxu0 %v3566
      %v3865 = vpop.f32.mrb[0].mxu0
      %v3866 = vadd.f32 0.0, %v3865
      %v3867 = vpop.f32.mrb[0].mxu0
      %v3868 = vpop.f32.mrb[0].mxu0
      %v3869 = vadd.f32 0.0, %v3868
      %v3870 = vpop.f32.mrb[0].mxu0
      %3871 = vmatprep.mubr.bf16.mxu0 %v3570
      %3872 = vmatmul.mubr.bf16.gmra.mrb[0].mxu0 %v3569
      %v3873 = vpop.f32.mrb[0].mxu0
      %v3874 = vadd.f32 0.0, %v3873
      %v3875 = vpop.f32.mrb[0].mxu0
      %v3876 = vpop.f32.mrb[0].mxu0
      %v3877 = vadd.f32 0.0, %v3876
      %v3878 = vpop.f32.mrb[0].mxu0
      %3879 = vmatprep.mubr.bf16.mxu0 %v3573
      %3880 = vmatmul.mubr.bf16.gmra.mrb[0].mxu0 %v3572
      %v3881 = vpop.f32.mrb[0].mxu0
      %v3882 = vadd.f32 0.0, %v3881
      %v3883 = vpop.f32.mrb[0].mxu0
      %v3884 = vpop.f32.mrb[0].mxu0
      %v3885 = vadd.f32 0.0, %v3884
      %v3886 = vpop.f32.mrb[0].mxu0
      %3887 = vmatprep.mubr.bf16.mxu0 %v3576
      %3888 = vmatmul.mubr.bf16.gmra.mrb[0].mxu0 %v3575
      %v3889 = vpop.f32.mrb[0].mxu0
      %v3890 = vadd.f32 0.0, %v3889
      %v3891 = vpop.f32.mrb[0].mxu0
      %v3892 = vpop.f32.mrb[0].mxu0
      %v3893 = vadd.f32 0.0, %v3892
      %v3894 = vpop.f32.mrb[0].mxu0
      %3895 = vmatprep.mubr.bf16.mxu0 %v3579
      %3896 = vmatmul.mubr.bf16.gmra.mrb[0].mxu0 %v3578
      %v3897 = vpop.f32.mrb[0].mxu0
      %v3898 = vadd.f32 0.0, %v3897
      %v3899 = vpop.f32.mrb[0].mxu0
      %v3900 = vpop.f32.mrb[0].mxu0
      %v3901 = vadd.f32 0.0, %v3900
      %v3902 = vpop.f32.mrb[0].mxu0
      %3903 = vmatprep.mubr.bf16.mxu0 %v3582
      %3904 = vmatmul.mubr.bf16.gmra.mrb[0].mxu0 %v3581
      %v3905 = vpop.f32.mrb[0].mxu0
      %v3906 = vadd.f32 0.0, %v3905
      %v3907 = vpop.f32.mrb[0].mxu0
      %v3908 = vpop.f32.mrb[0].mxu0
      %v3909 = vadd.f32 0.0, %v3908
      %v3910 = vpop.f32.mrb[0].mxu0
      %3911 = vmatprep.mubr.bf16.mxu0 %v3585
      %3912 = vmatmul.mubr.bf16.gmra.mrb[0].mxu0 %v3584
      %v3913 = vpop.f32.mrb[0].mxu0
      %v3914 = vadd.f32 0.0, %v3913
      %v3915 = vpop.f32.mrb[0].mxu0
      %v3916 = vpop.f32.mrb[0].mxu0
      %v3917 = vadd.f32 0.0, %v3916
      %v3918 = vpop.f32.mrb[0].mxu0
      %3919 = vmatprep.mubr.bf16.mxu0 %v3588
      %3920 = vmatmul.mubr.bf16.gmra.mrb[0].mxu0 %v3587
      %v3921 = vpop.f32.mrb[0].mxu0
      %v3922 = vadd.f32 0.0, %v3921
      %v3923 = vpop.f32.mrb[0].mxu0
      %v3924 = vpop.f32.mrb[0].mxu0
      %v3925 = vadd.f32 0.0, %v3924
      %v3926 = vpop.f32.mrb[0].mxu0
      %3927 = vmatprep.mubr.bf16.mxu0 %v3591
      %3928 = vmatmul.mubr.bf16.gmra.mrb[0].mxu0 %v3590
      %v3929 = vpop.f32.mrb[0].mxu0
      %v3930 = vadd.f32 0.0, %v3929
      %v3931 = vpop.f32.mrb[0].mxu0
      %v3932 = vpop.f32.mrb[0].mxu0
      %v3933 = vadd.f32 0.0, %v3932
      %v3934 = vpop.f32.mrb[0].mxu0
      %3935 = vmatprep.mubr.bf16.mxu0 %v3594
      %3936 = vmatmul.mubr.bf16.gmra.mrb[0].mxu0 %v3593
      %v3937 = vpop.f32.mrb[0].mxu0
      %v3938 = vadd.f32 0.0, %v3937
      %v3939 = vpop.f32.mrb[0].mxu0
      %v3940 = vpop.f32.mrb[0].mxu0
      %v3941 = vadd.f32 0.0, %v3940
      %v3942 = vpop.f32.mrb[0].mxu0
      %3943 = vmatprep.mubr.bf16.mxu0 %v3597
      %3944 = vmatmul.mubr.bf16.gmra.mrb[0].mxu0 %v3596
      %v3945 = vpop.f32.mrb[0].mxu0
      %v3946 = vpop.f32.mrb[0].mxu0
      %v3947 = vpop.f32.mrb[0].mxu0
      %v3948 = vpop.f32.mrb[0].mxu0
      %3949 = vdwg.mxu0
      %3950 = vmatprep.subr.bf16.mxu0 0
      %3951 = vmatpush1.bf16.msra.mxu0 %v3759
      %3952 = vmatprep.subr.bf16.mxu0 0
      %3953 = vmatpush1.bf16.msra.mxu0 %v3760
      %3954 = vmatprep.subr.bf16.mxu0 0
      %3955 = vmatpush1.bf16.msra.mxu0 %v3761
      %3956 = vmatprep.subr.bf16.mxu0 0
      %3957 = vmatpush1.bf16.msra.mxu0 %v3762
      %3958 = vmatprep.subr.bf16.mxu0 0
      %3959 = vmatpush1.bf16.msra.mxu0 %v3763
      %3960 = vmatprep.subr.bf16.mxu0 0
      %3961 = vmatpush1.bf16.msra.mxu0 %v3764
      %3962 = vmatprep.subr.bf16.mxu0 0
      %3963 = vmatpush1.bf16.msra.mxu0 %v3765
      %3964 = vmatprep.subr.bf16.mxu0 0
      %3965 = vmatpush1.bf16.msra.mxu0 %v3766
      %3966 = vmatprep.subr.bf16.mxu0 0
      %3967 = vmatpush1.bf16.msra.mxu0 0
      %3968 = vmatprep.subr.bf16.mxu0 0
      %3969 = vmatpush1.bf16.msra.mxu0 0
      %3970 = vmatprep.subr.bf16.mxu0 0
      %3971 = vmatpush1.bf16.msra.mxu0 0
      %3972 = vmatprep.subr.bf16.mxu0 0
      %3973 = vmatpush1.bf16.msra.mxu0 0
      %3974 = vmatprep.subr.bf16.mxu0 0
      %3975 = vmatpush1.bf16.msra.mxu0 0
      %3976 = vmatprep.subr.bf16.mxu0 0
      %3977 = vmatpush1.bf16.msra.mxu0 0
      %3978 = vmatprep.subr.bf16.mxu0 0
      %3979 = vmatpush1.bf16.msra.mxu0 0
      %3980 = vmatprep.subr.bf16.mxu0 0
      %3981 = vmatpush1.bf16.msra.mxu0 0
      %3982 = vmatprep.mubr.bf16.mxu0 0
      %3983 = vmatmul.mubr.bf16.gmra.mrb[0].mxu0 %v3553
      %v3984 = vpop.f32.mrb[0].mxu0
      %v3985 = vadd.f32 %v3826, %v3984
      %v3986 = vpop.f32.mrb[0].mxu0
      %v3987 = vpop.f32.mrb[0].mxu0
      %v3988 = vadd.f32 %v3829, %v3987
      %v3989 = vpop.f32.mrb[0].mxu0
      %3990 = vmatprep.mubr.bf16.mxu0 0
      %3991 = vmatmul.mubr.bf16.gmra.mrb[0].mxu0 %v3556
      %v3992 = vpop.f32.mrb[0].mxu0
      %v3993 = vadd.f32 %v3834, %v3992
      %v3994 = vpop.f32.mrb[0].mxu0
      %v3995 = vpop.f32.mrb[0].mxu0
      %v3996 = vadd.f32 %v3837, %v3995
      %v3997 = vpop.f32.mrb[0].mxu0
      %3998 = vmatprep.mubr.bf16.mxu0 0
      %3999 = vmatmul.mubr.bf16.gmra.mrb[0].mxu0 %v3559
      %v4000 = vpop.f32.mrb[0].mxu0
      %v4001 = vadd.f32 %v3842, %v4000
      %v4002 = vpop.f32.mrb[0].mxu0
      %v4003 = vpop.f32.mrb[0].mxu0
      %v4004 = vadd.f32 %v3845, %v4003
      %v4005 = vpop.f32.mrb[0].mxu0
      %4006 = vmatprep.mubr.bf16.mxu0 0
      %4007 = vmatmul.mubr.bf16.gmra.mrb[0].mxu0 %v3562
      %v4008 = vpop.f32.mrb[0].mxu0
      %v4009 = vadd.f32 %v3850, %v4008
      %v4010 = vpop.f32.mrb[0].mxu0
      %v4011 = vpop.f32.mrb[0].mxu0
      %v4012 = vadd.f32 %v3853, %v4011
      %v4013 = vpop.f32.mrb[0].mxu0
      %4014 = vmatprep.mubr.bf16.mxu0 0
      %4015 = vmatmul.mubr.bf16.gmra.mrb[0].mxu0 %v3565
      %v4016 = vpop.f32.mrb[0].mxu0
      %v4017 = vadd.f32 %v3858, %v4016
      %v4018 = vpop.f32.mrb[0].mxu0
      %v4019 = vpop.f32.mrb[0].mxu0
      %v4020 = vadd.f32 %v3861, %v4019
      %v4021 = vpop.f32.mrb[0].mxu0
      %4022 = vmatprep.mubr.bf16.mxu0 0
      %4023 = vmatmul.mubr.bf16.gmra.mrb[0].mxu0 %v3568
      %v4024 = vpop.f32.mrb[0].mxu0
      %v4025 = vadd.f32 %v3866, %v4024
      %v4026 = vpop.f32.mrb[0].mxu0
      %v4027 = vpop.f32.mrb[0].mxu0
      %v4028 = vadd.f32 %v3869, %v4027
      %v4029 = vpop.f32.mrb[0].mxu0
      %4030 = vmatprep.mubr.bf16.mxu0 0
      %4031 = vmatmul.mubr.bf16.gmra.mrb[0].mxu0 %v3571
      %v4032 = vpop.f32.mrb[0].mxu0
      %v4033 = vadd.f32 %v3874, %v4032
      %v4034 = vpop.f32.mrb[0].mxu0
      %v4035 = vpop.f32.mrb[0].mxu0
      %v4036 = vadd.f32 %v3877, %v4035
      %v4037 = vpop.f32.mrb[0].mxu0
      %4038 = vmatprep.mubr.bf16.mxu0 0
      %4039 = vmatmul.mubr.bf16.gmra.mrb[0].mxu0 %v3574
      %v4040 = vpop.f32.mrb[0].mxu0
      %v4041 = vadd.f32 %v3882, %v4040
      %v4042 = vpop.f32.mrb[0].mxu0
      %v4043 = vpop.f32.mrb[0].mxu0
      %v4044 = vadd.f32 %v3885, %v4043
      %v4045 = vpop.f32.mrb[0].mxu0
      %4046 = vmatprep.mubr.bf16.mxu0 0
      %4047 = vmatmul.mubr.bf16.gmra.mrb[0].mxu0 %v3577
      %v4048 = vpop.f32.mrb[0].mxu0
      %v4049 = vadd.f32 %v3890, %v4048
      %v4050 = vpop.f32.mrb[0].mxu0
      %v4051 = vpop.f32.mrb[0].mxu0
      %v4052 = vadd.f32 %v3893, %v4051
      %v4053 = vpop.f32.mrb[0].mxu0
      %4054 = vmatprep.mubr.bf16.mxu0 0
      %4055 = vmatmul.mubr.bf16.gmra.mrb[0].mxu0 %v3580
      %v4056 = vpop.f32.mrb[0].mxu0
      %v4057 = vadd.f32 %v3898, %v4056
      %v4058 = vpop.f32.mrb[0].mxu0
      %v4059 = vpop.f32.mrb[0].mxu0
      %v4060 = vadd.f32 %v3901, %v4059
      %v4061 = vpop.f32.mrb[0].mxu0
      %4062 = vmatprep.mubr.bf16.mxu0 0
      %4063 = vmatmul.mubr.bf16.gmra.mrb[0].mxu0 %v3583
      %v4064 = vpop.f32.mrb[0].mxu0
      %v4065 = vadd.f32 %v3906, %v4064
      %v4066 = vpop.f32.mrb[0].mxu0
      %v4067 = vpop.f32.mrb[0].mxu0
      %v4068 = vadd.f32 %v3909, %v4067
      %v4069 = vpop.f32.mrb[0].mxu0
      %4070 = vmatprep.mubr.bf16.mxu0 0
      %4071 = vmatmul.mubr.bf16.gmra.mrb[0].mxu0 %v3586
      %v4072 = vpop.f32.mrb[0].mxu0
      %v4073 = vadd.f32 %v3914, %v4072
      %v4074 = vpop.f32.mrb[0].mxu0
      %v4075 = vpop.f32.mrb[0].mxu0
      %v4076 = vadd.f32 %v3917, %v4075
      %v4077 = vpop.f32.mrb[0].mxu0
      %4078 = vmatprep.mubr.bf16.mxu0 0
      %4079 = vmatmul.mubr.bf16.gmra.mrb[0].mxu0 %v3589
      %v4080 = vpop.f32.mrb[0].mxu0
      %v4081 = vadd.f32 %v3922, %v4080
      %v4082 = vpop.f32.mrb[0].mxu0
      %v4083 = vpop.f32.mrb[0].mxu0
      %v4084 = vadd.f32 %v3925, %v4083
      %v4085 = vpop.f32.mrb[0].mxu0
      %4086 = vmatprep.mubr.bf16.mxu0 0
      %4087 = vmatmul.mubr.bf16.gmra.mrb[0].mxu0 %v3592
      %v4088 = vpop.f32.mrb[0].mxu0
      %v4089 = vadd.f32 %v3930, %v4088
      %v4090 = vpop.f32.mrb[0].mxu0
      %v4091 = vpop.f32.mrb[0].mxu0
      %v4092 = vadd.f32 %v3933, %v4091
      %v4093 = vpop.f32.mrb[0].mxu0
      %4094 = vmatprep.mubr.bf16.mxu0 0
      %4095 = vmatmul.mubr.bf16.gmra.mrb[0].mxu0 %v3595
      %v4096 = vpop.f32.mrb[0].mxu0
      %v4097 = vadd.f32 %v3938, %v4096
      %v4098 = vpop.f32.mrb[0].mxu0
      %v4099 = vpop.f32.mrb[0].mxu0
      %v4100 = vadd.f32 %v3941, %v4099
      %v4101 = vpop.f32.mrb[0].mxu0
      %4102 = vmatprep.mubr.bf16.mxu0 0
      %4103 = vmatmul.mubr.bf16.gmra.mrb[0].mxu0 %v3598
      %v4104 = vpop.f32.mrb[0].mxu0
      %v4105 = vpop.f32.mrb[0].mxu0
      %v4106 = vpop.f32.mrb[0].mxu0
      %v4107 = vpop.f32.mrb[0].mxu0
      %4108 = vdwg.mxu0
      %s4109 = scalar_lea.vmem %s5, 192
      %v4110 = vld [vmem:[%s4109] sm:$0xf]
      %v4111 = vld [vmem:[%s4109 + $0x4] sm:$0xf]
      %v4112 = vld [vmem:[%s4109 + $0x8] sm:$0xf]
      %v4113 = vld [vmem:[%s4109 + $0xc] sm:$0xf]
      %v4114 = vld [vmem:[%s4109 + $0x10] sm:$0xf]
      %v4115 = vld [vmem:[%s4109 + $0x14] sm:$0xf]
      %v4116 = vld [vmem:[%s4109 + $0x18] sm:$0xf]
      %v4117 = vld [vmem:[%s4109 + $0x1c] sm:$0xf]
      %v4118 = vld [vmem:[%s4109 + $0x20] sm:$0xf]
      %v4119 = vld [vmem:[%s4109 + $0x24] sm:$0xf]
      %v4120 = vld [vmem:[%s4109 + $0x28] sm:$0xf]
      %v4121 = vld [vmem:[%s4109 + $0x2c] sm:$0xf]
      %v4122 = vld [vmem:[%s4109 + $0x30] sm:$0xf]
      %v4123 = vld [vmem:[%s4109 + $0x34] sm:$0xf]
      %v4124 = vld [vmem:[%s4109 + $0x38] sm:$0xf]
      %v4125 = vld [vmem:[%s4109 + $0x3c] sm:$0xf]
      %v4126 = vld [vmem:[%s4109 + $0x40] sm:$0xf]
      %v4127 = vld [vmem:[%s4109 + $0x44] sm:$0xf]
      %v4128 = vld [vmem:[%s4109 + $0x48] sm:$0xf]
      %v4129 = vld [vmem:[%s4109 + $0x4c] sm:$0xf]
      %v4130 = vld [vmem:[%s4109 + $0x50] sm:$0xf]
      %v4131 = vld [vmem:[%s4109 + $0x54] sm:$0xf]
      %v4132 = vld [vmem:[%s4109 + $0x58] sm:$0xf]
      %v4133 = vld [vmem:[%s4109 + $0x5c] sm:$0xf]
      %v4134 = vld [vmem:[%s4109 + $0x60] sm:$0xf]
      %v4135 = vld [vmem:[%s4109 + $0x64] sm:$0xf]
      %v4136 = vld [vmem:[%s4109 + $0x68] sm:$0xf]
      %v4137 = vld [vmem:[%s4109 + $0x6c] sm:$0xf]
      %v4138 = vld [vmem:[%s4109 + $0x70] sm:$0xf]
      %v4139 = vld [vmem:[%s4109 + $0x74] sm:$0xf]
      %v4140 = vld [vmem:[%s4109 + $0x78] sm:$0xf]
      %v4141 = vld [vmem:[%s4109 + $0x7c] sm:$0xf]
      %v4142 = vld [vmem:[%s4109 + $0x80] sm:$0xf]
      %v4143 = vld [vmem:[%s4109 + $0x84] sm:$0xf]
      %v4144 = vld [vmem:[%s4109 + $0x88] sm:$0xf]
      %v4145 = vld [vmem:[%s4109 + $0x8c] sm:$0xf]
      %v4146 = vld [vmem:[%s4109 + $0x90] sm:$0xf]
      %v4147 = vld [vmem:[%s4109 + $0x94] sm:$0xf]
      %v4148 = vld [vmem:[%s4109 + $0x98] sm:$0xf]
      %v4149 = vld [vmem:[%s4109 + $0x9c] sm:$0xf]
      %v4150 = vld [vmem:[%s4109 + $0xa0] sm:$0xf]
      %v4151 = vld [vmem:[%s4109 + $0xa4] sm:$0xf]
      %v4152 = vld [vmem:[%s4109 + $0xa8] sm:$0xf]
      %v4153 = vld [vmem:[%s4109 + $0xac] sm:$0xf]
      %v4154 = vld [vmem:[%s4109 + $0xb0] sm:$0xf]
      %v4155 = vld [vmem:[%s4109 + $0xb4] sm:$0xf]
      %v4156 = vld [vmem:[%s4109 + $0xb8] sm:$0xf]
      %v4157 = vld [vmem:[%s4109 + $0xbc] sm:$0xf]
      %v4206 = vunpack.c.l.b16 %v4110
      %v4207 = vunpack.c.l.b16 %v4111
      %v4208 = vunpack.c.l.b16 %v4112
      %v4209 = vunpack.c.l.b16 %v4113
      %v4210 = vunpack.c.l.b16 %v4114
      %v4211 = vunpack.c.l.b16 %v4115
      %v4212 = vunpack.c.l.b16 %v4116
      %v4213 = vunpack.c.l.b16 %v4117
      %v4214 = vunpack.c.l.b16 %v4118
      %v4215 = vunpack.c.l.b16 %v4119
      %v4216 = vunpack.c.l.b16 %v4120
      %v4217 = vunpack.c.l.b16 %v4121
      %v4218 = vunpack.c.l.b16 %v4122
      %v4219 = vunpack.c.l.b16 %v4123
      %v4220 = vunpack.c.l.b16 %v4124
      %v4221 = vunpack.c.l.b16 %v4125
      %v4222 = vunpack.c.l.b16 %v4126
      %v4223 = vunpack.c.l.b16 %v4127
      %v4224 = vunpack.c.l.b16 %v4128
      %v4225 = vunpack.c.l.b16 %v4129
      %v4226 = vunpack.c.l.b16 %v4130
      %v4227 = vunpack.c.l.b16 %v4131
      %v4228 = vunpack.c.l.b16 %v4132
      %v4229 = vunpack.c.l.b16 %v4133
      %v4230 = vunpack.c.l.b16 %v4134
      %v4231 = vunpack.c.l.b16 %v4135
      %v4232 = vunpack.c.l.b16 %v4136
      %v4233 = vunpack.c.l.b16 %v4137
      %v4234 = vunpack.c.l.b16 %v4138
      %v4235 = vunpack.c.l.b16 %v4139
      %v4236 = vunpack.c.l.b16 %v4140
      %v4237 = vunpack.c.l.b16 %v4141
      %v4238 = vunpack.c.l.b16 %v4142
      %v4239 = vunpack.c.l.b16 %v4143
      %v4240 = vunpack.c.l.b16 %v4144
      %v4241 = vunpack.c.l.b16 %v4145
      %v4242 = vunpack.c.l.b16 %v4146
      %v4243 = vunpack.c.l.b16 %v4147
      %v4244 = vunpack.c.l.b16 %v4148
      %v4245 = vunpack.c.l.b16 %v4149
      %v4246 = vunpack.c.l.b16 %v4150
      %v4247 = vunpack.c.l.b16 %v4151
      %v4248 = vunpack.c.l.b16 %v4152
      %v4249 = vunpack.c.l.b16 %v4153
      %v4250 = vunpack.c.l.b16 %v4154
      %v4251 = vunpack.c.l.b16 %v4155
      %v4252 = vunpack.c.l.b16 %v4156
      %v4253 = vunpack.c.l.b16 %v4157
      %v4254 = vpack.c.b16 %v4207, %v4206
      %v4255 = vpack.c.b16 %v4209, %v4208
      %v4256 = vpack.c.b16 %v4211, %v4210
      %v4257 = vpack.c.b16 %v4213, %v4212
      %v4258 = vpack.c.b16 %v4215, %v4214
      %v4259 = vpack.c.b16 %v4217, %v4216
      %v4260 = vpack.c.b16 %v4219, %v4218
      %v4261 = vpack.c.b16 %v4221, %v4220
      %v4262 = vpack.c.b16 %v4223, %v4222
      %v4263 = vpack.c.b16 %v4225, %v4224
      %v4264 = vpack.c.b16 %v4227, %v4226
      %v4265 = vpack.c.b16 %v4229, %v4228
      %v4266 = vpack.c.b16 %v4231, %v4230
      %v4267 = vpack.c.b16 %v4233, %v4232
      %v4268 = vpack.c.b16 %v4235, %v4234
      %v4269 = vpack.c.b16 %v4237, %v4236
      %v4270 = vpack.c.b16 %v4239, %v4238
      %v4271 = vpack.c.b16 %v4241, %v4240
      %v4272 = vpack.c.b16 %v4243, %v4242
      %v4273 = vpack.c.b16 %v4245, %v4244
      %v4274 = vpack.c.b16 %v4247, %v4246
      %v4275 = vpack.c.b16 %v4249, %v4248
      %v4276 = vpack.c.b16 %v4251, %v4250
      %v4277 = vpack.c.b16 %v4253, %v4252
      %4302 = vmatprep.subr.bf16.mxu0 0
      %4303 = vmatpush1.bf16.msra.mxu0 %v4254
      %4304 = vmatprep.subr.bf16.mxu0 0
      %4305 = vmatpush1.bf16.msra.mxu0 %v4255
      %4306 = vmatprep.subr.bf16.mxu0 0
      %4307 = vmatpush1.bf16.msra.mxu0 %v4256
      %4308 = vmatprep.subr.bf16.mxu0 0
      %4309 = vmatpush1.bf16.msra.mxu0 %v4257
      %4310 = vmatprep.subr.bf16.mxu0 0
      %4311 = vmatpush1.bf16.msra.mxu0 %v4258
      %4312 = vmatprep.subr.bf16.mxu0 0
      %4313 = vmatpush1.bf16.msra.mxu0 %v4259
      %4314 = vmatprep.subr.bf16.mxu0 0
      %4315 = vmatpush1.bf16.msra.mxu0 %v4260
      %4316 = vmatprep.subr.bf16.mxu0 0
      %4317 = vmatpush1.bf16.msra.mxu0 %v4261
      %4318 = vmatprep.subr.bf16.mxu0 0
      %4319 = vmatpush1.bf16.msra.mxu0 %v4262
      %4320 = vmatprep.subr.bf16.mxu0 0
      %4321 = vmatpush1.bf16.msra.mxu0 %v4263
      %4322 = vmatprep.subr.bf16.mxu0 0
      %4323 = vmatpush1.bf16.msra.mxu0 %v4264
      %4324 = vmatprep.subr.bf16.mxu0 0
      %4325 = vmatpush1.bf16.msra.mxu0 %v4265
      %4326 = vmatprep.subr.bf16.mxu0 0
      %4327 = vmatpush1.bf16.msra.mxu0 %v4266
      %4328 = vmatprep.subr.bf16.mxu0 0
      %4329 = vmatpush1.bf16.msra.mxu0 %v4267
      %4330 = vmatprep.subr.bf16.mxu0 0
      %4331 = vmatpush1.bf16.msra.mxu0 %v4268
      %4332 = vmatprep.subr.bf16.mxu0 0
      %4333 = vmatpush1.bf16.msra.mxu0 %v4269
      %4334 = vmatprep.mubr.bf16.mxu0 %v3552
      %4335 = vmatmul.mubr.bf16.gmra.mrb[0].mxu0 %v3551
      %v4336 = vpop.f32.mrb[0].mxu0
      %v4337 = vadd.f32 0.0, %v4336
      %v4338 = vpop.f32.mrb[0].mxu0
      %v4339 = vpop.f32.mrb[0].mxu0
      %v4340 = vadd.f32 0.0, %v4339
      %v4341 = vpop.f32.mrb[0].mxu0
      %4342 = vmatprep.mubr.bf16.mxu0 %v3555
      %4343 = vmatmul.mubr.bf16.gmra.mrb[0].mxu0 %v3554
      %v4344 = vpop.f32.mrb[0].mxu0
      %v4345 = vadd.f32 0.0, %v4344
      %v4346 = vpop.f32.mrb[0].mxu0
      %v4347 = vpop.f32.mrb[0].mxu0
      %v4348 = vadd.f32 0.0, %v4347
      %v4349 = vpop.f32.mrb[0].mxu0
      %4350 = vmatprep.mubr.bf16.mxu0 %v3558
      %4351 = vmatmul.mubr.bf16.gmra.mrb[0].mxu0 %v3557
      %v4352 = vpop.f32.mrb[0].mxu0
      %v4353 = vadd.f32 0.0, %v4352
      %v4354 = vpop.f32.mrb[0].mxu0
      %v4355 = vpop.f32.mrb[0].mxu0
      %v4356 = vadd.f32 0.0, %v4355
      %v4357 = vpop.f32.mrb[0].mxu0
      %4358 = vmatprep.mubr.bf16.mxu0 %v3561
      %4359 = vmatmul.mubr.bf16.gmra.mrb[0].mxu0 %v3560
      %v4360 = vpop.f32.mrb[0].mxu0
      %v4361 = vadd.f32 0.0, %v4360
      %v4362 = vpop.f32.mrb[0].mxu0
      %v4363 = vpop.f32.mrb[0].mxu0
      %v4364 = vadd.f32 0.0, %v4363
      %v4365 = vpop.f32.mrb[0].mxu0
      %4366 = vmatprep.mubr.bf16.mxu0 %v3564
      %4367 = vmatmul.mubr.bf16.gmra.mrb[0].mxu0 %v3563
      %v4368 = vpop.f32.mrb[0].mxu0
      %v4369 = vadd.f32 0.0, %v4368
      %v4370 = vpop.f32.mrb[0].mxu0
      %v4371 = vpop.f32.mrb[0].mxu0
      %v4372 = vadd.f32 0.0, %v4371
      %v4373 = vpop.f32.mrb[0].mxu0
      %4374 = vmatprep.mubr.bf16.mxu0 %v3567
      %4375 = vmatmul.mubr.bf16.gmra.mrb[0].mxu0 %v3566
      %v4376 = vpop.f32.mrb[0].mxu0
      %v4377 = vadd.f32 0.0, %v4376
      %v4378 = vpop.f32.mrb[0].mxu0
      %v4379 = vpop.f32.mrb[0].mxu0
      %v4380 = vadd.f32 0.0, %v4379
      %v4381 = vpop.f32.mrb[0].mxu0
      %4382 = vmatprep.mubr.bf16.mxu0 %v3570
      %4383 = vmatmul.mubr.bf16.gmra.mrb[0].mxu0 %v3569
      %v4384 = vpop.f32.mrb[0].mxu0
      %v4385 = vadd.f32 0.0, %v4384
      %v4386 = vpop.f32.mrb[0].mxu0
      %v4387 = vpop.f32.mrb[0].mxu0
      %v4388 = vadd.f32 0.0, %v4387
      %v4389 = vpop.f32.mrb[0].mxu0
      %4390 = vmatprep.mubr.bf16.mxu0 %v3573
      %4391 = vmatmul.mubr.bf16.gmra.mrb[0].mxu0 %v3572
      %v4392 = vpop.f32.mrb[0].mxu0
      %v4393 = vadd.f32 0.0, %v4392
      %v4394 = vpop.f32.mrb[0].mxu0
      %v4395 = vpop.f32.mrb[0].mxu0
      %v4396 = vadd.f32 0.0, %v4395
      %v4397 = vpop.f32.mrb[0].mxu0
      %4398 = vmatprep.mubr.bf16.mxu0 %v3576
      %4399 = vmatmul.mubr.bf16.gmra.mrb[0].mxu0 %v3575
      %v4400 = vpop.f32.mrb[0].mxu0
      %v4401 = vadd.f32 0.0, %v4400
      %v4402 = vpop.f32.mrb[0].mxu0
      %v4403 = vpop.f32.mrb[0].mxu0
      %v4404 = vadd.f32 0.0, %v4403
      %v4405 = vpop.f32.mrb[0].mxu0
      %4406 = vmatprep.mubr.bf16.mxu0 %v3579
      %4407 = vmatmul.mubr.bf16.gmra.mrb[0].mxu0 %v3578
      %v4408 = vpop.f32.mrb[0].mxu0
      %v4409 = vadd.f32 0.0, %v4408
      %v4410 = vpop.f32.mrb[0].mxu0
      %v4411 = vpop.f32.mrb[0].mxu0
      %v4412 = vadd.f32 0.0, %v4411
      %v4413 = vpop.f32.mrb[0].mxu0
      %4414 = vmatprep.mubr.bf16.mxu0 %v3582
      %4415 = vmatmul.mubr.bf16.gmra.mrb[0].mxu0 %v3581
      %v4416 = vpop.f32.mrb[0].mxu0
      %v4417 = vadd.f32 0.0, %v4416
      %v4418 = vpop.f32.mrb[0].mxu0
      %v4419 = vpop.f32.mrb[0].mxu0
      %v4420 = vadd.f32 0.0, %v4419
      %v4421 = vpop.f32.mrb[0].mxu0
      %4422 = vmatprep.mubr.bf16.mxu0 %v3585
      %4423 = vmatmul.mubr.bf16.gmra.mrb[0].mxu0 %v3584
      %v4424 = vpop.f32.mrb[0].mxu0
      %v4425 = vadd.f32 0.0, %v4424
      %v4426 = vpop.f32.mrb[0].mxu0
      %v4427 = vpop.f32.mrb[0].mxu0
      %v4428 = vadd.f32 0.0, %v4427
      %v4429 = vpop.f32.mrb[0].mxu0
      %4430 = vmatprep.mubr.bf16.mxu0 %v3588
      %4431 = vmatmul.mubr.bf16.gmra.mrb[0].mxu0 %v3587
      %v4432 = vpop.f32.mrb[0].mxu0
      %v4433 = vadd.f32 0.0, %v4432
      %v4434 = vpop.f32.mrb[0].mxu0
      %v4435 = vpop.f32.mrb[0].mxu0
      %v4436 = vadd.f32 0.0, %v4435
      %v4437 = vpop.f32.mrb[0].mxu0
      %4438 = vmatprep.mubr.bf16.mxu0 %v3591
      %4439 = vmatmul.mubr.bf16.gmra.mrb[0].mxu0 %v3590
      %v4440 = vpop.f32.mrb[0].mxu0
      %v4441 = vadd.f32 0.0, %v4440
      %v4442 = vpop.f32.mrb[0].mxu0
      %v4443 = vpop.f32.mrb[0].mxu0
      %v4444 = vadd.f32 0.0, %v4443
      %v4445 = vpop.f32.mrb[0].mxu0
      %4446 = vmatprep.mubr.bf16.mxu0 %v3594
      %4447 = vmatmul.mubr.bf16.gmra.mrb[0].mxu0 %v3593
      %v4448 = vpop.f32.mrb[0].mxu0
      %v4449 = vadd.f32 0.0, %v4448
      %v4450 = vpop.f32.mrb[0].mxu0
      %v4451 = vpop.f32.mrb[0].mxu0
      %v4452 = vadd.f32 0.0, %v4451
      %v4453 = vpop.f32.mrb[0].mxu0
      %4454 = vmatprep.mubr.bf16.mxu0 %v3597
      %4455 = vmatmul.mubr.bf16.gmra.mrb[0].mxu0 %v3596
      %v4456 = vpop.f32.mrb[0].mxu0
      %v4457 = vadd.f32 0.0, %v4456
      %v4458 = vpop.f32.mrb[0].mxu0
      %v4459 = vpop.f32.mrb[0].mxu0
      %v4460 = vadd.f32 0.0, %v4459
      %v4461 = vpop.f32.mrb[0].mxu0
      %4462 = vdwg.mxu0
      %4463 = vmatprep.subr.bf16.mxu0 0
      %4464 = vmatpush1.bf16.msra.mxu0 %v4270
      %4465 = vmatprep.subr.bf16.mxu0 0
      %4466 = vmatpush1.bf16.msra.mxu0 %v4271
      %4467 = vmatprep.subr.bf16.mxu0 0
      %4468 = vmatpush1.bf16.msra.mxu0 %v4272
      %4469 = vmatprep.subr.bf16.mxu0 0
      %4470 = vmatpush1.bf16.msra.mxu0 %v4273
      %4471 = vmatprep.subr.bf16.mxu0 0
      %4472 = vmatpush1.bf16.msra.mxu0 %v4274
      %4473 = vmatprep.subr.bf16.mxu0 0
      %4474 = vmatpush1.bf16.msra.mxu0 %v4275
      %4475 = vmatprep.subr.bf16.mxu0 0
      %4476 = vmatpush1.bf16.msra.mxu0 %v4276
      %4477 = vmatprep.subr.bf16.mxu0 0
      %4478 = vmatpush1.bf16.msra.mxu0 %v4277
      %4479 = vmatprep.subr.bf16.mxu0 0
      %4480 = vmatpush1.bf16.msra.mxu0 0
      %4481 = vmatprep.subr.bf16.mxu0 0
      %4482 = vmatpush1.bf16.msra.mxu0 0
      %4483 = vmatprep.subr.bf16.mxu0 0
      %4484 = vmatpush1.bf16.msra.mxu0 0
      %4485 = vmatprep.subr.bf16.mxu0 0
      %4486 = vmatpush1.bf16.msra.mxu0 0
      %4487 = vmatprep.subr.bf16.mxu0 0
      %4488 = vmatpush1.bf16.msra.mxu0 0
      %4489 = vmatprep.subr.bf16.mxu0 0
      %4490 = vmatpush1.bf16.msra.mxu0 0
      %4491 = vmatprep.subr.bf16.mxu0 0
      %4492 = vmatpush1.bf16.msra.mxu0 0
      %4493 = vmatprep.subr.bf16.mxu0 0
      %4494 = vmatpush1.bf16.msra.mxu0 0
      %4495 = vmatprep.mubr.bf16.mxu0 0
      %4496 = vmatmul.mubr.bf16.gmra.mrb[0].mxu0 %v3553
      %v4497 = vpop.f32.mrb[0].mxu0
      %v4498 = vadd.f32 %v4337, %v4497
      %v4499 = vpop.f32.mrb[0].mxu0
      %v4500 = vpop.f32.mrb[0].mxu0
      %v4501 = vadd.f32 %v4340, %v4500
      %v4502 = vpop.f32.mrb[0].mxu0
      %4503 = vmatprep.mubr.bf16.mxu0 0
      %4504 = vmatmul.mubr.bf16.gmra.mrb[0].mxu0 %v3556
      %v4505 = vpop.f32.mrb[0].mxu0
      %v4506 = vadd.f32 %v4345, %v4505
      %v4507 = vpop.f32.mrb[0].mxu0
      %v4508 = vpop.f32.mrb[0].mxu0
      %v4509 = vadd.f32 %v4348, %v4508
      %v4510 = vpop.f32.mrb[0].mxu0
      %4511 = vmatprep.mubr.bf16.mxu0 0
      %4512 = vmatmul.mubr.bf16.gmra.mrb[0].mxu0 %v3559
      %v4513 = vpop.f32.mrb[0].mxu0
      %v4514 = vadd.f32 %v4353, %v4513
      %v4515 = vpop.f32.mrb[0].mxu0
      %v4516 = vpop.f32.mrb[0].mxu0
      %v4517 = vadd.f32 %v4356, %v4516
      %v4518 = vpop.f32.mrb[0].mxu0
      %4519 = vmatprep.mubr.bf16.mxu0 0
      %4520 = vmatmul.mubr.bf16.gmra.mrb[0].mxu0 %v3562
      %v4521 = vpop.f32.mrb[0].mxu0
      %v4522 = vadd.f32 %v4361, %v4521
      %v4523 = vpop.f32.mrb[0].mxu0
      %v4524 = vpop.f32.mrb[0].mxu0
      %v4525 = vadd.f32 %v4364, %v4524
      %v4526 = vpop.f32.mrb[0].mxu0
      %4527 = vmatprep.mubr.bf16.mxu0 0
      %4528 = vmatmul.mubr.bf16.gmra.mrb[0].mxu0 %v3565
      %v4529 = vpop.f32.mrb[0].mxu0
      %v4530 = vadd.f32 %v4369, %v4529
      %v4531 = vpop.f32.mrb[0].mxu0
      %v4532 = vpop.f32.mrb[0].mxu0
      %v4533 = vadd.f32 %v4372, %v4532
      %v4534 = vpop.f32.mrb[0].mxu0
      %4535 = vmatprep.mubr.bf16.mxu0 0
      %4536 = vmatmul.mubr.bf16.gmra.mrb[0].mxu0 %v3568
      %v4537 = vpop.f32.mrb[0].mxu0
      %v4538 = vadd.f32 %v4377, %v4537
      %v4539 = vpop.f32.mrb[0].mxu0
      %v4540 = vpop.f32.mrb[0].mxu0
      %v4541 = vadd.f32 %v4380, %v4540
      %v4542 = vpop.f32.mrb[0].mxu0
      %4543 = vmatprep.mubr.bf16.mxu0 0
      %4544 = vmatmul.mubr.bf16.gmra.mrb[0].mxu0 %v3571
      %v4545 = vpop.f32.mrb[0].mxu0
      %v4546 = vadd.f32 %v4385, %v4545
      %v4547 = vpop.f32.mrb[0].mxu0
      %v4548 = vpop.f32.mrb[0].mxu0
      %v4549 = vadd.f32 %v4388, %v4548
      %v4550 = vpop.f32.mrb[0].mxu0
      %4551 = vmatprep.mubr.bf16.mxu0 0
      %4552 = vmatmul.mubr.bf16.gmra.mrb[0].mxu0 %v3574
      %v4553 = vpop.f32.mrb[0].mxu0
      %v4554 = vadd.f32 %v4393, %v4553
      %v4555 = vpop.f32.mrb[0].mxu0
      %v4556 = vpop.f32.mrb[0].mxu0
      %v4557 = vadd.f32 %v4396, %v4556
      %v4558 = vpop.f32.mrb[0].mxu0
      %4559 = vmatprep.mubr.bf16.mxu0 0
      %4560 = vmatmul.mubr.bf16.gmra.mrb[0].mxu0 %v3577
      %v4561 = vpop.f32.mrb[0].mxu0
      %v4562 = vadd.f32 %v4401, %v4561
      %v4563 = vpop.f32.mrb[0].mxu0
      %v4564 = vpop.f32.mrb[0].mxu0
      %v4565 = vadd.f32 %v4404, %v4564
      %v4566 = vpop.f32.mrb[0].mxu0
      %4567 = vmatprep.mubr.bf16.mxu0 0
      %4568 = vmatmul.mubr.bf16.gmra.mrb[0].mxu0 %v3580
      %v4569 = vpop.f32.mrb[0].mxu0
      %v4570 = vadd.f32 %v4409, %v4569
      %v4571 = vpop.f32.mrb[0].mxu0
      %v4572 = vpop.f32.mrb[0].mxu0
      %v4573 = vadd.f32 %v4412, %v4572
      %v4574 = vpop.f32.mrb[0].mxu0
      %4575 = vmatprep.mubr.bf16.mxu0 0
      %4576 = vmatmul.mubr.bf16.gmra.mrb[0].mxu0 %v3583
      %v4577 = vpop.f32.mrb[0].mxu0
      %v4578 = vadd.f32 %v4417, %v4577
      %v4579 = vpop.f32.mrb[0].mxu0
      %v4580 = vpop.f32.mrb[0].mxu0
      %v4581 = vadd.f32 %v4420, %v4580
      %v4582 = vpop.f32.mrb[0].mxu0
      %4583 = vmatprep.mubr.bf16.mxu0 0
      %4584 = vmatmul.mubr.bf16.gmra.mrb[0].mxu0 %v3586
      %v4585 = vpop.f32.mrb[0].mxu0
      %v4586 = vadd.f32 %v4425, %v4585
      %v4587 = vpop.f32.mrb[0].mxu0
      %v4588 = vpop.f32.mrb[0].mxu0
      %v4589 = vadd.f32 %v4428, %v4588
      %v4590 = vpop.f32.mrb[0].mxu0
      %4591 = vmatprep.mubr.bf16.mxu0 0
      %4592 = vmatmul.mubr.bf16.gmra.mrb[0].mxu0 %v3589
      %v4593 = vpop.f32.mrb[0].mxu0
      %v4594 = vadd.f32 %v4433, %v4593
      %v4595 = vpop.f32.mrb[0].mxu0
      %v4596 = vpop.f32.mrb[0].mxu0
      %v4597 = vadd.f32 %v4436, %v4596
      %v4598 = vpop.f32.mrb[0].mxu0
      %4599 = vmatprep.mubr.bf16.mxu0 0
      %4600 = vmatmul.mubr.bf16.gmra.mrb[0].mxu0 %v3592
      %v4601 = vpop.f32.mrb[0].mxu0
      %v4602 = vadd.f32 %v4441, %v4601
      %v4603 = vpop.f32.mrb[0].mxu0
      %v4604 = vpop.f32.mrb[0].mxu0
      %v4605 = vadd.f32 %v4444, %v4604
      %v4606 = vpop.f32.mrb[0].mxu0
      %4607 = vmatprep.mubr.bf16.mxu0 0
      %4608 = vmatmul.mubr.bf16.gmra.mrb[0].mxu0 %v3595
      %v4609 = vpop.f32.mrb[0].mxu0
      %v4610 = vadd.f32 %v4449, %v4609
      %v4611 = vpop.f32.mrb[0].mxu0
      %v4612 = vpop.f32.mrb[0].mxu0
      %v4613 = vadd.f32 %v4452, %v4612
      %v4614 = vpop.f32.mrb[0].mxu0
      %4615 = vmatprep.mubr.bf16.mxu0 0
      %4616 = vmatmul.mubr.bf16.gmra.mrb[0].mxu0 %v3598
      %v4617 = vpop.f32.mrb[0].mxu0
      %v4618 = vadd.f32 %v4457, %v4617
      %v4619 = vpop.f32.mrb[0].mxu0
      %v4620 = vpop.f32.mrb[0].mxu0
      %v4621 = vadd.f32 %v4460, %v4620
      %v4622 = vpop.f32.mrb[0].mxu0
      %4623 = vdwg.mxu0
      %s4624 = scalar_lea.vmem %s5, 384
      %v4625 = vld [vmem:[%s4624] sm:$0xf]
      %v4626 = vld [vmem:[%s4624 + $0x4] sm:$0xf]
      %v4627 = vld [vmem:[%s4624 + $0x8] sm:$0xf]
      %v4628 = vld [vmem:[%s4624 + $0xc] sm:$0xf]
      %v4629 = vld [vmem:[%s4624 + $0x10] sm:$0xf]
      %v4630 = vld [vmem:[%s4624 + $0x14] sm:$0xf]
      %v4631 = vld [vmem:[%s4624 + $0x18] sm:$0xf]
      %v4632 = vld [vmem:[%s4624 + $0x1c] sm:$0xf]
      %v4633 = vld [vmem:[%s4624 + $0x20] sm:$0xf]
      %v4634 = vld [vmem:[%s4624 + $0x24] sm:$0xf]
      %v4635 = vld [vmem:[%s4624 + $0x28] sm:$0xf]
      %v4636 = vld [vmem:[%s4624 + $0x2c] sm:$0xf]
      %v4637 = vld [vmem:[%s4624 + $0x30] sm:$0xf]
      %v4638 = vld [vmem:[%s4624 + $0x34] sm:$0xf]
      %v4639 = vld [vmem:[%s4624 + $0x38] sm:$0xf]
      %v4640 = vld [vmem:[%s4624 + $0x3c] sm:$0xf]
      %v4641 = vld [vmem:[%s4624 + $0x40] sm:$0xf]
      %v4642 = vld [vmem:[%s4624 + $0x44] sm:$0xf]
      %v4643 = vld [vmem:[%s4624 + $0x48] sm:$0xf]
      %v4644 = vld [vmem:[%s4624 + $0x4c] sm:$0xf]
      %v4645 = vld [vmem:[%s4624 + $0x50] sm:$0xf]
      %v4646 = vld [vmem:[%s4624 + $0x54] sm:$0xf]
      %v4647 = vld [vmem:[%s4624 + $0x58] sm:$0xf]
      %v4648 = vld [vmem:[%s4624 + $0x5c] sm:$0xf]
      %v4649 = vld [vmem:[%s4624 + $0x60] sm:$0xf]
      %v4650 = vld [vmem:[%s4624 + $0x64] sm:$0xf]
      %v4651 = vld [vmem:[%s4624 + $0x68] sm:$0xf]
      %v4652 = vld [vmem:[%s4624 + $0x6c] sm:$0xf]
      %v4653 = vld [vmem:[%s4624 + $0x70] sm:$0xf]
      %v4654 = vld [vmem:[%s4624 + $0x74] sm:$0xf]
      %v4655 = vld [vmem:[%s4624 + $0x78] sm:$0xf]
      %v4656 = vld [vmem:[%s4624 + $0x7c] sm:$0xf]
      %v4657 = vld [vmem:[%s4624 + $0x80] sm:$0xf]
      %v4658 = vld [vmem:[%s4624 + $0x84] sm:$0xf]
      %v4659 = vld [vmem:[%s4624 + $0x88] sm:$0xf]
      %v4660 = vld [vmem:[%s4624 + $0x8c] sm:$0xf]
      %v4661 = vld [vmem:[%s4624 + $0x90] sm:$0xf]
      %v4662 = vld [vmem:[%s4624 + $0x94] sm:$0xf]
      %v4663 = vld [vmem:[%s4624 + $0x98] sm:$0xf]
      %v4664 = vld [vmem:[%s4624 + $0x9c] sm:$0xf]
      %v4665 = vld [vmem:[%s4624 + $0xa0] sm:$0xf]
      %v4666 = vld [vmem:[%s4624 + $0xa4] sm:$0xf]
      %v4667 = vld [vmem:[%s4624 + $0xa8] sm:$0xf]
      %v4668 = vld [vmem:[%s4624 + $0xac] sm:$0xf]
      %v4669 = vld [vmem:[%s4624 + $0xb0] sm:$0xf]
      %v4670 = vld [vmem:[%s4624 + $0xb4] sm:$0xf]
      %v4671 = vld [vmem:[%s4624 + $0xb8] sm:$0xf]
      %v4672 = vld [vmem:[%s4624 + $0xbc] sm:$0xf]
      %v4721 = vunpack.c.l.b16 %v4625
      %v4722 = vunpack.c.l.b16 %v4626
      %v4723 = vunpack.c.l.b16 %v4627
      %v4724 = vunpack.c.l.b16 %v4628
      %v4725 = vunpack.c.l.b16 %v4629
      %v4726 = vunpack.c.l.b16 %v4630
      %v4727 = vunpack.c.l.b16 %v4631
      %v4728 = vunpack.c.l.b16 %v4632
      %v4729 = vunpack.c.l.b16 %v4633
      %v4730 = vunpack.c.l.b16 %v4634
      %v4731 = vunpack.c.l.b16 %v4635
      %v4732 = vunpack.c.l.b16 %v4636
      %v4733 = vunpack.c.l.b16 %v4637
      %v4734 = vunpack.c.l.b16 %v4638
      %v4735 = vunpack.c.l.b16 %v4639
      %v4736 = vunpack.c.l.b16 %v4640
      %v4737 = vunpack.c.l.b16 %v4641
      %v4738 = vunpack.c.l.b16 %v4642
      %v4739 = vunpack.c.l.b16 %v4643
      %v4740 = vunpack.c.l.b16 %v4644
      %v4741 = vunpack.c.l.b16 %v4645
      %v4742 = vunpack.c.l.b16 %v4646
      %v4743 = vunpack.c.l.b16 %v4647
      %v4744 = vunpack.c.l.b16 %v4648
      %v4745 = vunpack.c.l.b16 %v4649
      %v4746 = vunpack.c.l.b16 %v4650
      %v4747 = vunpack.c.l.b16 %v4651
      %v4748 = vunpack.c.l.b16 %v4652
      %v4749 = vunpack.c.l.b16 %v4653
      %v4750 = vunpack.c.l.b16 %v4654
      %v4751 = vunpack.c.l.b16 %v4655
      %v4752 = vunpack.c.l.b16 %v4656
      %v4753 = vunpack.c.l.b16 %v4657
      %v4754 = vunpack.c.l.b16 %v4658
      %v4755 = vunpack.c.l.b16 %v4659
      %v4756 = vunpack.c.l.b16 %v4660
      %v4757 = vunpack.c.l.b16 %v4661
      %v4758 = vunpack.c.l.b16 %v4662
      %v4759 = vunpack.c.l.b16 %v4663
      %v4760 = vunpack.c.l.b16 %v4664
      %v4761 = vunpack.c.l.b16 %v4665
      %v4762 = vunpack.c.l.b16 %v4666
      %v4763 = vunpack.c.l.b16 %v4667
      %v4764 = vunpack.c.l.b16 %v4668
      %v4765 = vunpack.c.l.b16 %v4669
      %v4766 = vunpack.c.l.b16 %v4670
      %v4767 = vunpack.c.l.b16 %v4671
      %v4768 = vunpack.c.l.b16 %v4672
      %v4769 = vpack.c.b16 %v4722, %v4721
      %v4770 = vpack.c.b16 %v4724, %v4723
      %v4771 = vpack.c.b16 %v4726, %v4725
      %v4772 = vpack.c.b16 %v4728, %v4727
      %v4773 = vpack.c.b16 %v4730, %v4729
      %v4774 = vpack.c.b16 %v4732, %v4731
      %v4775 = vpack.c.b16 %v4734, %v4733
      %v4776 = vpack.c.b16 %v4736, %v4735
      %v4777 = vpack.c.b16 %v4738, %v4737
      %v4778 = vpack.c.b16 %v4740, %v4739
      %v4779 = vpack.c.b16 %v4742, %v4741
      %v4780 = vpack.c.b16 %v4744, %v4743
      %v4781 = vpack.c.b16 %v4746, %v4745
      %v4782 = vpack.c.b16 %v4748, %v4747
      %v4783 = vpack.c.b16 %v4750, %v4749
      %v4784 = vpack.c.b16 %v4752, %v4751
      %v4785 = vpack.c.b16 %v4754, %v4753
      %v4786 = vpack.c.b16 %v4756, %v4755
      %v4787 = vpack.c.b16 %v4758, %v4757
      %v4788 = vpack.c.b16 %v4760, %v4759
      %v4789 = vpack.c.b16 %v4762, %v4761
      %v4790 = vpack.c.b16 %v4764, %v4763
      %v4791 = vpack.c.b16 %v4766, %v4765
      %v4792 = vpack.c.b16 %v4768, %v4767
      %4817 = vmatprep.subr.bf16.mxu0 0
      %4818 = vmatpush1.bf16.msra.mxu0 %v4769
      %4819 = vmatprep.subr.bf16.mxu0 0
      %4820 = vmatpush1.bf16.msra.mxu0 %v4770
      %4821 = vmatprep.subr.bf16.mxu0 0
      %4822 = vmatpush1.bf16.msra.mxu0 %v4771
      %4823 = vmatprep.subr.bf16.mxu0 0
      %4824 = vmatpush1.bf16.msra.mxu0 %v4772
      %4825 = vmatprep.subr.bf16.mxu0 0
      %4826 = vmatpush1.bf16.msra.mxu0 %v4773
      %4827 = vmatprep.subr.bf16.mxu0 0
      %4828 = vmatpush1.bf16.msra.mxu0 %v4774
      %4829 = vmatprep.subr.bf16.mxu0 0
      %4830 = vmatpush1.bf16.msra.mxu0 %v4775
      %4831 = vmatprep.subr.bf16.mxu0 0
      %4832 = vmatpush1.bf16.msra.mxu0 %v4776
      %4833 = vmatprep.subr.bf16.mxu0 0
      %4834 = vmatpush1.bf16.msra.mxu0 %v4777
      %4835 = vmatprep.subr.bf16.mxu0 0
      %4836 = vmatpush1.bf16.msra.mxu0 %v4778
      %4837 = vmatprep.subr.bf16.mxu0 0
      %4838 = vmatpush1.bf16.msra.mxu0 %v4779
      %4839 = vmatprep.subr.bf16.mxu0 0
      %4840 = vmatpush1.bf16.msra.mxu0 %v4780
      %4841 = vmatprep.subr.bf16.mxu0 0
      %4842 = vmatpush1.bf16.msra.mxu0 %v4781
      %4843 = vmatprep.subr.bf16.mxu0 0
      %4844 = vmatpush1.bf16.msra.mxu0 %v4782
      %4845 = vmatprep.subr.bf16.mxu0 0
      %4846 = vmatpush1.bf16.msra.mxu0 %v4783
      %4847 = vmatprep.subr.bf16.mxu0 0
      %4848 = vmatpush1.bf16.msra.mxu0 %v4784
      %4849 = vmatprep.mubr.bf16.mxu0 %v3552
      %4850 = vmatmul.mubr.bf16.gmra.mrb[0].mxu0 %v3551
      %v4851 = vpop.f32.mrb[0].mxu0
      %v4852 = vpop.f32.mrb[0].mxu0
      %v4853 = vpop.f32.mrb[0].mxu0
      %v4854 = vpop.f32.mrb[0].mxu0
      %4855 = vmatprep.mubr.bf16.mxu0 %v3555
      %4856 = vmatmul.mubr.bf16.gmra.mrb[0].mxu0 %v3554
      %v4857 = vpop.f32.mrb[0].mxu0
      %v4858 = vadd.f32 0.0, %v4857
      %v4859 = vpop.f32.mrb[0].mxu0
      %v4860 = vpop.f32.mrb[0].mxu0
      %v4861 = vadd.f32 0.0, %v4860
      %v4862 = vpop.f32.mrb[0].mxu0
      %4863 = vmatprep.mubr.bf16.mxu0 %v3558
      %4864 = vmatmul.mubr.bf16.gmra.mrb[0].mxu0 %v3557
      %v4865 = vpop.f32.mrb[0].mxu0
      %v4866 = vadd.f32 0.0, %v4865
      %v4867 = vpop.f32.mrb[0].mxu0
      %v4868 = vpop.f32.mrb[0].mxu0
      %v4869 = vadd.f32 0.0, %v4868
      %v4870 = vpop.f32.mrb[0].mxu0
      %4871 = vmatprep.mubr.bf16.mxu0 %v3561
      %4872 = vmatmul.mubr.bf16.gmra.mrb[0].mxu0 %v3560
      %v4873 = vpop.f32.mrb[0].mxu0
      %v4874 = vadd.f32 0.0, %v4873
      %v4875 = vpop.f32.mrb[0].mxu0
      %v4876 = vpop.f32.mrb[0].mxu0
      %v4877 = vadd.f32 0.0, %v4876
      %v4878 = vpop.f32.mrb[0].mxu0
      %4879 = vmatprep.mubr.bf16.mxu0 %v3564
      %4880 = vmatmul.mubr.bf16.gmra.mrb[0].mxu0 %v3563
      %v4881 = vpop.f32.mrb[0].mxu0
      %v4882 = vadd.f32 0.0, %v4881
      %v4883 = vpop.f32.mrb[0].mxu0
      %v4884 = vpop.f32.mrb[0].mxu0
      %v4885 = vadd.f32 0.0, %v4884
      %v4886 = vpop.f32.mrb[0].mxu0
      %4887 = vmatprep.mubr.bf16.mxu0 %v3567
      %4888 = vmatmul.mubr.bf16.gmra.mrb[0].mxu0 %v3566
      %v4889 = vpop.f32.mrb[0].mxu0
      %v4890 = vadd.f32 0.0, %v4889
      %v4891 = vpop.f32.mrb[0].mxu0
      %v4892 = vpop.f32.mrb[0].mxu0
      %v4893 = vadd.f32 0.0, %v4892
      %v4894 = vpop.f32.mrb[0].mxu0
      %4895 = vmatprep.mubr.bf16.mxu0 %v3570
      %4896 = vmatmul.mubr.bf16.gmra.mrb[0].mxu0 %v3569
      %v4897 = vpop.f32.mrb[0].mxu0
      %v4898 = vadd.f32 0.0, %v4897
      %v4899 = vpop.f32.mrb[0].mxu0
      %v4900 = vpop.f32.mrb[0].mxu0
      %v4901 = vadd.f32 0.0, %v4900
      %v4902 = vpop.f32.mrb[0].mxu0
      %4903 = vmatprep.mubr.bf16.mxu0 %v3573
      %4904 = vmatmul.mubr.bf16.gmra.mrb[0].mxu0 %v3572
      %v4905 = vpop.f32.mrb[0].mxu0
      %v4906 = vadd.f32 0.0, %v4905
      %v4907 = vpop.f32.mrb[0].mxu0
      %v4908 = vpop.f32.mrb[0].mxu0
      %v4909 = vadd.f32 0.0, %v4908
      %v4910 = vpop.f32.mrb[0].mxu0
      %4911 = vmatprep.mubr.bf16.mxu0 %v3576
      %4912 = vmatmul.mubr.bf16.gmra.mrb[0].mxu0 %v3575
      %v4913 = vpop.f32.mrb[0].mxu0
      %v4914 = vadd.f32 0.0, %v4913
      %v4915 = vpop.f32.mrb[0].mxu0
      %v4916 = vpop.f32.mrb[0].mxu0
      %v4917 = vadd.f32 0.0, %v4916
      %v4918 = vpop.f32.mrb[0].mxu0
      %4919 = vmatprep.mubr.bf16.mxu0 %v3579
      %4920 = vmatmul.mubr.bf16.gmra.mrb[0].mxu0 %v3578
      %v4921 = vpop.f32.mrb[0].mxu0
      %v4922 = vadd.f32 0.0, %v4921
      %v4923 = vpop.f32.mrb[0].mxu0
      %v4924 = vpop.f32.mrb[0].mxu0
      %v4925 = vadd.f32 0.0, %v4924
      %v4926 = vpop.f32.mrb[0].mxu0
      %4927 = vmatprep.mubr.bf16.mxu0 %v3582
      %4928 = vmatmul.mubr.bf16.gmra.mrb[0].mxu0 %v3581
      %v4929 = vpop.f32.mrb[0].mxu0
      %v4930 = vadd.f32 0.0, %v4929
      %v4931 = vpop.f32.mrb[0].mxu0
      %v4932 = vpop.f32.mrb[0].mxu0
      %v4933 = vadd.f32 0.0, %v4932
      %v4934 = vpop.f32.mrb[0].mxu0
      %4935 = vmatprep.mubr.bf16.mxu0 %v3585
      %4936 = vmatmul.mubr.bf16.gmra.mrb[0].mxu0 %v3584
      %v4937 = vpop.f32.mrb[0].mxu0
      %v4938 = vadd.f32 0.0, %v4937
      %v4939 = vpop.f32.mrb[0].mxu0
      %v4940 = vpop.f32.mrb[0].mxu0
      %v4941 = vadd.f32 0.0, %v4940
      %v4942 = vpop.f32.mrb[0].mxu0
      %4943 = vmatprep.mubr.bf16.mxu0 %v3588
      %4944 = vmatmul.mubr.bf16.gmra.mrb[0].mxu0 %v3587
      %v4945 = vpop.f32.mrb[0].mxu0
      %v4946 = vadd.f32 0.0, %v4945
      %v4947 = vpop.f32.mrb[0].mxu0
      %v4948 = vpop.f32.mrb[0].mxu0
      %v4949 = vadd.f32 0.0, %v4948
      %v4950 = vpop.f32.mrb[0].mxu0
      %4951 = vmatprep.mubr.bf16.mxu0 %v3591
      %4952 = vmatmul.mubr.bf16.gmra.mrb[0].mxu0 %v3590
      %v4953 = vpop.f32.mrb[0].mxu0
      %v4954 = vadd.f32 0.0, %v4953
      %v4955 = vpop.f32.mrb[0].mxu0
      %v4956 = vpop.f32.mrb[0].mxu0
      %v4957 = vadd.f32 0.0, %v4956
      %v4958 = vpop.f32.mrb[0].mxu0
      %4959 = vmatprep.mubr.bf16.mxu0 %v3594
      %4960 = vmatmul.mubr.bf16.gmra.mrb[0].mxu0 %v3593
      %v4961 = vpop.f32.mrb[0].mxu0
      %v4962 = vadd.f32 0.0, %v4961
      %v4963 = vpop.f32.mrb[0].mxu0
      %v4964 = vpop.f32.mrb[0].mxu0
      %v4965 = vadd.f32 0.0, %v4964
      %v4966 = vpop.f32.mrb[0].mxu0
      %4967 = vmatprep.mubr.bf16.mxu0 %v3597
      %4968 = vmatmul.mubr.bf16.gmra.mrb[0].mxu0 %v3596
      %v4969 = vpop.f32.mrb[0].mxu0
      %v4970 = vadd.f32 0.0, %v4969
      %v4971 = vpop.f32.mrb[0].mxu0
      %v4972 = vpop.f32.mrb[0].mxu0
      %v4973 = vadd.f32 0.0, %v4972
      %v4974 = vpop.f32.mrb[0].mxu0
      %4975 = vdwg.mxu0
      %4976 = vmatprep.subr.bf16.mxu0 0
      %4977 = vmatpush1.bf16.msra.mxu0 %v4785
      %4978 = vmatprep.subr.bf16.mxu0 0
      %4979 = vmatpush1.bf16.msra.mxu0 %v4786
      %4980 = vmatprep.subr.bf16.mxu0 0
      %4981 = vmatpush1.bf16.msra.mxu0 %v4787
      %4982 = vmatprep.subr.bf16.mxu0 0
      %4983 = vmatpush1.bf16.msra.mxu0 %v4788
      %4984 = vmatprep.subr.bf16.mxu0 0
      %4985 = vmatpush1.bf16.msra.mxu0 %v4789
      %4986 = vmatprep.subr.bf16.mxu0 0
      %4987 = vmatpush1.bf16.msra.mxu0 %v4790
      %4988 = vmatprep.subr.bf16.mxu0 0
      %4989 = vmatpush1.bf16.msra.mxu0 %v4791
      %4990 = vmatprep.subr.bf16.mxu0 0
      %4991 = vmatpush1.bf16.msra.mxu0 %v4792
      %4992 = vmatprep.subr.bf16.mxu0 0
      %4993 = vmatpush1.bf16.msra.mxu0 0
      %4994 = vmatprep.subr.bf16.mxu0 0
      %4995 = vmatpush1.bf16.msra.mxu0 0
      %4996 = vmatprep.subr.bf16.mxu0 0
      %4997 = vmatpush1.bf16.msra.mxu0 0
      %4998 = vmatprep.subr.bf16.mxu0 0
      %4999 = vmatpush1.bf16.msra.mxu0 0
      %5000 = vmatprep.subr.bf16.mxu0 0
      %5001 = vmatpush1.bf16.msra.mxu0 0
      %5002 = vmatprep.subr.bf16.mxu0 0
      %5003 = vmatpush1.bf16.msra.mxu0 0
      %5004 = vmatprep.subr.bf16.mxu0 0
      %5005 = vmatpush1.bf16.msra.mxu0 0
      %5006 = vmatprep.subr.bf16.mxu0 0
      %5007 = vmatpush1.bf16.msra.mxu0 0
      %5008 = vmatprep.mubr.bf16.mxu0 0
      %5009 = vmatmul.mubr.bf16.gmra.mrb[0].mxu0 %v3553
      %v5010 = vpop.f32.mrb[0].mxu0
      %v5011 = vpop.f32.mrb[0].mxu0
      %v5012 = vpop.f32.mrb[0].mxu0
      %v5013 = vpop.f32.mrb[0].mxu0
      %5014 = vmatprep.mubr.bf16.mxu0 0
      %5015 = vmatmul.mubr.bf16.gmra.mrb[0].mxu0 %v3556
      %v5016 = vpop.f32.mrb[0].mxu0
      %v5017 = vadd.f32 %v4858, %v5016
      %v5018 = vpop.f32.mrb[0].mxu0
      %v5019 = vpop.f32.mrb[0].mxu0
      %v5020 = vadd.f32 %v4861, %v5019
      %v5021 = vpop.f32.mrb[0].mxu0
      %5022 = vmatprep.mubr.bf16.mxu0 0
      %5023 = vmatmul.mubr.bf16.gmra.mrb[0].mxu0 %v3559
      %v5024 = vpop.f32.mrb[0].mxu0
      %v5025 = vadd.f32 %v4866, %v5024
      %v5026 = vpop.f32.mrb[0].mxu0
      %v5027 = vpop.f32.mrb[0].mxu0
      %v5028 = vadd.f32 %v4869, %v5027
      %v5029 = vpop.f32.mrb[0].mxu0
      %5030 = vmatprep.mubr.bf16.mxu0 0
      %5031 = vmatmul.mubr.bf16.gmra.mrb[0].mxu0 %v3562
      %v5032 = vpop.f32.mrb[0].mxu0
      %v5033 = vadd.f32 %v4874, %v5032
      %v5034 = vpop.f32.mrb[0].mxu0
      %v5035 = vpop.f32.mrb[0].mxu0
      %v5036 = vadd.f32 %v4877, %v5035
      %v5037 = vpop.f32.mrb[0].mxu0
      %5038 = vmatprep.mubr.bf16.mxu0 0
      %5039 = vmatmul.mubr.bf16.gmra.mrb[0].mxu0 %v3565
      %v5040 = vpop.f32.mrb[0].mxu0
      %v5041 = vadd.f32 %v4882, %v5040
      %v5042 = vpop.f32.mrb[0].mxu0
      %v5043 = vpop.f32.mrb[0].mxu0
      %v5044 = vadd.f32 %v4885, %v5043
      %v5045 = vpop.f32.mrb[0].mxu0
      %5046 = vmatprep.mubr.bf16.mxu0 0
      %5047 = vmatmul.mubr.bf16.gmra.mrb[0].mxu0 %v3568
      %v5048 = vpop.f32.mrb[0].mxu0
      %v5049 = vadd.f32 %v4890, %v5048
      %v5050 = vpop.f32.mrb[0].mxu0
      %v5051 = vpop.f32.mrb[0].mxu0
      %v5052 = vadd.f32 %v4893, %v5051
      %v5053 = vpop.f32.mrb[0].mxu0
      %5054 = vmatprep.mubr.bf16.mxu0 0
      %5055 = vmatmul.mubr.bf16.gmra.mrb[0].mxu0 %v3571
      %v5056 = vpop.f32.mrb[0].mxu0
      %v5057 = vadd.f32 %v4898, %v5056
      %v5058 = vpop.f32.mrb[0].mxu0
      %v5059 = vpop.f32.mrb[0].mxu0
      %v5060 = vadd.f32 %v4901, %v5059
      %v5061 = vpop.f32.mrb[0].mxu0
      %5062 = vmatprep.mubr.bf16.mxu0 0
      %5063 = vmatmul.mubr.bf16.gmra.mrb[0].mxu0 %v3574
      %v5064 = vpop.f32.mrb[0].mxu0
      %v5065 = vadd.f32 %v4906, %v5064
      %v5066 = vpop.f32.mrb[0].mxu0
      %v5067 = vpop.f32.mrb[0].mxu0
      %v5068 = vadd.f32 %v4909, %v5067
      %v5069 = vpop.f32.mrb[0].mxu0
      %5070 = vmatprep.mubr.bf16.mxu0 0
      %5071 = vmatmul.mubr.bf16.gmra.mrb[0].mxu0 %v3577
      %v5072 = vpop.f32.mrb[0].mxu0
      %v5073 = vadd.f32 %v4914, %v5072
      %v5074 = vpop.f32.mrb[0].mxu0
      %v5075 = vpop.f32.mrb[0].mxu0
      %v5076 = vadd.f32 %v4917, %v5075
      %v5077 = vpop.f32.mrb[0].mxu0
      %5078 = vmatprep.mubr.bf16.mxu0 0
      %5079 = vmatmul.mubr.bf16.gmra.mrb[0].mxu0 %v3580
      %v5080 = vpop.f32.mrb[0].mxu0
      %v5081 = vadd.f32 %v4922, %v5080
      %v5082 = vpop.f32.mrb[0].mxu0
      %v5083 = vpop.f32.mrb[0].mxu0
      %v5084 = vadd.f32 %v4925, %v5083
      %v5085 = vpop.f32.mrb[0].mxu0
      %5086 = vmatprep.mubr.bf16.mxu0 0
      %5087 = vmatmul.mubr.bf16.gmra.mrb[0].mxu0 %v3583
      %v5088 = vpop.f32.mrb[0].mxu0
      %v5089 = vadd.f32 %v4930, %v5088
      %v5090 = vpop.f32.mrb[0].mxu0
      %v5091 = vpop.f32.mrb[0].mxu0
      %v5092 = vadd.f32 %v4933, %v5091
      %v5093 = vpop.f32.mrb[0].mxu0
      %5094 = vmatprep.mubr.bf16.mxu0 0
      %5095 = vmatmul.mubr.bf16.gmra.mrb[0].mxu0 %v3586
      %v5096 = vpop.f32.mrb[0].mxu0
      %v5097 = vadd.f32 %v4938, %v5096
      %v5098 = vpop.f32.mrb[0].mxu0
      %v5099 = vpop.f32.mrb[0].mxu0
      %v5100 = vadd.f32 %v4941, %v5099
      %v5101 = vpop.f32.mrb[0].mxu0
      %5102 = vmatprep.mubr.bf16.mxu0 0
      %5103 = vmatmul.mubr.bf16.gmra.mrb[0].mxu0 %v3589
      %v5104 = vpop.f32.mrb[0].mxu0
      %v5105 = vadd.f32 %v4946, %v5104
      %v5106 = vpop.f32.mrb[0].mxu0
      %v5107 = vpop.f32.mrb[0].mxu0
      %v5108 = vadd.f32 %v4949, %v5107
      %v5109 = vpop.f32.mrb[0].mxu0
      %5110 = vmatprep.mubr.bf16.mxu0 0
      %5111 = vmatmul.mubr.bf16.gmra.mrb[0].mxu0 %v3592
      %v5112 = vpop.f32.mrb[0].mxu0
      %v5113 = vadd.f32 %v4954, %v5112
      %v5114 = vpop.f32.mrb[0].mxu0
      %v5115 = vpop.f32.mrb[0].mxu0
      %v5116 = vadd.f32 %v4957, %v5115
      %v5117 = vpop.f32.mrb[0].mxu0
      %5118 = vmatprep.mubr.bf16.mxu0 0
      %5119 = vmatmul.mubr.bf16.gmra.mrb[0].mxu0 %v3595
      %v5120 = vpop.f32.mrb[0].mxu0
      %v5121 = vadd.f32 %v4962, %v5120
      %v5122 = vpop.f32.mrb[0].mxu0
      %v5123 = vpop.f32.mrb[0].mxu0
      %v5124 = vadd.f32 %v4965, %v5123
      %v5125 = vpop.f32.mrb[0].mxu0
      %5126 = vmatprep.mubr.bf16.mxu0 0
      %5127 = vmatmul.mubr.bf16.gmra.mrb[0].mxu0 %v3598
      %v5128 = vpop.f32.mrb[0].mxu0
      %v5129 = vadd.f32 %v4970, %v5128
      %v5130 = vpop.f32.mrb[0].mxu0
      %v5131 = vpop.f32.mrb[0].mxu0
      %v5132 = vadd.f32 %v4973, %v5131
      %v5133 = vpop.f32.mrb[0].mxu0
      %5134 = vdwg.mxu0
      %v5135 = vadd.f32 %v3993, %v4498
      %v5136 = vadd.f32 %v3996, %v4501
      %v5137 = vadd.f32 %v3985, %v4506
      %v5138 = vadd.f32 %v3988, %v4509
      %v5139 = vadd.f32 %v3993, %v4514
      %v5140 = vadd.f32 %v3996, %v4517
      %v5141 = vadd.f32 %v4001, %v4522
      %v5142 = vadd.f32 %v4004, %v4525
      %v5143 = vadd.f32 %v4009, %v4530
      %v5144 = vadd.f32 %v4012, %v4533
      %v5145 = vadd.f32 %v4017, %v4538
      %v5146 = vadd.f32 %v4020, %v4541
      %v5147 = vadd.f32 %v4025, %v4546
      %v5148 = vadd.f32 %v4028, %v4549
      %v5149 = vadd.f32 %v4033, %v4554
      %v5150 = vadd.f32 %v4036, %v4557
      %v5151 = vadd.f32 %v4041, %v4562
      %v5152 = vadd.f32 %v4044, %v4565
      %v5153 = vadd.f32 %v4049, %v4570
      %v5154 = vadd.f32 %v4052, %v4573
      %v5155 = vadd.f32 %v4057, %v4578
      %v5156 = vadd.f32 %v4060, %v4581
      %v5157 = vadd.f32 %v4065, %v4586
      %v5158 = vadd.f32 %v4068, %v4589
      %v5159 = vadd.f32 %v4073, %v4594
      %v5160 = vadd.f32 %v4076, %v4597
      %v5161 = vadd.f32 %v4081, %v4602
      %v5162 = vadd.f32 %v4084, %v4605
      %v5163 = vadd.f32 %v4089, %v4610
      %v5164 = vadd.f32 %v4092, %v4613
      %v5165 = vadd.f32 %v4097, %v4618
      %v5166 = vadd.f32 %v4100, %v4621
      %v5167 = vadd.f32 %v5135, %v5017
      %v5168 = vadd.f32 %v5136, %v5020
      %v5169 = vadd.f32 %v5137, %v5025
      %v5170 = vadd.f32 %v5138, %v5028
      %v5171 = vadd.f32 %v5139, %v5033
      %v5172 = vadd.f32 %v5140, %v5036
      %v5173 = vadd.f32 %v5141, %v5041
      %v5174 = vadd.f32 %v5142, %v5044
      %v5175 = vadd.f32 %v5143, %v5049
      %v5176 = vadd.f32 %v5144, %v5052
      %v5177 = vadd.f32 %v5145, %v5057
      %v5178 = vadd.f32 %v5146, %v5060
      %v5179 = vadd.f32 %v5147, %v5065
      %v5180 = vadd.f32 %v5148, %v5068
      %v5181 = vadd.f32 %v5149, %v5073
      %v5182 = vadd.f32 %v5150, %v5076
      %v5183 = vadd.f32 %v5151, %v5081
      %v5184 = vadd.f32 %v5152, %v5084
      %v5185 = vadd.f32 %v5153, %v5089
      %v5186 = vadd.f32 %v5154, %v5092
      %v5187 = vadd.f32 %v5155, %v5097
      %v5188 = vadd.f32 %v5156, %v5100
      %v5189 = vadd.f32 %v5157, %v5105
      %v5190 = vadd.f32 %v5158, %v5108
      %v5191 = vadd.f32 %v5159, %v5113
      %v5192 = vadd.f32 %v5160, %v5116
      %v5193 = vadd.f32 %v5161, %v5121
      %v5194 = vadd.f32 %v5162, %v5124
      %v5195 = vadd.f32 %v5163, %v5129
      %v5196 = vadd.f32 %v5164, %v5132
      %v5197 = vadd.f32 %v5165, %v5121
      %v5198 = vadd.f32 %v5166, %v5124
      %v5199 = vld [vmem:[%s6] sm:$0x1]
      %v5201 = vlaneseq
      %v5202 = vshrl.u32 %v5201, 7
      %v5203 = vsub.s32 0, %v5202
      %v5204 = vrot.slane %v5199, %v5203
      %v5206 = vadd.f32 %v5167, %v5204
      %v5207 = vadd.f32 %v5168, %v5204
      %v5208 = vadd.f32 %v5169, %v5204
      %v5209 = vadd.f32 %v5170, %v5204
      %v5210 = vadd.f32 %v5171, %v5204
      %v5211 = vadd.f32 %v5172, %v5204
      %v5212 = vadd.f32 %v5173, %v5204
      %v5213 = vadd.f32 %v5174, %v5204
      %v5214 = vadd.f32 %v5175, %v5204
      %v5215 = vadd.f32 %v5176, %v5204
      %v5216 = vadd.f32 %v5177, %v5204
      %v5217 = vadd.f32 %v5178, %v5204
      %v5218 = vadd.f32 %v5179, %v5204
      %v5219 = vadd.f32 %v5180, %v5204
      %v5220 = vadd.f32 %v5181, %v5204
      %v5221 = vadd.f32 %v5182, %v5204
      %v5222 = vadd.f32 %v5183, %v5204
      %v5223 = vadd.f32 %v5184, %v5204
      %v5224 = vadd.f32 %v5185, %v5204
      %v5225 = vadd.f32 %v5186, %v5204
      %v5226 = vadd.f32 %v5187, %v5204
      %v5227 = vadd.f32 %v5188, %v5204
      %v5228 = vadd.f32 %v5189, %v5204
      %v5229 = vadd.f32 %v5190, %v5204
      %v5230 = vadd.f32 %v5191, %v5204
      %v5231 = vadd.f32 %v5192, %v5204
      %v5232 = vadd.f32 %v5193, %v5204
      %v5233 = vadd.f32 %v5194, %v5204
      %v5234 = vadd.f32 %v5195, %v5204
      %v5235 = vadd.f32 %v5196, %v5204
      %v5236 = vadd.f32 %v5197, %v5204
      %v5237 = vadd.f32 %v5198, %v5204
      %vm5238 = vcmp.gt.f32.partialorder %v5206, 0.0
      %vm5239 = vcmp.gt.f32.partialorder %v5207, 0.0
      %vm5240 = vcmp.gt.f32.partialorder %v5208, 0.0
      %vm5241 = vcmp.gt.f32.partialorder %v5209, 0.0
      %vm5242 = vcmp.gt.f32.partialorder %v5210, 0.0
      %vm5243 = vcmp.gt.f32.partialorder %v5211, 0.0
      %vm5244 = vcmp.gt.f32.partialorder %v5212, 0.0
      %vm5245 = vcmp.gt.f32.partialorder %v5213, 0.0
      %vm5246 = vcmp.gt.f32.partialorder %v5214, 0.0
      %vm5247 = vcmp.gt.f32.partialorder %v5215, 0.0
      %vm5248 = vcmp.gt.f32.partialorder %v5216, 0.0
      %vm5249 = vcmp.gt.f32.partialorder %v5217, 0.0
      %vm5250 = vcmp.gt.f32.partialorder %v5218, 0.0
      %vm5251 = vcmp.gt.f32.partialorder %v5219, 0.0
      %vm5252 = vcmp.gt.f32.partialorder %v5220, 0.0
      %vm5253 = vcmp.gt.f32.partialorder %v5221, 0.0
      %vm5254 = vcmp.gt.f32.partialorder %v5222, 0.0
      %vm5255 = vcmp.gt.f32.partialorder %v5223, 0.0
      %vm5256 = vcmp.gt.f32.partialorder %v5224, 0.0
      %vm5257 = vcmp.gt.f32.partialorder %v5225, 0.0
      %vm5258 = vcmp.gt.f32.partialorder %v5226, 0.0
      %vm5259 = vcmp.gt.f32.partialorder %v5227, 0.0
      %vm5260 = vcmp.gt.f32.partialorder %v5228, 0.0
      %vm5261 = vcmp.gt.f32.partialorder %v5229, 0.0
      %vm5262 = vcmp.gt.f32.partialorder %v5230, 0.0
      %vm5263 = vcmp.gt.f32.partialorder %v5231, 0.0
      %vm5264 = vcmp.gt.f32.partialorder %v5232, 0.0
      %vm5265 = vcmp.gt.f32.partialorder %v5233, 0.0
      %vm5266 = vcmp.gt.f32.partialorder %v5234, 0.0
      %vm5267 = vcmp.gt.f32.partialorder %v5235, 0.0
      %vm5268 = vcmp.gt.f32.partialorder %v5236, 0.0
      %vm5269 = vcmp.gt.f32.partialorder %v5237, 0.0
      %v5270 = vmin.f32 %v5206, 0.0
      %v5271 = vmin.f32 %v5207, 0.0
      %v5272 = vmin.f32 %v5208, 0.0
      %v5273 = vmin.f32 %v5209, 0.0
      %v5274 = vmin.f32 %v5210, 0.0
      %v5275 = vmin.f32 %v5211, 0.0
      %v5276 = vmin.f32 %v5212, 0.0
      %v5277 = vmin.f32 %v5213, 0.0
      %v5278 = vmin.f32 %v5214, 0.0
      %v5279 = vmin.f32 %v5215, 0.0
      %v5280 = vmin.f32 %v5216, 0.0
      %v5281 = vmin.f32 %v5217, 0.0
      %v5282 = vmin.f32 %v5218, 0.0
      %v5283 = vmin.f32 %v5219, 0.0
      %v5284 = vmin.f32 %v5220, 0.0
      %v5285 = vmin.f32 %v5221, 0.0
      %v5286 = vmin.f32 %v5222, 0.0
      %v5287 = vmin.f32 %v5223, 0.0
      %v5288 = vmin.f32 %v5224, 0.0
      %v5289 = vmin.f32 %v5225, 0.0
      %v5290 = vmin.f32 %v5226, 0.0
      %v5291 = vmin.f32 %v5227, 0.0
      %v5292 = vmin.f32 %v5228, 0.0
      %v5293 = vmin.f32 %v5229, 0.0
      %v5294 = vmin.f32 %v5230, 0.0
      %v5295 = vmin.f32 %v5231, 0.0
      %v5296 = vmin.f32 %v5232, 0.0
      %v5297 = vmin.f32 %v5233, 0.0
      %v5298 = vmin.f32 %v5234, 0.0
      %v5299 = vmin.f32 %v5235, 0.0
      %v5300 = vmin.f32 %v5236, 0.0
      %v5301 = vmin.f32 %v5237, 0.0
      %v5302 = vmul.f32 %v5270, 1.442695
      %v5303 = vpow.pop %v5302
      %v5304 = vmul.f32 %v5271, 1.442695
      %v5305 = vpow.pop %v5304
      %v5306 = vmul.f32 %v5272, 1.442695
      %v5307 = vpow.pop %v5306
      %v5308 = vmul.f32 %v5273, 1.442695
      %v5309 = vpow.pop %v5308
      %v5310 = vmul.f32 %v5274, 1.442695
      %v5311 = vpow.pop %v5310
      %v5312 = vmul.f32 %v5275, 1.442695
      %v5313 = vpow.pop %v5312
      %v5314 = vmul.f32 %v5276, 1.442695
      %v5315 = vpow.pop %v5314
      %v5316 = vmul.f32 %v5277, 1.442695
      %v5317 = vpow.pop %v5316
      %v5318 = vmul.f32 %v5278, 1.442695
      %v5319 = vpow.pop %v5318
      %v5320 = vmul.f32 %v5279, 1.442695
      %v5321 = vpow.pop %v5320
      %v5322 = vmul.f32 %v5280, 1.442695
      %v5323 = vpow.pop %v5322
      %v5324 = vmul.f32 %v5281, 1.442695
      %v5325 = vpow.pop %v5324
      %v5326 = vmul.f32 %v5282, 1.442695
      %v5327 = vpow.pop %v5326
      %v5328 = vmul.f32 %v5283, 1.442695
      %v5329 = vpow.pop %v5328
      %v5330 = vmul.f32 %v5284, 1.442695
      %v5331 = vpow.pop %v5330
      %v5332 = vmul.f32 %v5285, 1.442695
      %v5333 = vpow.pop %v5332
      %v5334 = vmul.f32 %v5286, 1.442695
      %v5335 = vpow.pop %v5334
      %v5336 = vmul.f32 %v5287, 1.442695
      %v5337 = vpow.pop %v5336
      %v5338 = vmul.f32 %v5288, 1.442695
      %v5339 = vpow.pop %v5338
      %v5340 = vmul.f32 %v5289, 1.442695
      %v5341 = vpow.pop %v5340
      %v5342 = vmul.f32 %v5290, 1.442695
      %v5343 = vpow.pop %v5342
      %v5344 = vmul.f32 %v5291, 1.442695
      %v5345 = vpow.pop %v5344
      %v5346 = vmul.f32 %v5292, 1.442695
      %v5347 = vpow.pop %v5346
      %v5348 = vmul.f32 %v5293, 1.442695
      %v5349 = vpow.pop %v5348
      %v5350 = vmul.f32 %v5294, 1.442695
      %v5351 = vpow.pop %v5350
      %v5352 = vmul.f32 %v5295, 1.442695
      %v5353 = vpow.pop %v5352
      %v5354 = vmul.f32 %v5296, 1.442695
      %v5355 = vpow.pop %v5354
      %v5356 = vmul.f32 %v5297, 1.442695
      %v5357 = vpow.pop %v5356
      %v5358 = vmul.f32 %v5298, 1.442695
      %v5359 = vpow.pop %v5358
      %v5360 = vmul.f32 %v5299, 1.442695
      %v5361 = vpow.pop %v5360
      %v5362 = vmul.f32 %v5300, 1.442695
      %v5363 = vpow.pop %v5362
      %v5364 = vmul.f32 %v5301, 1.442695
      %v5365 = vpow.pop %v5364
      %v5366 = vsub.f32 %v5303, 1.0
      %v5367 = vsub.f32 %v5305, 1.0
      %v5368 = vsub.f32 %v5307, 1.0
      %v5369 = vsub.f32 %v5309, 1.0
      %v5370 = vsub.f32 %v5311, 1.0
      %v5371 = vsub.f32 %v5313, 1.0
      %v5372 = vsub.f32 %v5315, 1.0
      %v5373 = vsub.f32 %v5317, 1.0
      %v5374 = vsub.f32 %v5319, 1.0
      %v5375 = vsub.f32 %v5321, 1.0
      %v5376 = vsub.f32 %v5323, 1.0
      %v5377 = vsub.f32 %v5325, 1.0
      %v5378 = vsub.f32 %v5327, 1.0
      %v5379 = vsub.f32 %v5329, 1.0
      %v5380 = vsub.f32 %v5331, 1.0
      %v5381 = vsub.f32 %v5333, 1.0
      %v5382 = vsub.f32 %v5335, 1.0
      %v5383 = vsub.f32 %v5337, 1.0
      %v5384 = vsub.f32 %v5339, 1.0
      %v5385 = vsub.f32 %v5341, 1.0
      %v5386 = vsub.f32 %v5343, 1.0
      %v5387 = vsub.f32 %v5345, 1.0
      %v5388 = vsub.f32 %v5347, 1.0
      %v5389 = vsub.f32 %v5349, 1.0
      %v5390 = vsub.f32 %v5351, 1.0
      %v5391 = vsub.f32 %v5353, 1.0
      %v5392 = vsub.f32 %v5355, 1.0
      %v5393 = vsub.f32 %v5357, 1.0
      %v5394 = vsub.f32 %v5359, 1.0
      %v5395 = vsub.f32 %v5361, 1.0
      %v5396 = vsub.f32 %v5363, 1.0
      %v5397 = vsub.f32 %v5365, 1.0
      %v5398 = vsel %vm5238, %v5206, %v5366
      %v5399 = vsel %vm5239, %v5207, %v5367
      %v5400 = vsel %vm5240, %v5208, %v5368
      %v5401 = vsel %vm5241, %v5209, %v5369
      %v5402 = vsel %vm5242, %v5210, %v5370
      %v5403 = vsel %vm5243, %v5211, %v5371
      %v5404 = vsel %vm5244, %v5212, %v5372
      %v5405 = vsel %vm5245, %v5213, %v5373
      %v5406 = vsel %vm5246, %v5214, %v5374
      %v5407 = vsel %vm5247, %v5215, %v5375
      %v5408 = vsel %vm5248, %v5216, %v5376
      %v5409 = vsel %vm5249, %v5217, %v5377
      %v5410 = vsel %vm5250, %v5218, %v5378
      %v5411 = vsel %vm5251, %v5219, %v5379
      %v5412 = vsel %vm5252, %v5220, %v5380
      %v5413 = vsel %vm5253, %v5221, %v5381
      %v5414 = vsel %vm5254, %v5222, %v5382
      %v5415 = vsel %vm5255, %v5223, %v5383
      %v5416 = vsel %vm5256, %v5224, %v5384
      %v5417 = vsel %vm5257, %v5225, %v5385
      %v5418 = vsel %vm5258, %v5226, %v5386
      %v5419 = vsel %vm5259, %v5227, %v5387
      %v5420 = vsel %vm5260, %v5228, %v5388
      %v5421 = vsel %vm5261, %v5229, %v5389
      %v5422 = vsel %vm5262, %v5230, %v5390
      %v5423 = vsel %vm5263, %v5231, %v5391
      %v5424 = vsel %vm5264, %v5232, %v5392
      %v5425 = vsel %vm5265, %v5233, %v5393
      %v5426 = vsel %vm5266, %v5234, %v5394
      %v5427 = vsel %vm5267, %v5235, %v5395
      %v5428 = vsel %vm5268, %v5236, %v5396
      %v5429 = vsel %vm5269, %v5237, %v5397
      %v5446 = vrot.slane %v5398, 1
      %v5447 = vrot.slane %v5400, 1
      %v5448 = vrot.slane %v5402, 1
      %v5449 = vrot.slane %v5404, 1
      %v5450 = vrot.slane %v5406, 1
      %v5451 = vrot.slane %v5408, 1
      %v5452 = vrot.slane %v5410, 1
      %v5453 = vrot.slane %v5412, 1
      %v5454 = vrot.slane %v5414, 1
      %v5455 = vrot.slane %v5416, 1
      %v5456 = vrot.slane %v5418, 1
      %v5457 = vrot.slane %v5420, 1
      %v5458 = vrot.slane %v5422, 1
      %v5459 = vrot.slane %v5424, 1
      %v5460 = vrot.slane %v5426, 1
      %v5461 = vrot.slane %v5428, 1
      %v5494 = vrot.slane %v5398, 7
      %v5495 = vrot.slane %v5399, 7
      %v5496 = vsel %vm950, %v5494, %v5495
      %v5497 = vrot.slane %v5400, 7
      %v5498 = vrot.slane %v5401, 7
      %v5499 = vsel %vm950, %v5497, %v5498
      %v5500 = vrot.slane %v5402, 7
      %v5501 = vrot.slane %v5403, 7
      %v5502 = vsel %vm950, %v5500, %v5501
      %v5503 = vrot.slane %v5404, 7
      %v5504 = vrot.slane %v5405, 7
      %v5505 = vsel %vm950, %v5503, %v5504
      %v5506 = vrot.slane %v5406, 7
      %v5507 = vrot.slane %v5407, 7
      %v5508 = vsel %vm950, %v5506, %v5507
      %v5509 = vrot.slane %v5408, 7
      %v5510 = vrot.slane %v5409, 7
      %v5511 = vsel %vm950, %v5509, %v5510
      %v5512 = vrot.slane %v5410, 7
      %v5513 = vrot.slane %v5411, 7
      %v5514 = vsel %vm950, %v5512, %v5513
      %v5515 = vrot.slane %v5412, 7
      %v5516 = vrot.slane %v5413, 7
      %v5517 = vsel %vm950, %v5515, %v5516
      %v5518 = vrot.slane %v5414, 7
      %v5519 = vrot.slane %v5415, 7
      %v5520 = vsel %vm950, %v5518, %v5519
      %v5521 = vrot.slane %v5416, 7
      %v5522 = vrot.slane %v5417, 7
      %v5523 = vsel %vm950, %v5521, %v5522
      %v5524 = vrot.slane %v5418, 7
      %v5525 = vrot.slane %v5419, 7
      %v5526 = vsel %vm950, %v5524, %v5525
      %v5527 = vrot.slane %v5420, 7
      %v5528 = vrot.slane %v5421, 7
      %v5529 = vsel %vm950, %v5527, %v5528
      %v5530 = vrot.slane %v5422, 7
      %v5531 = vrot.slane %v5423, 7
      %v5532 = vsel %vm950, %v5530, %v5531
      %v5533 = vrot.slane %v5424, 7
      %v5534 = vrot.slane %v5425, 7
      %v5535 = vsel %vm950, %v5533, %v5534
      %v5536 = vrot.slane %v5426, 7
      %v5537 = vrot.slane %v5427, 7
      %v5538 = vsel %vm950, %v5536, %v5537
      %v5539 = vrot.slane %v5428, 7
      %v5540 = vrot.slane %v5429, 7
      %v5541 = vsel %vm950, %v5539, %v5540
      %v5574 = vsel %vm950, %v5446, %v5494
      %v5575 = vsel %vm950, %v5447, %v5497
      %v5576 = vsel %vm950, %v5448, %v5500
      %v5577 = vsel %vm950, %v5449, %v5503
      %v5578 = vsel %vm950, %v5450, %v5506
      %v5579 = vsel %vm950, %v5451, %v5509
      %v5580 = vsel %vm950, %v5452, %v5512
      %v5581 = vsel %vm950, %v5453, %v5515
      %v5582 = vsel %vm950, %v5454, %v5518
      %v5583 = vsel %vm950, %v5455, %v5521
      %v5584 = vsel %vm950, %v5456, %v5524
      %v5585 = vsel %vm950, %v5457, %v5527
      %v5586 = vsel %vm950, %v5458, %v5530
      %v5587 = vsel %vm950, %v5459, %v5533
      %v5588 = vsel %vm950, %v5460, %v5536
      %v5589 = vsel %vm950, %v5461, %v5539
      %v5590 = vrot.slane %v5399, 1
      %v5591 = vsel %vm1047, %v5446, %v5590
      %v5592 = vrot.slane %v5401, 1
      %v5593 = vsel %vm1047, %v5447, %v5592
      %v5594 = vrot.slane %v5403, 1
      %v5595 = vsel %vm1047, %v5448, %v5594
      %v5596 = vrot.slane %v5405, 1
      %v5597 = vsel %vm1047, %v5449, %v5596
      %v5598 = vrot.slane %v5407, 1
      %v5599 = vsel %vm1047, %v5450, %v5598
      %v5600 = vrot.slane %v5409, 1
      %v5601 = vsel %vm1047, %v5451, %v5600
      %v5602 = vrot.slane %v5411, 1
      %v5603 = vsel %vm1047, %v5452, %v5602
      %v5604 = vrot.slane %v5413, 1
      %v5605 = vsel %vm1047, %v5453, %v5604
      %v5606 = vrot.slane %v5415, 1
      %v5607 = vsel %vm1047, %v5454, %v5606
      %v5608 = vrot.slane %v5417, 1
      %v5609 = vsel %vm1047, %v5455, %v5608
      %v5610 = vrot.slane %v5419, 1
      %v5611 = vsel %vm1047, %v5456, %v5610
      %v5612 = vrot.slane %v5421, 1
      %v5613 = vsel %vm1047, %v5457, %v5612
      %v5614 = vrot.slane %v5423, 1
      %v5615 = vsel %vm1047, %v5458, %v5614
      %v5616 = vrot.slane %v5425, 1
      %v5617 = vsel %vm1047, %v5459, %v5616
      %v5618 = vrot.slane %v5427, 1
      %v5619 = vsel %vm1047, %v5460, %v5618
      %v5620 = vrot.slane %v5429, 1
      %v5621 = vsel %vm1047, %v5461, %v5620
      %v5670 = vsel %vm1047, %v5590, %v5495
      %v5671 = vsel %vm1047, %v5592, %v5498
      %v5672 = vsel %vm1047, %v5594, %v5501
      %v5673 = vsel %vm1047, %v5596, %v5504
      %v5674 = vsel %vm1047, %v5598, %v5507
      %v5675 = vsel %vm1047, %v5600, %v5510
      %v5676 = vsel %vm1047, %v5602, %v5513
      %v5677 = vsel %vm1047, %v5604, %v5516
      %v5678 = vsel %vm1047, %v5606, %v5519
      %v5679 = vsel %vm1047, %v5608, %v5522
      %v5680 = vsel %vm1047, %v5610, %v5525
      %v5681 = vsel %vm1047, %v5612, %v5528
      %v5682 = vsel %vm1047, %v5614, %v5531
      %v5683 = vsel %vm1047, %v5616, %v5534
      %v5684 = vsel %vm1047, %v5618, %v5537
      %v5685 = vsel %vm1047, %v5620, %v5540
      %v5686 = vpack.c.bf16 %v5496, %v5574
      %v5687 = vpack.c.bf16 %v5499, %v5575
      %v5688 = vpack.c.bf16 %v5502, %v5576
      %v5689 = vpack.c.bf16 %v5505, %v5577
      %v5690 = vpack.c.bf16 %v5508, %v5578
      %v5691 = vpack.c.bf16 %v5511, %v5579
      %v5692 = vpack.c.bf16 %v5514, %v5580
      %v5693 = vpack.c.bf16 %v5517, %v5581
      %v5694 = vpack.c.bf16 %v5520, %v5582
      %v5695 = vpack.c.bf16 %v5523, %v5583
      %v5696 = vpack.c.bf16 %v5526, %v5584
      %v5697 = vpack.c.bf16 %v5529, %v5585
      %v5698 = vpack.c.bf16 %v5532, %v5586
      %v5699 = vpack.c.bf16 %v5535, %v5587
      %v5700 = vpack.c.bf16 %v5538, %v5588
      %v5701 = vpack.c.bf16 %v5541, %v5589
      %5702 = vst [vmem:[#allocation2] sm:$0xff] %v5686
      %5703 = vst [vmem:[#allocation2 + $0x18] sm:$0xff] %v5687
      %5704 = vst [vmem:[#allocation2 + $0x30] sm:$0xff] %v5688
      %5705 = vst [vmem:[#allocation2 + $0x48] sm:$0xff] %v5689
      %5706 = vst [vmem:[#allocation2 + $0x60] sm:$0xff] %v5690
      %5707 = vst [vmem:[#allocation2 + $0x78] sm:$0xff] %v5691
      %5708 = vst [vmem:[#allocation2 + $0x90] sm:$0xff] %v5692
      %5709 = vst [vmem:[#allocation2 + $0xa8] sm:$0xff] %v5693
      %5710 = vst [vmem:[#allocation2 + $0xc0] sm:$0xff] %v5694
      %5711 = vst [vmem:[#allocation2 + $0xd8] sm:$0xff] %v5695
      %5712 = vst [vmem:[#allocation2 + $0xf0] sm:$0xff] %v5696
      %5713 = vst [vmem:[#allocation2 + $0x108] sm:$0xff] %v5697
      %5714 = vst [vmem:[#allocation2 + $0x120] sm:$0xff] %v5698
      %5715 = vst [vmem:[#allocation2 + $0x138] sm:$0xff] %v5699
      %5716 = vst [vmem:[#allocation2 + $0x150] sm:$0xff] %v5700
      %5717 = vst [vmem:[#allocation2 + $0x168] sm:$0xff] %v5701
      %v5718 = vpack.c.bf16 %v5399, %v5398
      %v5719 = vpack.c.bf16 %v5401, %v5400
      %v5720 = vpack.c.bf16 %v5403, %v5402
      %v5721 = vpack.c.bf16 %v5405, %v5404
      %v5722 = vpack.c.bf16 %v5407, %v5406
      %v5723 = vpack.c.bf16 %v5409, %v5408
      %v5724 = vpack.c.bf16 %v5411, %v5410
      %v5725 = vpack.c.bf16 %v5413, %v5412
      %v5726 = vpack.c.bf16 %v5415, %v5414
      %v5727 = vpack.c.bf16 %v5417, %v5416
      %v5728 = vpack.c.bf16 %v5419, %v5418
      %v5729 = vpack.c.bf16 %v5421, %v5420
      %v5730 = vpack.c.bf16 %v5423, %v5422
      %v5731 = vpack.c.bf16 %v5425, %v5424
      %v5732 = vpack.c.bf16 %v5427, %v5426
      %v5733 = vpack.c.bf16 %v5429, %v5428
      %5734 = vst [vmem:[#allocation2 + $0x8] sm:$0xff] %v5718
      %5735 = vst [vmem:[#allocation2 + $0x20] sm:$0xff] %v5719
      %5736 = vst [vmem:[#allocation2 + $0x38] sm:$0xff] %v5720
      %5737 = vst [vmem:[#allocation2 + $0x50] sm:$0xff] %v5721
      %5738 = vst [vmem:[#allocation2 + $0x68] sm:$0xff] %v5722
      %5739 = vst [vmem:[#allocation2 + $0x80] sm:$0xff] %v5723
      %5740 = vst [vmem:[#allocation2 + $0x98] sm:$0xff] %v5724
      %5741 = vst [vmem:[#allocation2 + $0xb0] sm:$0xff] %v5725
      %5742 = vst [vmem:[#allocation2 + $0xc8] sm:$0xff] %v5726
      %5743 = vst [vmem:[#allocation2 + $0xe0] sm:$0xff] %v5727
      %5744 = vst [vmem:[#allocation2 + $0xf8] sm:$0xff] %v5728
      %5745 = vst [vmem:[#allocation2 + $0x110] sm:$0xff] %v5729
      %5746 = vst [vmem:[#allocation2 + $0x128] sm:$0xff] %v5730
      %5747 = vst [vmem:[#allocation2 + $0x140] sm:$0xff] %v5731
      %5748 = vst [vmem:[#allocation2 + $0x158] sm:$0xff] %v5732
      %5749 = vst [vmem:[#allocation2 + $0x170] sm:$0xff] %v5733
      %v5750 = vpack.c.bf16 %v5670, %v5591
      %v5751 = vpack.c.bf16 %v5671, %v5593
      %v5752 = vpack.c.bf16 %v5672, %v5595
      %v5753 = vpack.c.bf16 %v5673, %v5597
      %v5754 = vpack.c.bf16 %v5674, %v5599
      %v5755 = vpack.c.bf16 %v5675, %v5601
      %v5756 = vpack.c.bf16 %v5676, %v5603
      %v5757 = vpack.c.bf16 %v5677, %v5605
      %v5758 = vpack.c.bf16 %v5678, %v5607
      %v5759 = vpack.c.bf16 %v5679, %v5609
      %v5760 = vpack.c.bf16 %v5680, %v5611
      %v5761 = vpack.c.bf16 %v5681, %v5613
      %v5762 = vpack.c.bf16 %v5682, %v5615
      %v5763 = vpack.c.bf16 %v5683, %v5617
      %v5764 = vpack.c.bf16 %v5684, %v5619
      %v5765 = vpack.c.bf16 %v5685, %v5621
      %5766 = vst [vmem:[#allocation2 + $0x10] sm:$0xff] %v5750
      %5767 = vst [vmem:[#allocation2 + $0x28] sm:$0xff] %v5751
      %5768 = vst [vmem:[#allocation2 + $0x40] sm:$0xff] %v5752
      %5769 = vst [vmem:[#allocation2 + $0x58] sm:$0xff] %v5753
      %5770 = vst [vmem:[#allocation2 + $0x70] sm:$0xff] %v5754
      %5771 = vst [vmem:[#allocation2 + $0x88] sm:$0xff] %v5755
      %5772 = vst [vmem:[#allocation2 + $0xa0] sm:$0xff] %v5756
      %5773 = vst [vmem:[#allocation2 + $0xb8] sm:$0xff] %v5757
      %5774 = vst [vmem:[#allocation2 + $0xd0] sm:$0xff] %v5758
      %5775 = vst [vmem:[#allocation2 + $0xe8] sm:$0xff] %v5759
      %5776 = vst [vmem:[#allocation2 + $0x100] sm:$0xff] %v5760
      %5777 = vst [vmem:[#allocation2 + $0x118] sm:$0xff] %v5761
      %5778 = vst [vmem:[#allocation2 + $0x130] sm:$0xff] %v5762
      %5779 = vst [vmem:[#allocation2 + $0x148] sm:$0xff] %v5763
      %5780 = vst [vmem:[#allocation2 + $0x160] sm:$0xff] %v5764
      %5781 = vst [vmem:[#allocation2 + $0x178] sm:$0xff] %v5765
      %v5782 = vld [vmem:[#allocation2] sm:$0xff]
      %v5783 = vld [vmem:[#allocation2 + $0x8] sm:$0xff]
      %v5784 = vld [vmem:[#allocation2 + $0x10] sm:$0xff]
      %v5785 = vld [vmem:[#allocation2 + $0x18] sm:$0xff]
      %v5786 = vld [vmem:[#allocation2 + $0x20] sm:$0xff]
      %v5787 = vld [vmem:[#allocation2 + $0x28] sm:$0xff]
      %v5788 = vld [vmem:[#allocation2 + $0x30] sm:$0xff]
      %v5789 = vld [vmem:[#allocation2 + $0x38] sm:$0xff]
      %v5790 = vld [vmem:[#allocation2 + $0x40] sm:$0xff]
      %v5791 = vld [vmem:[#allocation2 + $0x48] sm:$0xff]
      %v5792 = vld [vmem:[#allocation2 + $0x50] sm:$0xff]
      %v5793 = vld [vmem:[#allocation2 + $0x58] sm:$0xff]
      %v5794 = vld [vmem:[#allocation2 + $0x60] sm:$0xff]
      %v5795 = vld [vmem:[#allocation2 + $0x68] sm:$0xff]
      %v5796 = vld [vmem:[#allocation2 + $0x70] sm:$0xff]
      %v5797 = vld [vmem:[#allocation2 + $0x78] sm:$0xff]
      %v5798 = vld [vmem:[#allocation2 + $0x80] sm:$0xff]
      %v5799 = vld [vmem:[#allocation2 + $0x88] sm:$0xff]
      %v5800 = vld [vmem:[#allocation2 + $0x90] sm:$0xff]
      %v5801 = vld [vmem:[#allocation2 + $0x98] sm:$0xff]
      %v5802 = vld [vmem:[#allocation2 + $0xa0] sm:$0xff]
      %v5803 = vld [vmem:[#allocation2 + $0xa8] sm:$0xff]
      %v5804 = vld [vmem:[#allocation2 + $0xb0] sm:$0xff]
      %v5805 = vld [vmem:[#allocation2 + $0xb8] sm:$0xff]
      %v5806 = vld [vmem:[#allocation2 + $0xc0] sm:$0xff]
      %v5807 = vld [vmem:[#allocation2 + $0xc8] sm:$0xff]
      %v5808 = vld [vmem:[#allocation2 + $0xd0] sm:$0xff]
      %v5809 = vld [vmem:[#allocation2 + $0xd8] sm:$0xff]
      %v5810 = vld [vmem:[#allocation2 + $0xe0] sm:$0xff]
      %v5811 = vld [vmem:[#allocation2 + $0xe8] sm:$0xff]
      %v5812 = vld [vmem:[#allocation2 + $0xf0] sm:$0xff]
      %v5813 = vld [vmem:[#allocation2 + $0xf8] sm:$0xff]
      %v5814 = vld [vmem:[#allocation2 + $0x100] sm:$0xff]
      %v5815 = vld [vmem:[#allocation2 + $0x108] sm:$0xff]
      %v5816 = vld [vmem:[#allocation2 + $0x110] sm:$0xff]
      %v5817 = vld [vmem:[#allocation2 + $0x118] sm:$0xff]
      %v5818 = vld [vmem:[#allocation2 + $0x120] sm:$0xff]
      %v5819 = vld [vmem:[#allocation2 + $0x128] sm:$0xff]
      %v5820 = vld [vmem:[#allocation2 + $0x130] sm:$0xff]
      %v5821 = vld [vmem:[#allocation2 + $0x138] sm:$0xff]
      %v5822 = vld [vmem:[#allocation2 + $0x140] sm:$0xff]
      %v5823 = vld [vmem:[#allocation2 + $0x148] sm:$0xff]
      %v5824 = vld [vmem:[#allocation2 + $0x150] sm:$0xff]
      %v5825 = vld [vmem:[#allocation2 + $0x158] sm:$0xff]
      %v5826 = vld [vmem:[#allocation2 + $0x160] sm:$0xff]
      %v5827 = vld [vmem:[#allocation2 + $0x168] sm:$0xff]
      %v5828 = vld [vmem:[#allocation2 + $0x170] sm:$0xff]
      %v5829 = vld [vmem:[#allocation2 + $0x178] sm:$0xff]
      %v5830 = vld [vmem:[%s7] sm:$0xf]
      %v5831 = vld [vmem:[%s7 + $0x4] sm:$0xf]
      %v5832 = vld [vmem:[%s7 + $0x8] sm:$0xf]
      %v5833 = vld [vmem:[%s7 + $0xc] sm:$0xf]
      %v5834 = vld [vmem:[%s7 + $0x10] sm:$0xf]
      %v5835 = vld [vmem:[%s7 + $0x14] sm:$0xf]
      %v5836 = vld [vmem:[%s7 + $0x18] sm:$0xf]
      %v5837 = vld [vmem:[%s7 + $0x1c] sm:$0xf]
      %v5838 = vld [vmem:[%s7 + $0x20] sm:$0xf]
      %v5839 = vld [vmem:[%s7 + $0x24] sm:$0xf]
      %v5840 = vld [vmem:[%s7 + $0x28] sm:$0xf]
      %v5841 = vld [vmem:[%s7 + $0x2c] sm:$0xf]
      %v5842 = vld [vmem:[%s7 + $0x30] sm:$0xf]
      %v5843 = vld [vmem:[%s7 + $0x34] sm:$0xf]
      %v5844 = vld [vmem:[%s7 + $0x38] sm:$0xf]
      %v5845 = vld [vmem:[%s7 + $0x3c] sm:$0xf]
      %v5846 = vld [vmem:[%s7 + $0x40] sm:$0xf]
      %v5847 = vld [vmem:[%s7 + $0x44] sm:$0xf]
      %v5848 = vld [vmem:[%s7 + $0x48] sm:$0xf]
      %v5849 = vld [vmem:[%s7 + $0x4c] sm:$0xf]
      %v5850 = vld [vmem:[%s7 + $0x50] sm:$0xf]
      %v5851 = vld [vmem:[%s7 + $0x54] sm:$0xf]
      %v5852 = vld [vmem:[%s7 + $0x58] sm:$0xf]
      %v5853 = vld [vmem:[%s7 + $0x5c] sm:$0xf]
      %v5854 = vld [vmem:[%s7 + $0x60] sm:$0xf]
      %v5855 = vld [vmem:[%s7 + $0x64] sm:$0xf]
      %v5856 = vld [vmem:[%s7 + $0x68] sm:$0xf]
      %v5857 = vld [vmem:[%s7 + $0x6c] sm:$0xf]
      %v5858 = vld [vmem:[%s7 + $0x70] sm:$0xf]
      %v5859 = vld [vmem:[%s7 + $0x74] sm:$0xf]
      %v5860 = vld [vmem:[%s7 + $0x78] sm:$0xf]
      %v5861 = vld [vmem:[%s7 + $0x7c] sm:$0xf]
      %v5862 = vld [vmem:[%s7 + $0x80] sm:$0xf]
      %v5863 = vld [vmem:[%s7 + $0x84] sm:$0xf]
      %v5864 = vld [vmem:[%s7 + $0x88] sm:$0xf]
      %v5865 = vld [vmem:[%s7 + $0x8c] sm:$0xf]
      %v5866 = vld [vmem:[%s7 + $0x90] sm:$0xf]
      %v5867 = vld [vmem:[%s7 + $0x94] sm:$0xf]
      %v5868 = vld [vmem:[%s7 + $0x98] sm:$0xf]
      %v5869 = vld [vmem:[%s7 + $0x9c] sm:$0xf]
      %v5870 = vld [vmem:[%s7 + $0xa0] sm:$0xf]
      %v5871 = vld [vmem:[%s7 + $0xa4] sm:$0xf]
      %v5872 = vld [vmem:[%s7 + $0xa8] sm:$0xf]
      %v5873 = vld [vmem:[%s7 + $0xac] sm:$0xf]
      %v5874 = vld [vmem:[%s7 + $0xb0] sm:$0xf]
      %v5875 = vld [vmem:[%s7 + $0xb4] sm:$0xf]
      %v5876 = vld [vmem:[%s7 + $0xb8] sm:$0xf]
      %v5877 = vld [vmem:[%s7 + $0xbc] sm:$0xf]
      %v5926 = vunpack.c.l.b16 %v5830
      %v5927 = vunpack.c.l.b16 %v5831
      %v5928 = vunpack.c.l.b16 %v5832
      %v5929 = vunpack.c.l.b16 %v5833
      %v5930 = vunpack.c.l.b16 %v5834
      %v5931 = vunpack.c.l.b16 %v5835
      %v5932 = vunpack.c.l.b16 %v5836
      %v5933 = vunpack.c.l.b16 %v5837
      %v5934 = vunpack.c.l.b16 %v5838
      %v5935 = vunpack.c.l.b16 %v5839
      %v5936 = vunpack.c.l.b16 %v5840
      %v5937 = vunpack.c.l.b16 %v5841
      %v5938 = vunpack.c.l.b16 %v5842
      %v5939 = vunpack.c.l.b16 %v5843
      %v5940 = vunpack.c.l.b16 %v5844
      %v5941 = vunpack.c.l.b16 %v5845
      %v5942 = vunpack.c.l.b16 %v5846
      %v5943 = vunpack.c.l.b16 %v5847
      %v5944 = vunpack.c.l.b16 %v5848
      %v5945 = vunpack.c.l.b16 %v5849
      %v5946 = vunpack.c.l.b16 %v5850
      %v5947 = vunpack.c.l.b16 %v5851
      %v5948 = vunpack.c.l.b16 %v5852
      %v5949 = vunpack.c.l.b16 %v5853
      %v5950 = vunpack.c.l.b16 %v5854
      %v5951 = vunpack.c.l.b16 %v5855
      %v5952 = vunpack.c.l.b16 %v5856
      %v5953 = vunpack.c.l.b16 %v5857
      %v5954 = vunpack.c.l.b16 %v5858
      %v5955 = vunpack.c.l.b16 %v5859
      %v5956 = vunpack.c.l.b16 %v5860
      %v5957 = vunpack.c.l.b16 %v5861
      %v5958 = vunpack.c.l.b16 %v5862
      %v5959 = vunpack.c.l.b16 %v5863
      %v5960 = vunpack.c.l.b16 %v5864
      %v5961 = vunpack.c.l.b16 %v5865
      %v5962 = vunpack.c.l.b16 %v5866
      %v5963 = vunpack.c.l.b16 %v5867
      %v5964 = vunpack.c.l.b16 %v5868
      %v5965 = vunpack.c.l.b16 %v5869
      %v5966 = vunpack.c.l.b16 %v5870
      %v5967 = vunpack.c.l.b16 %v5871
      %v5968 = vunpack.c.l.b16 %v5872
      %v5969 = vunpack.c.l.b16 %v5873
      %v5970 = vunpack.c.l.b16 %v5874
      %v5971 = vunpack.c.l.b16 %v5875
      %v5972 = vunpack.c.l.b16 %v5876
      %v5973 = vunpack.c.l.b16 %v5877
      %v5974 = vpack.c.b16 %v5927, %v5926
      %v5975 = vpack.c.b16 %v5929, %v5928
      %v5976 = vpack.c.b16 %v5931, %v5930
      %v5977 = vpack.c.b16 %v5933, %v5932
      %v5978 = vpack.c.b16 %v5935, %v5934
      %v5979 = vpack.c.b16 %v5937, %v5936
      %v5980 = vpack.c.b16 %v5939, %v5938
      %v5981 = vpack.c.b16 %v5941, %v5940
      %v5982 = vpack.c.b16 %v5943, %v5942
      %v5983 = vpack.c.b16 %v5945, %v5944
      %v5984 = vpack.c.b16 %v5947, %v5946
      %v5985 = vpack.c.b16 %v5949, %v5948
      %v5986 = vpack.c.b16 %v5951, %v5950
      %v5987 = vpack.c.b16 %v5953, %v5952
      %v5988 = vpack.c.b16 %v5955, %v5954
      %v5989 = vpack.c.b16 %v5957, %v5956
      %v5990 = vpack.c.b16 %v5959, %v5958
      %v5991 = vpack.c.b16 %v5961, %v5960
      %v5992 = vpack.c.b16 %v5963, %v5962
      %v5993 = vpack.c.b16 %v5965, %v5964
      %v5994 = vpack.c.b16 %v5967, %v5966
      %v5995 = vpack.c.b16 %v5969, %v5968
      %v5996 = vpack.c.b16 %v5971, %v5970
      %v5997 = vpack.c.b16 %v5973, %v5972
      %6022 = vmatprep.subr.bf16.mxu0 0
      %6023 = vmatpush1.bf16.msra.mxu0 %v5974
      %6024 = vmatprep.subr.bf16.mxu0 0
      %6025 = vmatpush1.bf16.msra.mxu0 %v5975
      %6026 = vmatprep.subr.bf16.mxu0 0
      %6027 = vmatpush1.bf16.msra.mxu0 %v5976
      %6028 = vmatprep.subr.bf16.mxu0 0
      %6029 = vmatpush1.bf16.msra.mxu0 %v5977
      %6030 = vmatprep.subr.bf16.mxu0 0
      %6031 = vmatpush1.bf16.msra.mxu0 %v5978
      %6032 = vmatprep.subr.bf16.mxu0 0
      %6033 = vmatpush1.bf16.msra.mxu0 %v5979
      %6034 = vmatprep.subr.bf16.mxu0 0
      %6035 = vmatpush1.bf16.msra.mxu0 %v5980
      %6036 = vmatprep.subr.bf16.mxu0 0
      %6037 = vmatpush1.bf16.msra.mxu0 %v5981
      %6038 = vmatprep.subr.bf16.mxu0 0
      %6039 = vmatpush1.bf16.msra.mxu0 %v5982
      %6040 = vmatprep.subr.bf16.mxu0 0
      %6041 = vmatpush1.bf16.msra.mxu0 %v5983
      %6042 = vmatprep.subr.bf16.mxu0 0
      %6043 = vmatpush1.bf16.msra.mxu0 %v5984
      %6044 = vmatprep.subr.bf16.mxu0 0
      %6045 = vmatpush1.bf16.msra.mxu0 %v5985
      %6046 = vmatprep.subr.bf16.mxu0 0
      %6047 = vmatpush1.bf16.msra.mxu0 %v5986
      %6048 = vmatprep.subr.bf16.mxu0 0
      %6049 = vmatpush1.bf16.msra.mxu0 %v5987
      %6050 = vmatprep.subr.bf16.mxu0 0
      %6051 = vmatpush1.bf16.msra.mxu0 %v5988
      %6052 = vmatprep.subr.bf16.mxu0 0
      %6053 = vmatpush1.bf16.msra.mxu0 %v5989
      %6054 = vmatprep.mubr.bf16.mxu0 %v5783
      %6055 = vmatmul.mubr.bf16.gmra.mrb[0].mxu0 %v5782
      %v6056 = vpop.f32.mrb[0].mxu0
      %v6057 = vadd.f32 0.0, %v6056
      %v6058 = vpop.f32.mrb[0].mxu0
      %v6059 = vpop.f32.mrb[0].mxu0
      %v6060 = vadd.f32 0.0, %v6059
      %v6061 = vpop.f32.mrb[0].mxu0
      %6062 = vmatprep.mubr.bf16.mxu0 %v5786
      %6063 = vmatmul.mubr.bf16.gmra.mrb[0].mxu0 %v5785
      %v6064 = vpop.f32.mrb[0].mxu0
      %v6065 = vadd.f32 0.0, %v6064
      %v6066 = vpop.f32.mrb[0].mxu0
      %v6067 = vpop.f32.mrb[0].mxu0
      %v6068 = vadd.f32 0.0, %v6067
      %v6069 = vpop.f32.mrb[0].mxu0
      %6070 = vmatprep.mubr.bf16.mxu0 %v5789
      %6071 = vmatmul.mubr.bf16.gmra.mrb[0].mxu0 %v5788
      %v6072 = vpop.f32.mrb[0].mxu0
      %v6073 = vadd.f32 0.0, %v6072
      %v6074 = vpop.f32.mrb[0].mxu0
      %v6075 = vpop.f32.mrb[0].mxu0
      %v6076 = vadd.f32 0.0, %v6075
      %v6077 = vpop.f32.mrb[0].mxu0
      %6078 = vmatprep.mubr.bf16.mxu0 %v5792
      %6079 = vmatmul.mubr.bf16.gmra.mrb[0].mxu0 %v5791
      %v6080 = vpop.f32.mrb[0].mxu0
      %v6081 = vadd.f32 0.0, %v6080
      %v6082 = vpop.f32.mrb[0].mxu0
      %v6083 = vpop.f32.mrb[0].mxu0
      %v6084 = vadd.f32 0.0, %v6083
      %v6085 = vpop.f32.mrb[0].mxu0
      %6086 = vmatprep.mubr.bf16.mxu0 %v5795
      %6087 = vmatmul.mubr.bf16.gmra.mrb[0].mxu0 %v5794
      %v6088 = vpop.f32.mrb[0].mxu0
      %v6089 = vadd.f32 0.0, %v6088
      %v6090 = vpop.f32.mrb[0].mxu0
      %v6091 = vpop.f32.mrb[0].mxu0
      %v6092 = vadd.f32 0.0, %v6091
      %v6093 = vpop.f32.mrb[0].mxu0
      %6094 = vmatprep.mubr.bf16.mxu0 %v5798
      %6095 = vmatmul.mubr.bf16.gmra.mrb[0].mxu0 %v5797
      %v6096 = vpop.f32.mrb[0].mxu0
      %v6097 = vadd.f32 0.0, %v6096
      %v6098 = vpop.f32.mrb[0].mxu0
      %v6099 = vpop.f32.mrb[0].mxu0
      %v6100 = vadd.f32 0.0, %v6099
      %v6101 = vpop.f32.mrb[0].mxu0
      %6102 = vmatprep.mubr.bf16.mxu0 %v5801
      %6103 = vmatmul.mubr.bf16.gmra.mrb[0].mxu0 %v5800
      %v6104 = vpop.f32.mrb[0].mxu0
      %v6105 = vadd.f32 0.0, %v6104
      %v6106 = vpop.f32.mrb[0].mxu0
      %v6107 = vpop.f32.mrb[0].mxu0
      %v6108 = vadd.f32 0.0, %v6107
      %v6109 = vpop.f32.mrb[0].mxu0
      %6110 = vmatprep.mubr.bf16.mxu0 %v5804
      %6111 = vmatmul.mubr.bf16.gmra.mrb[0].mxu0 %v5803
      %v6112 = vpop.f32.mrb[0].mxu0
      %v6113 = vadd.f32 0.0, %v6112
      %v6114 = vpop.f32.mrb[0].mxu0
      %v6115 = vpop.f32.mrb[0].mxu0
      %v6116 = vadd.f32 0.0, %v6115
      %v6117 = vpop.f32.mrb[0].mxu0
      %6118 = vmatprep.mubr.bf16.mxu0 %v5807
      %6119 = vmatmul.mubr.bf16.gmra.mrb[0].mxu0 %v5806
      %v6120 = vpop.f32.mrb[0].mxu0
      %v6121 = vadd.f32 0.0, %v6120
      %v6122 = vpop.f32.mrb[0].mxu0
      %v6123 = vpop.f32.mrb[0].mxu0
      %v6124 = vadd.f32 0.0, %v6123
      %v6125 = vpop.f32.mrb[0].mxu0
      %6126 = vmatprep.mubr.bf16.mxu0 %v5810
      %6127 = vmatmul.mubr.bf16.gmra.mrb[0].mxu0 %v5809
      %v6128 = vpop.f32.mrb[0].mxu0
      %v6129 = vadd.f32 0.0, %v6128
      %v6130 = vpop.f32.mrb[0].mxu0
      %v6131 = vpop.f32.mrb[0].mxu0
      %v6132 = vadd.f32 0.0, %v6131
      %v6133 = vpop.f32.mrb[0].mxu0
      %6134 = vmatprep.mubr.bf16.mxu0 %v5813
      %6135 = vmatmul.mubr.bf16.gmra.mrb[0].mxu0 %v5812
      %v6136 = vpop.f32.mrb[0].mxu0
      %v6137 = vadd.f32 0.0, %v6136
      %v6138 = vpop.f32.mrb[0].mxu0
      %v6139 = vpop.f32.mrb[0].mxu0
      %v6140 = vadd.f32 0.0, %v6139
      %v6141 = vpop.f32.mrb[0].mxu0
      %6142 = vmatprep.mubr.bf16.mxu0 %v5816
      %6143 = vmatmul.mubr.bf16.gmra.mrb[0].mxu0 %v5815
      %v6144 = vpop.f32.mrb[0].mxu0
      %v6145 = vadd.f32 0.0, %v6144
      %v6146 = vpop.f32.mrb[0].mxu0
      %v6147 = vpop.f32.mrb[0].mxu0
      %v6148 = vadd.f32 0.0, %v6147
      %v6149 = vpop.f32.mrb[0].mxu0
      %6150 = vmatprep.mubr.bf16.mxu0 %v5819
      %6151 = vmatmul.mubr.bf16.gmra.mrb[0].mxu0 %v5818
      %v6152 = vpop.f32.mrb[0].mxu0
      %v6153 = vadd.f32 0.0, %v6152
      %v6154 = vpop.f32.mrb[0].mxu0
      %v6155 = vpop.f32.mrb[0].mxu0
      %v6156 = vadd.f32 0.0, %v6155
      %v6157 = vpop.f32.mrb[0].mxu0
      %6158 = vmatprep.mubr.bf16.mxu0 %v5822
      %6159 = vmatmul.mubr.bf16.gmra.mrb[0].mxu0 %v5821
      %v6160 = vpop.f32.mrb[0].mxu0
      %v6161 = vadd.f32 0.0, %v6160
      %v6162 = vpop.f32.mrb[0].mxu0
      %v6163 = vpop.f32.mrb[0].mxu0
      %v6164 = vadd.f32 0.0, %v6163
      %v6165 = vpop.f32.mrb[0].mxu0
      %6166 = vmatprep.mubr.bf16.mxu0 %v5825
      %6167 = vmatmul.mubr.bf16.gmra.mrb[0].mxu0 %v5824
      %v6168 = vpop.f32.mrb[0].mxu0
      %v6169 = vadd.f32 0.0, %v6168
      %v6170 = vpop.f32.mrb[0].mxu0
      %v6171 = vpop.f32.mrb[0].mxu0
      %v6172 = vadd.f32 0.0, %v6171
      %v6173 = vpop.f32.mrb[0].mxu0
      %6174 = vmatprep.mubr.bf16.mxu0 %v5828
      %6175 = vmatmul.mubr.bf16.gmra.mrb[0].mxu0 %v5827
      %v6176 = vpop.f32.mrb[0].mxu0
      %v6177 = vpop.f32.mrb[0].mxu0
      %v6178 = vpop.f32.mrb[0].mxu0
      %v6179 = vpop.f32.mrb[0].mxu0
      %6180 = vdwg.mxu0
      %6181 = vmatprep.subr.bf16.mxu0 0
      %6182 = vmatpush1.bf16.msra.mxu0 %v5990
      %6183 = vmatprep.subr.bf16.mxu0 0
      %6184 = vmatpush1.bf16.msra.mxu0 %v5991
      %6185 = vmatprep.subr.bf16.mxu0 0
      %6186 = vmatpush1.bf16.msra.mxu0 %v5992
      %6187 = vmatprep.subr.bf16.mxu0 0
      %6188 = vmatpush1.bf16.msra.mxu0 %v5993
      %6189 = vmatprep.subr.bf16.mxu0 0
      %6190 = vmatpush1.bf16.msra.mxu0 %v5994
      %6191 = vmatprep.subr.bf16.mxu0 0
      %6192 = vmatpush1.bf16.msra.mxu0 %v5995
      %6193 = vmatprep.subr.bf16.mxu0 0
      %6194 = vmatpush1.bf16.msra.mxu0 %v5996
      %6195 = vmatprep.subr.bf16.mxu0 0
      %6196 = vmatpush1.bf16.msra.mxu0 %v5997
      %6197 = vmatprep.subr.bf16.mxu0 0
      %6198 = vmatpush1.bf16.msra.mxu0 0
      %6199 = vmatprep.subr.bf16.mxu0 0
      %6200 = vmatpush1.bf16.msra.mxu0 0
      %6201 = vmatprep.subr.bf16.mxu0 0
      %6202 = vmatpush1.bf16.msra.mxu0 0
      %6203 = vmatprep.subr.bf16.mxu0 0
      %6204 = vmatpush1.bf16.msra.mxu0 0
      %6205 = vmatprep.subr.bf16.mxu0 0
      %6206 = vmatpush1.bf16.msra.mxu0 0
      %6207 = vmatprep.subr.bf16.mxu0 0
      %6208 = vmatpush1.bf16.msra.mxu0 0
      %6209 = vmatprep.subr.bf16.mxu0 0
      %6210 = vmatpush1.bf16.msra.mxu0 0
      %6211 = vmatprep.subr.bf16.mxu0 0
      %6212 = vmatpush1.bf16.msra.mxu0 0
      %6213 = vmatprep.mubr.bf16.mxu0 0
      %6214 = vmatmul.mubr.bf16.gmra.mrb[0].mxu0 %v5784
      %v6215 = vpop.f32.mrb[0].mxu0
      %v6216 = vadd.f32 %v6057, %v6215
      %v6217 = vpop.f32.mrb[0].mxu0
      %v6218 = vpop.f32.mrb[0].mxu0
      %v6219 = vadd.f32 %v6060, %v6218
      %v6220 = vpop.f32.mrb[0].mxu0
      %6221 = vmatprep.mubr.bf16.mxu0 0
      %6222 = vmatmul.mubr.bf16.gmra.mrb[0].mxu0 %v5787
      %v6223 = vpop.f32.mrb[0].mxu0
      %v6224 = vadd.f32 %v6065, %v6223
      %v6225 = vpop.f32.mrb[0].mxu0
      %v6226 = vpop.f32.mrb[0].mxu0
      %v6227 = vadd.f32 %v6068, %v6226
      %v6228 = vpop.f32.mrb[0].mxu0
      %6229 = vmatprep.mubr.bf16.mxu0 0
      %6230 = vmatmul.mubr.bf16.gmra.mrb[0].mxu0 %v5790
      %v6231 = vpop.f32.mrb[0].mxu0
      %v6232 = vadd.f32 %v6073, %v6231
      %v6233 = vpop.f32.mrb[0].mxu0
      %v6234 = vpop.f32.mrb[0].mxu0
      %v6235 = vadd.f32 %v6076, %v6234
      %v6236 = vpop.f32.mrb[0].mxu0
      %6237 = vmatprep.mubr.bf16.mxu0 0
      %6238 = vmatmul.mubr.bf16.gmra.mrb[0].mxu0 %v5793
      %v6239 = vpop.f32.mrb[0].mxu0
      %v6240 = vadd.f32 %v6081, %v6239
      %v6241 = vpop.f32.mrb[0].mxu0
      %v6242 = vpop.f32.mrb[0].mxu0
      %v6243 = vadd.f32 %v6084, %v6242
      %v6244 = vpop.f32.mrb[0].mxu0
      %6245 = vmatprep.mubr.bf16.mxu0 0
      %6246 = vmatmul.mubr.bf16.gmra.mrb[0].mxu0 %v5796
      %v6247 = vpop.f32.mrb[0].mxu0
      %v6248 = vadd.f32 %v6089, %v6247
      %v6249 = vpop.f32.mrb[0].mxu0
      %v6250 = vpop.f32.mrb[0].mxu0
      %v6251 = vadd.f32 %v6092, %v6250
      %v6252 = vpop.f32.mrb[0].mxu0
      %6253 = vmatprep.mubr.bf16.mxu0 0
      %6254 = vmatmul.mubr.bf16.gmra.mrb[0].mxu0 %v5799
      %v6255 = vpop.f32.mrb[0].mxu0
      %v6256 = vadd.f32 %v6097, %v6255
      %v6257 = vpop.f32.mrb[0].mxu0
      %v6258 = vpop.f32.mrb[0].mxu0
      %v6259 = vadd.f32 %v6100, %v6258
      %v6260 = vpop.f32.mrb[0].mxu0
      %6261 = vmatprep.mubr.bf16.mxu0 0
      %6262 = vmatmul.mubr.bf16.gmra.mrb[0].mxu0 %v5802
      %v6263 = vpop.f32.mrb[0].mxu0
      %v6264 = vadd.f32 %v6105, %v6263
      %v6265 = vpop.f32.mrb[0].mxu0
      %v6266 = vpop.f32.mrb[0].mxu0
      %v6267 = vadd.f32 %v6108, %v6266
      %v6268 = vpop.f32.mrb[0].mxu0
      %6269 = vmatprep.mubr.bf16.mxu0 0
      %6270 = vmatmul.mubr.bf16.gmra.mrb[0].mxu0 %v5805
      %v6271 = vpop.f32.mrb[0].mxu0
      %v6272 = vadd.f32 %v6113, %v6271
      %v6273 = vpop.f32.mrb[0].mxu0
      %v6274 = vpop.f32.mrb[0].mxu0
      %v6275 = vadd.f32 %v6116, %v6274
      %v6276 = vpop.f32.mrb[0].mxu0
      %6277 = vmatprep.mubr.bf16.mxu0 0
      %6278 = vmatmul.mubr.bf16.gmra.mrb[0].mxu0 %v5808
      %v6279 = vpop.f32.mrb[0].mxu0
      %v6280 = vadd.f32 %v6121, %v6279
      %v6281 = vpop.f32.mrb[0].mxu0
      %v6282 = vpop.f32.mrb[0].mxu0
      %v6283 = vadd.f32 %v6124, %v6282
      %v6284 = vpop.f32.mrb[0].mxu0
      %6285 = vmatprep.mubr.bf16.mxu0 0
      %6286 = vmatmul.mubr.bf16.gmra.mrb[0].mxu0 %v5811
      %v6287 = vpop.f32.mrb[0].mxu0
      %v6288 = vadd.f32 %v6129, %v6287
      %v6289 = vpop.f32.mrb[0].mxu0
      %v6290 = vpop.f32.mrb[0].mxu0
      %v6291 = vadd.f32 %v6132, %v6290
      %v6292 = vpop.f32.mrb[0].mxu0
      %6293 = vmatprep.mubr.bf16.mxu0 0
      %6294 = vmatmul.mubr.bf16.gmra.mrb[0].mxu0 %v5814
      %v6295 = vpop.f32.mrb[0].mxu0
      %v6296 = vadd.f32 %v6137, %v6295
      %v6297 = vpop.f32.mrb[0].mxu0
      %v6298 = vpop.f32.mrb[0].mxu0
      %v6299 = vadd.f32 %v6140, %v6298
      %v6300 = vpop.f32.mrb[0].mxu0
      %6301 = vmatprep.mubr.bf16.mxu0 0
      %6302 = vmatmul.mubr.bf16.gmra.mrb[0].mxu0 %v5817
      %v6303 = vpop.f32.mrb[0].mxu0
      %v6304 = vadd.f32 %v6145, %v6303
      %v6305 = vpop.f32.mrb[0].mxu0
      %v6306 = vpop.f32.mrb[0].mxu0
      %v6307 = vadd.f32 %v6148, %v6306
      %v6308 = vpop.f32.mrb[0].mxu0
      %6309 = vmatprep.mubr.bf16.mxu0 0
      %6310 = vmatmul.mubr.bf16.gmra.mrb[0].mxu0 %v5820
      %v6311 = vpop.f32.mrb[0].mxu0
      %v6312 = vadd.f32 %v6153, %v6311
      %v6313 = vpop.f32.mrb[0].mxu0
      %v6314 = vpop.f32.mrb[0].mxu0
      %v6315 = vadd.f32 %v6156, %v6314
      %v6316 = vpop.f32.mrb[0].mxu0
      %6317 = vmatprep.mubr.bf16.mxu0 0
      %6318 = vmatmul.mubr.bf16.gmra.mrb[0].mxu0 %v5823
      %v6319 = vpop.f32.mrb[0].mxu0
      %v6320 = vadd.f32 %v6161, %v6319
      %v6321 = vpop.f32.mrb[0].mxu0
      %v6322 = vpop.f32.mrb[0].mxu0
      %v6323 = vadd.f32 %v6164, %v6322
      %v6324 = vpop.f32.mrb[0].mxu0
      %6325 = vmatprep.mubr.bf16.mxu0 0
      %6326 = vmatmul.mubr.bf16.gmra.mrb[0].mxu0 %v5826
      %v6327 = vpop.f32.mrb[0].mxu0
      %v6328 = vadd.f32 %v6169, %v6327
      %v6329 = vpop.f32.mrb[0].mxu0
      %v6330 = vpop.f32.mrb[0].mxu0
      %v6331 = vadd.f32 %v6172, %v6330
      %v6332 = vpop.f32.mrb[0].mxu0
      %6333 = vmatprep.mubr.bf16.mxu0 0
      %6334 = vmatmul.mubr.bf16.gmra.mrb[0].mxu0 %v5829
      %v6335 = vpop.f32.mrb[0].mxu0
      %v6336 = vpop.f32.mrb[0].mxu0
      %v6337 = vpop.f32.mrb[0].mxu0
      %v6338 = vpop.f32.mrb[0].mxu0
      %6339 = vdwg.mxu0
      %s6340 = scalar_lea.vmem %s7, 192
      %v6341 = vld [vmem:[%s6340] sm:$0xf]
      %v6342 = vld [vmem:[%s6340 + $0x4] sm:$0xf]
      %v6343 = vld [vmem:[%s6340 + $0x8] sm:$0xf]
      %v6344 = vld [vmem:[%s6340 + $0xc] sm:$0xf]
      %v6345 = vld [vmem:[%s6340 + $0x10] sm:$0xf]
      %v6346 = vld [vmem:[%s6340 + $0x14] sm:$0xf]
      %v6347 = vld [vmem:[%s6340 + $0x18] sm:$0xf]
      %v6348 = vld [vmem:[%s6340 + $0x1c] sm:$0xf]
      %v6349 = vld [vmem:[%s6340 + $0x20] sm:$0xf]
      %v6350 = vld [vmem:[%s6340 + $0x24] sm:$0xf]
      %v6351 = vld [vmem:[%s6340 + $0x28] sm:$0xf]
      %v6352 = vld [vmem:[%s6340 + $0x2c] sm:$0xf]
      %v6353 = vld [vmem:[%s6340 + $0x30] sm:$0xf]
      %v6354 = vld [vmem:[%s6340 + $0x34] sm:$0xf]
      %v6355 = vld [vmem:[%s6340 + $0x38] sm:$0xf]
      %v6356 = vld [vmem:[%s6340 + $0x3c] sm:$0xf]
      %v6357 = vld [vmem:[%s6340 + $0x40] sm:$0xf]
      %v6358 = vld [vmem:[%s6340 + $0x44] sm:$0xf]
      %v6359 = vld [vmem:[%s6340 + $0x48] sm:$0xf]
      %v6360 = vld [vmem:[%s6340 + $0x4c] sm:$0xf]
      %v6361 = vld [vmem:[%s6340 + $0x50] sm:$0xf]
      %v6362 = vld [vmem:[%s6340 + $0x54] sm:$0xf]
      %v6363 = vld [vmem:[%s6340 + $0x58] sm:$0xf]
      %v6364 = vld [vmem:[%s6340 + $0x5c] sm:$0xf]
      %v6365 = vld [vmem:[%s6340 + $0x60] sm:$0xf]
      %v6366 = vld [vmem:[%s6340 + $0x64] sm:$0xf]
      %v6367 = vld [vmem:[%s6340 + $0x68] sm:$0xf]
      %v6368 = vld [vmem:[%s6340 + $0x6c] sm:$0xf]
      %v6369 = vld [vmem:[%s6340 + $0x70] sm:$0xf]
      %v6370 = vld [vmem:[%s6340 + $0x74] sm:$0xf]
      %v6371 = vld [vmem:[%s6340 + $0x78] sm:$0xf]
      %v6372 = vld [vmem:[%s6340 + $0x7c] sm:$0xf]
      %v6373 = vld [vmem:[%s6340 + $0x80] sm:$0xf]
      %v6374 = vld [vmem:[%s6340 + $0x84] sm:$0xf]
      %v6375 = vld [vmem:[%s6340 + $0x88] sm:$0xf]
      %v6376 = vld [vmem:[%s6340 + $0x8c] sm:$0xf]
      %v6377 = vld [vmem:[%s6340 + $0x90] sm:$0xf]
      %v6378 = vld [vmem:[%s6340 + $0x94] sm:$0xf]
      %v6379 = vld [vmem:[%s6340 + $0x98] sm:$0xf]
      %v6380 = vld [vmem:[%s6340 + $0x9c] sm:$0xf]
      %v6381 = vld [vmem:[%s6340 + $0xa0] sm:$0xf]
      %v6382 = vld [vmem:[%s6340 + $0xa4] sm:$0xf]
      %v6383 = vld [vmem:[%s6340 + $0xa8] sm:$0xf]
      %v6384 = vld [vmem:[%s6340 + $0xac] sm:$0xf]
      %v6385 = vld [vmem:[%s6340 + $0xb0] sm:$0xf]
      %v6386 = vld [vmem:[%s6340 + $0xb4] sm:$0xf]
      %v6387 = vld [vmem:[%s6340 + $0xb8] sm:$0xf]
      %v6388 = vld [vmem:[%s6340 + $0xbc] sm:$0xf]
      %v6437 = vunpack.c.l.b16 %v6341
      %v6438 = vunpack.c.l.b16 %v6342
      %v6439 = vunpack.c.l.b16 %v6343
      %v6440 = vunpack.c.l.b16 %v6344
      %v6441 = vunpack.c.l.b16 %v6345
      %v6442 = vunpack.c.l.b16 %v6346
      %v6443 = vunpack.c.l.b16 %v6347
      %v6444 = vunpack.c.l.b16 %v6348
      %v6445 = vunpack.c.l.b16 %v6349
      %v6446 = vunpack.c.l.b16 %v6350
      %v6447 = vunpack.c.l.b16 %v6351
      %v6448 = vunpack.c.l.b16 %v6352
      %v6449 = vunpack.c.l.b16 %v6353
      %v6450 = vunpack.c.l.b16 %v6354
      %v6451 = vunpack.c.l.b16 %v6355
      %v6452 = vunpack.c.l.b16 %v6356
      %v6453 = vunpack.c.l.b16 %v6357
      %v6454 = vunpack.c.l.b16 %v6358
      %v6455 = vunpack.c.l.b16 %v6359
      %v6456 = vunpack.c.l.b16 %v6360
      %v6457 = vunpack.c.l.b16 %v6361
      %v6458 = vunpack.c.l.b16 %v6362
      %v6459 = vunpack.c.l.b16 %v6363
      %v6460 = vunpack.c.l.b16 %v6364
      %v6461 = vunpack.c.l.b16 %v6365
      %v6462 = vunpack.c.l.b16 %v6366
      %v6463 = vunpack.c.l.b16 %v6367
      %v6464 = vunpack.c.l.b16 %v6368
      %v6465 = vunpack.c.l.b16 %v6369
      %v6466 = vunpack.c.l.b16 %v6370
      %v6467 = vunpack.c.l.b16 %v6371
      %v6468 = vunpack.c.l.b16 %v6372
      %v6469 = vunpack.c.l.b16 %v6373
      %v6470 = vunpack.c.l.b16 %v6374
      %v6471 = vunpack.c.l.b16 %v6375
      %v6472 = vunpack.c.l.b16 %v6376
      %v6473 = vunpack.c.l.b16 %v6377
      %v6474 = vunpack.c.l.b16 %v6378
      %v6475 = vunpack.c.l.b16 %v6379
      %v6476 = vunpack.c.l.b16 %v6380
      %v6477 = vunpack.c.l.b16 %v6381
      %v6478 = vunpack.c.l.b16 %v6382
      %v6479 = vunpack.c.l.b16 %v6383
      %v6480 = vunpack.c.l.b16 %v6384
      %v6481 = vunpack.c.l.b16 %v6385
      %v6482 = vunpack.c.l.b16 %v6386
      %v6483 = vunpack.c.l.b16 %v6387
      %v6484 = vunpack.c.l.b16 %v6388
      %v6485 = vpack.c.b16 %v6438, %v6437
      %v6486 = vpack.c.b16 %v6440, %v6439
      %v6487 = vpack.c.b16 %v6442, %v6441
      %v6488 = vpack.c.b16 %v6444, %v6443
      %v6489 = vpack.c.b16 %v6446, %v6445
      %v6490 = vpack.c.b16 %v6448, %v6447
      %v6491 = vpack.c.b16 %v6450, %v6449
      %v6492 = vpack.c.b16 %v6452, %v6451
      %v6493 = vpack.c.b16 %v6454, %v6453
      %v6494 = vpack.c.b16 %v6456, %v6455
      %v6495 = vpack.c.b16 %v6458, %v6457
      %v6496 = vpack.c.b16 %v6460, %v6459
      %v6497 = vpack.c.b16 %v6462, %v6461
      %v6498 = vpack.c.b16 %v6464, %v6463
      %v6499 = vpack.c.b16 %v6466, %v6465
      %v6500 = vpack.c.b16 %v6468, %v6467
      %v6501 = vpack.c.b16 %v6470, %v6469
      %v6502 = vpack.c.b16 %v6472, %v6471
      %v6503 = vpack.c.b16 %v6474, %v6473
      %v6504 = vpack.c.b16 %v6476, %v6475
      %v6505 = vpack.c.b16 %v6478, %v6477
      %v6506 = vpack.c.b16 %v6480, %v6479
      %v6507 = vpack.c.b16 %v6482, %v6481
      %v6508 = vpack.c.b16 %v6484, %v6483
      %6533 = vmatprep.subr.bf16.mxu0 0
      %6534 = vmatpush1.bf16.msra.mxu0 %v6485
      %6535 = vmatprep.subr.bf16.mxu0 0
      %6536 = vmatpush1.bf16.msra.mxu0 %v6486
      %6537 = vmatprep.subr.bf16.mxu0 0
      %6538 = vmatpush1.bf16.msra.mxu0 %v6487
      %6539 = vmatprep.subr.bf16.mxu0 0
      %6540 = vmatpush1.bf16.msra.mxu0 %v6488
      %6541 = vmatprep.subr.bf16.mxu0 0
      %6542 = vmatpush1.bf16.msra.mxu0 %v6489
      %6543 = vmatprep.subr.bf16.mxu0 0
      %6544 = vmatpush1.bf16.msra.mxu0 %v6490
      %6545 = vmatprep.subr.bf16.mxu0 0
      %6546 = vmatpush1.bf16.msra.mxu0 %v6491
      %6547 = vmatprep.subr.bf16.mxu0 0
      %6548 = vmatpush1.bf16.msra.mxu0 %v6492
      %6549 = vmatprep.subr.bf16.mxu0 0
      %6550 = vmatpush1.bf16.msra.mxu0 %v6493
      %6551 = vmatprep.subr.bf16.mxu0 0
      %6552 = vmatpush1.bf16.msra.mxu0 %v6494
      %6553 = vmatprep.subr.bf16.mxu0 0
      %6554 = vmatpush1.bf16.msra.mxu0 %v6495
      %6555 = vmatprep.subr.bf16.mxu0 0
      %6556 = vmatpush1.bf16.msra.mxu0 %v6496
      %6557 = vmatprep.subr.bf16.mxu0 0
      %6558 = vmatpush1.bf16.msra.mxu0 %v6497
      %6559 = vmatprep.subr.bf16.mxu0 0
      %6560 = vmatpush1.bf16.msra.mxu0 %v6498
      %6561 = vmatprep.subr.bf16.mxu0 0
      %6562 = vmatpush1.bf16.msra.mxu0 %v6499
      %6563 = vmatprep.subr.bf16.mxu0 0
      %6564 = vmatpush1.bf16.msra.mxu0 %v6500
      %6565 = vmatprep.mubr.bf16.mxu0 %v5783
      %6566 = vmatmul.mubr.bf16.gmra.mrb[0].mxu0 %v5782
      %v6567 = vpop.f32.mrb[0].mxu0
      %v6568 = vadd.f32 0.0, %v6567
      %v6569 = vpop.f32.mrb[0].mxu0
      %v6570 = vpop.f32.mrb[0].mxu0
      %v6571 = vadd.f32 0.0, %v6570
      %v6572 = vpop.f32.mrb[0].mxu0
      %6573 = vmatprep.mubr.bf16.mxu0 %v5786
      %6574 = vmatmul.mubr.bf16.gmra.mrb[0].mxu0 %v5785
      %v6575 = vpop.f32.mrb[0].mxu0
      %v6576 = vadd.f32 0.0, %v6575
      %v6577 = vpop.f32.mrb[0].mxu0
      %v6578 = vpop.f32.mrb[0].mxu0
      %v6579 = vadd.f32 0.0, %v6578
      %v6580 = vpop.f32.mrb[0].mxu0
      %6581 = vmatprep.mubr.bf16.mxu0 %v5789
      %6582 = vmatmul.mubr.bf16.gmra.mrb[0].mxu0 %v5788
      %v6583 = vpop.f32.mrb[0].mxu0
      %v6584 = vadd.f32 0.0, %v6583
      %v6585 = vpop.f32.mrb[0].mxu0
      %v6586 = vpop.f32.mrb[0].mxu0
      %v6587 = vadd.f32 0.0, %v6586
      %v6588 = vpop.f32.mrb[0].mxu0
      %6589 = vmatprep.mubr.bf16.mxu0 %v5792
      %6590 = vmatmul.mubr.bf16.gmra.mrb[0].mxu0 %v5791
      %v6591 = vpop.f32.mrb[0].mxu0
      %v6592 = vadd.f32 0.0, %v6591
      %v6593 = vpop.f32.mrb[0].mxu0
      %v6594 = vpop.f32.mrb[0].mxu0
      %v6595 = vadd.f32 0.0, %v6594
      %v6596 = vpop.f32.mrb[0].mxu0
      %6597 = vmatprep.mubr.bf16.mxu0 %v5795
      %6598 = vmatmul.mubr.bf16.gmra.mrb[0].mxu0 %v5794
      %v6599 = vpop.f32.mrb[0].mxu0
      %v6600 = vadd.f32 0.0, %v6599
      %v6601 = vpop.f32.mrb[0].mxu0
      %v6602 = vpop.f32.mrb[0].mxu0
      %v6603 = vadd.f32 0.0, %v6602
      %v6604 = vpop.f32.mrb[0].mxu0
      %6605 = vmatprep.mubr.bf16.mxu0 %v5798
      %6606 = vmatmul.mubr.bf16.gmra.mrb[0].mxu0 %v5797
      %v6607 = vpop.f32.mrb[0].mxu0
      %v6608 = vadd.f32 0.0, %v6607
      %v6609 = vpop.f32.mrb[0].mxu0
      %v6610 = vpop.f32.mrb[0].mxu0
      %v6611 = vadd.f32 0.0, %v6610
      %v6612 = vpop.f32.mrb[0].mxu0
      %6613 = vmatprep.mubr.bf16.mxu0 %v5801
      %6614 = vmatmul.mubr.bf16.gmra.mrb[0].mxu0 %v5800
      %v6615 = vpop.f32.mrb[0].mxu0
      %v6616 = vadd.f32 0.0, %v6615
      %v6617 = vpop.f32.mrb[0].mxu0
      %v6618 = vpop.f32.mrb[0].mxu0
      %v6619 = vadd.f32 0.0, %v6618
      %v6620 = vpop.f32.mrb[0].mxu0
      %6621 = vmatprep.mubr.bf16.mxu0 %v5804
      %6622 = vmatmul.mubr.bf16.gmra.mrb[0].mxu0 %v5803
      %v6623 = vpop.f32.mrb[0].mxu0
      %v6624 = vadd.f32 0.0, %v6623
      %v6625 = vpop.f32.mrb[0].mxu0
      %v6626 = vpop.f32.mrb[0].mxu0
      %v6627 = vadd.f32 0.0, %v6626
      %v6628 = vpop.f32.mrb[0].mxu0
      %6629 = vmatprep.mubr.bf16.mxu0 %v5807
      %6630 = vmatmul.mubr.bf16.gmra.mrb[0].mxu0 %v5806
      %v6631 = vpop.f32.mrb[0].mxu0
      %v6632 = vadd.f32 0.0, %v6631
      %v6633 = vpop.f32.mrb[0].mxu0
      %v6634 = vpop.f32.mrb[0].mxu0
      %v6635 = vadd.f32 0.0, %v6634
      %v6636 = vpop.f32.mrb[0].mxu0
      %6637 = vmatprep.mubr.bf16.mxu0 %v5810
      %6638 = vmatmul.mubr.bf16.gmra.mrb[0].mxu0 %v5809
      %v6639 = vpop.f32.mrb[0].mxu0
      %v6640 = vadd.f32 0.0, %v6639
      %v6641 = vpop.f32.mrb[0].mxu0
      %v6642 = vpop.f32.mrb[0].mxu0
      %v6643 = vadd.f32 0.0, %v6642
      %v6644 = vpop.f32.mrb[0].mxu0
      %6645 = vmatprep.mubr.bf16.mxu0 %v5813
      %6646 = vmatmul.mubr.bf16.gmra.mrb[0].mxu0 %v5812
      %v6647 = vpop.f32.mrb[0].mxu0
      %v6648 = vadd.f32 0.0, %v6647
      %v6649 = vpop.f32.mrb[0].mxu0
      %v6650 = vpop.f32.mrb[0].mxu0
      %v6651 = vadd.f32 0.0, %v6650
      %v6652 = vpop.f32.mrb[0].mxu0
      %6653 = vmatprep.mubr.bf16.mxu0 %v5816
      %6654 = vmatmul.mubr.bf16.gmra.mrb[0].mxu0 %v5815
      %v6655 = vpop.f32.mrb[0].mxu0
      %v6656 = vadd.f32 0.0, %v6655
      %v6657 = vpop.f32.mrb[0].mxu0
      %v6658 = vpop.f32.mrb[0].mxu0
      %v6659 = vadd.f32 0.0, %v6658
      %v6660 = vpop.f32.mrb[0].mxu0
      %6661 = vmatprep.mubr.bf16.mxu0 %v5819
      %6662 = vmatmul.mubr.bf16.gmra.mrb[0].mxu0 %v5818
      %v6663 = vpop.f32.mrb[0].mxu0
      %v6664 = vadd.f32 0.0, %v6663
      %v6665 = vpop.f32.mrb[0].mxu0
      %v6666 = vpop.f32.mrb[0].mxu0
      %v6667 = vadd.f32 0.0, %v6666
      %v6668 = vpop.f32.mrb[0].mxu0
      %6669 = vmatprep.mubr.bf16.mxu0 %v5822
      %6670 = vmatmul.mubr.bf16.gmra.mrb[0].mxu0 %v5821
      %v6671 = vpop.f32.mrb[0].mxu0
      %v6672 = vadd.f32 0.0, %v6671
      %v6673 = vpop.f32.mrb[0].mxu0
      %v6674 = vpop.f32.mrb[0].mxu0
      %v6675 = vadd.f32 0.0, %v6674
      %v6676 = vpop.f32.mrb[0].mxu0
      %6677 = vmatprep.mubr.bf16.mxu0 %v5825
      %6678 = vmatmul.mubr.bf16.gmra.mrb[0].mxu0 %v5824
      %v6679 = vpop.f32.mrb[0].mxu0
      %v6680 = vadd.f32 0.0, %v6679
      %v6681 = vpop.f32.mrb[0].mxu0
      %v6682 = vpop.f32.mrb[0].mxu0
      %v6683 = vadd.f32 0.0, %v6682
      %v6684 = vpop.f32.mrb[0].mxu0
      %6685 = vmatprep.mubr.bf16.mxu0 %v5828
      %6686 = vmatmul.mubr.bf16.gmra.mrb[0].mxu0 %v5827
      %v6687 = vpop.f32.mrb[0].mxu0
      %v6688 = vadd.f32 0.0, %v6687
      %v6689 = vpop.f32.mrb[0].mxu0
      %v6690 = vpop.f32.mrb[0].mxu0
      %v6691 = vadd.f32 0.0, %v6690
      %v6692 = vpop.f32.mrb[0].mxu0
      %6693 = vdwg.mxu0
      %6694 = vmatprep.subr.bf16.mxu0 0
      %6695 = vmatpush1.bf16.msra.mxu0 %v6501
      %6696 = vmatprep.subr.bf16.mxu0 0
      %6697 = vmatpush1.bf16.msra.mxu0 %v6502
      %6698 = vmatprep.subr.bf16.mxu0 0
      %6699 = vmatpush1.bf16.msra.mxu0 %v6503
      %6700 = vmatprep.subr.bf16.mxu0 0
      %6701 = vmatpush1.bf16.msra.mxu0 %v6504
      %6702 = vmatprep.subr.bf16.mxu0 0
      %6703 = vmatpush1.bf16.msra.mxu0 %v6505
      %6704 = vmatprep.subr.bf16.mxu0 0
      %6705 = vmatpush1.bf16.msra.mxu0 %v6506
      %6706 = vmatprep.subr.bf16.mxu0 0
      %6707 = vmatpush1.bf16.msra.mxu0 %v6507
      %6708 = vmatprep.subr.bf16.mxu0 0
      %6709 = vmatpush1.bf16.msra.mxu0 %v6508
      %6710 = vmatprep.subr.bf16.mxu0 0
      %6711 = vmatpush1.bf16.msra.mxu0 0
      %6712 = vmatprep.subr.bf16.mxu0 0
      %6713 = vmatpush1.bf16.msra.mxu0 0
      %6714 = vmatprep.subr.bf16.mxu0 0
      %6715 = vmatpush1.bf16.msra.mxu0 0
      %6716 = vmatprep.subr.bf16.mxu0 0
      %6717 = vmatpush1.bf16.msra.mxu0 0
      %6718 = vmatprep.subr.bf16.mxu0 0
      %6719 = vmatpush1.bf16.msra.mxu0 0
      %6720 = vmatprep.subr.bf16.mxu0 0
      %6721 = vmatpush1.bf16.msra.mxu0 0
      %6722 = vmatprep.subr.bf16.mxu0 0
      %6723 = vmatpush1.bf16.msra.mxu0 0
      %6724 = vmatprep.subr.bf16.mxu0 0
      %6725 = vmatpush1.bf16.msra.mxu0 0
      %6726 = vmatprep.mubr.bf16.mxu0 0
      %6727 = vmatmul.mubr.bf16.gmra.mrb[0].mxu0 %v5784
      %v6728 = vpop.f32.mrb[0].mxu0
      %v6729 = vadd.f32 %v6568, %v6728
      %v6730 = vpop.f32.mrb[0].mxu0
      %v6731 = vpop.f32.mrb[0].mxu0
      %v6732 = vadd.f32 %v6571, %v6731
      %v6733 = vpop.f32.mrb[0].mxu0
      %6734 = vmatprep.mubr.bf16.mxu0 0
      %6735 = vmatmul.mubr.bf16.gmra.mrb[0].mxu0 %v5787
      %v6736 = vpop.f32.mrb[0].mxu0
      %v6737 = vadd.f32 %v6576, %v6736
      %v6738 = vpop.f32.mrb[0].mxu0
      %v6739 = vpop.f32.mrb[0].mxu0
      %v6740 = vadd.f32 %v6579, %v6739
      %v6741 = vpop.f32.mrb[0].mxu0
      %6742 = vmatprep.mubr.bf16.mxu0 0
      %6743 = vmatmul.mubr.bf16.gmra.mrb[0].mxu0 %v5790
      %v6744 = vpop.f32.mrb[0].mxu0
      %v6745 = vadd.f32 %v6584, %v6744
      %v6746 = vpop.f32.mrb[0].mxu0
      %v6747 = vpop.f32.mrb[0].mxu0
      %v6748 = vadd.f32 %v6587, %v6747
      %v6749 = vpop.f32.mrb[0].mxu0
      %6750 = vmatprep.mubr.bf16.mxu0 0
      %6751 = vmatmul.mubr.bf16.gmra.mrb[0].mxu0 %v5793
      %v6752 = vpop.f32.mrb[0].mxu0
      %v6753 = vadd.f32 %v6592, %v6752
      %v6754 = vpop.f32.mrb[0].mxu0
      %v6755 = vpop.f32.mrb[0].mxu0
      %v6756 = vadd.f32 %v6595, %v6755
      %v6757 = vpop.f32.mrb[0].mxu0
      %6758 = vmatprep.mubr.bf16.mxu0 0
      %6759 = vmatmul.mubr.bf16.gmra.mrb[0].mxu0 %v5796
      %v6760 = vpop.f32.mrb[0].mxu0
      %v6761 = vadd.f32 %v6600, %v6760
      %v6762 = vpop.f32.mrb[0].mxu0
      %v6763 = vpop.f32.mrb[0].mxu0
      %v6764 = vadd.f32 %v6603, %v6763
      %v6765 = vpop.f32.mrb[0].mxu0
      %6766 = vmatprep.mubr.bf16.mxu0 0
      %6767 = vmatmul.mubr.bf16.gmra.mrb[0].mxu0 %v5799
      %v6768 = vpop.f32.mrb[0].mxu0
      %v6769 = vadd.f32 %v6608, %v6768
      %v6770 = vpop.f32.mrb[0].mxu0
      %v6771 = vpop.f32.mrb[0].mxu0
      %v6772 = vadd.f32 %v6611, %v6771
      %v6773 = vpop.f32.mrb[0].mxu0
      %6774 = vmatprep.mubr.bf16.mxu0 0
      %6775 = vmatmul.mubr.bf16.gmra.mrb[0].mxu0 %v5802
      %v6776 = vpop.f32.mrb[0].mxu0
      %v6777 = vadd.f32 %v6616, %v6776
      %v6778 = vpop.f32.mrb[0].mxu0
      %v6779 = vpop.f32.mrb[0].mxu0
      %v6780 = vadd.f32 %v6619, %v6779
      %v6781 = vpop.f32.mrb[0].mxu0
      %6782 = vmatprep.mubr.bf16.mxu0 0
      %6783 = vmatmul.mubr.bf16.gmra.mrb[0].mxu0 %v5805
      %v6784 = vpop.f32.mrb[0].mxu0
      %v6785 = vadd.f32 %v6624, %v6784
      %v6786 = vpop.f32.mrb[0].mxu0
      %v6787 = vpop.f32.mrb[0].mxu0
      %v6788 = vadd.f32 %v6627, %v6787
      %v6789 = vpop.f32.mrb[0].mxu0
      %6790 = vmatprep.mubr.bf16.mxu0 0
      %6791 = vmatmul.mubr.bf16.gmra.mrb[0].mxu0 %v5808
      %v6792 = vpop.f32.mrb[0].mxu0
      %v6793 = vadd.f32 %v6632, %v6792
      %v6794 = vpop.f32.mrb[0].mxu0
      %v6795 = vpop.f32.mrb[0].mxu0
      %v6796 = vadd.f32 %v6635, %v6795
      %v6797 = vpop.f32.mrb[0].mxu0
      %6798 = vmatprep.mubr.bf16.mxu0 0
      %6799 = vmatmul.mubr.bf16.gmra.mrb[0].mxu0 %v5811
      %v6800 = vpop.f32.mrb[0].mxu0
      %v6801 = vadd.f32 %v6640, %v6800
      %v6802 = vpop.f32.mrb[0].mxu0
      %v6803 = vpop.f32.mrb[0].mxu0
      %v6804 = vadd.f32 %v6643, %v6803
      %v6805 = vpop.f32.mrb[0].mxu0
      %6806 = vmatprep.mubr.bf16.mxu0 0
      %6807 = vmatmul.mubr.bf16.gmra.mrb[0].mxu0 %v5814
      %v6808 = vpop.f32.mrb[0].mxu0
      %v6809 = vadd.f32 %v6648, %v6808
      %v6810 = vpop.f32.mrb[0].mxu0
      %v6811 = vpop.f32.mrb[0].mxu0
      %v6812 = vadd.f32 %v6651, %v6811
      %v6813 = vpop.f32.mrb[0].mxu0
      %6814 = vmatprep.mubr.bf16.mxu0 0
      %6815 = vmatmul.mubr.bf16.gmra.mrb[0].mxu0 %v5817
      %v6816 = vpop.f32.mrb[0].mxu0
      %v6817 = vadd.f32 %v6656, %v6816
      %v6818 = vpop.f32.mrb[0].mxu0
      %v6819 = vpop.f32.mrb[0].mxu0
      %v6820 = vadd.f32 %v6659, %v6819
      %v6821 = vpop.f32.mrb[0].mxu0
      %6822 = vmatprep.mubr.bf16.mxu0 0
      %6823 = vmatmul.mubr.bf16.gmra.mrb[0].mxu0 %v5820
      %v6824 = vpop.f32.mrb[0].mxu0
      %v6825 = vadd.f32 %v6664, %v6824
      %v6826 = vpop.f32.mrb[0].mxu0
      %v6827 = vpop.f32.mrb[0].mxu0
      %v6828 = vadd.f32 %v6667, %v6827
      %v6829 = vpop.f32.mrb[0].mxu0
      %6830 = vmatprep.mubr.bf16.mxu0 0
      %6831 = vmatmul.mubr.bf16.gmra.mrb[0].mxu0 %v5823
      %v6832 = vpop.f32.mrb[0].mxu0
      %v6833 = vadd.f32 %v6672, %v6832
      %v6834 = vpop.f32.mrb[0].mxu0
      %v6835 = vpop.f32.mrb[0].mxu0
      %v6836 = vadd.f32 %v6675, %v6835
      %v6837 = vpop.f32.mrb[0].mxu0
      %6838 = vmatprep.mubr.bf16.mxu0 0
      %6839 = vmatmul.mubr.bf16.gmra.mrb[0].mxu0 %v5826
      %v6840 = vpop.f32.mrb[0].mxu0
      %v6841 = vadd.f32 %v6680, %v6840
      %v6842 = vpop.f32.mrb[0].mxu0
      %v6843 = vpop.f32.mrb[0].mxu0
      %v6844 = vadd.f32 %v6683, %v6843
      %v6845 = vpop.f32.mrb[0].mxu0
      %6846 = vmatprep.mubr.bf16.mxu0 0
      %6847 = vmatmul.mubr.bf16.gmra.mrb[0].mxu0 %v5829
      %v6848 = vpop.f32.mrb[0].mxu0
      %v6849 = vadd.f32 %v6688, %v6848
      %v6850 = vpop.f32.mrb[0].mxu0
      %v6851 = vpop.f32.mrb[0].mxu0
      %v6852 = vadd.f32 %v6691, %v6851
      %v6853 = vpop.f32.mrb[0].mxu0
      %6854 = vdwg.mxu0
      %s6855 = scalar_lea.vmem %s7, 384
      %v6856 = vld [vmem:[%s6855] sm:$0xf]
      %v6857 = vld [vmem:[%s6855 + $0x4] sm:$0xf]
      %v6858 = vld [vmem:[%s6855 + $0x8] sm:$0xf]
      %v6859 = vld [vmem:[%s6855 + $0xc] sm:$0xf]
      %v6860 = vld [vmem:[%s6855 + $0x10] sm:$0xf]
      %v6861 = vld [vmem:[%s6855 + $0x14] sm:$0xf]
      %v6862 = vld [vmem:[%s6855 + $0x18] sm:$0xf]
      %v6863 = vld [vmem:[%s6855 + $0x1c] sm:$0xf]
      %v6864 = vld [vmem:[%s6855 + $0x20] sm:$0xf]
      %v6865 = vld [vmem:[%s6855 + $0x24] sm:$0xf]
      %v6866 = vld [vmem:[%s6855 + $0x28] sm:$0xf]
      %v6867 = vld [vmem:[%s6855 + $0x2c] sm:$0xf]
      %v6868 = vld [vmem:[%s6855 + $0x30] sm:$0xf]
      %v6869 = vld [vmem:[%s6855 + $0x34] sm:$0xf]
      %v6870 = vld [vmem:[%s6855 + $0x38] sm:$0xf]
      %v6871 = vld [vmem:[%s6855 + $0x3c] sm:$0xf]
      %v6872 = vld [vmem:[%s6855 + $0x40] sm:$0xf]
      %v6873 = vld [vmem:[%s6855 + $0x44] sm:$0xf]
      %v6874 = vld [vmem:[%s6855 + $0x48] sm:$0xf]
      %v6875 = vld [vmem:[%s6855 + $0x4c] sm:$0xf]
      %v6876 = vld [vmem:[%s6855 + $0x50] sm:$0xf]
      %v6877 = vld [vmem:[%s6855 + $0x54] sm:$0xf]
      %v6878 = vld [vmem:[%s6855 + $0x58] sm:$0xf]
      %v6879 = vld [vmem:[%s6855 + $0x5c] sm:$0xf]
      %v6880 = vld [vmem:[%s6855 + $0x60] sm:$0xf]
      %v6881 = vld [vmem:[%s6855 + $0x64] sm:$0xf]
      %v6882 = vld [vmem:[%s6855 + $0x68] sm:$0xf]
      %v6883 = vld [vmem:[%s6855 + $0x6c] sm:$0xf]
      %v6884 = vld [vmem:[%s6855 + $0x70] sm:$0xf]
      %v6885 = vld [vmem:[%s6855 + $0x74] sm:$0xf]
      %v6886 = vld [vmem:[%s6855 + $0x78] sm:$0xf]
      %v6887 = vld [vmem:[%s6855 + $0x7c] sm:$0xf]
      %v6888 = vld [vmem:[%s6855 + $0x80] sm:$0xf]
      %v6889 = vld [vmem:[%s6855 + $0x84] sm:$0xf]
      %v6890 = vld [vmem:[%s6855 + $0x88] sm:$0xf]
      %v6891 = vld [vmem:[%s6855 + $0x8c] sm:$0xf]
      %v6892 = vld [vmem:[%s6855 + $0x90] sm:$0xf]
      %v6893 = vld [vmem:[%s6855 + $0x94] sm:$0xf]
      %v6894 = vld [vmem:[%s6855 + $0x98] sm:$0xf]
      %v6895 = vld [vmem:[%s6855 + $0x9c] sm:$0xf]
      %v6896 = vld [vmem:[%s6855 + $0xa0] sm:$0xf]
      %v6897 = vld [vmem:[%s6855 + $0xa4] sm:$0xf]
      %v6898 = vld [vmem:[%s6855 + $0xa8] sm:$0xf]
      %v6899 = vld [vmem:[%s6855 + $0xac] sm:$0xf]
      %v6900 = vld [vmem:[%s6855 + $0xb0] sm:$0xf]
      %v6901 = vld [vmem:[%s6855 + $0xb4] sm:$0xf]
      %v6902 = vld [vmem:[%s6855 + $0xb8] sm:$0xf]
      %v6903 = vld [vmem:[%s6855 + $0xbc] sm:$0xf]
      %v6952 = vunpack.c.l.b16 %v6856
      %v6953 = vunpack.c.l.b16 %v6857
      %v6954 = vunpack.c.l.b16 %v6858
      %v6955 = vunpack.c.l.b16 %v6859
      %v6956 = vunpack.c.l.b16 %v6860
      %v6957 = vunpack.c.l.b16 %v6861
      %v6958 = vunpack.c.l.b16 %v6862
      %v6959 = vunpack.c.l.b16 %v6863
      %v6960 = vunpack.c.l.b16 %v6864
      %v6961 = vunpack.c.l.b16 %v6865
      %v6962 = vunpack.c.l.b16 %v6866
      %v6963 = vunpack.c.l.b16 %v6867
      %v6964 = vunpack.c.l.b16 %v6868
      %v6965 = vunpack.c.l.b16 %v6869
      %v6966 = vunpack.c.l.b16 %v6870
      %v6967 = vunpack.c.l.b16 %v6871
      %v6968 = vunpack.c.l.b16 %v6872
      %v6969 = vunpack.c.l.b16 %v6873
      %v6970 = vunpack.c.l.b16 %v6874
      %v6971 = vunpack.c.l.b16 %v6875
      %v6972 = vunpack.c.l.b16 %v6876
      %v6973 = vunpack.c.l.b16 %v6877
      %v6974 = vunpack.c.l.b16 %v6878
      %v6975 = vunpack.c.l.b16 %v6879
      %v6976 = vunpack.c.l.b16 %v6880
      %v6977 = vunpack.c.l.b16 %v6881
      %v6978 = vunpack.c.l.b16 %v6882
      %v6979 = vunpack.c.l.b16 %v6883
      %v6980 = vunpack.c.l.b16 %v6884
      %v6981 = vunpack.c.l.b16 %v6885
      %v6982 = vunpack.c.l.b16 %v6886
      %v6983 = vunpack.c.l.b16 %v6887
      %v6984 = vunpack.c.l.b16 %v6888
      %v6985 = vunpack.c.l.b16 %v6889
      %v6986 = vunpack.c.l.b16 %v6890
      %v6987 = vunpack.c.l.b16 %v6891
      %v6988 = vunpack.c.l.b16 %v6892
      %v6989 = vunpack.c.l.b16 %v6893
      %v6990 = vunpack.c.l.b16 %v6894
      %v6991 = vunpack.c.l.b16 %v6895
      %v6992 = vunpack.c.l.b16 %v6896
      %v6993 = vunpack.c.l.b16 %v6897
      %v6994 = vunpack.c.l.b16 %v6898
      %v6995 = vunpack.c.l.b16 %v6899
      %v6996 = vunpack.c.l.b16 %v6900
      %v6997 = vunpack.c.l.b16 %v6901
      %v6998 = vunpack.c.l.b16 %v6902
      %v6999 = vunpack.c.l.b16 %v6903
      %v7000 = vpack.c.b16 %v6953, %v6952
      %v7001 = vpack.c.b16 %v6955, %v6954
      %v7002 = vpack.c.b16 %v6957, %v6956
      %v7003 = vpack.c.b16 %v6959, %v6958
      %v7004 = vpack.c.b16 %v6961, %v6960
      %v7005 = vpack.c.b16 %v6963, %v6962
      %v7006 = vpack.c.b16 %v6965, %v6964
      %v7007 = vpack.c.b16 %v6967, %v6966
      %v7008 = vpack.c.b16 %v6969, %v6968
      %v7009 = vpack.c.b16 %v6971, %v6970
      %v7010 = vpack.c.b16 %v6973, %v6972
      %v7011 = vpack.c.b16 %v6975, %v6974
      %v7012 = vpack.c.b16 %v6977, %v6976
      %v7013 = vpack.c.b16 %v6979, %v6978
      %v7014 = vpack.c.b16 %v6981, %v6980
      %v7015 = vpack.c.b16 %v6983, %v6982
      %v7016 = vpack.c.b16 %v6985, %v6984
      %v7017 = vpack.c.b16 %v6987, %v6986
      %v7018 = vpack.c.b16 %v6989, %v6988
      %v7019 = vpack.c.b16 %v6991, %v6990
      %v7020 = vpack.c.b16 %v6993, %v6992
      %v7021 = vpack.c.b16 %v6995, %v6994
      %v7022 = vpack.c.b16 %v6997, %v6996
      %v7023 = vpack.c.b16 %v6999, %v6998
      %7048 = vmatprep.subr.bf16.mxu0 0
      %7049 = vmatpush1.bf16.msra.mxu0 %v7000
      %7050 = vmatprep.subr.bf16.mxu0 0
      %7051 = vmatpush1.bf16.msra.mxu0 %v7001
      %7052 = vmatprep.subr.bf16.mxu0 0
      %7053 = vmatpush1.bf16.msra.mxu0 %v7002
      %7054 = vmatprep.subr.bf16.mxu0 0
      %7055 = vmatpush1.bf16.msra.mxu0 %v7003
      %7056 = vmatprep.subr.bf16.mxu0 0
      %7057 = vmatpush1.bf16.msra.mxu0 %v7004
      %7058 = vmatprep.subr.bf16.mxu0 0
      %7059 = vmatpush1.bf16.msra.mxu0 %v7005
      %7060 = vmatprep.subr.bf16.mxu0 0
      %7061 = vmatpush1.bf16.msra.mxu0 %v7006
      %7062 = vmatprep.subr.bf16.mxu0 0
      %7063 = vmatpush1.bf16.msra.mxu0 %v7007
      %7064 = vmatprep.subr.bf16.mxu0 0
      %7065 = vmatpush1.bf16.msra.mxu0 %v7008
      %7066 = vmatprep.subr.bf16.mxu0 0
      %7067 = vmatpush1.bf16.msra.mxu0 %v7009
      %7068 = vmatprep.subr.bf16.mxu0 0
      %7069 = vmatpush1.bf16.msra.mxu0 %v7010
      %7070 = vmatprep.subr.bf16.mxu0 0
      %7071 = vmatpush1.bf16.msra.mxu0 %v7011
      %7072 = vmatprep.subr.bf16.mxu0 0
      %7073 = vmatpush1.bf16.msra.mxu0 %v7012
      %7074 = vmatprep.subr.bf16.mxu0 0
      %7075 = vmatpush1.bf16.msra.mxu0 %v7013
      %7076 = vmatprep.subr.bf16.mxu0 0
      %7077 = vmatpush1.bf16.msra.mxu0 %v7014
      %7078 = vmatprep.subr.bf16.mxu0 0
      %7079 = vmatpush1.bf16.msra.mxu0 %v7015
      %7080 = vmatprep.mubr.bf16.mxu0 %v5783
      %7081 = vmatmul.mubr.bf16.gmra.mrb[0].mxu0 %v5782
      %v7082 = vpop.f32.mrb[0].mxu0
      %v7083 = vpop.f32.mrb[0].mxu0
      %v7084 = vpop.f32.mrb[0].mxu0
      %v7085 = vpop.f32.mrb[0].mxu0
      %7086 = vmatprep.mubr.bf16.mxu0 %v5786
      %7087 = vmatmul.mubr.bf16.gmra.mrb[0].mxu0 %v5785
      %v7088 = vpop.f32.mrb[0].mxu0
      %v7089 = vadd.f32 0.0, %v7088
      %v7090 = vpop.f32.mrb[0].mxu0
      %v7091 = vpop.f32.mrb[0].mxu0
      %v7092 = vadd.f32 0.0, %v7091
      %v7093 = vpop.f32.mrb[0].mxu0
      %7094 = vmatprep.mubr.bf16.mxu0 %v5789
      %7095 = vmatmul.mubr.bf16.gmra.mrb[0].mxu0 %v5788
      %v7096 = vpop.f32.mrb[0].mxu0
      %v7097 = vadd.f32 0.0, %v7096
      %v7098 = vpop.f32.mrb[0].mxu0
      %v7099 = vpop.f32.mrb[0].mxu0
      %v7100 = vadd.f32 0.0, %v7099
      %v7101 = vpop.f32.mrb[0].mxu0
      %7102 = vmatprep.mubr.bf16.mxu0 %v5792
      %7103 = vmatmul.mubr.bf16.gmra.mrb[0].mxu0 %v5791
      %v7104 = vpop.f32.mrb[0].mxu0
      %v7105 = vadd.f32 0.0, %v7104
      %v7106 = vpop.f32.mrb[0].mxu0
      %v7107 = vpop.f32.mrb[0].mxu0
      %v7108 = vadd.f32 0.0, %v7107
      %v7109 = vpop.f32.mrb[0].mxu0
      %7110 = vmatprep.mubr.bf16.mxu0 %v5795
      %7111 = vmatmul.mubr.bf16.gmra.mrb[0].mxu0 %v5794
      %v7112 = vpop.f32.mrb[0].mxu0
      %v7113 = vadd.f32 0.0, %v7112
      %v7114 = vpop.f32.mrb[0].mxu0
      %v7115 = vpop.f32.mrb[0].mxu0
      %v7116 = vadd.f32 0.0, %v7115
      %v7117 = vpop.f32.mrb[0].mxu0
      %7118 = vmatprep.mubr.bf16.mxu0 %v5798
      %7119 = vmatmul.mubr.bf16.gmra.mrb[0].mxu0 %v5797
      %v7120 = vpop.f32.mrb[0].mxu0
      %v7121 = vadd.f32 0.0, %v7120
      %v7122 = vpop.f32.mrb[0].mxu0
      %v7123 = vpop.f32.mrb[0].mxu0
      %v7124 = vadd.f32 0.0, %v7123
      %v7125 = vpop.f32.mrb[0].mxu0
      %7126 = vmatprep.mubr.bf16.mxu0 %v5801
      %7127 = vmatmul.mubr.bf16.gmra.mrb[0].mxu0 %v5800
      %v7128 = vpop.f32.mrb[0].mxu0
      %v7129 = vadd.f32 0.0, %v7128
      %v7130 = vpop.f32.mrb[0].mxu0
      %v7131 = vpop.f32.mrb[0].mxu0
      %v7132 = vadd.f32 0.0, %v7131
      %v7133 = vpop.f32.mrb[0].mxu0
      %7134 = vmatprep.mubr.bf16.mxu0 %v5804
      %7135 = vmatmul.mubr.bf16.gmra.mrb[0].mxu0 %v5803
      %v7136 = vpop.f32.mrb[0].mxu0
      %v7137 = vadd.f32 0.0, %v7136
      %v7138 = vpop.f32.mrb[0].mxu0
      %v7139 = vpop.f32.mrb[0].mxu0
      %v7140 = vadd.f32 0.0, %v7139
      %v7141 = vpop.f32.mrb[0].mxu0
      %7142 = vmatprep.mubr.bf16.mxu0 %v5807
      %7143 = vmatmul.mubr.bf16.gmra.mrb[0].mxu0 %v5806
      %v7144 = vpop.f32.mrb[0].mxu0
      %v7145 = vadd.f32 0.0, %v7144
      %v7146 = vpop.f32.mrb[0].mxu0
      %v7147 = vpop.f32.mrb[0].mxu0
      %v7148 = vadd.f32 0.0, %v7147
      %v7149 = vpop.f32.mrb[0].mxu0
      %7150 = vmatprep.mubr.bf16.mxu0 %v5810
      %7151 = vmatmul.mubr.bf16.gmra.mrb[0].mxu0 %v5809
      %v7152 = vpop.f32.mrb[0].mxu0
      %v7153 = vadd.f32 0.0, %v7152
      %v7154 = vpop.f32.mrb[0].mxu0
      %v7155 = vpop.f32.mrb[0].mxu0
      %v7156 = vadd.f32 0.0, %v7155
      %v7157 = vpop.f32.mrb[0].mxu0
      %7158 = vmatprep.mubr.bf16.mxu0 %v5813
      %7159 = vmatmul.mubr.bf16.gmra.mrb[0].mxu0 %v5812
      %v7160 = vpop.f32.mrb[0].mxu0
      %v7161 = vadd.f32 0.0, %v7160
      %v7162 = vpop.f32.mrb[0].mxu0
      %v7163 = vpop.f32.mrb[0].mxu0
      %v7164 = vadd.f32 0.0, %v7163
      %v7165 = vpop.f32.mrb[0].mxu0
      %7166 = vmatprep.mubr.bf16.mxu0 %v5816
      %7167 = vmatmul.mubr.bf16.gmra.mrb[0].mxu0 %v5815
      %v7168 = vpop.f32.mrb[0].mxu0
      %v7169 = vadd.f32 0.0, %v7168
      %v7170 = vpop.f32.mrb[0].mxu0
      %v7171 = vpop.f32.mrb[0].mxu0
      %v7172 = vadd.f32 0.0, %v7171
      %v7173 = vpop.f32.mrb[0].mxu0
      %7174 = vmatprep.mubr.bf16.mxu0 %v5819
      %7175 = vmatmul.mubr.bf16.gmra.mrb[0].mxu0 %v5818
      %v7176 = vpop.f32.mrb[0].mxu0
      %v7177 = vadd.f32 0.0, %v7176
      %v7178 = vpop.f32.mrb[0].mxu0
      %v7179 = vpop.f32.mrb[0].mxu0
      %v7180 = vadd.f32 0.0, %v7179
      %v7181 = vpop.f32.mrb[0].mxu0
      %7182 = vmatprep.mubr.bf16.mxu0 %v5822
      %7183 = vmatmul.mubr.bf16.gmra.mrb[0].mxu0 %v5821
      %v7184 = vpop.f32.mrb[0].mxu0
      %v7185 = vadd.f32 0.0, %v7184
      %v7186 = vpop.f32.mrb[0].mxu0
      %v7187 = vpop.f32.mrb[0].mxu0
      %v7188 = vadd.f32 0.0, %v7187
      %v7189 = vpop.f32.mrb[0].mxu0
      %7190 = vmatprep.mubr.bf16.mxu0 %v5825
      %7191 = vmatmul.mubr.bf16.gmra.mrb[0].mxu0 %v5824
      %v7192 = vpop.f32.mrb[0].mxu0
      %v7193 = vadd.f32 0.0, %v7192
      %v7194 = vpop.f32.mrb[0].mxu0
      %v7195 = vpop.f32.mrb[0].mxu0
      %v7196 = vadd.f32 0.0, %v7195
      %v7197 = vpop.f32.mrb[0].mxu0
      %7198 = vmatprep.mubr.bf16.mxu0 %v5828
      %7199 = vmatmul.mubr.bf16.gmra.mrb[0].mxu0 %v5827
      %v7200 = vpop.f32.mrb[0].mxu0
      %v7201 = vadd.f32 0.0, %v7200
      %v7202 = vpop.f32.mrb[0].mxu0
      %v7203 = vpop.f32.mrb[0].mxu0
      %v7204 = vadd.f32 0.0, %v7203
      %v7205 = vpop.f32.mrb[0].mxu0
      %7206 = vdwg.mxu0
      %7207 = vmatprep.subr.bf16.mxu0 0
      %7208 = vmatpush1.bf16.msra.mxu0 %v7016
      %7209 = vmatprep.subr.bf16.mxu0 0
      %7210 = vmatpush1.bf16.msra.mxu0 %v7017
      %7211 = vmatprep.subr.bf16.mxu0 0
      %7212 = vmatpush1.bf16.msra.mxu0 %v7018
      %7213 = vmatprep.subr.bf16.mxu0 0
      %7214 = vmatpush1.bf16.msra.mxu0 %v7019
      %7215 = vmatprep.subr.bf16.mxu0 0
      %7216 = vmatpush1.bf16.msra.mxu0 %v7020
      %7217 = vmatprep.subr.bf16.mxu0 0
      %7218 = vmatpush1.bf16.msra.mxu0 %v7021
      %7219 = vmatprep.subr.bf16.mxu0 0
      %7220 = vmatpush1.bf16.msra.mxu0 %v7022
      %7221 = vmatprep.subr.bf16.mxu0 0
      %7222 = vmatpush1.bf16.msra.mxu0 %v7023
      %7223 = vmatprep.subr.bf16.mxu0 0
      %7224 = vmatpush1.bf16.msra.mxu0 0
      %7225 = vmatprep.subr.bf16.mxu0 0
      %7226 = vmatpush1.bf16.msra.mxu0 0
      %7227 = vmatprep.subr.bf16.mxu0 0
      %7228 = vmatpush1.bf16.msra.mxu0 0
      %7229 = vmatprep.subr.bf16.mxu0 0
      %7230 = vmatpush1.bf16.msra.mxu0 0
      %7231 = vmatprep.subr.bf16.mxu0 0
      %7232 = vmatpush1.bf16.msra.mxu0 0
      %7233 = vmatprep.subr.bf16.mxu0 0
      %7234 = vmatpush1.bf16.msra.mxu0 0
      %7235 = vmatprep.subr.bf16.mxu0 0
      %7236 = vmatpush1.bf16.msra.mxu0 0
      %7237 = vmatprep.subr.bf16.mxu0 0
      %7238 = vmatpush1.bf16.msra.mxu0 0
      %7239 = vmatprep.mubr.bf16.mxu0 0
      %7240 = vmatmul.mubr.bf16.gmra.mrb[0].mxu0 %v5784
      %v7241 = vpop.f32.mrb[0].mxu0
      %v7242 = vpop.f32.mrb[0].mxu0
      %v7243 = vpop.f32.mrb[0].mxu0
      %v7244 = vpop.f32.mrb[0].mxu0
      %7245 = vmatprep.mubr.bf16.mxu0 0
      %7246 = vmatmul.mubr.bf16.gmra.mrb[0].mxu0 %v5787
      %v7247 = vpop.f32.mrb[0].mxu0
      %v7248 = vadd.f32 %v7089, %v7247
      %v7249 = vpop.f32.mrb[0].mxu0
      %v7250 = vpop.f32.mrb[0].mxu0
      %v7251 = vadd.f32 %v7092, %v7250
      %v7252 = vpop.f32.mrb[0].mxu0
      %7253 = vmatprep.mubr.bf16.mxu0 0
      %7254 = vmatmul.mubr.bf16.gmra.mrb[0].mxu0 %v5790
      %v7255 = vpop.f32.mrb[0].mxu0
      %v7256 = vadd.f32 %v7097, %v7255
      %v7257 = vpop.f32.mrb[0].mxu0
      %v7258 = vpop.f32.mrb[0].mxu0
      %v7259 = vadd.f32 %v7100, %v7258
      %v7260 = vpop.f32.mrb[0].mxu0
      %7261 = vmatprep.mubr.bf16.mxu0 0
      %7262 = vmatmul.mubr.bf16.gmra.mrb[0].mxu0 %v5793
      %v7263 = vpop.f32.mrb[0].mxu0
      %v7264 = vadd.f32 %v7105, %v7263
      %v7265 = vpop.f32.mrb[0].mxu0
      %v7266 = vpop.f32.mrb[0].mxu0
      %v7267 = vadd.f32 %v7108, %v7266
      %v7268 = vpop.f32.mrb[0].mxu0
      %7269 = vmatprep.mubr.bf16.mxu0 0
      %7270 = vmatmul.mubr.bf16.gmra.mrb[0].mxu0 %v5796
      %v7271 = vpop.f32.mrb[0].mxu0
      %v7272 = vadd.f32 %v7113, %v7271
      %v7273 = vpop.f32.mrb[0].mxu0
      %v7274 = vpop.f32.mrb[0].mxu0
      %v7275 = vadd.f32 %v7116, %v7274
      %v7276 = vpop.f32.mrb[0].mxu0
      %7277 = vmatprep.mubr.bf16.mxu0 0
      %7278 = vmatmul.mubr.bf16.gmra.mrb[0].mxu0 %v5799
      %v7279 = vpop.f32.mrb[0].mxu0
      %v7280 = vadd.f32 %v7121, %v7279
      %v7281 = vpop.f32.mrb[0].mxu0
      %v7282 = vpop.f32.mrb[0].mxu0
      %v7283 = vadd.f32 %v7124, %v7282
      %v7284 = vpop.f32.mrb[0].mxu0
      %7285 = vmatprep.mubr.bf16.mxu0 0
      %7286 = vmatmul.mubr.bf16.gmra.mrb[0].mxu0 %v5802
      %v7287 = vpop.f32.mrb[0].mxu0
      %v7288 = vadd.f32 %v7129, %v7287
      %v7289 = vpop.f32.mrb[0].mxu0
      %v7290 = vpop.f32.mrb[0].mxu0
      %v7291 = vadd.f32 %v7132, %v7290
      %v7292 = vpop.f32.mrb[0].mxu0
      %7293 = vmatprep.mubr.bf16.mxu0 0
      %7294 = vmatmul.mubr.bf16.gmra.mrb[0].mxu0 %v5805
      %v7295 = vpop.f32.mrb[0].mxu0
      %v7296 = vadd.f32 %v7137, %v7295
      %v7297 = vpop.f32.mrb[0].mxu0
      %v7298 = vpop.f32.mrb[0].mxu0
      %v7299 = vadd.f32 %v7140, %v7298
      %v7300 = vpop.f32.mrb[0].mxu0
      %7301 = vmatprep.mubr.bf16.mxu0 0
      %7302 = vmatmul.mubr.bf16.gmra.mrb[0].mxu0 %v5808
      %v7303 = vpop.f32.mrb[0].mxu0
      %v7304 = vadd.f32 %v7145, %v7303
      %v7305 = vpop.f32.mrb[0].mxu0
      %v7306 = vpop.f32.mrb[0].mxu0
      %v7307 = vadd.f32 %v7148, %v7306
      %v7308 = vpop.f32.mrb[0].mxu0
      %7309 = vmatprep.mubr.bf16.mxu0 0
      %7310 = vmatmul.mubr.bf16.gmra.mrb[0].mxu0 %v5811
      %v7311 = vpop.f32.mrb[0].mxu0
      %v7312 = vadd.f32 %v7153, %v7311
      %v7313 = vpop.f32.mrb[0].mxu0
      %v7314 = vpop.f32.mrb[0].mxu0
      %v7315 = vadd.f32 %v7156, %v7314
      %v7316 = vpop.f32.mrb[0].mxu0
      %7317 = vmatprep.mubr.bf16.mxu0 0
      %7318 = vmatmul.mubr.bf16.gmra.mrb[0].mxu0 %v5814
      %v7319 = vpop.f32.mrb[0].mxu0
      %v7320 = vadd.f32 %v7161, %v7319
      %v7321 = vpop.f32.mrb[0].mxu0
      %v7322 = vpop.f32.mrb[0].mxu0
      %v7323 = vadd.f32 %v7164, %v7322
      %v7324 = vpop.f32.mrb[0].mxu0
      %7325 = vmatprep.mubr.bf16.mxu0 0
      %7326 = vmatmul.mubr.bf16.gmra.mrb[0].mxu0 %v5817
      %v7327 = vpop.f32.mrb[0].mxu0
      %v7328 = vadd.f32 %v7169, %v7327
      %v7329 = vpop.f32.mrb[0].mxu0
      %v7330 = vpop.f32.mrb[0].mxu0
      %v7331 = vadd.f32 %v7172, %v7330
      %v7332 = vpop.f32.mrb[0].mxu0
      %7333 = vmatprep.mubr.bf16.mxu0 0
      %7334 = vmatmul.mubr.bf16.gmra.mrb[0].mxu0 %v5820
      %v7335 = vpop.f32.mrb[0].mxu0
      %v7336 = vadd.f32 %v7177, %v7335
      %v7337 = vpop.f32.mrb[0].mxu0
      %v7338 = vpop.f32.mrb[0].mxu0
      %v7339 = vadd.f32 %v7180, %v7338
      %v7340 = vpop.f32.mrb[0].mxu0
      %7341 = vmatprep.mubr.bf16.mxu0 0
      %7342 = vmatmul.mubr.bf16.gmra.mrb[0].mxu0 %v5823
      %v7343 = vpop.f32.mrb[0].mxu0
      %v7344 = vadd.f32 %v7185, %v7343
      %v7345 = vpop.f32.mrb[0].mxu0
      %v7346 = vpop.f32.mrb[0].mxu0
      %v7347 = vadd.f32 %v7188, %v7346
      %v7348 = vpop.f32.mrb[0].mxu0
      %7349 = vmatprep.mubr.bf16.mxu0 0
      %7350 = vmatmul.mubr.bf16.gmra.mrb[0].mxu0 %v5826
      %v7351 = vpop.f32.mrb[0].mxu0
      %v7352 = vadd.f32 %v7193, %v7351
      %v7353 = vpop.f32.mrb[0].mxu0
      %v7354 = vpop.f32.mrb[0].mxu0
      %v7355 = vadd.f32 %v7196, %v7354
      %v7356 = vpop.f32.mrb[0].mxu0
      %7357 = vmatprep.mubr.bf16.mxu0 0
      %7358 = vmatmul.mubr.bf16.gmra.mrb[0].mxu0 %v5829
      %v7359 = vpop.f32.mrb[0].mxu0
      %v7360 = vadd.f32 %v7201, %v7359
      %v7361 = vpop.f32.mrb[0].mxu0
      %v7362 = vpop.f32.mrb[0].mxu0
      %v7363 = vadd.f32 %v7204, %v7362
      %v7364 = vpop.f32.mrb[0].mxu0
      %7365 = vdwg.mxu0
      %v7366 = vadd.f32 %v6224, %v6729
      %v7367 = vadd.f32 %v6227, %v6732
      %v7368 = vadd.f32 %v6216, %v6737
      %v7369 = vadd.f32 %v6219, %v6740
      %v7370 = vadd.f32 %v6224, %v6745
      %v7371 = vadd.f32 %v6227, %v6748
      %v7372 = vadd.f32 %v6232, %v6753
      %v7373 = vadd.f32 %v6235, %v6756
      %v7374 = vadd.f32 %v6240, %v6761
      %v7375 = vadd.f32 %v6243, %v6764
      %v7376 = vadd.f32 %v6248, %v6769
      %v7377 = vadd.f32 %v6251, %v6772
      %v7378 = vadd.f32 %v6256, %v6777
      %v7379 = vadd.f32 %v6259, %v6780
      %v7380 = vadd.f32 %v6264, %v6785
      %v7381 = vadd.f32 %v6267, %v6788
      %v7382 = vadd.f32 %v6272, %v6793
      %v7383 = vadd.f32 %v6275, %v6796
      %v7384 = vadd.f32 %v6280, %v6801
      %v7385 = vadd.f32 %v6283, %v6804
      %v7386 = vadd.f32 %v6288, %v6809
      %v7387 = vadd.f32 %v6291, %v6812
      %v7388 = vadd.f32 %v6296, %v6817
      %v7389 = vadd.f32 %v6299, %v6820
      %v7390 = vadd.f32 %v6304, %v6825
      %v7391 = vadd.f32 %v6307, %v6828
      %v7392 = vadd.f32 %v6312, %v6833
      %v7393 = vadd.f32 %v6315, %v6836
      %v7394 = vadd.f32 %v6320, %v6841
      %v7395 = vadd.f32 %v6323, %v6844
      %v7396 = vadd.f32 %v6328, %v6849
      %v7397 = vadd.f32 %v6331, %v6852
      %v7398 = vadd.f32 %v7366, %v7248
      %v7399 = vadd.f32 %v7367, %v7251
      %v7400 = vadd.f32 %v7368, %v7256
      %v7401 = vadd.f32 %v7369, %v7259
      %v7402 = vadd.f32 %v7370, %v7264
      %v7403 = vadd.f32 %v7371, %v7267
      %v7404 = vadd.f32 %v7372, %v7272
      %v7405 = vadd.f32 %v7373, %v7275
      %v7406 = vadd.f32 %v7374, %v7280
      %v7407 = vadd.f32 %v7375, %v7283
      %v7408 = vadd.f32 %v7376, %v7288
      %v7409 = vadd.f32 %v7377, %v7291
      %v7410 = vadd.f32 %v7378, %v7296
      %v7411 = vadd.f32 %v7379, %v7299
      %v7412 = vadd.f32 %v7380, %v7304
      %v7413 = vadd.f32 %v7381, %v7307
      %v7414 = vadd.f32 %v7382, %v7312
      %v7415 = vadd.f32 %v7383, %v7315
      %v7416 = vadd.f32 %v7384, %v7320
      %v7417 = vadd.f32 %v7385, %v7323
      %v7418 = vadd.f32 %v7386, %v7328
      %v7419 = vadd.f32 %v7387, %v7331
      %v7420 = vadd.f32 %v7388, %v7336
      %v7421 = vadd.f32 %v7389, %v7339
      %v7422 = vadd.f32 %v7390, %v7344
      %v7423 = vadd.f32 %v7391, %v7347
      %v7424 = vadd.f32 %v7392, %v7352
      %v7425 = vadd.f32 %v7393, %v7355
      %v7426 = vadd.f32 %v7394, %v7360
      %v7427 = vadd.f32 %v7395, %v7363
      %v7428 = vadd.f32 %v7396, %v7352
      %v7429 = vadd.f32 %v7397, %v7355
      %v7430 = vld [vmem:[%s8] sm:$0x1]
      %v7432 = vlaneseq
      %v7433 = vshrl.u32 %v7432, 7
      %v7434 = vsub.s32 0, %v7433
      %v7435 = vrot.slane %v7430, %v7434
      %v7437 = vadd.f32 %v7398, %v7435
      %v7438 = vadd.f32 %v7399, %v7435
      %v7439 = vadd.f32 %v7400, %v7435
      %v7440 = vadd.f32 %v7401, %v7435
      %v7441 = vadd.f32 %v7402, %v7435
      %v7442 = vadd.f32 %v7403, %v7435
      %v7443 = vadd.f32 %v7404, %v7435
      %v7444 = vadd.f32 %v7405, %v7435
      %v7445 = vadd.f32 %v7406, %v7435
      %v7446 = vadd.f32 %v7407, %v7435
      %v7447 = vadd.f32 %v7408, %v7435
      %v7448 = vadd.f32 %v7409, %v7435
      %v7449 = vadd.f32 %v7410, %v7435
      %v7450 = vadd.f32 %v7411, %v7435
      %v7451 = vadd.f32 %v7412, %v7435
      %v7452 = vadd.f32 %v7413, %v7435
      %v7453 = vadd.f32 %v7414, %v7435
      %v7454 = vadd.f32 %v7415, %v7435
      %v7455 = vadd.f32 %v7416, %v7435
      %v7456 = vadd.f32 %v7417, %v7435
      %v7457 = vadd.f32 %v7418, %v7435
      %v7458 = vadd.f32 %v7419, %v7435
      %v7459 = vadd.f32 %v7420, %v7435
      %v7460 = vadd.f32 %v7421, %v7435
      %v7461 = vadd.f32 %v7422, %v7435
      %v7462 = vadd.f32 %v7423, %v7435
      %v7463 = vadd.f32 %v7424, %v7435
      %v7464 = vadd.f32 %v7425, %v7435
      %v7465 = vadd.f32 %v7426, %v7435
      %v7466 = vadd.f32 %v7427, %v7435
      %v7467 = vadd.f32 %v7428, %v7435
      %v7468 = vadd.f32 %v7429, %v7435
      %vm7469 = vcmask 64512
      %7470 = vst.msk [vmem:[%s332] sm:$0xff] %vm7469, %v7437
      %7471 = vst.msk [vmem:[%s332 + $0x8] sm:$0xff] %vm7469, %v7438
      %7472 = vst.msk [vmem:[%s332 + $0x10] sm:$0xff] %vm7469, %v7439
      %7473 = vst.msk [vmem:[%s332 + $0x18] sm:$0xff] %vm7469, %v7440
      %7474 = vst.msk [vmem:[%s332 + $0x20] sm:$0xff] %vm7469, %v7441
      %7475 = vst.msk [vmem:[%s332 + $0x28] sm:$0xff] %vm7469, %v7442
      %7476 = vst.msk [vmem:[%s332 + $0x30] sm:$0xff] %vm7469, %v7443
      %7477 = vst.msk [vmem:[%s332 + $0x38] sm:$0xff] %vm7469, %v7444
      %7478 = vst.msk [vmem:[%s332 + $0x40] sm:$0xff] %vm7469, %v7445
      %7479 = vst.msk [vmem:[%s332 + $0x48] sm:$0xff] %vm7469, %v7446
      %7480 = vst.msk [vmem:[%s332 + $0x50] sm:$0xff] %vm7469, %v7447
      %7481 = vst.msk [vmem:[%s332 + $0x58] sm:$0xff] %vm7469, %v7448
      %7482 = vst.msk [vmem:[%s332 + $0x60] sm:$0xff] %vm7469, %v7449
      %7483 = vst.msk [vmem:[%s332 + $0x68] sm:$0xff] %vm7469, %v7450
      %7484 = vst.msk [vmem:[%s332 + $0x70] sm:$0xff] %vm7469, %v7451
      %7485 = vst.msk [vmem:[%s332 + $0x78] sm:$0xff] %vm7469, %v7452
      %7486 = vst.msk [vmem:[%s332 + $0x80] sm:$0xff] %vm7469, %v7453
      %7487 = vst.msk [vmem:[%s332 + $0x88] sm:$0xff] %vm7469, %v7454
      %7488 = vst.msk [vmem:[%s332 + $0x90] sm:$0xff] %vm7469, %v7455
      %7489 = vst.msk [vmem:[%s332 + $0x98] sm:$0xff] %vm7469, %v7456
      %7490 = vst.msk [vmem:[%s332 + $0xa0] sm:$0xff] %vm7469, %v7457
      %7491 = vst.msk [vmem:[%s332 + $0xa8] sm:$0xff] %vm7469, %v7458
      %7492 = vst.msk [vmem:[%s332 + $0xb0] sm:$0xff] %vm7469, %v7459
      %7493 = vst.msk [vmem:[%s332 + $0xb8] sm:$0xff] %vm7469, %v7460
      %7494 = vst.msk [vmem:[%s332 + $0xc0] sm:$0xff] %vm7469, %v7461
      %7495 = vst.msk [vmem:[%s332 + $0xc8] sm:$0xff] %vm7469, %v7462
      %7496 = vst.msk [vmem:[%s332 + $0xd0] sm:$0xff] %vm7469, %v7463
      %7497 = vst.msk [vmem:[%s332 + $0xd8] sm:$0xff] %vm7469, %v7464
      %7498 = vst.msk [vmem:[%s332 + $0xe0] sm:$0xff] %vm7469, %v7465
      %7499 = vst.msk [vmem:[%s332 + $0xe8] sm:$0xff] %vm7469, %v7466
      %7500 = vst.msk [vmem:[%s332 + $0xf0] sm:$0xff] %vm7469, %v7467
      %7501 = vst.msk [vmem:[%s332 + $0xf8] sm:$0xff] %vm7469, %v7468
      %p7502 = scmp.lt.s32.totalorder %s20, 1
      %s7503 = scalar_select %p7502, %s20, 1
      %s7504 = smul.addr %s7503, 32
      %s7505 = smul.addr %s7504, 8
      %s7506 = scalar_lea.vmem %s9, %s7505
      // Predicated region
      $region57: #{block_forward.1} parent=55 // pred_check
        %p7507 = pneg %p232
      $region58: #{block_forward.1} parent=55 // pred_check_branch
        %7509 = sbr.rel (%p7507) target = $region60
      $region59: #{block_forward.1} parent=55 // pred_region
        _
      $region60: #{block_forward.1} parent=55 // pred_fallthru
        _
    $region56: #{block_forward.1} parent=5 // pred_fallthru
      _
    %p7510 = scmp.le.s32.totalorder 2, %s15
    // Predicated region
    $region61: #{block_forward.1} parent=5 // pred_check
      %p7511 = pneg %p7510
    $region62: #{block_forward.1} parent=5 // pred_check_branch
      %7513 = sbr.rel (%p7511) target = $region64
    $region63: #{block_forward.1} parent=5 // pred_region
      %s7514 = ssub.s32 %s15, 2
      // Predicated region
      $region65: #{block_forward.1} parent=63 // pred_check
        %p7515 = pneg %p238
      $region66: #{block_forward.1} parent=63 // pred_check_branch
        %7517 = sbr.rel (%p7515) target = $region68
      $region67: #{block_forward.1} parent=63 // pred_region
        %p7518 = scmp.lt.s32.totalorder %s21, 1
        %s7519 = scalar_select %p7518, %s21, 1
        %s7520 = smul.addr %s7519, 32
        %s7521 = smul.addr %s7520, 8
        %s7522 = scalar_lea.vmem %s9, %s7521
      $region68: #{block_forward.1} parent=63 // pred_fallthru
        _
    $region64: #{block_forward.1} parent=5 // pred_fallthru
      _
  $region6: #{block_forward.1} parent=0 // loop_footer
    %s19 = sadd.s32 1, %s15
  $region7: #{block_forward.1} parent=0 // loop_footer_branch
    %14 = sbr.rel target = $region3
  $region8: #{block_forward.1} parent=0 // loop_exit
    _

</llo_original>
